<compile_context>
chip_gen: v7x
topology: tpu7x:2x2x1
jax: 0.10.0
libtpu: 0.0.40
codegen_flags: <defaults>
</compile_context>

<pallas_src>
import jax
import jax.numpy as jnp
from jax import lax
from jax.experimental import pallas as pl
from jax.experimental.pallas import tpu as pltpu

# ----------------------------------------------------------------------------
# Small, lane-dense stand-in for bert-base (768 hidden, 12 layers, 12 heads):
B = 2            # batch
S = 128          # sequence length
H = 256          # hidden size (stands in for 768)
NH = 2           # attention heads
HD = H // NH     # head dim = 128 -> aligned lane tiles
I = 4 * H        # FFN intermediate size (BERT uses 4x hidden)
VOCAB = 1000     # vocab size
NUM_LAYERS = 2   # encoder layers
LN_EPS = 1e-12   # BERT layernorm eps

BS = B * S

# Row indices of the packed per-layer bias / LayerNorm parameter table.
_BQ, _BK, _BV, _BO, _LN1G, _LN1B, _B2, _LN2G, _LN2B = range(9)
_NVEC = 9


# ------------------------------ kernel helpers ------------------------------
def _layernorm(x, g, b):
    mu = jnp.mean(x, axis=-1, keepdims=True)
    var = jnp.mean((x - mu) ** 2, axis=-1, keepdims=True)
    return (x - mu) * lax.rsqrt(var + LN_EPS) * g + b


def _gelu(x):
    # TODO(synk): HF BERT uses the erf-form GELU; tanh approximation is close.
    c = jnp.float32(0.7978845608028654)  # sqrt(2/pi)
    return 0.5 * x * (1.0 + jnp.tanh(c * (x + 0.044715 * x * x * x)))


# ------------------------------ fused Pallas kernel --------------------------
def encoder_kernel(x0_hbm, wqkv_ref, wo_ref, w1_ref, w2_ref, vec_ref, b1_ref,
                   out_ref, x_ref, dma_sem):
    b = pl.program_id(0)        # batch block (parallel)
    layer = pl.program_id(1)    # encoder layer (arbitrary / sequential)

    # Layer 0: pull this batch block's embedding slab (already LayerNormed
    # outside the kernel) from HBM into the resident VMEM activation.  It is
    # not a pipelined input, so it costs no double-buffered VMEM afterwards.
    @pl.when(layer == 0)
    def _():
        start = pl.multiple_of(b * S, S)
        cp = pltpu.make_async_copy(x0_hbm.at[pl.ds(start, S)], x_ref, dma_sem)
        cp.start()
        cp.wait()

    x = x_ref[...]                                           # [S, H] f32
    vec = vec_ref[0]                                         # [9, H] f32

    # Fused Q/K/V projection: one wide bf16 MXU matmul, f32 accumulation.
    qkv = jnp.dot(x.astype(jnp.bfloat16), wqkv_ref[0],
                  preferred_element_type=jnp.float32)        # [S, 3H]
    # 1/sqrt(HD) is folded into Wq / bq at init time.
    q = (qkv[:, 0 * H:1 * H] + vec[_BQ:_BQ + 1]).astype(jnp.bfloat16)
    k = (qkv[:, 1 * H:2 * H] + vec[_BK:_BK + 1]).astype(jnp.bfloat16)
    v = (qkv[:, 2 * H:3 * H] + vec[_BV:_BV + 1]).astype(jnp.bfloat16)

    # Exact per-head attention.  HD == 128, so each head slice is a full,
    # aligned lane tile (no cross-lane shuffles); the batch dim is carried by
    # the parallel grid axis, so there is no block-diagonal masking and no
    # wasted score / exp work.
    ctx_heads = []
    for h in range(NH):
        sl = slice(h * HD, (h + 1) * HD)
        s = lax.dot_general(q[:, sl], k[:, sl], (((1,), (1,)), ((), ())),
                            preferred_element_type=jnp.float32)      # [S, S]
        # TODO(synk): tokenizer padding masks would be folded in here; inputs
        # are assumed all-valid (matches the zero mask of the reference run).
        s = s - jnp.max(s, axis=-1, keepdims=True)
        e = jnp.exp(s)
        p = e * pl.reciprocal(jnp.sum(e, axis=-1, keepdims=True), approx=True)
        ctx_heads.append(jnp.dot(p.astype(jnp.bfloat16), v[:, sl],
                                 preferred_element_type=jnp.float32))
    ctx = jnp.concatenate(ctx_heads, axis=-1)                # [S, H], aligned

    attn = jnp.dot(ctx.astype(jnp.bfloat16), wo_ref[0],
                   preferred_element_type=jnp.float32) + vec[_BO:_BO + 1]
    x1 = _layernorm(x + attn, vec[_LN1G:_LN1G + 1], vec[_LN1B:_LN1B + 1])

    hmid = _gelu(jnp.dot(x1.astype(jnp.bfloat16), w1_ref[0],
                         preferred_element_type=jnp.float32) + b1_ref[0])
    ffn = jnp.dot(hmid.astype(jnp.bfloat16), w2_ref[0],
                  preferred_element_type=jnp.float32) + vec[_B2:_B2 + 1]
    x_new = _layernorm(x1 + ffn, vec[_LN2G:_LN2G + 1], vec[_LN2B:_LN2B + 1])
    x_ref[...] = x_new                                       # carry to next layer

    # Last layer: mean-pool over the sequence with one [1,S]x[S,H] matmul
    # (MXU is otherwise idle here) and write this batch block's pooled row.
    @pl.when(layer == pl.num_programs(1) - 1)
    def _():
        pool = jnp.full((1, S), 1.0 / S, dtype=jnp.float32)
        pooled = jnp.dot(pool, x_new, preferred_element_type=jnp.float32)
        out_ref[...] = pooled.reshape(1, 1, H)


# ------------------------------ wrapper --------------------------------------
def text_encoder_forward(token_ids, params):
    # --- embedding lookup + embedding LayerNorm (glue, outside the kernel) ---
    word = params["word_emb"][token_ids]                    # [B, S, H]
    pos = params["pos_emb"][None, :S, :]                    # [1, S, H]
    typ = params["type_emb"][0][None, None, :]              # [1, 1, H]
    emb = (word + pos + typ).reshape(BS, H)                 # [B*S, H]
    mu = jnp.mean(emb, axis=-1, keepdims=True)
    var = jnp.mean((emb - mu) ** 2, axis=-1, keepdims=True)
    x0 = ((emb - mu) * lax.rsqrt(var + LN_EPS) * params["emb_ln_g"]
          + params["emb_ln_b"]).astype(jnp.float32)

    stk = params["stacked"]

    def layer_map(b, l):
        return (l, 0, 0)

    grid_spec = pltpu.PrefetchScalarGridSpec(
        num_scalar_prefetch=0,
        grid=(B, NUM_LAYERS),
        in_specs=[
            pl.BlockSpec(memory_space=pl.ANY),               # x0 stays in HBM
            pl.BlockSpec((1, H, 3 * H), layer_map),          # wqkv  (bf16)
            pl.BlockSpec((1, H, H), layer_map),              # wo    (bf16)
            pl.BlockSpec((1, H, I), layer_map),              # w1    (bf16)
            pl.BlockSpec((1, I, H), layer_map),              # w2    (bf16)
            pl.BlockSpec((1, _NVEC, H), layer_map),          # biases + LN (f32)
            pl.BlockSpec((1, 1, I), layer_map),              # b1    (f32)
        ],
        out_specs=pl.BlockSpec((1, 1, H), lambda b, l: (b, 0, 0)),
        scratch_shapes=[
            pltpu.VMEM((S, H), jnp.float32),                 # resident activation
            pltpu.SemaphoreType.DMA,                         # layer-0 x0 DMA
        ],
    )

    out = pl.pallas_call(
        encoder_kernel,
        out_shape=jax.ShapeDtypeStruct((B, 1, H), jnp.float32),
        grid_spec=grid_spec,
        compiler_params=pltpu.CompilerParams(
            # batch axis feeds v7x's 2nd TensorCore; layer axis is sequential.
            dimension_semantics=("parallel", "arbitrary"),
            # Explicit limit so double-buffered per-layer weights keep fitting
            # when H/I are scaled toward real BERT-base sizes.
            vmem_limit_bytes=64 * 1024 * 1024,
        ),
    )(x0, stk["wqkv"], stk["wo"], stk["w1"], stk["w2"], stk["vec"], stk["b1"])
    return out.reshape(B, H)


# ------------------------------ params ---------------------------------------
def init_params(key):
    keys = iter(jax.random.split(key, 32))

    def nrm(shape):
        return 0.02 * jax.random.normal(next(keys), shape, jnp.float32)

    L = NUM_LAYERS
    scale = 1.0 / (HD ** 0.5)           # attention scale folded into Wq / bq
    wq = nrm((L, H, H)) * scale
    wk = nrm((L, H, H))
    wv = nrm((L, H, H))
    bq = nrm((L, 1, H)) * scale
    bk = nrm((L, 1, H))
    bv = nrm((L, 1, H))
    bo = nrm((L, 1, H))
    b2 = nrm((L, 1, H))
    ln1g = jnp.ones((L, 1, H), jnp.float32)
    ln1b = jnp.zeros((L, 1, H), jnp.float32)
    ln2g = jnp.ones((L, 1, H), jnp.float32)
    ln2b = jnp.zeros((L, 1, H), jnp.float32)

    return {
        "word_emb": nrm((VOCAB, H)),
        "pos_emb": nrm((S, H)),
        "type_emb": nrm((2, H)),
        "emb_ln_g": jnp.ones((1, H), jnp.float32),
        "emb_ln_b": jnp.zeros((1, H), jnp.float32),
        "stacked": {
            # MXU weights in bf16; f32 accumulation happens in-kernel.
            "wqkv": jnp.concatenate([wq, wk, wv], axis=-1).astype(jnp.bfloat16),
            "wo": nrm((L, H, H)).astype(jnp.bfloat16),
            "w1": nrm((L, H, I)).astype(jnp.bfloat16),
            "w2": nrm((L, I, H)).astype(jnp.bfloat16),
            # All H-wide biases / LayerNorm params packed into one table
            # (rows: bq, bk, bv, bo, ln1g, ln1b, b2, ln2g, ln2b).
            "vec": jnp.concatenate(
                [bq, bk, bv, bo, ln1g, ln1b, b2, ln2g, ln2b], axis=1),
            "b1": nrm((L, 1, I)),
        },
    }


# ------------------------------ main -----------------------------------------
if __name__ == "__main__":
    key = jax.random.PRNGKey(0)
    k_ids, k_params = jax.random.split(key)

    token_ids = jax.random.randint(k_ids, (B, S), 0, VOCAB, dtype=jnp.int32)
    params = init_params(k_params)

    out = text_encoder_forward(token_ids, params)
    out = jax.block_until_ready(out)

    assert out.shape == (B, H), out.shape
    assert out.dtype == jnp.float32
    assert bool(jnp.all(jnp.isfinite(out)))
    print("KERNEL_OK")
</pallas_src>

<mosaic_0001>
module attributes {stable_mosaic.version = 11 : i64} {
  func.func @encoder_kernel(%arg0: i32, %arg1: i32, %arg2: memref<256x256xf32, #tpu.memory_space<any>>, %arg3: memref<1x256x768xbf16, #tpu.memory_space<vmem>>, %arg4: memref<1x256x256xbf16, #tpu.memory_space<vmem>>, %arg5: memref<1x256x1024xbf16, #tpu.memory_space<vmem>>, %arg6: memref<1x1024x256xbf16, #tpu.memory_space<vmem>>, %arg7: memref<1x9x256xf32, #tpu.memory_space<vmem>>, %arg8: memref<1x1x1024xf32, #tpu.memory_space<vmem>>, %arg9: memref<1x1x256xf32, #tpu.memory_space<vmem>>, %arg10: memref<128x256xf32, #tpu.memory_space<vmem>>, %arg11: memref<!tpu.dma_semaphore, #tpu.memory_space<semaphore_mem>>) attributes {dimension_semantics = [#tpu.dimension_semantics<parallel>, #tpu.dimension_semantics<arbitrary>], iteration_bounds = array<i64: 2, 2>, scalar_prefetch = 0 : i64, scratch_operands = 2 : i64, tpu.core_type = #tpu.core_type<tc>, window_params = [{}, {transform_indices = @transform_1, window_bounds = array<i64: 1, 256, 768>}, {transform_indices = @transform_2, window_bounds = array<i64: 1, 256, 256>}, {transform_indices = @transform_3, window_bounds = array<i64: 1, 256, 1024>}, {transform_indices = @transform_4, window_bounds = array<i64: 1, 1024, 256>}, {transform_indices = @transform_5, window_bounds = array<i64: 1, 9, 256>}, {transform_indices = @transform_6, window_bounds = array<i64: 1, 1, 1024>}, {transform_indices = @transform_7, window_bounds = array<i64: 1, 1, 256>}]} {
    %c0_i32 = arith.constant 0 : i32
    %0 = arith.cmpi eq, %arg1, %c0_i32 : i32
    %1 = arith.extui %0 : i1 to i32
    %c0_i32_0 = arith.constant 0 : i32
    %2 = arith.cmpi ne, %1, %c0_i32_0 : i32
    scf.if %2 {
      %c128_i32 = arith.constant 128 : i32
      %147 = arith.muli %arg0, %c128_i32 : i32
      %148 = tpu.assume_multiple %147, 128 : i32
      %c0_i32_48 = arith.constant 0 : i32
      %149 = tpu.memref_slice %arg2[%148, %c0_i32_48] : memref<256x256xf32, #tpu.memory_space<any>> -> memref<128x256xf32, #tpu.memory_space<any>>
      tpu.enqueue_dma source(%149 : memref<128x256xf32, #tpu.memory_space<any>>) target(%arg10 : memref<128x256xf32, #tpu.memory_space<vmem>>) target_semaphore(%arg11 : memref<!tpu.dma_semaphore, #tpu.memory_space<semaphore_mem>>)
      %c0_i32_49 = arith.constant 0 : i32
      %150 = tpu.memref_slice %arg2[%148, %c0_i32_49] : memref<256x256xf32, #tpu.memory_space<any>> -> memref<128x256xf32, #tpu.memory_space<any>>
      tpu.wait_dma2 semaphore(%arg11 : memref<!tpu.dma_semaphore, #tpu.memory_space<semaphore_mem>>) src(%150 : memref<128x256xf32, #tpu.memory_space<any>>) dst(%arg10 : memref<128x256xf32, #tpu.memory_space<vmem>>)
    } else {
    }
    %c0 = arith.constant 0 : index
    %c0_1 = arith.constant 0 : index
    %3 = vector.load %arg10[%c0, %c0_1] : memref<128x256xf32, #tpu.memory_space<vmem>>, vector<128x256xf32>
    %c0_2 = arith.constant 0 : index
    %c0_3 = arith.constant 0 : index
    %c0_4 = arith.constant 0 : index
    %4 = vector.load %arg7[%c0_2, %c0_3, %c0_4] : memref<1x9x256xf32, #tpu.memory_space<vmem>>, vector<1x9x256xf32>
    %5 = vector.shape_cast %4 : vector<1x9x256xf32> to vector<9x256xf32>
    %6 = arith.truncf %3 : vector<128x256xf32> to vector<128x256xbf16>
    %c0_5 = arith.constant 0 : index
    %c0_6 = arith.constant 0 : index
    %c0_7 = arith.constant 0 : index
    %7 = vector.load %arg3[%c0_5, %c0_6, %c0_7] : memref<1x256x768xbf16, #tpu.memory_space<vmem>>, vector<1x256x768xbf16>
    %8 = vector.shape_cast %7 : vector<1x256x768xbf16> to vector<256x768xbf16>
    %cst = arith.constant dense<0.000000e+00> : vector<128x768xf32>
    %9 = tpu.matmul %6, %8, %cst {dimension_numbers = #tpu.dot_dimension_numbers<[1], [0], [0], [1], [0, 0, 1, 1], [], []>} : vector<128x256xbf16>, vector<256x768xbf16>, vector<128x768xf32> -> vector<128x768xf32>
    %10 = vector.extract_strided_slice %9 {offsets = [0, 0], sizes = [128, 256], strides = [1, 1]} : vector<128x768xf32> to vector<128x256xf32>
    %11 = vector.extract_strided_slice %5 {offsets = [0, 0], sizes = [1, 256], strides = [1, 1]} : vector<9x256xf32> to vector<1x256xf32>
    %12 = vector.broadcast %11 : vector<1x256xf32> to vector<128x256xf32>
    %13 = arith.addf %10, %12 : vector<128x256xf32>
    %14 = arith.truncf %13 : vector<128x256xf32> to vector<128x256xbf16>
    %15 = vector.extract_strided_slice %9 {offsets = [0, 256], sizes = [128, 256], strides = [1, 1]} : vector<128x768xf32> to vector<128x256xf32>
    %16 = vector.extract_strided_slice %5 {offsets = [1, 0], sizes = [1, 256], strides = [1, 1]} : vector<9x256xf32> to vector<1x256xf32>
    %17 = vector.broadcast %16 : vector<1x256xf32> to vector<128x256xf32>
    %18 = arith.addf %15, %17 : vector<128x256xf32>
    %19 = arith.truncf %18 : vector<128x256xf32> to vector<128x256xbf16>
    %20 = vector.extract_strided_slice %9 {offsets = [0, 512], sizes = [128, 256], strides = [1, 1]} : vector<128x768xf32> to vector<128x256xf32>
    %21 = vector.extract_strided_slice %5 {offsets = [2, 0], sizes = [1, 256], strides = [1, 1]} : vector<9x256xf32> to vector<1x256xf32>
    %22 = vector.broadcast %21 : vector<1x256xf32> to vector<128x256xf32>
    %23 = arith.addf %20, %22 : vector<128x256xf32>
    %24 = arith.truncf %23 : vector<128x256xf32> to vector<128x256xbf16>
    %25 = vector.extract_strided_slice %14 {offsets = [0, 0], sizes = [128, 128], strides = [1, 1]} : vector<128x256xbf16> to vector<128x128xbf16>
    %26 = vector.extract_strided_slice %19 {offsets = [0, 0], sizes = [128, 128], strides = [1, 1]} : vector<128x256xbf16> to vector<128x128xbf16>
    %cst_8 = arith.constant dense<0.000000e+00> : vector<128x128xf32>
    %27 = tpu.matmul %25, %26, %cst_8 {dimension_numbers = #tpu.dot_dimension_numbers<[1], [1], [0], [0], [0, 0, 1, 0], [], []>} : vector<128x128xbf16>, vector<128x128xbf16>, vector<128x128xf32> -> vector<128x128xf32>
    %cst_9 = arith.constant dense<0xFF800000> : vector<128xf32>
    %28 = vector.multi_reduction <maximumf>, %27, %cst_9 [1] : vector<128x128xf32> to vector<128xf32>
    %29 = vector.shape_cast %28 : vector<128xf32> to vector<128x1xf32>
    %30 = vector.broadcast %29 : vector<128x1xf32> to vector<128x128xf32>
    %31 = arith.subf %27, %30 : vector<128x128xf32>
    %32 = math.exp %31 : vector<128x128xf32>
    %cst_10 = arith.constant dense<0.000000e+00> : vector<128xf32>
    %33 = vector.multi_reduction <add>, %32, %cst_10 [1] : vector<128x128xf32> to vector<128xf32>
    %34 = vector.shape_cast %33 : vector<128xf32> to vector<128x1xf32>
    %35 = tpu.reciprocal %34 {approx = true} : vector<128x1xf32> -> vector<128x1xf32>
    %36 = vector.broadcast %35 : vector<128x1xf32> to vector<128x128xf32>
    %37 = arith.mulf %32, %36 : vector<128x128xf32>
    %38 = arith.truncf %37 : vector<128x128xf32> to vector<128x128xbf16>
    %39 = vector.extract_strided_slice %24 {offsets = [0, 0], sizes = [128, 128], strides = [1, 1]} : vector<128x256xbf16> to vector<128x128xbf16>
    %cst_11 = arith.constant dense<0.000000e+00> : vector<128x128xf32>
    %40 = tpu.matmul %38, %39, %cst_11 {dimension_numbers = #tpu.dot_dimension_numbers<[1], [0], [0], [1], [0, 0, 1, 1], [], []>} : vector<128x128xbf16>, vector<128x128xbf16>, vector<128x128xf32> -> vector<128x128xf32>
    %41 = vector.extract_strided_slice %14 {offsets = [0, 128], sizes = [128, 128], strides = [1, 1]} : vector<128x256xbf16> to vector<128x128xbf16>
    %42 = vector.extract_strided_slice %19 {offsets = [0, 128], sizes = [128, 128], strides = [1, 1]} : vector<128x256xbf16> to vector<128x128xbf16>
    %cst_12 = arith.constant dense<0.000000e+00> : vector<128x128xf32>
    %43 = tpu.matmul %41, %42, %cst_12 {dimension_numbers = #tpu.dot_dimension_numbers<[1], [1], [0], [0], [0, 0, 1, 0], [], []>} : vector<128x128xbf16>, vector<128x128xbf16>, vector<128x128xf32> -> vector<128x128xf32>
    %cst_13 = arith.constant dense<0xFF800000> : vector<128xf32>
    %44 = vector.multi_reduction <maximumf>, %43, %cst_13 [1] : vector<128x128xf32> to vector<128xf32>
    %45 = vector.shape_cast %44 : vector<128xf32> to vector<128x1xf32>
    %46 = vector.broadcast %45 : vector<128x1xf32> to vector<128x128xf32>
    %47 = arith.subf %43, %46 : vector<128x128xf32>
    %48 = math.exp %47 : vector<128x128xf32>
    %cst_14 = arith.constant dense<0.000000e+00> : vector<128xf32>
    %49 = vector.multi_reduction <add>, %48, %cst_14 [1] : vector<128x128xf32> to vector<128xf32>
    %50 = vector.shape_cast %49 : vector<128xf32> to vector<128x1xf32>
    %51 = tpu.reciprocal %50 {approx = true} : vector<128x1xf32> -> vector<128x1xf32>
    %52 = vector.broadcast %51 : vector<128x1xf32> to vector<128x128xf32>
    %53 = arith.mulf %48, %52 : vector<128x128xf32>
    %54 = arith.truncf %53 : vector<128x128xf32> to vector<128x128xbf16>
    %55 = vector.extract_strided_slice %24 {offsets = [0, 128], sizes = [128, 128], strides = [1, 1]} : vector<128x256xbf16> to vector<128x128xbf16>
    %cst_15 = arith.constant dense<0.000000e+00> : vector<128x128xf32>
    %56 = tpu.matmul %54, %55, %cst_15 {dimension_numbers = #tpu.dot_dimension_numbers<[1], [0], [0], [1], [0, 0, 1, 1], [], []>} : vector<128x128xbf16>, vector<128x128xbf16>, vector<128x128xf32> -> vector<128x128xf32>
    %57 = tpu.concatenate %40, %56 in 1 : vector<128x128xf32>, vector<128x128xf32> -> vector<128x256xf32>
    %58 = arith.truncf %57 : vector<128x256xf32> to vector<128x256xbf16>
    %c0_16 = arith.constant 0 : index
    %c0_17 = arith.constant 0 : index
    %c0_18 = arith.constant 0 : index
    %59 = vector.load %arg4[%c0_16, %c0_17, %c0_18] : memref<1x256x256xbf16, #tpu.memory_space<vmem>>, vector<1x256x256xbf16>
    %60 = vector.shape_cast %59 : vector<1x256x256xbf16> to vector<256x256xbf16>
    %cst_19 = arith.constant dense<0.000000e+00> : vector<128x256xf32>
    %61 = tpu.matmul %58, %60, %cst_19 {dimension_numbers = #tpu.dot_dimension_numbers<[1], [0], [0], [1], [0, 0, 1, 1], [], []>} : vector<128x256xbf16>, vector<256x256xbf16>, vector<128x256xf32> -> vector<128x256xf32>
    %62 = vector.extract_strided_slice %5 {offsets = [3, 0], sizes = [1, 256], strides = [1, 1]} : vector<9x256xf32> to vector<1x256xf32>
    %63 = vector.broadcast %62 : vector<1x256xf32> to vector<128x256xf32>
    %64 = arith.addf %61, %63 : vector<128x256xf32>
    %65 = arith.addf %3, %64 : vector<128x256xf32>
    %66 = vector.extract_strided_slice %5 {offsets = [4, 0], sizes = [1, 256], strides = [1, 1]} : vector<9x256xf32> to vector<1x256xf32>
    %67 = vector.extract_strided_slice %5 {offsets = [5, 0], sizes = [1, 256], strides = [1, 1]} : vector<9x256xf32> to vector<1x256xf32>
    %cst_20 = arith.constant dense<0.000000e+00> : vector<128xf32>
    %68 = vector.multi_reduction <add>, %65, %cst_20 [1] : vector<128x256xf32> to vector<128xf32>
    %69 = vector.shape_cast %68 : vector<128xf32> to vector<128x1xf32>
    %cst_21 = arith.constant 2.560000e+02 : f32
    %70 = vector.broadcast %cst_21 : f32 to vector<128x1xf32>
    %71 = arith.divf %69, %70 : vector<128x1xf32>
    %72 = vector.broadcast %71 : vector<128x1xf32> to vector<128x256xf32>
    %73 = arith.subf %65, %72 : vector<128x256xf32>
    %74 = arith.mulf %73, %73 : vector<128x256xf32>
    %cst_22 = arith.constant dense<0.000000e+00> : vector<128xf32>
    %75 = vector.multi_reduction <add>, %74, %cst_22 [1] : vector<128x256xf32> to vector<128xf32>
    %76 = vector.shape_cast %75 : vector<128xf32> to vector<128x1xf32>
    %cst_23 = arith.constant 2.560000e+02 : f32
    %77 = vector.broadcast %cst_23 : f32 to vector<128x1xf32>
    %78 = arith.divf %76, %77 : vector<128x1xf32>
    %79 = vector.broadcast %71 : vector<128x1xf32> to vector<128x256xf32>
    %80 = arith.subf %65, %79 : vector<128x256xf32>
    %cst_24 = arith.constant 9.99999996E-13 : f32
    %81 = vector.broadcast %cst_24 : f32 to vector<128x1xf32>
    %82 = arith.addf %78, %81 : vector<128x1xf32>
    %83 = math.rsqrt %82 : vector<128x1xf32>
    %84 = vector.broadcast %83 : vector<128x1xf32> to vector<128x256xf32>
    %85 = arith.mulf %80, %84 : vector<128x256xf32>
    %86 = vector.broadcast %66 : vector<1x256xf32> to vector<128x256xf32>
    %87 = arith.mulf %85, %86 : vector<128x256xf32>
    %88 = vector.broadcast %67 : vector<1x256xf32> to vector<128x256xf32>
    %89 = arith.addf %87, %88 : vector<128x256xf32>
    %90 = arith.truncf %89 : vector<128x256xf32> to vector<128x256xbf16>
    %c0_25 = arith.constant 0 : index
    %c0_26 = arith.constant 0 : index
    %c0_27 = arith.constant 0 : index
    %91 = vector.load %arg5[%c0_25, %c0_26, %c0_27] : memref<1x256x1024xbf16, #tpu.memory_space<vmem>>, vector<1x256x1024xbf16>
    %92 = vector.shape_cast %91 : vector<1x256x1024xbf16> to vector<256x1024xbf16>
    %cst_28 = arith.constant dense<0.000000e+00> : vector<128x1024xf32>
    %93 = tpu.matmul %90, %92, %cst_28 {dimension_numbers = #tpu.dot_dimension_numbers<[1], [0], [0], [1], [0, 0, 1, 1], [], []>} : vector<128x256xbf16>, vector<256x1024xbf16>, vector<128x1024xf32> -> vector<128x1024xf32>
    %c0_29 = arith.constant 0 : index
    %c0_30 = arith.constant 0 : index
    %c0_31 = arith.constant 0 : index
    %94 = vector.load %arg8[%c0_29, %c0_30, %c0_31] : memref<1x1x1024xf32, #tpu.memory_space<vmem>>, vector<1x1x1024xf32>
    %95 = vector.shape_cast %94 : vector<1x1x1024xf32> to vector<1x1024xf32>
    %96 = vector.broadcast %95 : vector<1x1024xf32> to vector<128x1024xf32>
    %97 = arith.addf %93, %96 : vector<128x1024xf32>
    %cst_32 = arith.constant 5.000000e-01 : f32
    %98 = vector.broadcast %cst_32 : f32 to vector<128x1024xf32>
    %99 = arith.mulf %98, %97 : vector<128x1024xf32>
    %cst_33 = arith.constant 4.471500e-02 : f32
    %100 = vector.broadcast %cst_33 : f32 to vector<128x1024xf32>
    %101 = arith.mulf %100, %97 : vector<128x1024xf32>
    %102 = arith.mulf %101, %97 : vector<128x1024xf32>
    %103 = arith.mulf %102, %97 : vector<128x1024xf32>
    %104 = arith.addf %97, %103 : vector<128x1024xf32>
    %cst_34 = arith.constant 0.797884583 : f32
    %105 = vector.broadcast %cst_34 : f32 to vector<128x1024xf32>
    %106 = arith.mulf %105, %104 : vector<128x1024xf32>
    %107 = math.tanh %106 : vector<128x1024xf32>
    %cst_35 = arith.constant 1.000000e+00 : f32
    %108 = vector.broadcast %cst_35 : f32 to vector<128x1024xf32>
    %109 = arith.addf %108, %107 : vector<128x1024xf32>
    %110 = arith.mulf %99, %109 : vector<128x1024xf32>
    %111 = arith.truncf %110 : vector<128x1024xf32> to vector<128x1024xbf16>
    %c0_36 = arith.constant 0 : index
    %c0_37 = arith.constant 0 : index
    %c0_38 = arith.constant 0 : index
    %112 = vector.load %arg6[%c0_36, %c0_37, %c0_38] : memref<1x1024x256xbf16, #tpu.memory_space<vmem>>, vector<1x1024x256xbf16>
    %113 = vector.shape_cast %112 : vector<1x1024x256xbf16> to vector<1024x256xbf16>
    %cst_39 = arith.constant dense<0.000000e+00> : vector<128x256xf32>
    %114 = tpu.matmul %111, %113, %cst_39 {dimension_numbers = #tpu.dot_dimension_numbers<[1], [0], [0], [1], [0, 0, 1, 1], [], []>} : vector<128x1024xbf16>, vector<1024x256xbf16>, vector<128x256xf32> -> vector<128x256xf32>
    %115 = vector.extract_strided_slice %5 {offsets = [6, 0], sizes = [1, 256], strides = [1, 1]} : vector<9x256xf32> to vector<1x256xf32>
    %116 = vector.broadcast %115 : vector<1x256xf32> to vector<128x256xf32>
    %117 = arith.addf %114, %116 : vector<128x256xf32>
    %118 = arith.addf %89, %117 : vector<128x256xf32>
    %119 = vector.extract_strided_slice %5 {offsets = [7, 0], sizes = [1, 256], strides = [1, 1]} : vector<9x256xf32> to vector<1x256xf32>
    %120 = vector.extract_strided_slice %5 {offsets = [8, 0], sizes = [1, 256], strides = [1, 1]} : vector<9x256xf32> to vector<1x256xf32>
    %cst_40 = arith.constant dense<0.000000e+00> : vector<128xf32>
    %121 = vector.multi_reduction <add>, %118, %cst_40 [1] : vector<128x256xf32> to vector<128xf32>
    %122 = vector.shape_cast %121 : vector<128xf32> to vector<128x1xf32>
    %cst_41 = arith.constant 2.560000e+02 : f32
    %123 = vector.broadcast %cst_41 : f32 to vector<128x1xf32>
    %124 = arith.divf %122, %123 : vector<128x1xf32>
    %125 = vector.broadcast %124 : vector<128x1xf32> to vector<128x256xf32>
    %126 = arith.subf %118, %125 : vector<128x256xf32>
    %127 = arith.mulf %126, %126 : vector<128x256xf32>
    %cst_42 = arith.constant dense<0.000000e+00> : vector<128xf32>
    %128 = vector.multi_reduction <add>, %127, %cst_42 [1] : vector<128x256xf32> to vector<128xf32>
    %129 = vector.shape_cast %128 : vector<128xf32> to vector<128x1xf32>
    %cst_43 = arith.constant 2.560000e+02 : f32
    %130 = vector.broadcast %cst_43 : f32 to vector<128x1xf32>
    %131 = arith.divf %129, %130 : vector<128x1xf32>
    %132 = vector.broadcast %124 : vector<128x1xf32> to vector<128x256xf32>
    %133 = arith.subf %118, %132 : vector<128x256xf32>
    %cst_44 = arith.constant 9.99999996E-13 : f32
    %134 = vector.broadcast %cst_44 : f32 to vector<128x1xf32>
    %135 = arith.addf %131, %134 : vector<128x1xf32>
    %136 = math.rsqrt %135 : vector<128x1xf32>
    %137 = vector.broadcast %136 : vector<128x1xf32> to vector<128x256xf32>
    %138 = arith.mulf %133, %137 : vector<128x256xf32>
    %139 = vector.broadcast %119 : vector<1x256xf32> to vector<128x256xf32>
    %140 = arith.mulf %138, %139 : vector<128x256xf32>
    %141 = vector.broadcast %120 : vector<1x256xf32> to vector<128x256xf32>
    %142 = arith.addf %140, %141 : vector<128x256xf32>
    %c0_45 = arith.constant 0 : index
    %c0_46 = arith.constant 0 : index
    %143 = vector.load %arg10[%c0_45, %c0_46] : memref<128x256xf32, #tpu.memory_space<vmem>>, vector<128x256xf32>
    tpu.vector_store %arg10[%c0_45, %c0_46], %142 {strides = array<i32>} : memref<128x256xf32, #tpu.memory_space<vmem>>, vector<128x256xf32>,
    %c1_i32 = arith.constant 1 : i32
    %144 = arith.cmpi eq, %arg1, %c1_i32 : i32
    %145 = arith.extui %144 : i1 to i32
    %c0_i32_47 = arith.constant 0 : i32
    %146 = arith.cmpi ne, %145, %c0_i32_47 : i32
    scf.if %146 {
      %cst_48 = arith.constant 7.812500e-03 : f32
      %147 = vector.broadcast %cst_48 : f32 to vector<1x128xf32>
      %cst_49 = arith.constant dense<0.000000e+00> : vector<1x256xf32>
      %148 = tpu.matmul %147, %142, %cst_49 {dimension_numbers = #tpu.dot_dimension_numbers<[1], [0], [0], [1], [0, 0, 1, 1], [], []>} : vector<1x128xf32>, vector<128x256xf32>, vector<1x256xf32> -> vector<1x256xf32>
      %149 = vector.shape_cast %148 : vector<1x256xf32> to vector<1x1x256xf32>
      %c0_50 = arith.constant 0 : index
      %c0_51 = arith.constant 0 : index
      %c0_52 = arith.constant 0 : index
      %150 = vector.load %arg9[%c0_50, %c0_51, %c0_52] : memref<1x1x256xf32, #tpu.memory_space<vmem>>, vector<1x1x256xf32>
      tpu.vector_store %arg9[%c0_50, %c0_51, %c0_52], %149 {strides = array<i32>} : memref<1x1x256xf32, #tpu.memory_space<vmem>>, vector<1x1x256xf32>,
    } else {
    }
    return
  }
  func.func @transform_1(%arg0: i32, %arg1: i32) -> (i32, i32, i32) {
    %c0_i32 = arith.constant 0 : i32
    %c0_i32_0 = arith.constant 0 : i32
    %c0_i32_1 = arith.constant 0 : i32
    return %arg1, %c0_i32, %c0_i32_0 : i32, i32, i32
  }
  func.func @transform_2(%arg0: i32, %arg1: i32) -> (i32, i32, i32) {
    %c0_i32 = arith.constant 0 : i32
    %c0_i32_0 = arith.constant 0 : i32
    %c0_i32_1 = arith.constant 0 : i32
    return %arg1, %c0_i32, %c0_i32_0 : i32, i32, i32
  }
  func.func @transform_3(%arg0: i32, %arg1: i32) -> (i32, i32, i32) {
    %c0_i32 = arith.constant 0 : i32
    %c0_i32_0 = arith.constant 0 : i32
    %c0_i32_1 = arith.constant 0 : i32
    return %arg1, %c0_i32, %c0_i32_0 : i32, i32, i32
  }
  func.func @transform_4(%arg0: i32, %arg1: i32) -> (i32, i32, i32) {
    %c0_i32 = arith.constant 0 : i32
    %c0_i32_0 = arith.constant 0 : i32
    %c0_i32_1 = arith.constant 0 : i32
    return %arg1, %c0_i32, %c0_i32_0 : i32, i32, i32
  }
  func.func @transform_5(%arg0: i32, %arg1: i32) -> (i32, i32, i32) {
    %c0_i32 = arith.constant 0 : i32
    %c0_i32_0 = arith.constant 0 : i32
    %c0_i32_1 = arith.constant 0 : i32
    return %arg1, %c0_i32, %c0_i32_0 : i32, i32, i32
  }
  func.func @transform_6(%arg0: i32, %arg1: i32) -> (i32, i32, i32) {
    %c0_i32 = arith.constant 0 : i32
    %c0_i32_0 = arith.constant 0 : i32
    %c0_i32_1 = arith.constant 0 : i32
    return %arg1, %c0_i32, %c0_i32_0 : i32, i32, i32
  }
  func.func @transform_7(%arg0: i32, %arg1: i32) -> (i32, i32, i32) {
    %c0_i32 = arith.constant 0 : i32
    %c0_i32_0 = arith.constant 0 : i32
    %c0_i32_1 = arith.constant 0 : i32
    return %arg0, %c0_i32, %c0_i32_0 : i32, i32, i32
  }
}

</mosaic_0001>

<llo_original>
// kernel: tpu_custom_call.1
$region0: #{tpu_custom_call.1}
  #allocation0 [shape = 'u32[]', space=smem, size = 0x4, offset = 0x4, fixed_abs, tag = 'smem constant byte address 0x4 - core index']
  #allocation1 [shape = 'u32[144,128]{1,0:T(1,128)}', space=vmem, size = 0x12000, scoped, tag = 'internal scratch']
  #allocation2 [shape = 'f32[128,256]{1,0:T(8,128)}', space=vmem, size = 0x20000, scoped, tag = 'scratch operand']
  #allocation3 [shape = 's32[1]{0}', space=sflag, size = 0x4, scoped, tag = 'scratch operand']
  #allocation16 [shape = 's32[]', space=sflag, size = 0x4, offset = 0, fixed_abs, tag = 'sflag constant byte address 0x0 - dummy sync flag']
  #allocation17 [shape = 's32[]', space=sflag, size = 0x4, offset = 0, fixed_abs, tag = 'sflag constant byte address 0x0 - dummy sync flag']
  #allocation18 [shape = 'u32[]', space=smem, size = 0x4, offset = 0x44, fixed_abs, tag = 'smem constant byte address 0x44 - assertion arg 0']
  #allocation19 [shape = 'u32[]', space=smem, size = 0x4, offset = 0x48, fixed_abs, tag = 'smem constant byte address 0x48 - assertion arg 1']
  %s0 = inlined_call_operand.hbm [shape: f32[256,256], index: 0, kind: input, shape index: {}]
  %s1 = inlined_call_operand.hbm [shape: bf16[2,256,768], index: 1, kind: input, shape index: {}]
  %s2 = inlined_call_operand.hbm [shape: bf16[2,256,256], index: 2, kind: input, shape index: {}]
  %s3 = inlined_call_operand.hbm [shape: bf16[2,256,1024], index: 3, kind: input, shape index: {}]
  %s4 = inlined_call_operand.hbm [shape: bf16[2,1024,256], index: 4, kind: input, shape index: {}]
  %s5 = inlined_call_operand.hbm [shape: f32[2,9,256], index: 5, kind: input, shape index: {}]
  %s6 = inlined_call_operand.hbm [shape: f32[2,1,1024], index: 6, kind: input, shape index: {}]
  %s7 = inlined_call_operand.hbm [shape: f32[2,1,256], index: 7, kind: output, shape index: {}]
  %s8 = sld [smem:[#allocation0]]
  $region93: #{tpu_custom_call.1} parent=0
    _
  %s10 = ssub.s32 1, %s8
  %s11 = scalar_select 0, %s10, %s8
  $region1: #{tpu_custom_call.1} parent=0
    #allocation4 [shape = 'u8[786432]{0}', space=vmem, size = 0xc0000, scoped, tag = 'input window, operand 1']
    #allocation5 [shape = 's32[2]{0}', space=sflag, size = 0x8, scoped, tag = 'scoped memory for tpu_custom_call.1']
    #allocation6 [shape = 's32[2]{0}', space=sflag, size = 0x8, scoped, tag = 'scoped memory for tpu_custom_call.1']
    #allocation7 [shape = 'u8[262144]{0}', space=vmem, size = 0x40000, scoped, tag = 'input window, operand 2']
    #allocation8 [shape = 's32[2]{0}', space=sflag, size = 0x8, scoped, tag = 'scoped memory for tpu_custom_call.1']
    #allocation9 [shape = 'u8[1048576]{0}', space=vmem, size = 0x100000, scoped, tag = 'input window, operand 3']
    #allocation10 [shape = 'u8[1048576]{0}', space=vmem, size = 0x100000, scoped, tag = 'input window, operand 4']
    #allocation11 [shape = 's32[2]{0}', space=sflag, size = 0x8, scoped, tag = 'scoped memory for tpu_custom_call.1']
    #allocation12 [shape = 'u8[32768]{0}', space=vmem, size = 0x8000, scoped, tag = 'input window, operand 5']
    #allocation13 [shape = 'u8[8192]{0}', space=vmem, size = 0x2000, scoped, tag = 'input window, operand 6']
    #allocation14 [shape = 's32[2]{0}', space=sflag, size = 0x8, scoped, tag = 'scoped memory for tpu_custom_call.1']
    #allocation15 [shape = 'u8[2048]{0}', space=vmem, size = 0x800, scoped, tag = 'output window, operand 0']
    %12 = vsyncpa [#allocation5], 0
    %s13 = scalar_lea.sflag [#allocation5], 1
    %14 = vsyncpa %s13, 0
    %15 = vsyncpa [#allocation8], 0
    %s16 = scalar_lea.sflag [#allocation8], 1
    %17 = vsyncpa %s16, 0
    %18 = vsyncpa [#allocation11], 0
    %s19 = scalar_lea.sflag [#allocation11], 1
    %20 = vsyncpa %s19, 0
    %21 = vsyncpa [#allocation14], 0
    %s22 = scalar_lea.sflag [#allocation14], 1
    %23 = vsyncpa %s22, 0
    %24 = vsyncpa [#allocation6], 0
    %s25 = scalar_lea.sflag [#allocation6], 1
    %26 = vsyncpa %s25, 0
    loop: start=0, step=1, limit=6
    $region2: #{tpu_custom_call.1} parent=1 // loop_pre_header
      _
    $region3: #{tpu_custom_call.1} parent=1 // loop_header
      %s28 = sphi 0, %s32
      %p29 = scmp.ge.s32.totalorder %s28, 6
      %s35 = sphi 0, %s47
      %s36 = sphi 0, %s43
      %s37 = sphi 0, %s35
      %s38 = sphi 0, %s36
      %s39 = sphi 0, %s37
      %s40 = sphi 0, %s38
      %s50 = sphi 0, %s52
      %s53 = sphi 0, %s50
      %s54 = sphi 0, %s53
      %s70 = sphi 0, %s54
      %s76 = sphi 0, %s78
      %s79 = sphi 0, %s76
      %s80 = sphi 0, %s79
      %s96 = sphi 0, %s80
      %s102 = sphi 0, %s104
      %s105 = sphi 0, %s102
      %s106 = sphi 0, %s105
      %s122 = sphi 0, %s106
      %s128 = sphi 0, %s130
      %s131 = sphi 0, %s128
      %s132 = sphi 0, %s131
      %s148 = sphi 0, %s132
      %s154 = sphi 0, %s156
      %s157 = sphi 0, %s154
      %s158 = sphi 0, %s157
      %s174 = sphi 0, %s158
      %s180 = sphi 0, %s182
      %s183 = sphi 0, %s180
      %s184 = sphi 0, %s183
      %s200 = sphi 0, %s184
      %s206 = sphi 0, %s208
      %s209 = sphi 0, %s206
      %s210 = sphi 0, %s209
      %s226 = sphi 0, %s210
    $region4: #{tpu_custom_call.1} parent=1 // loop_header_branch
      %31 = sbr.rel (%p29) target = $region8
    $region5: #{tpu_custom_call.1} parent=1 // loop_body
      %s33 = ssub.s32 %s28, 1
      %s34 = ssub.s32 %s28, 2
      %s41 = sadd.s32 1, %s36
      %p42 = scmp.ge.s32.totalorder %s41, 2
      %s43 = scalar_select %p42, 0, %s41
      %s44 = sadd.s32 1, %s35
      %s45 = scalar_select %p42, %s44, %s35
      %p46 = scmp.ge.s32.totalorder %s45, 2
      %s47 = scalar_select %p46, 0, %s45
      %s48 = ssub.s32 %s36, %s43
      %p49 = scmp.eq.s32.totalorder %s48, 0
      %s51 = sadd.s32 %s50, 1
      %s52 = scalar_select %p49, %s50, %s51
      %p55 = pneg %p49
      %p56 = scmp.eq.s32.totalorder %s28, 3
      %p57 = por %p55, %p56
      %p58 = scmp.ne.s32.totalorder %s50, %s53
      %p59 = scmp.eq.s32.totalorder %s28, 0
      %p60 = por %p58, %p59
      %p61 = scmp.ne.s32.totalorder %s50, %s53
      %p62 = scmp.eq.s32.totalorder %s33, 3
      %p63 = por %p61, %p62
      %p64 = scmp.ne.s32.totalorder %s53, %s54
      %p65 = scmp.eq.s32.totalorder %s33, 0
      %p66 = por %p64, %p65
      %p67 = scmp.ne.s32.totalorder %s53, %s54
      %p68 = scmp.eq.s32.totalorder %s34, 3
      %p69 = por %p67, %p68
      %p71 = scmp.ne.s32.totalorder %s54, %s70
      %p72 = scmp.eq.s32.totalorder %s34, 0
      %p73 = por %p71, %p72
      %s74 = ssub.s32 %s36, %s43
      %p75 = scmp.eq.s32.totalorder %s74, 0
      %s77 = sadd.s32 %s76, 1
      %s78 = scalar_select %p75, %s76, %s77
      %p81 = pneg %p75
      %p82 = scmp.eq.s32.totalorder %s28, 3
      %p83 = por %p81, %p82
      %p84 = scmp.ne.s32.totalorder %s76, %s79
      %p85 = scmp.eq.s32.totalorder %s28, 0
      %p86 = por %p84, %p85
      %p87 = scmp.ne.s32.totalorder %s76, %s79
      %p88 = scmp.eq.s32.totalorder %s33, 3
      %p89 = por %p87, %p88
      %p90 = scmp.ne.s32.totalorder %s79, %s80
      %p91 = scmp.eq.s32.totalorder %s33, 0
      %p92 = por %p90, %p91
      %p93 = scmp.ne.s32.totalorder %s79, %s80
      %p94 = scmp.eq.s32.totalorder %s34, 3
      %p95 = por %p93, %p94
      %p97 = scmp.ne.s32.totalorder %s80, %s96
      %p98 = scmp.eq.s32.totalorder %s34, 0
      %p99 = por %p97, %p98
      %s100 = ssub.s32 %s36, %s43
      %p101 = scmp.eq.s32.totalorder %s100, 0
      %s103 = sadd.s32 %s102, 1
      %s104 = scalar_select %p101, %s102, %s103
      %p107 = pneg %p101
      %p108 = scmp.eq.s32.totalorder %s28, 3
      %p109 = por %p107, %p108
      %p110 = scmp.ne.s32.totalorder %s102, %s105
      %p111 = scmp.eq.s32.totalorder %s28, 0
      %p112 = por %p110, %p111
      %p113 = scmp.ne.s32.totalorder %s102, %s105
      %p114 = scmp.eq.s32.totalorder %s33, 3
      %p115 = por %p113, %p114
      %p116 = scmp.ne.s32.totalorder %s105, %s106
      %p117 = scmp.eq.s32.totalorder %s33, 0
      %p118 = por %p116, %p117
      %p119 = scmp.ne.s32.totalorder %s105, %s106
      %p120 = scmp.eq.s32.totalorder %s34, 3
      %p121 = por %p119, %p120
      %p123 = scmp.ne.s32.totalorder %s106, %s122
      %p124 = scmp.eq.s32.totalorder %s34, 0
      %p125 = por %p123, %p124
      %s126 = ssub.s32 %s36, %s43
      %p127 = scmp.eq.s32.totalorder %s126, 0
      %s129 = sadd.s32 %s128, 1
      %s130 = scalar_select %p127, %s128, %s129
      %p133 = pneg %p127
      %p134 = scmp.eq.s32.totalorder %s28, 3
      %p135 = por %p133, %p134
      %p136 = scmp.ne.s32.totalorder %s128, %s131
      %p137 = scmp.eq.s32.totalorder %s28, 0
      %p138 = por %p136, %p137
      %p139 = scmp.ne.s32.totalorder %s128, %s131
      %p140 = scmp.eq.s32.totalorder %s33, 3
      %p141 = por %p139, %p140
      %p142 = scmp.ne.s32.totalorder %s131, %s132
      %p143 = scmp.eq.s32.totalorder %s33, 0
      %p144 = por %p142, %p143
      %p145 = scmp.ne.s32.totalorder %s131, %s132
      %p146 = scmp.eq.s32.totalorder %s34, 3
      %p147 = por %p145, %p146
      %p149 = scmp.ne.s32.totalorder %s132, %s148
      %p150 = scmp.eq.s32.totalorder %s34, 0
      %p151 = por %p149, %p150
      %s152 = ssub.s32 %s36, %s43
      %p153 = scmp.eq.s32.totalorder %s152, 0
      %s155 = sadd.s32 %s154, 1
      %s156 = scalar_select %p153, %s154, %s155
      %p159 = pneg %p153
      %p160 = scmp.eq.s32.totalorder %s28, 3
      %p161 = por %p159, %p160
      %p162 = scmp.ne.s32.totalorder %s154, %s157
      %p163 = scmp.eq.s32.totalorder %s28, 0
      %p164 = por %p162, %p163
      %p165 = scmp.ne.s32.totalorder %s154, %s157
      %p166 = scmp.eq.s32.totalorder %s33, 3
      %p167 = por %p165, %p166
      %p168 = scmp.ne.s32.totalorder %s157, %s158
      %p169 = scmp.eq.s32.totalorder %s33, 0
      %p170 = por %p168, %p169
      %p171 = scmp.ne.s32.totalorder %s157, %s158
      %p172 = scmp.eq.s32.totalorder %s34, 3
      %p173 = por %p171, %p172
      %p175 = scmp.ne.s32.totalorder %s158, %s174
      %p176 = scmp.eq.s32.totalorder %s34, 0
      %p177 = por %p175, %p176
      %s178 = ssub.s32 %s36, %s43
      %p179 = scmp.eq.s32.totalorder %s178, 0
      %s181 = sadd.s32 %s180, 1
      %s182 = scalar_select %p179, %s180, %s181
      %p185 = pneg %p179
      %p186 = scmp.eq.s32.totalorder %s28, 3
      %p187 = por %p185, %p186
      %p188 = scmp.ne.s32.totalorder %s180, %s183
      %p189 = scmp.eq.s32.totalorder %s28, 0
      %p190 = por %p188, %p189
      %p191 = scmp.ne.s32.totalorder %s180, %s183
      %p192 = scmp.eq.s32.totalorder %s33, 3
      %p193 = por %p191, %p192
      %p194 = scmp.ne.s32.totalorder %s183, %s184
      %p195 = scmp.eq.s32.totalorder %s33, 0
      %p196 = por %p194, %p195
      %p197 = scmp.ne.s32.totalorder %s183, %s184
      %p198 = scmp.eq.s32.totalorder %s34, 3
      %p199 = por %p197, %p198
      %p201 = scmp.ne.s32.totalorder %s184, %s200
      %p202 = scmp.eq.s32.totalorder %s34, 0
      %p203 = por %p201, %p202
      %s204 = ssub.s32 %s35, %s47
      %p205 = scmp.eq.s32.totalorder %s204, 0
      %s207 = sadd.s32 %s206, 1
      %s208 = scalar_select %p205, %s206, %s207
      %p211 = pneg %p205
      %p212 = scmp.eq.s32.totalorder %s28, 3
      %p213 = por %p211, %p212
      %p214 = scmp.ne.s32.totalorder %s206, %s209
      %p215 = scmp.eq.s32.totalorder %s28, 0
      %p216 = por %p214, %p215
      %p217 = scmp.ne.s32.totalorder %s206, %s209
      %p218 = scmp.eq.s32.totalorder %s33, 3
      %p219 = por %p217, %p218
      %p220 = scmp.ne.s32.totalorder %s209, %s210
      %p221 = scmp.eq.s32.totalorder %s33, 0
      %p222 = por %p220, %p221
      %p223 = scmp.ne.s32.totalorder %s209, %s210
      %p224 = scmp.eq.s32.totalorder %s34, 3
      %p225 = por %p223, %p224
      %p227 = scmp.ne.s32.totalorder %s210, %s226
      %p228 = scmp.eq.s32.totalorder %s34, 0
      %p229 = por %p227, %p228
      %p230 = scmp.le.s32.totalorder 1, %s28
      %p231 = scmp.lt.s32.totalorder %s28, 5
      %p232 = pnand %p230, %p231
      %p233 = pneg %p232
      // Predicated region
      $region9: #{tpu_custom_call.1} parent=5 // pred_check
        _
      $region10: #{tpu_custom_call.1} parent=5 // pred_check_branch
        %235 = sbr.rel (%p232) target = $region12
      $region11: #{tpu_custom_call.1} parent=5 // pred_region
        %s236 = ssub.s32 %s28, 1
      $region12: #{tpu_custom_call.1} parent=5 // pred_fallthru
        _
      %p237 = scmp.lt.s32.totalorder %s28, 4
      // Predicated region
      $region13: #{tpu_custom_call.1} parent=5 // pred_check
        %p238 = pneg %p237
      $region14: #{tpu_custom_call.1} parent=5 // pred_check_branch
        %240 = sbr.rel (%p238) target = $region16
      $region15: #{tpu_custom_call.1} parent=5 // pred_region
        // Predicated region
        $region17: #{tpu_custom_call.1} parent=15 // pred_check
          %p241 = pneg %p60
        $region18: #{tpu_custom_call.1} parent=15 // pred_check_branch
          %243 = sbr.rel (%p241) target = $region20
        $region19: #{tpu_custom_call.1} parent=15 // pred_region
          %s244 = sand.u32 %s50, 1
          %s245 = scalar_lea.sflag [#allocation5], %s244
          %s246 = sand.u32 %s50, 1
          %s247 = smul.addr %s246, 768
          %s248 = scalar_lea.vmem [#allocation4], %s247
          %s250 = ssub.s32 12288, 12288
          %251 = vsyncadd %s245, %s250
          %s252 = smul.addr %s36, 192
          %s253 = smul.addr %s252, 64
          %s254 = scalar_lea.hbm %s1, %s253
          %s255 = sshll.u32 %s248, 4
          %s256 = int_to_ptr.vmem [resolvable:$true] %s255
          %261 = dma.hbm_to_vmem [thread:$0]  %s254, 12288, %s256, %s245, 384, 384, 24
        $region20: #{tpu_custom_call.1} parent=15 // pred_fallthru
          _
        // Predicated region
        $region21: #{tpu_custom_call.1} parent=15 // pred_check
          %p262 = pneg %p86
        $region22: #{tpu_custom_call.1} parent=15 // pred_check_branch
          %264 = sbr.rel (%p262) target = $region24
        $region23: #{tpu_custom_call.1} parent=15 // pred_region
          %s265 = sand.u32 %s28, 1
          %s266 = scalar_lea.sflag [#allocation8], %s265
          %s267 = sand.u32 %s76, 1
          %s268 = smul.addr %s267, 256
          %s269 = scalar_lea.vmem [#allocation7], %s268
          %s271 = ssub.s32 4096, 4096
          %272 = vsyncadd %s266, %s271
          %s273 = smul.addr %s36, 64
          %s274 = smul.addr %s273, 64
          %s275 = scalar_lea.hbm %s2, %s274
          %s276 = sshll.u32 %s269, 4
          %s277 = int_to_ptr.vmem [resolvable:$true] %s276
          %282 = dma.hbm_to_vmem [thread:$0]  %s275, 4096, %s277, %s266, 128, 128, 8
        $region24: #{tpu_custom_call.1} parent=15 // pred_fallthru
          _
        // Predicated region
        $region25: #{tpu_custom_call.1} parent=15 // pred_check
          %p283 = pneg %p112
        $region26: #{tpu_custom_call.1} parent=15 // pred_check_branch
          %285 = sbr.rel (%p283) target = $region28
        $region27: #{tpu_custom_call.1} parent=15 // pred_region
          %s286 = sand.u32 %s28, 1
          %s287 = scalar_lea.sflag [#allocation8], %s286
          %s288 = sand.u32 %s102, 1
          %s289 = smul.addr %s288, 1024
          %s290 = scalar_lea.vmem [#allocation9], %s289
          %s292 = ssub.s32 16384, 16384
          %293 = vsyncadd %s287, %s292
          %s294 = smul.addr %s36, 256
          %s295 = smul.addr %s294, 64
          %s296 = scalar_lea.hbm %s3, %s295
          %s297 = sshll.u32 %s290, 4
          %s298 = int_to_ptr.vmem [resolvable:$true] %s297
          %303 = dma.hbm_to_vmem [thread:$0]  %s296, 16384, %s298, %s287, 512, 512, 32
        $region28: #{tpu_custom_call.1} parent=15 // pred_fallthru
          _
        // Predicated region
        $region29: #{tpu_custom_call.1} parent=15 // pred_check
          %p304 = pneg %p138
        $region30: #{tpu_custom_call.1} parent=15 // pred_check_branch
          %306 = sbr.rel (%p304) target = $region32
        $region31: #{tpu_custom_call.1} parent=15 // pred_region
          %s307 = sand.u32 %s28, 1
          %s308 = scalar_lea.sflag [#allocation11], %s307
          %s309 = sand.u32 %s128, 1
          %s310 = smul.addr %s309, 1024
          %s311 = scalar_lea.vmem [#allocation10], %s310
          %s313 = ssub.s32 16384, 16384
          %314 = vsyncadd %s308, %s313
          %s315 = smul.addr %s36, 256
          %s316 = smul.addr %s315, 64
          %s317 = scalar_lea.hbm %s4, %s316
          %s318 = sshll.u32 %s311, 4
          %s319 = int_to_ptr.vmem [resolvable:$true] %s318
          %324 = dma.hbm_to_vmem [thread:$0]  %s317, 16384, %s319, %s308, 128, 128, 8
        $region32: #{tpu_custom_call.1} parent=15 // pred_fallthru
          _
        // Predicated region
        $region33: #{tpu_custom_call.1} parent=15 // pred_check
          %p325 = pneg %p164
        $region34: #{tpu_custom_call.1} parent=15 // pred_check_branch
          %327 = sbr.rel (%p325) target = $region36
        $region35: #{tpu_custom_call.1} parent=15 // pred_region
          %s328 = sand.u32 %s28, 1
          %s329 = scalar_lea.sflag [#allocation11], %s328
          %s330 = sand.u32 %s154, 1
          %s331 = smul.addr %s330, 32
          %s332 = scalar_lea.vmem [#allocation12], %s331
          %s334 = ssub.s32 512, 512
          %335 = vsyncadd %s329, %s334
          %s336 = smul.addr %s36, 4
          %s337 = smul.addr %s336, 128
          %s338 = scalar_lea.hbm %s5, %s337
          %s339 = sshll.u32 %s332, 4
          %s340 = int_to_ptr.vmem [resolvable:$true] %s339
          %345 = dma.hbm_to_vmem [thread:$0]  %s338, 512, %s340, %s329, 256, 256, 16
        $region36: #{tpu_custom_call.1} parent=15 // pred_fallthru
          _
        // Predicated region
        $region37: #{tpu_custom_call.1} parent=15 // pred_check
          %p346 = pneg %p190
        $region38: #{tpu_custom_call.1} parent=15 // pred_check_branch
          %348 = sbr.rel (%p346) target = $region40
        $region39: #{tpu_custom_call.1} parent=15 // pred_region
          %s349 = sand.u32 %s180, 1
          %s350 = scalar_lea.sflag [#allocation14], %s349
          %s351 = sand.u32 %s180, 1
          %s352 = smul.addr %s351, 8
          %s353 = scalar_lea.vmem [#allocation13], %s352
          %s355 = ssub.s32 128, 128
          %356 = vsyncadd %s350, %s355
          %s357 = smul.addr %s36, 8
          %s358 = smul.addr %s357, 16
          %s359 = scalar_lea.hbm %s6, %s358
          %s361 = sshll.u32 %s353, 4
          %s362 = int_to_ptr.vmem [resolvable:$true] %s361
          %364 = dma.hbm_to_vmem [thread:$0]  %s359, 128, %s362, %s350
        $region40: #{tpu_custom_call.1} parent=15 // pred_fallthru
          _
      $region16: #{tpu_custom_call.1} parent=5 // pred_fallthru
        _
      %p365 = scmp.le.s32.totalorder 1, %s28
      %p366 = scmp.lt.s32.totalorder %s28, 5
      %p367 = pnand %p365, %p366
      %p368 = pneg %p367
      // Predicated region
      $region41: #{tpu_custom_call.1} parent=5 // pred_check
        _
      $region42: #{tpu_custom_call.1} parent=5 // pred_check_branch
        %370 = sbr.rel (%p367) target = $region44
      $region43: #{tpu_custom_call.1} parent=5 // pred_region
        %s371 = ssub.s32 %s28, 1
        %s372 = sand.u32 %s53, 1
        %s373 = scalar_lea.sflag [#allocation5], %s372
        %s374 = sand.u32 %s53, 1
        %s375 = smul.addr %s374, 768
        %s376 = scalar_lea.vmem [#allocation4], %s375
        // Predicated region
        $region45: #{tpu_custom_call.1} parent=43 // pred_check
          %p377 = pneg %p66
        $region46: #{tpu_custom_call.1} parent=43 // pred_check_branch
          %379 = sbr.rel (%p377) target = $region48
        $region47: #{tpu_custom_call.1} parent=43 // pred_region
          %380 = dma.done %s373, 12288
        $region48: #{tpu_custom_call.1} parent=43 // pred_fallthru
          _
        %s381 = sand.u32 %s33, 1
        %s382 = scalar_lea.sflag [#allocation8], %s381
        %s383 = sand.u32 %s79, 1
        %s384 = smul.addr %s383, 256
        %s385 = scalar_lea.vmem [#allocation7], %s384
        // Predicated region
        $region49: #{tpu_custom_call.1} parent=43 // pred_check
          %p386 = pneg %p92
        $region50: #{tpu_custom_call.1} parent=43 // pred_check_branch
          %388 = sbr.rel (%p386) target = $region52
        $region51: #{tpu_custom_call.1} parent=43 // pred_region
          %389 = dma.done %s382, 4096
        $region52: #{tpu_custom_call.1} parent=43 // pred_fallthru
          _
        %s390 = sand.u32 %s33, 1
        %s391 = scalar_lea.sflag [#allocation8], %s390
        %s392 = sand.u32 %s105, 1
        %s393 = smul.addr %s392, 1024
        %s394 = scalar_lea.vmem [#allocation9], %s393
        // Predicated region
        $region53: #{tpu_custom_call.1} parent=43 // pred_check
          %p395 = pneg %p118
        $region54: #{tpu_custom_call.1} parent=43 // pred_check_branch
          %397 = sbr.rel (%p395) target = $region56
        $region55: #{tpu_custom_call.1} parent=43 // pred_region
          %398 = dma.done %s391, 16384
        $region56: #{tpu_custom_call.1} parent=43 // pred_fallthru
          _
        %s399 = sand.u32 %s33, 1
        %s400 = scalar_lea.sflag [#allocation11], %s399
        %s401 = sand.u32 %s131, 1
        %s402 = smul.addr %s401, 1024
        %s403 = scalar_lea.vmem [#allocation10], %s402
        // Predicated region
        $region57: #{tpu_custom_call.1} parent=43 // pred_check
          %p404 = pneg %p144
        $region58: #{tpu_custom_call.1} parent=43 // pred_check_branch
          %406 = sbr.rel (%p404) target = $region60
        $region59: #{tpu_custom_call.1} parent=43 // pred_region
          %407 = dma.done %s400, 16384
        $region60: #{tpu_custom_call.1} parent=43 // pred_fallthru
          _
        %s408 = sand.u32 %s33, 1
        %s409 = scalar_lea.sflag [#allocation11], %s408
        %s410 = sand.u32 %s157, 1
        %s411 = smul.addr %s410, 32
        %s412 = scalar_lea.vmem [#allocation12], %s411
        // Predicated region
        $region61: #{tpu_custom_call.1} parent=43 // pred_check
          %p413 = pneg %p170
        $region62: #{tpu_custom_call.1} parent=43 // pred_check_branch
          %415 = sbr.rel (%p413) target = $region64
        $region63: #{tpu_custom_call.1} parent=43 // pred_region
          %416 = dma.done %s409, 512
        $region64: #{tpu_custom_call.1} parent=43 // pred_fallthru
          _
        %s417 = sand.u32 %s183, 1
        %s418 = scalar_lea.sflag [#allocation14], %s417
        %s419 = sand.u32 %s183, 1
        %s420 = smul.addr %s419, 8
        %s421 = scalar_lea.vmem [#allocation13], %s420
        // Predicated region
        $region65: #{tpu_custom_call.1} parent=43 // pred_check
          %p422 = pneg %p196
        $region66: #{tpu_custom_call.1} parent=43 // pred_check_branch
          %424 = sbr.rel (%p422) target = $region68
        $region67: #{tpu_custom_call.1} parent=43 // pred_region
          %425 = dma.done %s418, 128
        $region68: #{tpu_custom_call.1} parent=43 // pred_fallthru
          _
        %s426 = sand.u32 %s53, 1
        %s427 = scalar_lea.sflag [#allocation5], %s426
        %s428 = sand.u32 %s53, 1
        %s429 = smul.addr %s428, 768
        %s430 = scalar_lea.vmem [#allocation4], %s429
        %p431 = pneg %p66
        %p432 = pneg %p63
        %s433 = sand.u32 %s33, 1
        %s434 = scalar_lea.sflag [#allocation8], %s433
        %s435 = sand.u32 %s79, 1
        %s436 = smul.addr %s435, 256
        %s437 = scalar_lea.vmem [#allocation7], %s436
        %p438 = pneg %p92
        %p439 = pneg %p89
        %s440 = sand.u32 %s33, 1
        %s441 = scalar_lea.sflag [#allocation8], %s440
        %s442 = sand.u32 %s105, 1
        %s443 = smul.addr %s442, 1024
        %s444 = scalar_lea.vmem [#allocation9], %s443
        %p445 = pneg %p118
        %p446 = pneg %p115
        %s447 = sand.u32 %s33, 1
        %s448 = scalar_lea.sflag [#allocation11], %s447
        %s449 = sand.u32 %s131, 1
        %s450 = smul.addr %s449, 1024
        %s451 = scalar_lea.vmem [#allocation10], %s450
        %p452 = pneg %p144
        %p453 = pneg %p141
        %s454 = sand.u32 %s33, 1
        %s455 = scalar_lea.sflag [#allocation11], %s454
        %s456 = sand.u32 %s157, 1
        %s457 = smul.addr %s456, 32
        %s458 = scalar_lea.vmem [#allocation12], %s457
        %p459 = pneg %p170
        %p460 = pneg %p167
        %s461 = sand.u32 %s183, 1
        %s462 = scalar_lea.sflag [#allocation14], %s461
        %s463 = sand.u32 %s183, 1
        %s464 = smul.addr %s463, 8
        %s465 = scalar_lea.vmem [#allocation13], %s464
        %p466 = pneg %p196
        %p467 = pneg %p193
        %p468 = pneg %p222
        %p469 = pneg %p219
        %s470 = sand.u32 %s209, 1
        %s471 = scalar_lea.sflag [#allocation6], %s470
        %s472 = sand.u32 %s209, 1
        %s473 = smul.addr %s472, 2
        %s474 = scalar_lea.vmem [#allocation15], %s473
        %p476 = scmp.eq.s32.totalorder %s38, 0
        // Predicated region
        $region69: #{tpu_custom_call.1} parent=43 // pred_check
          %p477 = pneg %p476
        $region70: #{tpu_custom_call.1} parent=43 // pred_check_branch
          %479 = sbr.rel (%p477) target = $region72
        $region71: #{tpu_custom_call.1} parent=43 // pred_region
          %s480 = smul.u32 %s37, 128
          %s481 = sshra.s32 %s480, 3
          %s482 = sand.u32 %s480, 7
          %s483 = smul.u32 %s481, 2
          %s484 = smul.addr %s483, 128
          %s485 = scalar_lea.hbm %s0, %s484
          // Predicated region
          $region73: #{tpu_custom_call.1} parent=71 // pred_check
            _
          $region74: #{tpu_custom_call.1} parent=71 // pred_check_branch
            %487 = sbr.rel target = $region76
          $region75: #{tpu_custom_call.1} parent=71 // pred_region
            %488 = sst [smem:[#allocation18]] [#allocation17]
            %489 = sst [smem:[#allocation19]] [#allocation16]
          $region76: #{tpu_custom_call.1} parent=71 // pred_fallthru
            _
          %491 = shalt.err (0)
          %s493 = sshll.u32 [#allocation2], 4
          %s494 = int_to_ptr.vmem [resolvable:$true] %s493
          %496 = dma.hbm_to_vmem [thread:$0]  %s485, 4096, %s494, [#allocation3]
          %s497 = smul.u32 8, 16
          %s498 = smul.u32 %s497, 2
          %s499 = sshll.u32 %s498, 4
          %500 = dma.done [#allocation3], %s499
        $region72: #{tpu_custom_call.1} parent=43 // pred_fallthru
          _
        %v501 = vld [vmem:[#allocation2] sm:$0xff]
        %v502 = vld [vmem:[#allocation2 + $0x8] sm:$0xff]
        %v503 = vld [vmem:[#allocation2 + $0x10] sm:$0xff]
        %v504 = vld [vmem:[#allocation2 + $0x18] sm:$0xff]
        %v505 = vld [vmem:[#allocation2 + $0x20] sm:$0xff]
        %v506 = vld [vmem:[#allocation2 + $0x28] sm:$0xff]
        %v507 = vld [vmem:[#allocation2 + $0x30] sm:$0xff]
        %v508 = vld [vmem:[#allocation2 + $0x38] sm:$0xff]
        %v509 = vld [vmem:[#allocation2 + $0x40] sm:$0xff]
        %v510 = vld [vmem:[#allocation2 + $0x48] sm:$0xff]
        %v511 = vld [vmem:[#allocation2 + $0x50] sm:$0xff]
        %v512 = vld [vmem:[#allocation2 + $0x58] sm:$0xff]
        %v513 = vld [vmem:[#allocation2 + $0x60] sm:$0xff]
        %v514 = vld [vmem:[#allocation2 + $0x68] sm:$0xff]
        %v515 = vld [vmem:[#allocation2 + $0x70] sm:$0xff]
        %v516 = vld [vmem:[#allocation2 + $0x78] sm:$0xff]
        %v517 = vld [vmem:[#allocation2 + $0x80] sm:$0xff]
        %v518 = vld [vmem:[#allocation2 + $0x88] sm:$0xff]
        %v519 = vld [vmem:[#allocation2 + $0x90] sm:$0xff]
        %v520 = vld [vmem:[#allocation2 + $0x98] sm:$0xff]
        %v521 = vld [vmem:[#allocation2 + $0xa0] sm:$0xff]
        %v522 = vld [vmem:[#allocation2 + $0xa8] sm:$0xff]
        %v523 = vld [vmem:[#allocation2 + $0xb0] sm:$0xff]
        %v524 = vld [vmem:[#allocation2 + $0xb8] sm:$0xff]
        %v525 = vld [vmem:[#allocation2 + $0xc0] sm:$0xff]
        %v526 = vld [vmem:[#allocation2 + $0xc8] sm:$0xff]
        %v527 = vld [vmem:[#allocation2 + $0xd0] sm:$0xff]
        %v528 = vld [vmem:[#allocation2 + $0xd8] sm:$0xff]
        %v529 = vld [vmem:[#allocation2 + $0xe0] sm:$0xff]
        %v530 = vld [vmem:[#allocation2 + $0xe8] sm:$0xff]
        %v531 = vld [vmem:[#allocation2 + $0xf0] sm:$0xff]
        %v532 = vld [vmem:[#allocation2 + $0xf8] sm:$0xff]
        %v533 = vld [vmem:[%s412] sm:$0xff]
        %v534 = vld [vmem:[%s412 + $0x8] sm:$0xff]
        %v535 = vld [vmem:[%s412 + $0x10] sm:$0x1]
        %v536 = vld [vmem:[%s412 + $0x18] sm:$0x1]
        %v537 = vpack.c.bf16 %v503, %v501
        %v538 = vpack.c.bf16 %v504, %v502
        %v539 = vpack.c.bf16 %v507, %v505
        %v540 = vpack.c.bf16 %v508, %v506
        %v541 = vpack.c.bf16 %v511, %v509
        %v542 = vpack.c.bf16 %v512, %v510
        %v543 = vpack.c.bf16 %v515, %v513
        %v544 = vpack.c.bf16 %v516, %v514
        %v545 = vpack.c.bf16 %v519, %v517
        %v546 = vpack.c.bf16 %v520, %v518
        %v547 = vpack.c.bf16 %v523, %v521
        %v548 = vpack.c.bf16 %v524, %v522
        %v549 = vpack.c.bf16 %v527, %v525
        %v550 = vpack.c.bf16 %v528, %v526
        %v551 = vpack.c.bf16 %v531, %v529
        %v552 = vpack.c.bf16 %v532, %v530
        %v553 = vld [vmem:[%s376] sm:$0xff]
        %v554 = vld [vmem:[%s376 + $0x8] sm:$0xff]
        %v555 = vld [vmem:[%s376 + $0x10] sm:$0xff]
        %v556 = vld [vmem:[%s376 + $0x18] sm:$0xff]
        %v557 = vld [vmem:[%s376 + $0x20] sm:$0xff]
        %v558 = vld [vmem:[%s376 + $0x28] sm:$0xff]
        %v559 = vld [vmem:[%s376 + $0x30] sm:$0xff]
        %v560 = vld [vmem:[%s376 + $0x38] sm:$0xff]
        %v561 = vld [vmem:[%s376 + $0x40] sm:$0xff]
        %v562 = vld [vmem:[%s376 + $0x48] sm:$0xff]
        %v563 = vld [vmem:[%s376 + $0x50] sm:$0xff]
        %v564 = vld [vmem:[%s376 + $0x58] sm:$0xff]
        %v565 = vld [vmem:[%s376 + $0x60] sm:$0xff]
        %v566 = vld [vmem:[%s376 + $0x68] sm:$0xff]
        %v567 = vld [vmem:[%s376 + $0x70] sm:$0xff]
        %v568 = vld [vmem:[%s376 + $0x78] sm:$0xff]
        %v569 = vld [vmem:[%s376 + $0x80] sm:$0xff]
        %v570 = vld [vmem:[%s376 + $0x88] sm:$0xff]
        %v571 = vld [vmem:[%s376 + $0x90] sm:$0xff]
        %v572 = vld [vmem:[%s376 + $0x98] sm:$0xff]
        %v573 = vld [vmem:[%s376 + $0xa0] sm:$0xff]
        %v574 = vld [vmem:[%s376 + $0xa8] sm:$0xff]
        %v575 = vld [vmem:[%s376 + $0xb0] sm:$0xff]
        %v576 = vld [vmem:[%s376 + $0xb8] sm:$0xff]
        %v577 = vld [vmem:[%s376 + $0xc0] sm:$0xff]
        %v578 = vld [vmem:[%s376 + $0xc8] sm:$0xff]
        %v579 = vld [vmem:[%s376 + $0xd0] sm:$0xff]
        %v580 = vld [vmem:[%s376 + $0xd8] sm:$0xff]
        %v581 = vld [vmem:[%s376 + $0xe0] sm:$0xff]
        %v582 = vld [vmem:[%s376 + $0xe8] sm:$0xff]
        %v583 = vld [vmem:[%s376 + $0xf0] sm:$0xff]
        %v584 = vld [vmem:[%s376 + $0xf8] sm:$0xff]
        %v585 = vld [vmem:[%s376 + $0x100] sm:$0xff]
        %v586 = vld [vmem:[%s376 + $0x108] sm:$0xff]
        %v587 = vld [vmem:[%s376 + $0x110] sm:$0xff]
        %v588 = vld [vmem:[%s376 + $0x118] sm:$0xff]
        %v589 = vld [vmem:[%s376 + $0x120] sm:$0xff]
        %v590 = vld [vmem:[%s376 + $0x128] sm:$0xff]
        %v591 = vld [vmem:[%s376 + $0x130] sm:$0xff]
        %v592 = vld [vmem:[%s376 + $0x138] sm:$0xff]
        %v593 = vld [vmem:[%s376 + $0x140] sm:$0xff]
        %v594 = vld [vmem:[%s376 + $0x148] sm:$0xff]
        %v595 = vld [vmem:[%s376 + $0x150] sm:$0xff]
        %v596 = vld [vmem:[%s376 + $0x158] sm:$0xff]
        %v597 = vld [vmem:[%s376 + $0x160] sm:$0xff]
        %v598 = vld [vmem:[%s376 + $0x168] sm:$0xff]
        %v599 = vld [vmem:[%s376 + $0x170] sm:$0xff]
        %v600 = vld [vmem:[%s376 + $0x178] sm:$0xff]
        %v601 = vld [vmem:[%s376 + $0x180] sm:$0xff]
        %v602 = vld [vmem:[%s376 + $0x188] sm:$0xff]
        %v603 = vld [vmem:[%s376 + $0x190] sm:$0xff]
        %v604 = vld [vmem:[%s376 + $0x198] sm:$0xff]
        %v605 = vld [vmem:[%s376 + $0x1a0] sm:$0xff]
        %v606 = vld [vmem:[%s376 + $0x1a8] sm:$0xff]
        %v607 = vld [vmem:[%s376 + $0x1b0] sm:$0xff]
        %v608 = vld [vmem:[%s376 + $0x1b8] sm:$0xff]
        %v609 = vld [vmem:[%s376 + $0x1c0] sm:$0xff]
        %v610 = vld [vmem:[%s376 + $0x1c8] sm:$0xff]
        %v611 = vld [vmem:[%s376 + $0x1d0] sm:$0xff]
        %v612 = vld [vmem:[%s376 + $0x1d8] sm:$0xff]
        %v613 = vld [vmem:[%s376 + $0x1e0] sm:$0xff]
        %v614 = vld [vmem:[%s376 + $0x1e8] sm:$0xff]
        %v615 = vld [vmem:[%s376 + $0x1f0] sm:$0xff]
        %v616 = vld [vmem:[%s376 + $0x1f8] sm:$0xff]
        %v617 = vld [vmem:[%s376 + $0x200] sm:$0xff]
        %v618 = vld [vmem:[%s376 + $0x208] sm:$0xff]
        %v619 = vld [vmem:[%s376 + $0x210] sm:$0xff]
        %v620 = vld [vmem:[%s376 + $0x218] sm:$0xff]
        %v621 = vld [vmem:[%s376 + $0x220] sm:$0xff]
        %v622 = vld [vmem:[%s376 + $0x228] sm:$0xff]
        %v623 = vld [vmem:[%s376 + $0x230] sm:$0xff]
        %v624 = vld [vmem:[%s376 + $0x238] sm:$0xff]
        %v625 = vld [vmem:[%s376 + $0x240] sm:$0xff]
        %v626 = vld [vmem:[%s376 + $0x248] sm:$0xff]
        %v627 = vld [vmem:[%s376 + $0x250] sm:$0xff]
        %v628 = vld [vmem:[%s376 + $0x258] sm:$0xff]
        %v629 = vld [vmem:[%s376 + $0x260] sm:$0xff]
        %v630 = vld [vmem:[%s376 + $0x268] sm:$0xff]
        %v631 = vld [vmem:[%s376 + $0x270] sm:$0xff]
        %v632 = vld [vmem:[%s376 + $0x278] sm:$0xff]
        %v633 = vld [vmem:[%s376 + $0x280] sm:$0xff]
        %v634 = vld [vmem:[%s376 + $0x288] sm:$0xff]
        %v635 = vld [vmem:[%s376 + $0x290] sm:$0xff]
        %v636 = vld [vmem:[%s376 + $0x298] sm:$0xff]
        %v637 = vld [vmem:[%s376 + $0x2a0] sm:$0xff]
        %v638 = vld [vmem:[%s376 + $0x2a8] sm:$0xff]
        %v639 = vld [vmem:[%s376 + $0x2b0] sm:$0xff]
        %v640 = vld [vmem:[%s376 + $0x2b8] sm:$0xff]
        %v641 = vld [vmem:[%s376 + $0x2c0] sm:$0xff]
        %v642 = vld [vmem:[%s376 + $0x2c8] sm:$0xff]
        %v643 = vld [vmem:[%s376 + $0x2d0] sm:$0xff]
        %v644 = vld [vmem:[%s376 + $0x2d8] sm:$0xff]
        %v645 = vld [vmem:[%s376 + $0x2e0] sm:$0xff]
        %v646 = vld [vmem:[%s376 + $0x2e8] sm:$0xff]
        %v647 = vld [vmem:[%s376 + $0x2f0] sm:$0xff]
        %v648 = vld [vmem:[%s376 + $0x2f8] sm:$0xff]
        %v745 = vunpack.c.l.b16 %v553
        %v746 = vunpack.c.h.b16 %v553
        %v747 = vunpack.c.l.b16 %v554
        %v748 = vunpack.c.h.b16 %v554
        %v749 = vunpack.c.l.b16 %v555
        %v750 = vunpack.c.h.b16 %v555
        %v751 = vunpack.c.l.b16 %v556
        %v752 = vunpack.c.h.b16 %v556
        %v753 = vunpack.c.l.b16 %v557
        %v754 = vunpack.c.h.b16 %v557
        %v755 = vunpack.c.l.b16 %v558
        %v756 = vunpack.c.h.b16 %v558
        %v757 = vunpack.c.l.b16 %v559
        %v758 = vunpack.c.h.b16 %v559
        %v759 = vunpack.c.l.b16 %v560
        %v760 = vunpack.c.h.b16 %v560
        %v761 = vunpack.c.l.b16 %v561
        %v762 = vunpack.c.h.b16 %v561
        %v763 = vunpack.c.l.b16 %v562
        %v764 = vunpack.c.h.b16 %v562
        %v765 = vunpack.c.l.b16 %v563
        %v766 = vunpack.c.h.b16 %v563
        %v767 = vunpack.c.l.b16 %v564
        %v768 = vunpack.c.h.b16 %v564
        %v769 = vunpack.c.l.b16 %v565
        %v770 = vunpack.c.h.b16 %v565
        %v771 = vunpack.c.l.b16 %v566
        %v772 = vunpack.c.h.b16 %v566
        %v773 = vunpack.c.l.b16 %v567
        %v774 = vunpack.c.h.b16 %v567
        %v775 = vunpack.c.l.b16 %v568
        %v776 = vunpack.c.h.b16 %v568
        %v777 = vunpack.c.l.b16 %v569
        %v778 = vunpack.c.h.b16 %v569
        %v779 = vunpack.c.l.b16 %v570
        %v780 = vunpack.c.h.b16 %v570
        %v781 = vunpack.c.l.b16 %v571
        %v782 = vunpack.c.h.b16 %v571
        %v783 = vunpack.c.l.b16 %v572
        %v784 = vunpack.c.h.b16 %v572
        %v785 = vunpack.c.l.b16 %v573
        %v786 = vunpack.c.h.b16 %v573
        %v787 = vunpack.c.l.b16 %v574
        %v788 = vunpack.c.h.b16 %v574
        %v789 = vunpack.c.l.b16 %v575
        %v790 = vunpack.c.h.b16 %v575
        %v791 = vunpack.c.l.b16 %v576
        %v792 = vunpack.c.h.b16 %v576
        %v793 = vunpack.c.l.b16 %v577
        %v794 = vunpack.c.h.b16 %v577
        %v795 = vunpack.c.l.b16 %v578
        %v796 = vunpack.c.h.b16 %v578
        %v797 = vunpack.c.l.b16 %v579
        %v798 = vunpack.c.h.b16 %v579
        %v799 = vunpack.c.l.b16 %v580
        %v800 = vunpack.c.h.b16 %v580
        %v801 = vunpack.c.l.b16 %v581
        %v802 = vunpack.c.h.b16 %v581
        %v803 = vunpack.c.l.b16 %v582
        %v804 = vunpack.c.h.b16 %v582
        %v805 = vunpack.c.l.b16 %v583
        %v806 = vunpack.c.h.b16 %v583
        %v807 = vunpack.c.l.b16 %v584
        %v808 = vunpack.c.h.b16 %v584
        %v809 = vunpack.c.l.b16 %v585
        %v810 = vunpack.c.h.b16 %v585
        %v811 = vunpack.c.l.b16 %v586
        %v812 = vunpack.c.h.b16 %v586
        %v813 = vunpack.c.l.b16 %v587
        %v814 = vunpack.c.h.b16 %v587
        %v815 = vunpack.c.l.b16 %v588
        %v816 = vunpack.c.h.b16 %v588
        %v817 = vunpack.c.l.b16 %v589
        %v818 = vunpack.c.h.b16 %v589
        %v819 = vunpack.c.l.b16 %v590
        %v820 = vunpack.c.h.b16 %v590
        %v821 = vunpack.c.l.b16 %v591
        %v822 = vunpack.c.h.b16 %v591
        %v823 = vunpack.c.l.b16 %v592
        %v824 = vunpack.c.h.b16 %v592
        %v825 = vunpack.c.l.b16 %v593
        %v826 = vunpack.c.h.b16 %v593
        %v827 = vunpack.c.l.b16 %v594
        %v828 = vunpack.c.h.b16 %v594
        %v829 = vunpack.c.l.b16 %v595
        %v830 = vunpack.c.h.b16 %v595
        %v831 = vunpack.c.l.b16 %v596
        %v832 = vunpack.c.h.b16 %v596
        %v833 = vunpack.c.l.b16 %v597
        %v834 = vunpack.c.h.b16 %v597
        %v835 = vunpack.c.l.b16 %v598
        %v836 = vunpack.c.h.b16 %v598
        %v837 = vunpack.c.l.b16 %v599
        %v838 = vunpack.c.h.b16 %v599
        %v839 = vunpack.c.l.b16 %v600
        %v840 = vunpack.c.h.b16 %v600
        %v841 = vunpack.c.l.b16 %v601
        %v842 = vunpack.c.h.b16 %v601
        %v843 = vunpack.c.l.b16 %v602
        %v844 = vunpack.c.h.b16 %v602
        %v845 = vunpack.c.l.b16 %v603
        %v846 = vunpack.c.h.b16 %v603
        %v847 = vunpack.c.l.b16 %v604
        %v848 = vunpack.c.h.b16 %v604
        %v849 = vunpack.c.l.b16 %v605
        %v850 = vunpack.c.h.b16 %v605
        %v851 = vunpack.c.l.b16 %v606
        %v852 = vunpack.c.h.b16 %v606
        %v853 = vunpack.c.l.b16 %v607
        %v854 = vunpack.c.h.b16 %v607
        %v855 = vunpack.c.l.b16 %v608
        %v856 = vunpack.c.h.b16 %v608
        %v857 = vunpack.c.l.b16 %v609
        %v858 = vunpack.c.h.b16 %v609
        %v859 = vunpack.c.l.b16 %v610
        %v860 = vunpack.c.h.b16 %v610
        %v861 = vunpack.c.l.b16 %v611
        %v862 = vunpack.c.h.b16 %v611
        %v863 = vunpack.c.l.b16 %v612
        %v864 = vunpack.c.h.b16 %v612
        %v865 = vunpack.c.l.b16 %v613
        %v866 = vunpack.c.h.b16 %v613
        %v867 = vunpack.c.l.b16 %v614
        %v868 = vunpack.c.h.b16 %v614
        %v869 = vunpack.c.l.b16 %v615
        %v870 = vunpack.c.h.b16 %v615
        %v871 = vunpack.c.l.b16 %v616
        %v872 = vunpack.c.h.b16 %v616
        %v873 = vunpack.c.l.b16 %v617
        %v874 = vunpack.c.h.b16 %v617
        %v875 = vunpack.c.l.b16 %v618
        %v876 = vunpack.c.h.b16 %v618
        %v877 = vunpack.c.l.b16 %v619
        %v878 = vunpack.c.h.b16 %v619
        %v879 = vunpack.c.l.b16 %v620
        %v880 = vunpack.c.h.b16 %v620
        %v881 = vunpack.c.l.b16 %v621
        %v882 = vunpack.c.h.b16 %v621
        %v883 = vunpack.c.l.b16 %v622
        %v884 = vunpack.c.h.b16 %v622
        %v885 = vunpack.c.l.b16 %v623
        %v886 = vunpack.c.h.b16 %v623
        %v887 = vunpack.c.l.b16 %v624
        %v888 = vunpack.c.h.b16 %v624
        %v889 = vunpack.c.l.b16 %v625
        %v890 = vunpack.c.h.b16 %v625
        %v891 = vunpack.c.l.b16 %v626
        %v892 = vunpack.c.h.b16 %v626
        %v893 = vunpack.c.l.b16 %v627
        %v894 = vunpack.c.h.b16 %v627
        %v895 = vunpack.c.l.b16 %v628
        %v896 = vunpack.c.h.b16 %v628
        %v897 = vunpack.c.l.b16 %v629
        %v898 = vunpack.c.h.b16 %v629
        %v899 = vunpack.c.l.b16 %v630
        %v900 = vunpack.c.h.b16 %v630
        %v901 = vunpack.c.l.b16 %v631
        %v902 = vunpack.c.h.b16 %v631
        %v903 = vunpack.c.l.b16 %v632
        %v904 = vunpack.c.h.b16 %v632
        %v905 = vunpack.c.l.b16 %v633
        %v906 = vunpack.c.h.b16 %v633
        %v907 = vunpack.c.l.b16 %v634
        %v908 = vunpack.c.h.b16 %v634
        %v909 = vunpack.c.l.b16 %v635
        %v910 = vunpack.c.h.b16 %v635
        %v911 = vunpack.c.l.b16 %v636
        %v912 = vunpack.c.h.b16 %v636
        %v913 = vunpack.c.l.b16 %v637
        %v914 = vunpack.c.h.b16 %v637
        %v915 = vunpack.c.l.b16 %v638
        %v916 = vunpack.c.h.b16 %v638
        %v917 = vunpack.c.l.b16 %v639
        %v918 = vunpack.c.h.b16 %v639
        %v919 = vunpack.c.l.b16 %v640
        %v920 = vunpack.c.h.b16 %v640
        %v921 = vunpack.c.l.b16 %v641
        %v922 = vunpack.c.h.b16 %v641
        %v923 = vunpack.c.l.b16 %v642
        %v924 = vunpack.c.h.b16 %v642
        %v925 = vunpack.c.l.b16 %v643
        %v926 = vunpack.c.h.b16 %v643
        %v927 = vunpack.c.l.b16 %v644
        %v928 = vunpack.c.h.b16 %v644
        %v929 = vunpack.c.l.b16 %v645
        %v930 = vunpack.c.h.b16 %v645
        %v931 = vunpack.c.l.b16 %v646
        %v932 = vunpack.c.h.b16 %v646
        %v933 = vunpack.c.l.b16 %v647
        %v934 = vunpack.c.h.b16 %v647
        %v935 = vunpack.c.l.b16 %v648
        %v936 = vunpack.c.h.b16 %v648
        %v937 = vpack.c.b16 %v751, %v745
        %v938 = vpack.c.b16 %v752, %v746
        %v939 = vpack.c.b16 %v753, %v747
        %v940 = vpack.c.b16 %v754, %v748
        %v941 = vpack.c.b16 %v755, %v749
        %v942 = vpack.c.b16 %v756, %v750
        %v943 = vpack.c.b16 %v763, %v757
        %v944 = vpack.c.b16 %v764, %v758
        %v945 = vpack.c.b16 %v765, %v759
        %v946 = vpack.c.b16 %v766, %v760
        %v947 = vpack.c.b16 %v767, %v761
        %v948 = vpack.c.b16 %v768, %v762
        %v949 = vpack.c.b16 %v775, %v769
        %v950 = vpack.c.b16 %v776, %v770
        %v951 = vpack.c.b16 %v777, %v771
        %v952 = vpack.c.b16 %v778, %v772
        %v953 = vpack.c.b16 %v779, %v773
        %v954 = vpack.c.b16 %v780, %v774
        %v955 = vpack.c.b16 %v787, %v781
        %v956 = vpack.c.b16 %v788, %v782
        %v957 = vpack.c.b16 %v789, %v783
        %v958 = vpack.c.b16 %v790, %v784
        %v959 = vpack.c.b16 %v791, %v785
        %v960 = vpack.c.b16 %v792, %v786
        %v961 = vpack.c.b16 %v799, %v793
        %v962 = vpack.c.b16 %v800, %v794
        %v963 = vpack.c.b16 %v801, %v795
        %v964 = vpack.c.b16 %v802, %v796
        %v965 = vpack.c.b16 %v803, %v797
        %v966 = vpack.c.b16 %v804, %v798
        %v967 = vpack.c.b16 %v811, %v805
        %v968 = vpack.c.b16 %v812, %v806
        %v969 = vpack.c.b16 %v813, %v807
        %v970 = vpack.c.b16 %v814, %v808
        %v971 = vpack.c.b16 %v815, %v809
        %v972 = vpack.c.b16 %v816, %v810
        %v973 = vpack.c.b16 %v823, %v817
        %v974 = vpack.c.b16 %v824, %v818
        %v975 = vpack.c.b16 %v825, %v819
        %v976 = vpack.c.b16 %v826, %v820
        %v977 = vpack.c.b16 %v827, %v821
        %v978 = vpack.c.b16 %v828, %v822
        %v979 = vpack.c.b16 %v835, %v829
        %v980 = vpack.c.b16 %v836, %v830
        %v981 = vpack.c.b16 %v837, %v831
        %v982 = vpack.c.b16 %v838, %v832
        %v983 = vpack.c.b16 %v839, %v833
        %v984 = vpack.c.b16 %v840, %v834
        %v985 = vpack.c.b16 %v847, %v841
        %v986 = vpack.c.b16 %v848, %v842
        %v987 = vpack.c.b16 %v849, %v843
        %v988 = vpack.c.b16 %v850, %v844
        %v989 = vpack.c.b16 %v851, %v845
        %v990 = vpack.c.b16 %v852, %v846
        %v991 = vpack.c.b16 %v859, %v853
        %v992 = vpack.c.b16 %v860, %v854
        %v993 = vpack.c.b16 %v861, %v855
        %v994 = vpack.c.b16 %v862, %v856
        %v995 = vpack.c.b16 %v863, %v857
        %v996 = vpack.c.b16 %v864, %v858
        %v997 = vpack.c.b16 %v871, %v865
        %v998 = vpack.c.b16 %v872, %v866
        %v999 = vpack.c.b16 %v873, %v867
        %v1000 = vpack.c.b16 %v874, %v868
        %v1001 = vpack.c.b16 %v875, %v869
        %v1002 = vpack.c.b16 %v876, %v870
        %v1003 = vpack.c.b16 %v883, %v877
        %v1004 = vpack.c.b16 %v884, %v878
        %v1005 = vpack.c.b16 %v885, %v879
        %v1006 = vpack.c.b16 %v886, %v880
        %v1007 = vpack.c.b16 %v887, %v881
        %v1008 = vpack.c.b16 %v888, %v882
        %v1009 = vpack.c.b16 %v895, %v889
        %v1010 = vpack.c.b16 %v896, %v890
        %v1011 = vpack.c.b16 %v897, %v891
        %v1012 = vpack.c.b16 %v898, %v892
        %v1013 = vpack.c.b16 %v899, %v893
        %v1014 = vpack.c.b16 %v900, %v894
        %v1015 = vpack.c.b16 %v907, %v901
        %v1016 = vpack.c.b16 %v908, %v902
        %v1017 = vpack.c.b16 %v909, %v903
        %v1018 = vpack.c.b16 %v910, %v904
        %v1019 = vpack.c.b16 %v911, %v905
        %v1020 = vpack.c.b16 %v912, %v906
        %v1021 = vpack.c.b16 %v919, %v913
        %v1022 = vpack.c.b16 %v920, %v914
        %v1023 = vpack.c.b16 %v921, %v915
        %v1024 = vpack.c.b16 %v922, %v916
        %v1025 = vpack.c.b16 %v923, %v917
        %v1026 = vpack.c.b16 %v924, %v918
        %v1027 = vpack.c.b16 %v931, %v925
        %v1028 = vpack.c.b16 %v932, %v926
        %v1029 = vpack.c.b16 %v933, %v927
        %v1030 = vpack.c.b16 %v934, %v928
        %v1031 = vpack.c.b16 %v935, %v929
        %v1032 = vpack.c.b16 %v936, %v930
        %1129 = vmatprep.subr.bf16.mxu0 %v938
        %1130 = vmatpush1.bf16.msra.mxu0 %v937
        %1131 = vmatprep.subr.bf16.mxu0 %v944
        %1132 = vmatpush1.bf16.msra.mxu0 %v943
        %1133 = vmatprep.subr.bf16.mxu0 %v950
        %1134 = vmatpush1.bf16.msra.mxu0 %v949
        %1135 = vmatprep.subr.bf16.mxu0 %v956
        %1136 = vmatpush1.bf16.msra.mxu0 %v955
        %1137 = vmatprep.subr.bf16.mxu0 %v962
        %1138 = vmatpush1.bf16.msra.mxu0 %v961
        %1139 = vmatprep.subr.bf16.mxu0 %v968
        %1140 = vmatpush1.bf16.msra.mxu0 %v967
        %1141 = vmatprep.subr.bf16.mxu0 %v974
        %1142 = vmatpush1.bf16.msra.mxu0 %v973
        %1143 = vmatprep.subr.bf16.mxu0 %v980
        %1144 = vmatpush1.bf16.msra.mxu0 %v979
        %1145 = vmatprep.subr.bf16.mxu0 %v986
        %1146 = vmatpush1.bf16.msra.mxu0 %v985
        %1147 = vmatprep.subr.bf16.mxu0 %v992
        %1148 = vmatpush1.bf16.msra.mxu0 %v991
        %1149 = vmatprep.subr.bf16.mxu0 %v998
        %1150 = vmatpush1.bf16.msra.mxu0 %v997
        %1151 = vmatprep.subr.bf16.mxu0 %v1004
        %1152 = vmatpush1.bf16.msra.mxu0 %v1003
        %1153 = vmatprep.subr.bf16.mxu0 %v1010
        %1154 = vmatpush1.bf16.msra.mxu0 %v1009
        %1155 = vmatprep.subr.bf16.mxu0 %v1016
        %1156 = vmatpush1.bf16.msra.mxu0 %v1015
        %1157 = vmatprep.subr.bf16.mxu0 %v1022
        %1158 = vmatpush1.bf16.msra.mxu0 %v1021
        %1159 = vmatprep.subr.bf16.mxu0 %v1028
        %1160 = vmatpush1.bf16.msra.mxu0 %v1027
        %1161 = vmatprep.mubr.bf16.mxu0 %v538
        %1162 = vmatmul.mubr.bf16.gmra.mrb[0].mxu0 %v537
        %v1163 = vpop.f32.mrb[0].mxu0
        %v1164 = vadd.f32 0.0, %v1163
        %v1165 = vpop.f32.mrb[0].mxu0
        %v1166 = vadd.f32 0.0, %v1165
        %v1167 = vpop.f32.mrb[0].mxu0
        %v1168 = vadd.f32 0.0, %v1167
        %v1169 = vpop.f32.mrb[0].mxu0
        %v1170 = vadd.f32 0.0, %v1169
        %1171 = vmatprep.mubr.bf16.mxu0 %v540
        %1172 = vmatmul.mubr.bf16.gmra.mrb[0].mxu0 %v539
        %v1173 = vpop.f32.mrb[0].mxu0
        %v1174 = vadd.f32 0.0, %v1173
        %v1175 = vpop.f32.mrb[0].mxu0
        %v1176 = vadd.f32 0.0, %v1175
        %v1177 = vpop.f32.mrb[0].mxu0
        %v1178 = vadd.f32 0.0, %v1177
        %v1179 = vpop.f32.mrb[0].mxu0
        %v1180 = vadd.f32 0.0, %v1179
        %1181 = vmatprep.mubr.bf16.mxu0 %v542
        %1182 = vmatmul.mubr.bf16.gmra.mrb[0].mxu0 %v541
        %v1183 = vpop.f32.mrb[0].mxu0
        %v1184 = vadd.f32 0.0, %v1183
        %v1185 = vpop.f32.mrb[0].mxu0
        %v1186 = vadd.f32 0.0, %v1185
        %v1187 = vpop.f32.mrb[0].mxu0
        %v1188 = vadd.f32 0.0, %v1187
        %v1189 = vpop.f32.mrb[0].mxu0
        %v1190 = vadd.f32 0.0, %v1189
        %1191 = vmatprep.mubr.bf16.mxu0 %v544
        %1192 = vmatmul.mubr.bf16.gmra.mrb[0].mxu0 %v543
        %v1193 = vpop.f32.mrb[0].mxu0
        %v1194 = vadd.f32 0.0, %v1193
        %v1195 = vpop.f32.mrb[0].mxu0
        %v1196 = vadd.f32 0.0, %v1195
        %v1197 = vpop.f32.mrb[0].mxu0
        %v1198 = vadd.f32 0.0, %v1197
        %v1199 = vpop.f32.mrb[0].mxu0
        %v1200 = vadd.f32 0.0, %v1199
        %1201 = vmatprep.mubr.bf16.mxu0 %v546
        %1202 = vmatmul.mubr.bf16.gmra.mrb[0].mxu0 %v545
        %v1203 = vpop.f32.mrb[0].mxu0
        %v1204 = vadd.f32 0.0, %v1203
        %v1205 = vpop.f32.mrb[0].mxu0
        %v1206 = vadd.f32 0.0, %v1205
        %v1207 = vpop.f32.mrb[0].mxu0
        %v1208 = vadd.f32 0.0, %v1207
        %v1209 = vpop.f32.mrb[0].mxu0
        %v1210 = vadd.f32 0.0, %v1209
        %1211 = vmatprep.mubr.bf16.mxu0 %v548
        %1212 = vmatmul.mubr.bf16.gmra.mrb[0].mxu0 %v547
        %v1213 = vpop.f32.mrb[0].mxu0
        %v1214 = vadd.f32 0.0, %v1213
        %v1215 = vpop.f32.mrb[0].mxu0
        %v1216 = vadd.f32 0.0, %v1215
        %v1217 = vpop.f32.mrb[0].mxu0
        %v1218 = vadd.f32 0.0, %v1217
        %v1219 = vpop.f32.mrb[0].mxu0
        %v1220 = vadd.f32 0.0, %v1219
        %1221 = vmatprep.mubr.bf16.mxu0 %v550
        %1222 = vmatmul.mubr.bf16.gmra.mrb[0].mxu0 %v549
        %v1223 = vpop.f32.mrb[0].mxu0
        %v1224 = vadd.f32 0.0, %v1223
        %v1225 = vpop.f32.mrb[0].mxu0
        %v1226 = vadd.f32 0.0, %v1225
        %v1227 = vpop.f32.mrb[0].mxu0
        %v1228 = vadd.f32 0.0, %v1227
        %v1229 = vpop.f32.mrb[0].mxu0
        %v1230 = vadd.f32 0.0, %v1229
        %1231 = vmatprep.mubr.bf16.mxu0 %v552
        %1232 = vmatmul.mubr.bf16.gmra.mrb[0].mxu0 %v551
        %v1233 = vpop.f32.mrb[0].mxu0
        %v1234 = vadd.f32 0.0, %v1233
        %v1235 = vpop.f32.mrb[0].mxu0
        %v1236 = vadd.f32 0.0, %v1235
        %v1237 = vpop.f32.mrb[0].mxu0
        %v1238 = vadd.f32 0.0, %v1237
        %v1239 = vpop.f32.mrb[0].mxu0
        %v1240 = vadd.f32 0.0, %v1239
        %1241 = vdwg.mxu0
        %1242 = vmatprep.subr.bf16.mxu0 %v940
        %1243 = vmatpush1.bf16.msra.mxu0 %v939
        %1244 = vmatprep.subr.bf16.mxu0 %v946
        %1245 = vmatpush1.bf16.msra.mxu0 %v945
        %1246 = vmatprep.subr.bf16.mxu0 %v952
        %1247 = vmatpush1.bf16.msra.mxu0 %v951
        %1248 = vmatprep.subr.bf16.mxu0 %v958
        %1249 = vmatpush1.bf16.msra.mxu0 %v957
        %1250 = vmatprep.subr.bf16.mxu0 %v964
        %1251 = vmatpush1.bf16.msra.mxu0 %v963
        %1252 = vmatprep.subr.bf16.mxu0 %v970
        %1253 = vmatpush1.bf16.msra.mxu0 %v969
        %1254 = vmatprep.subr.bf16.mxu0 %v976
        %1255 = vmatpush1.bf16.msra.mxu0 %v975
        %1256 = vmatprep.subr.bf16.mxu0 %v982
        %1257 = vmatpush1.bf16.msra.mxu0 %v981
        %1258 = vmatprep.subr.bf16.mxu0 %v988
        %1259 = vmatpush1.bf16.msra.mxu0 %v987
        %1260 = vmatprep.subr.bf16.mxu0 %v994
        %1261 = vmatpush1.bf16.msra.mxu0 %v993
        %1262 = vmatprep.subr.bf16.mxu0 %v1000
        %1263 = vmatpush1.bf16.msra.mxu0 %v999
        %1264 = vmatprep.subr.bf16.mxu0 %v1006
        %1265 = vmatpush1.bf16.msra.mxu0 %v1005
        %1266 = vmatprep.subr.bf16.mxu0 %v1012
        %1267 = vmatpush1.bf16.msra.mxu0 %v1011
        %1268 = vmatprep.subr.bf16.mxu0 %v1018
        %1269 = vmatpush1.bf16.msra.mxu0 %v1017
        %1270 = vmatprep.subr.bf16.mxu0 %v1024
        %1271 = vmatpush1.bf16.msra.mxu0 %v1023
        %1272 = vmatprep.subr.bf16.mxu0 %v1030
        %1273 = vmatpush1.bf16.msra.mxu0 %v1029
        %1274 = vmatprep.mubr.bf16.mxu0 %v538
        %1275 = vmatmul.mubr.bf16.gmra.mrb[0].mxu0 %v537
        %v1276 = vpop.f32.mrb[0].mxu0
        %v1277 = vadd.f32 0.0, %v1276
        %v1278 = vpop.f32.mrb[0].mxu0
        %v1279 = vadd.f32 0.0, %v1278
        %v1280 = vpop.f32.mrb[0].mxu0
        %v1281 = vadd.f32 0.0, %v1280
        %v1282 = vpop.f32.mrb[0].mxu0
        %v1283 = vadd.f32 0.0, %v1282
        %1284 = vmatprep.mubr.bf16.mxu0 %v540
        %1285 = vmatmul.mubr.bf16.gmra.mrb[0].mxu0 %v539
        %v1286 = vpop.f32.mrb[0].mxu0
        %v1287 = vadd.f32 0.0, %v1286
        %v1288 = vpop.f32.mrb[0].mxu0
        %v1289 = vadd.f32 0.0, %v1288
        %v1290 = vpop.f32.mrb[0].mxu0
        %v1291 = vadd.f32 0.0, %v1290
        %v1292 = vpop.f32.mrb[0].mxu0
        %v1293 = vadd.f32 0.0, %v1292
        %1294 = vmatprep.mubr.bf16.mxu0 %v542
        %1295 = vmatmul.mubr.bf16.gmra.mrb[0].mxu0 %v541
        %v1296 = vpop.f32.mrb[0].mxu0
        %v1297 = vadd.f32 0.0, %v1296
        %v1298 = vpop.f32.mrb[0].mxu0
        %v1299 = vadd.f32 0.0, %v1298
        %v1300 = vpop.f32.mrb[0].mxu0
        %v1301 = vadd.f32 0.0, %v1300
        %v1302 = vpop.f32.mrb[0].mxu0
        %v1303 = vadd.f32 0.0, %v1302
        %1304 = vmatprep.mubr.bf16.mxu0 %v544
        %1305 = vmatmul.mubr.bf16.gmra.mrb[0].mxu0 %v543
        %v1306 = vpop.f32.mrb[0].mxu0
        %v1307 = vadd.f32 0.0, %v1306
        %v1308 = vpop.f32.mrb[0].mxu0
        %v1309 = vadd.f32 0.0, %v1308
        %v1310 = vpop.f32.mrb[0].mxu0
        %v1311 = vadd.f32 0.0, %v1310
        %v1312 = vpop.f32.mrb[0].mxu0
        %v1313 = vadd.f32 0.0, %v1312
        %1314 = vmatprep.mubr.bf16.mxu0 %v546
        %1315 = vmatmul.mubr.bf16.gmra.mrb[0].mxu0 %v545
        %v1316 = vpop.f32.mrb[0].mxu0
        %v1317 = vadd.f32 0.0, %v1316
        %v1318 = vpop.f32.mrb[0].mxu0
        %v1319 = vadd.f32 0.0, %v1318
        %v1320 = vpop.f32.mrb[0].mxu0
        %v1321 = vadd.f32 0.0, %v1320
        %v1322 = vpop.f32.mrb[0].mxu0
        %v1323 = vadd.f32 0.0, %v1322
        %1324 = vmatprep.mubr.bf16.mxu0 %v548
        %1325 = vmatmul.mubr.bf16.gmra.mrb[0].mxu0 %v547
        %v1326 = vpop.f32.mrb[0].mxu0
        %v1327 = vadd.f32 0.0, %v1326
        %v1328 = vpop.f32.mrb[0].mxu0
        %v1329 = vadd.f32 0.0, %v1328
        %v1330 = vpop.f32.mrb[0].mxu0
        %v1331 = vadd.f32 0.0, %v1330
        %v1332 = vpop.f32.mrb[0].mxu0
        %v1333 = vadd.f32 0.0, %v1332
        %1334 = vmatprep.mubr.bf16.mxu0 %v550
        %1335 = vmatmul.mubr.bf16.gmra.mrb[0].mxu0 %v549
        %v1336 = vpop.f32.mrb[0].mxu0
        %v1337 = vadd.f32 0.0, %v1336
        %v1338 = vpop.f32.mrb[0].mxu0
        %v1339 = vadd.f32 0.0, %v1338
        %v1340 = vpop.f32.mrb[0].mxu0
        %v1341 = vadd.f32 0.0, %v1340
        %v1342 = vpop.f32.mrb[0].mxu0
        %v1343 = vadd.f32 0.0, %v1342
        %1344 = vmatprep.mubr.bf16.mxu0 %v552
        %1345 = vmatmul.mubr.bf16.gmra.mrb[0].mxu0 %v551
        %v1346 = vpop.f32.mrb[0].mxu0
        %v1347 = vadd.f32 0.0, %v1346
        %v1348 = vpop.f32.mrb[0].mxu0
        %v1349 = vadd.f32 0.0, %v1348
        %v1350 = vpop.f32.mrb[0].mxu0
        %v1351 = vadd.f32 0.0, %v1350
        %v1352 = vpop.f32.mrb[0].mxu0
        %v1353 = vadd.f32 0.0, %v1352
        %1354 = vdwg.mxu0
        %1355 = vmatprep.subr.bf16.mxu0 %v942
        %1356 = vmatpush1.bf16.msra.mxu0 %v941
        %1357 = vmatprep.subr.bf16.mxu0 %v948
        %1358 = vmatpush1.bf16.msra.mxu0 %v947
        %1359 = vmatprep.subr.bf16.mxu0 %v954
        %1360 = vmatpush1.bf16.msra.mxu0 %v953
        %1361 = vmatprep.subr.bf16.mxu0 %v960
        %1362 = vmatpush1.bf16.msra.mxu0 %v959
        %1363 = vmatprep.subr.bf16.mxu0 %v966
        %1364 = vmatpush1.bf16.msra.mxu0 %v965
        %1365 = vmatprep.subr.bf16.mxu0 %v972
        %1366 = vmatpush1.bf16.msra.mxu0 %v971
        %1367 = vmatprep.subr.bf16.mxu0 %v978
        %1368 = vmatpush1.bf16.msra.mxu0 %v977
        %1369 = vmatprep.subr.bf16.mxu0 %v984
        %1370 = vmatpush1.bf16.msra.mxu0 %v983
        %1371 = vmatprep.subr.bf16.mxu0 %v990
        %1372 = vmatpush1.bf16.msra.mxu0 %v989
        %1373 = vmatprep.subr.bf16.mxu0 %v996
        %1374 = vmatpush1.bf16.msra.mxu0 %v995
        %1375 = vmatprep.subr.bf16.mxu0 %v1002
        %1376 = vmatpush1.bf16.msra.mxu0 %v1001
        %1377 = vmatprep.subr.bf16.mxu0 %v1008
        %1378 = vmatpush1.bf16.msra.mxu0 %v1007
        %1379 = vmatprep.subr.bf16.mxu0 %v1014
        %1380 = vmatpush1.bf16.msra.mxu0 %v1013
        %1381 = vmatprep.subr.bf16.mxu0 %v1020
        %1382 = vmatpush1.bf16.msra.mxu0 %v1019
        %1383 = vmatprep.subr.bf16.mxu0 %v1026
        %1384 = vmatpush1.bf16.msra.mxu0 %v1025
        %1385 = vmatprep.subr.bf16.mxu0 %v1032
        %1386 = vmatpush1.bf16.msra.mxu0 %v1031
        %1387 = vmatprep.mubr.bf16.mxu0 %v538
        %1388 = vmatmul.mubr.bf16.gmra.mrb[0].mxu0 %v537
        %v1389 = vpop.f32.mrb[0].mxu0
        %v1390 = vadd.f32 0.0, %v1389
        %v1391 = vpop.f32.mrb[0].mxu0
        %v1392 = vadd.f32 0.0, %v1391
        %v1393 = vpop.f32.mrb[0].mxu0
        %v1394 = vadd.f32 0.0, %v1393
        %v1395 = vpop.f32.mrb[0].mxu0
        %v1396 = vadd.f32 0.0, %v1395
        %1397 = vmatprep.mubr.bf16.mxu0 %v540
        %1398 = vmatmul.mubr.bf16.gmra.mrb[0].mxu0 %v539
        %v1399 = vpop.f32.mrb[0].mxu0
        %v1400 = vadd.f32 0.0, %v1399
        %v1401 = vpop.f32.mrb[0].mxu0
        %v1402 = vadd.f32 0.0, %v1401
        %v1403 = vpop.f32.mrb[0].mxu0
        %v1404 = vadd.f32 0.0, %v1403
        %v1405 = vpop.f32.mrb[0].mxu0
        %v1406 = vadd.f32 0.0, %v1405
        %1407 = vmatprep.mubr.bf16.mxu0 %v542
        %1408 = vmatmul.mubr.bf16.gmra.mrb[0].mxu0 %v541
        %v1409 = vpop.f32.mrb[0].mxu0
        %v1410 = vadd.f32 0.0, %v1409
        %v1411 = vpop.f32.mrb[0].mxu0
        %v1412 = vadd.f32 0.0, %v1411
        %v1413 = vpop.f32.mrb[0].mxu0
        %v1414 = vadd.f32 0.0, %v1413
        %v1415 = vpop.f32.mrb[0].mxu0
        %v1416 = vadd.f32 0.0, %v1415
        %1417 = vmatprep.mubr.bf16.mxu0 %v544
        %1418 = vmatmul.mubr.bf16.gmra.mrb[0].mxu0 %v543
        %v1419 = vpop.f32.mrb[0].mxu0
        %v1420 = vadd.f32 0.0, %v1419
        %v1421 = vpop.f32.mrb[0].mxu0
        %v1422 = vadd.f32 0.0, %v1421
        %v1423 = vpop.f32.mrb[0].mxu0
        %v1424 = vadd.f32 0.0, %v1423
        %v1425 = vpop.f32.mrb[0].mxu0
        %v1426 = vadd.f32 0.0, %v1425
        %1427 = vmatprep.mubr.bf16.mxu0 %v546
        %1428 = vmatmul.mubr.bf16.gmra.mrb[0].mxu0 %v545
        %v1429 = vpop.f32.mrb[0].mxu0
        %v1430 = vadd.f32 0.0, %v1429
        %v1431 = vpop.f32.mrb[0].mxu0
        %v1432 = vadd.f32 0.0, %v1431
        %v1433 = vpop.f32.mrb[0].mxu0
        %v1434 = vadd.f32 0.0, %v1433
        %v1435 = vpop.f32.mrb[0].mxu0
        %v1436 = vadd.f32 0.0, %v1435
        %1437 = vmatprep.mubr.bf16.mxu0 %v548
        %1438 = vmatmul.mubr.bf16.gmra.mrb[0].mxu0 %v547
        %v1439 = vpop.f32.mrb[0].mxu0
        %v1440 = vadd.f32 0.0, %v1439
        %v1441 = vpop.f32.mrb[0].mxu0
        %v1442 = vadd.f32 0.0, %v1441
        %v1443 = vpop.f32.mrb[0].mxu0
        %v1444 = vadd.f32 0.0, %v1443
        %v1445 = vpop.f32.mrb[0].mxu0
        %v1446 = vadd.f32 0.0, %v1445
        %1447 = vmatprep.mubr.bf16.mxu0 %v550
        %1448 = vmatmul.mubr.bf16.gmra.mrb[0].mxu0 %v549
        %v1449 = vpop.f32.mrb[0].mxu0
        %v1450 = vadd.f32 0.0, %v1449
        %v1451 = vpop.f32.mrb[0].mxu0
        %v1452 = vadd.f32 0.0, %v1451
        %v1453 = vpop.f32.mrb[0].mxu0
        %v1454 = vadd.f32 0.0, %v1453
        %v1455 = vpop.f32.mrb[0].mxu0
        %v1456 = vadd.f32 0.0, %v1455
        %1457 = vmatprep.mubr.bf16.mxu0 %v552
        %1458 = vmatmul.mubr.bf16.gmra.mrb[0].mxu0 %v551
        %v1459 = vpop.f32.mrb[0].mxu0
        %v1460 = vadd.f32 0.0, %v1459
        %v1461 = vpop.f32.mrb[0].mxu0
        %v1462 = vadd.f32 0.0, %v1461
        %v1463 = vpop.f32.mrb[0].mxu0
        %v1464 = vadd.f32 0.0, %v1463
        %v1465 = vpop.f32.mrb[0].mxu0
        %v1466 = vadd.f32 0.0, %v1465
        %1467 = vdwg.mxu0
        %v1468 = vlaneseq
        %v1469 = vshrl.u32 %v1468, 7
        %v1470 = vsub.s32 0, %v1469
        %v1471 = vrot.slane %v533, %v1470
        %v1472 = vlaneseq
        %v1473 = vshrl.u32 %v1472, 7
        %v1474 = vsub.s32 0, %v1473
        %v1475 = vrot.slane %v534, %v1474
        %v1476 = vadd.f32 %v1164, %v1471
        %v1477 = vadd.f32 %v1166, %v1475
        %v1478 = vadd.f32 %v1168, %v1471
        %v1479 = vadd.f32 %v1170, %v1475
        %v1480 = vadd.f32 %v1174, %v1471
        %v1481 = vadd.f32 %v1176, %v1475
        %v1482 = vadd.f32 %v1178, %v1471
        %v1483 = vadd.f32 %v1180, %v1475
        %v1484 = vadd.f32 %v1184, %v1471
        %v1485 = vadd.f32 %v1186, %v1475
        %v1486 = vadd.f32 %v1188, %v1471
        %v1487 = vadd.f32 %v1190, %v1475
        %v1488 = vadd.f32 %v1194, %v1471
        %v1489 = vadd.f32 %v1196, %v1475
        %v1490 = vadd.f32 %v1198, %v1471
        %v1491 = vadd.f32 %v1200, %v1475
        %v1492 = vadd.f32 %v1204, %v1471
        %v1493 = vadd.f32 %v1206, %v1475
        %v1494 = vadd.f32 %v1208, %v1471
        %v1495 = vadd.f32 %v1210, %v1475
        %v1496 = vadd.f32 %v1214, %v1471
        %v1497 = vadd.f32 %v1216, %v1475
        %v1498 = vadd.f32 %v1218, %v1471
        %v1499 = vadd.f32 %v1220, %v1475
        %v1500 = vadd.f32 %v1224, %v1471
        %v1501 = vadd.f32 %v1226, %v1475
        %v1502 = vadd.f32 %v1228, %v1471
        %v1503 = vadd.f32 %v1230, %v1475
        %v1504 = vadd.f32 %v1234, %v1471
        %v1505 = vadd.f32 %v1236, %v1475
        %v1506 = vadd.f32 %v1238, %v1471
        %v1507 = vadd.f32 %v1240, %v1475
        %v1508 = vpack.c.bf16 %v1478, %v1476
        %v1509 = vpack.c.bf16 %v1479, %v1477
        %v1510 = vpack.c.bf16 %v1482, %v1480
        %v1511 = vpack.c.bf16 %v1483, %v1481
        %v1512 = vpack.c.bf16 %v1486, %v1484
        %v1513 = vpack.c.bf16 %v1487, %v1485
        %v1514 = vpack.c.bf16 %v1490, %v1488
        %v1515 = vpack.c.bf16 %v1491, %v1489
        %v1516 = vpack.c.bf16 %v1494, %v1492
        %v1517 = vpack.c.bf16 %v1495, %v1493
        %v1518 = vpack.c.bf16 %v1498, %v1496
        %v1519 = vpack.c.bf16 %v1499, %v1497
        %v1520 = vpack.c.bf16 %v1502, %v1500
        %v1521 = vpack.c.bf16 %v1503, %v1501
        %v1522 = vpack.c.bf16 %v1506, %v1504
        %v1523 = vpack.c.bf16 %v1507, %v1505
        %v1524 = vlaneseq
        %v1525 = vshrl.u32 %v1524, 7
        %v1526 = vsub.s32 1, %v1525
        %v1527 = vrot.slane %v533, %v1526
        %v1528 = vlaneseq
        %v1529 = vshrl.u32 %v1528, 7
        %v1530 = vsub.s32 1, %v1529
        %v1531 = vrot.slane %v534, %v1530
        %v1532 = vadd.f32 %v1277, %v1527
        %v1533 = vadd.f32 %v1279, %v1531
        %v1534 = vadd.f32 %v1281, %v1527
        %v1535 = vadd.f32 %v1283, %v1531
        %v1536 = vadd.f32 %v1287, %v1527
        %v1537 = vadd.f32 %v1289, %v1531
        %v1538 = vadd.f32 %v1291, %v1527
        %v1539 = vadd.f32 %v1293, %v1531
        %v1540 = vadd.f32 %v1297, %v1527
        %v1541 = vadd.f32 %v1299, %v1531
        %v1542 = vadd.f32 %v1301, %v1527
        %v1543 = vadd.f32 %v1303, %v1531
        %v1544 = vadd.f32 %v1307, %v1527
        %v1545 = vadd.f32 %v1309, %v1531
        %v1546 = vadd.f32 %v1311, %v1527
        %v1547 = vadd.f32 %v1313, %v1531
        %v1548 = vadd.f32 %v1317, %v1527
        %v1549 = vadd.f32 %v1319, %v1531
        %v1550 = vadd.f32 %v1321, %v1527
        %v1551 = vadd.f32 %v1323, %v1531
        %v1552 = vadd.f32 %v1327, %v1527
        %v1553 = vadd.f32 %v1329, %v1531
        %v1554 = vadd.f32 %v1331, %v1527
        %v1555 = vadd.f32 %v1333, %v1531
        %v1556 = vadd.f32 %v1337, %v1527
        %v1557 = vadd.f32 %v1339, %v1531
        %v1558 = vadd.f32 %v1341, %v1527
        %v1559 = vadd.f32 %v1343, %v1531
        %v1560 = vadd.f32 %v1347, %v1527
        %v1561 = vadd.f32 %v1349, %v1531
        %v1562 = vadd.f32 %v1351, %v1527
        %v1563 = vadd.f32 %v1353, %v1531
        %v1564 = vpack.c.bf16 %v1534, %v1532
        %v1565 = vpack.c.bf16 %v1535, %v1533
        %v1566 = vpack.c.bf16 %v1538, %v1536
        %v1567 = vpack.c.bf16 %v1539, %v1537
        %v1568 = vpack.c.bf16 %v1542, %v1540
        %v1569 = vpack.c.bf16 %v1543, %v1541
        %v1570 = vpack.c.bf16 %v1546, %v1544
        %v1571 = vpack.c.bf16 %v1547, %v1545
        %v1572 = vpack.c.bf16 %v1550, %v1548
        %v1573 = vpack.c.bf16 %v1551, %v1549
        %v1574 = vpack.c.bf16 %v1554, %v1552
        %v1575 = vpack.c.bf16 %v1555, %v1553
        %v1576 = vpack.c.bf16 %v1558, %v1556
        %v1577 = vpack.c.bf16 %v1559, %v1557
        %v1578 = vpack.c.bf16 %v1562, %v1560
        %v1579 = vpack.c.bf16 %v1563, %v1561
        %v1580 = vlaneseq
        %v1581 = vshrl.u32 %v1580, 7
        %v1582 = vsub.s32 2, %v1581
        %v1583 = vrot.slane %v533, %v1582
        %v1584 = vlaneseq
        %v1585 = vshrl.u32 %v1584, 7
        %v1586 = vsub.s32 2, %v1585
        %v1587 = vrot.slane %v534, %v1586
        %v1588 = vadd.f32 %v1390, %v1583
        %v1589 = vadd.f32 %v1392, %v1587
        %v1590 = vadd.f32 %v1394, %v1583
        %v1591 = vadd.f32 %v1396, %v1587
        %v1592 = vadd.f32 %v1400, %v1583
        %v1593 = vadd.f32 %v1402, %v1587
        %v1594 = vadd.f32 %v1404, %v1583
        %v1595 = vadd.f32 %v1406, %v1587
        %v1596 = vadd.f32 %v1410, %v1583
        %v1597 = vadd.f32 %v1412, %v1587
        %v1598 = vadd.f32 %v1414, %v1583
        %v1599 = vadd.f32 %v1416, %v1587
        %v1600 = vadd.f32 %v1420, %v1583
        %v1601 = vadd.f32 %v1422, %v1587
        %v1602 = vadd.f32 %v1424, %v1583
        %v1603 = vadd.f32 %v1426, %v1587
        %v1604 = vadd.f32 %v1430, %v1583
        %v1605 = vadd.f32 %v1432, %v1587
        %v1606 = vadd.f32 %v1434, %v1583
        %v1607 = vadd.f32 %v1436, %v1587
        %v1608 = vadd.f32 %v1440, %v1583
        %v1609 = vadd.f32 %v1442, %v1587
        %v1610 = vadd.f32 %v1444, %v1583
        %v1611 = vadd.f32 %v1446, %v1587
        %v1612 = vadd.f32 %v1450, %v1583
        %v1613 = vadd.f32 %v1452, %v1587
        %v1614 = vadd.f32 %v1454, %v1583
        %v1615 = vadd.f32 %v1456, %v1587
        %v1616 = vadd.f32 %v1460, %v1583
        %v1617 = vadd.f32 %v1462, %v1587
        %v1618 = vadd.f32 %v1464, %v1583
        %v1619 = vadd.f32 %v1466, %v1587
        %v1620 = vpack.c.bf16 %v1590, %v1588
        %v1621 = vpack.c.bf16 %v1591, %v1589
        %v1622 = vpack.c.bf16 %v1594, %v1592
        %v1623 = vpack.c.bf16 %v1595, %v1593
        %v1624 = vpack.c.bf16 %v1598, %v1596
        %v1625 = vpack.c.bf16 %v1599, %v1597
        %v1626 = vpack.c.bf16 %v1602, %v1600
        %v1627 = vpack.c.bf16 %v1603, %v1601
        %v1628 = vpack.c.bf16 %v1606, %v1604
        %v1629 = vpack.c.bf16 %v1607, %v1605
        %v1630 = vpack.c.bf16 %v1610, %v1608
        %v1631 = vpack.c.bf16 %v1611, %v1609
        %v1632 = vpack.c.bf16 %v1614, %v1612
        %v1633 = vpack.c.bf16 %v1615, %v1613
        %v1634 = vpack.c.bf16 %v1618, %v1616
        %v1635 = vpack.c.bf16 %v1619, %v1617
        %1636 = vmatprep.subr.bf16.mxu0 0
        %1637 = vmatpush1.bf16.xpose.msra.mxu0 %v1564
        %1638 = vmatprep.subr.bf16.mxu0 0
        %1639 = vmatpush1.bf16.xpose.msra.mxu0 %v1566
        %1640 = vmatprep.subr.bf16.mxu0 0
        %1641 = vmatpush1.bf16.xpose.msra.mxu0 %v1568
        %1642 = vmatprep.subr.bf16.mxu0 0
        %1643 = vmatpush1.bf16.xpose.msra.mxu0 %v1570
        %1644 = vmatprep.subr.bf16.mxu0 0
        %1645 = vmatpush1.bf16.xpose.msra.mxu0 %v1572
        %1646 = vmatprep.subr.bf16.mxu0 0
        %1647 = vmatpush1.bf16.xpose.msra.mxu0 %v1574
        %1648 = vmatprep.subr.bf16.mxu0 0
        %1649 = vmatpush1.bf16.xpose.msra.mxu0 %v1576
        %1650 = vmatprep.subr.bf16.mxu0 0
        %1651 = vmatpush1.bf16.xpose.msra.mxu0 %v1578
        %1652 = vmatprep.subr.bf16.mxu0 0
        %1653 = vmatpush1.bf16.xpose.msra.mxu0 0
        %1654 = vmatprep.subr.bf16.mxu0 0
        %1655 = vmatpush1.bf16.xpose.msra.mxu0 0
        %1656 = vmatprep.subr.bf16.mxu0 0
        %1657 = vmatpush1.bf16.xpose.msra.mxu0 0
        %1658 = vmatprep.subr.bf16.mxu0 0
        %1659 = vmatpush1.bf16.xpose.msra.mxu0 0
        %1660 = vmatprep.subr.bf16.mxu0 0
        %1661 = vmatpush1.bf16.xpose.msra.mxu0 0
        %1662 = vmatprep.subr.bf16.mxu0 0
        %1663 = vmatpush1.bf16.xpose.msra.mxu0 0
        %1664 = vmatprep.subr.bf16.mxu0 0
        %1665 = vmatpush1.bf16.xpose.msra.mxu0 0
        %1666 = vmatprep.subr.bf16.mxu0 0
        %1667 = vmatpush1.bf16.xpose.msra.mxu0 0
        %1668 = vmatprep.mubr.bf16.mxu0 0
        %1669 = vmatmul.mubr.bf16.gmra.mrb[0].mxu0 %v1508
        %v1670 = vpop.f32.mrb[0].mxu0
        %v1671 = vadd.f32 0.0, %v1670
        %v1672 = vpop.f32.mrb[0].mxu0
        %v1673 = vpop.f32.mrb[0].mxu0
        %v1674 = vadd.f32 0.0, %v1673
        %v1675 = vpop.f32.mrb[0].mxu0
        %1676 = vmatprep.mubr.bf16.mxu0 0
        %1677 = vmatmul.mubr.bf16.gmra.mrb[0].mxu0 %v1510
        %v1678 = vpop.f32.mrb[0].mxu0
        %v1679 = vadd.f32 0.0, %v1678
        %v1680 = vpop.f32.mrb[0].mxu0
        %v1681 = vpop.f32.mrb[0].mxu0
        %v1682 = vadd.f32 0.0, %v1681
        %v1683 = vpop.f32.mrb[0].mxu0
        %1684 = vmatprep.mubr.bf16.mxu0 0
        %1685 = vmatmul.mubr.bf16.gmra.mrb[0].mxu0 %v1512
        %v1686 = vpop.f32.mrb[0].mxu0
        %v1687 = vadd.f32 0.0, %v1686
        %v1688 = vpop.f32.mrb[0].mxu0
        %v1689 = vpop.f32.mrb[0].mxu0
        %v1690 = vadd.f32 0.0, %v1689
        %v1691 = vpop.f32.mrb[0].mxu0
        %1692 = vmatprep.mubr.bf16.mxu0 0
        %1693 = vmatmul.mubr.bf16.gmra.mrb[0].mxu0 %v1514
        %v1694 = vpop.f32.mrb[0].mxu0
        %v1695 = vadd.f32 0.0, %v1694
        %v1696 = vpop.f32.mrb[0].mxu0
        %v1697 = vpop.f32.mrb[0].mxu0
        %v1698 = vadd.f32 0.0, %v1697
        %v1699 = vpop.f32.mrb[0].mxu0
        %1700 = vmatprep.mubr.bf16.mxu0 0
        %1701 = vmatmul.mubr.bf16.gmra.mrb[0].mxu0 %v1516
        %v1702 = vpop.f32.mrb[0].mxu0
        %v1703 = vadd.f32 0.0, %v1702
        %v1704 = vpop.f32.mrb[0].mxu0
        %v1705 = vpop.f32.mrb[0].mxu0
        %v1706 = vadd.f32 0.0, %v1705
        %v1707 = vpop.f32.mrb[0].mxu0
        %1708 = vmatprep.mubr.bf16.mxu0 0
        %1709 = vmatmul.mubr.bf16.gmra.mrb[0].mxu0 %v1518
        %v1710 = vpop.f32.mrb[0].mxu0
        %v1711 = vadd.f32 0.0, %v1710
        %v1712 = vpop.f32.mrb[0].mxu0
        %v1713 = vpop.f32.mrb[0].mxu0
        %v1714 = vadd.f32 0.0, %v1713
        %v1715 = vpop.f32.mrb[0].mxu0
        %1716 = vmatprep.mubr.bf16.mxu0 0
        %1717 = vmatmul.mubr.bf16.gmra.mrb[0].mxu0 %v1520
        %v1718 = vpop.f32.mrb[0].mxu0
        %v1719 = vadd.f32 0.0, %v1718
        %v1720 = vpop.f32.mrb[0].mxu0
        %v1721 = vpop.f32.mrb[0].mxu0
        %v1722 = vadd.f32 0.0, %v1721
        %v1723 = vpop.f32.mrb[0].mxu0
        %1724 = vmatprep.mubr.bf16.mxu0 0
        %1725 = vmatmul.mubr.bf16.gmra.mrb[0].mxu0 %v1522
        %v1726 = vpop.f32.mrb[0].mxu0
        %v1727 = vadd.f32 0.0, %v1726
        %v1728 = vpop.f32.mrb[0].mxu0
        %v1729 = vpop.f32.mrb[0].mxu0
        %v1730 = vadd.f32 0.0, %v1729
        %v1731 = vpop.f32.mrb[0].mxu0
        %1732 = vdwg.mxu0
        %1733 = vmax.xlane.f32.xlu0 %v1671
        %v1734 = vpop.xlane.xlu0 %1733
        %1735 = vmax.xlane.f32.xlu0 %v1674
        %v1736 = vpop.xlane.xlu0 %1735
        %1737 = vmax.xlane.f32.xlu0 %v1679
        %v1738 = vpop.xlane.xlu0 %1737
        %1739 = vmax.xlane.f32.xlu0 %v1682
        %v1740 = vpop.xlane.xlu0 %1739
        %1741 = vmax.xlane.f32.xlu0 %v1687
        %v1742 = vpop.xlane.xlu0 %1741
        %1743 = vmax.xlane.f32.xlu0 %v1690
        %v1744 = vpop.xlane.xlu0 %1743
        %1745 = vmax.xlane.f32.xlu0 %v1695
        %v1746 = vpop.xlane.xlu0 %1745
        %1747 = vmax.xlane.f32.xlu0 %v1698
        %v1748 = vpop.xlane.xlu0 %1747
        %1749 = vmax.xlane.f32.xlu0 %v1703
        %v1750 = vpop.xlane.xlu0 %1749
        %1751 = vmax.xlane.f32.xlu0 %v1706
        %v1752 = vpop.xlane.xlu0 %1751
        %1753 = vmax.xlane.f32.xlu0 %v1711
        %v1754 = vpop.xlane.xlu0 %1753
        %1755 = vmax.xlane.f32.xlu0 %v1714
        %v1756 = vpop.xlane.xlu0 %1755
        %1757 = vmax.xlane.f32.xlu0 %v1719
        %v1758 = vpop.xlane.xlu0 %1757
        %1759 = vmax.xlane.f32.xlu0 %v1722
        %v1760 = vpop.xlane.xlu0 %1759
        %1761 = vmax.xlane.f32.xlu0 %v1727
        %v1762 = vpop.xlane.xlu0 %1761
        %1763 = vmax.xlane.f32.xlu0 %v1730
        %v1764 = vpop.xlane.xlu0 %1763
        %v1765 = vsub.f32 %v1671, %v1734
        %v1766 = vsub.f32 %v1674, %v1736
        %v1767 = vsub.f32 %v1679, %v1738
        %v1768 = vsub.f32 %v1682, %v1740
        %v1769 = vsub.f32 %v1687, %v1742
        %v1770 = vsub.f32 %v1690, %v1744
        %v1771 = vsub.f32 %v1695, %v1746
        %v1772 = vsub.f32 %v1698, %v1748
        %v1773 = vsub.f32 %v1703, %v1750
        %v1774 = vsub.f32 %v1706, %v1752
        %v1775 = vsub.f32 %v1711, %v1754
        %v1776 = vsub.f32 %v1714, %v1756
        %v1777 = vsub.f32 %v1719, %v1758
        %v1778 = vsub.f32 %v1722, %v1760
        %v1779 = vsub.f32 %v1727, %v1762
        %v1780 = vsub.f32 %v1730, %v1764
        %v1781 = vmul.f32 %v1765, 1.442695
        %v1782 = vpow.pop %v1781
        %v1783 = vmul.f32 %v1766, 1.442695
        %v1784 = vpow.pop %v1783
        %v1785 = vmul.f32 %v1767, 1.442695
        %v1786 = vpow.pop %v1785
        %v1787 = vmul.f32 %v1768, 1.442695
        %v1788 = vpow.pop %v1787
        %v1789 = vmul.f32 %v1769, 1.442695
        %v1790 = vpow.pop %v1789
        %v1791 = vmul.f32 %v1770, 1.442695
        %v1792 = vpow.pop %v1791
        %v1793 = vmul.f32 %v1771, 1.442695
        %v1794 = vpow.pop %v1793
        %v1795 = vmul.f32 %v1772, 1.442695
        %v1796 = vpow.pop %v1795
        %v1797 = vmul.f32 %v1773, 1.442695
        %v1798 = vpow.pop %v1797
        %v1799 = vmul.f32 %v1774, 1.442695
        %v1800 = vpow.pop %v1799
        %v1801 = vmul.f32 %v1775, 1.442695
        %v1802 = vpow.pop %v1801
        %v1803 = vmul.f32 %v1776, 1.442695
        %v1804 = vpow.pop %v1803
        %v1805 = vmul.f32 %v1777, 1.442695
        %v1806 = vpow.pop %v1805
        %v1807 = vmul.f32 %v1778, 1.442695
        %v1808 = vpow.pop %v1807
        %v1809 = vmul.f32 %v1779, 1.442695
        %v1810 = vpow.pop %v1809
        %v1811 = vmul.f32 %v1780, 1.442695
        %v1812 = vpow.pop %v1811
        %1813 = vadd.xlane.f32.xlu0 %v1782
        %v1814 = vpop.xlane.xlu0 %1813
        %1815 = vadd.xlane.f32.xlu0 %v1784
        %v1816 = vpop.xlane.xlu0 %1815
        %1817 = vadd.xlane.f32.xlu0 %v1786
        %v1818 = vpop.xlane.xlu0 %1817
        %1819 = vadd.xlane.f32.xlu0 %v1788
        %v1820 = vpop.xlane.xlu0 %1819
        %1821 = vadd.xlane.f32.xlu0 %v1790
        %v1822 = vpop.xlane.xlu0 %1821
        %1823 = vadd.xlane.f32.xlu0 %v1792
        %v1824 = vpop.xlane.xlu0 %1823
        %1825 = vadd.xlane.f32.xlu0 %v1794
        %v1826 = vpop.xlane.xlu0 %1825
        %1827 = vadd.xlane.f32.xlu0 %v1796
        %v1828 = vpop.xlane.xlu0 %1827
        %1829 = vadd.xlane.f32.xlu0 %v1798
        %v1830 = vpop.xlane.xlu0 %1829
        %1831 = vadd.xlane.f32.xlu0 %v1800
        %v1832 = vpop.xlane.xlu0 %1831
        %1833 = vadd.xlane.f32.xlu0 %v1802
        %v1834 = vpop.xlane.xlu0 %1833
        %1835 = vadd.xlane.f32.xlu0 %v1804
        %v1836 = vpop.xlane.xlu0 %1835
        %1837 = vadd.xlane.f32.xlu0 %v1806
        %v1838 = vpop.xlane.xlu0 %1837
        %1839 = vadd.xlane.f32.xlu0 %v1808
        %v1840 = vpop.xlane.xlu0 %1839
        %1841 = vadd.xlane.f32.xlu0 %v1810
        %v1842 = vpop.xlane.xlu0 %1841
        %1843 = vadd.xlane.f32.xlu0 %v1812
        %v1844 = vpop.xlane.xlu0 %1843
        %v1845 = vrcp.pop %v1814
        %v1846 = vrcp.pop %v1816
        %v1847 = vrcp.pop %v1818
        %v1848 = vrcp.pop %v1820
        %v1849 = vrcp.pop %v1822
        %v1850 = vrcp.pop %v1824
        %v1851 = vrcp.pop %v1826
        %v1852 = vrcp.pop %v1828
        %v1853 = vrcp.pop %v1830
        %v1854 = vrcp.pop %v1832
        %v1855 = vrcp.pop %v1834
        %v1856 = vrcp.pop %v1836
        %v1857 = vrcp.pop %v1838
        %v1858 = vrcp.pop %v1840
        %v1859 = vrcp.pop %v1842
        %v1860 = vrcp.pop %v1844
        %v1861 = vmul.f32 %v1782, %v1845
        %v1862 = vmul.f32 %v1784, %v1846
        %v1863 = vmul.f32 %v1786, %v1847
        %v1864 = vmul.f32 %v1788, %v1848
        %v1865 = vmul.f32 %v1790, %v1849
        %v1866 = vmul.f32 %v1792, %v1850
        %v1867 = vmul.f32 %v1794, %v1851
        %v1868 = vmul.f32 %v1796, %v1852
        %v1869 = vmul.f32 %v1798, %v1853
        %v1870 = vmul.f32 %v1800, %v1854
        %v1871 = vmul.f32 %v1802, %v1855
        %v1872 = vmul.f32 %v1804, %v1856
        %v1873 = vmul.f32 %v1806, %v1857
        %v1874 = vmul.f32 %v1808, %v1858
        %v1875 = vmul.f32 %v1810, %v1859
        %v1876 = vmul.f32 %v1812, %v1860
        %v1877 = vpack.c.bf16 %v1862, %v1861
        %v1878 = vpack.c.bf16 %v1864, %v1863
        %v1879 = vpack.c.bf16 %v1866, %v1865
        %v1880 = vpack.c.bf16 %v1868, %v1867
        %v1881 = vpack.c.bf16 %v1870, %v1869
        %v1882 = vpack.c.bf16 %v1872, %v1871
        %v1883 = vpack.c.bf16 %v1874, %v1873
        %v1884 = vpack.c.bf16 %v1876, %v1875
        %1885 = vmatprep.subr.bf16.mxu0 0
        %1886 = vmatpush1.bf16.msra.mxu0 %v1620
        %1887 = vmatprep.subr.bf16.mxu0 0
        %1888 = vmatpush1.bf16.msra.mxu0 %v1622
        %1889 = vmatprep.subr.bf16.mxu0 0
        %1890 = vmatpush1.bf16.msra.mxu0 %v1624
        %1891 = vmatprep.subr.bf16.mxu0 0
        %1892 = vmatpush1.bf16.msra.mxu0 %v1626
        %1893 = vmatprep.subr.bf16.mxu0 0
        %1894 = vmatpush1.bf16.msra.mxu0 %v1628
        %1895 = vmatprep.subr.bf16.mxu0 0
        %1896 = vmatpush1.bf16.msra.mxu0 %v1630
        %1897 = vmatprep.subr.bf16.mxu0 0
        %1898 = vmatpush1.bf16.msra.mxu0 %v1632
        %1899 = vmatprep.subr.bf16.mxu0 0
        %1900 = vmatpush1.bf16.msra.mxu0 %v1634
        %1901 = vmatprep.subr.bf16.mxu0 0
        %1902 = vmatpush1.bf16.msra.mxu0 0
        %1903 = vmatprep.subr.bf16.mxu0 0
        %1904 = vmatpush1.bf16.msra.mxu0 0
        %1905 = vmatprep.subr.bf16.mxu0 0
        %1906 = vmatpush1.bf16.msra.mxu0 0
        %1907 = vmatprep.subr.bf16.mxu0 0
        %1908 = vmatpush1.bf16.msra.mxu0 0
        %1909 = vmatprep.subr.bf16.mxu0 0
        %1910 = vmatpush1.bf16.msra.mxu0 0
        %1911 = vmatprep.subr.bf16.mxu0 0
        %1912 = vmatpush1.bf16.msra.mxu0 0
        %1913 = vmatprep.subr.bf16.mxu0 0
        %1914 = vmatpush1.bf16.msra.mxu0 0
        %1915 = vmatprep.subr.bf16.mxu0 0
        %1916 = vmatpush1.bf16.msra.mxu0 0
        %1917 = vmatprep.mubr.bf16.mxu0 0
        %1918 = vmatmul.mubr.bf16.gmra.mrb[0].mxu0 %v1877
        %v1919 = vpop.f32.mrb[0].mxu0
        %v1920 = vadd.f32 0.0, %v1919
        %v1921 = vpop.f32.mrb[0].mxu0
        %v1922 = vpop.f32.mrb[0].mxu0
        %v1923 = vadd.f32 0.0, %v1922
        %v1924 = vpop.f32.mrb[0].mxu0
        %1925 = vmatprep.mubr.bf16.mxu0 0
        %1926 = vmatmul.mubr.bf16.gmra.mrb[0].mxu0 %v1878
        %v1927 = vpop.f32.mrb[0].mxu0
        %v1928 = vadd.f32 0.0, %v1927
        %v1929 = vpop.f32.mrb[0].mxu0
        %v1930 = vpop.f32.mrb[0].mxu0
        %v1931 = vadd.f32 0.0, %v1930
        %v1932 = vpop.f32.mrb[0].mxu0
        %1933 = vmatprep.mubr.bf16.mxu0 0
        %1934 = vmatmul.mubr.bf16.gmra.mrb[0].mxu0 %v1879
        %v1935 = vpop.f32.mrb[0].mxu0
        %v1936 = vadd.f32 0.0, %v1935
        %v1937 = vpop.f32.mrb[0].mxu0
        %v1938 = vpop.f32.mrb[0].mxu0
        %v1939 = vadd.f32 0.0, %v1938
        %v1940 = vpop.f32.mrb[0].mxu0
        %1941 = vmatprep.mubr.bf16.mxu0 0
        %1942 = vmatmul.mubr.bf16.gmra.mrb[0].mxu0 %v1880
        %v1943 = vpop.f32.mrb[0].mxu0
        %v1944 = vadd.f32 0.0, %v1943
        %v1945 = vpop.f32.mrb[0].mxu0
        %v1946 = vpop.f32.mrb[0].mxu0
        %v1947 = vadd.f32 0.0, %v1946
        %v1948 = vpop.f32.mrb[0].mxu0
        %1949 = vmatprep.mubr.bf16.mxu0 0
        %1950 = vmatmul.mubr.bf16.gmra.mrb[0].mxu0 %v1881
        %v1951 = vpop.f32.mrb[0].mxu0
        %v1952 = vadd.f32 0.0, %v1951
        %v1953 = vpop.f32.mrb[0].mxu0
        %v1954 = vpop.f32.mrb[0].mxu0
        %v1955 = vadd.f32 0.0, %v1954
        %v1956 = vpop.f32.mrb[0].mxu0
        %1957 = vmatprep.mubr.bf16.mxu0 0
        %1958 = vmatmul.mubr.bf16.gmra.mrb[0].mxu0 %v1882
        %v1959 = vpop.f32.mrb[0].mxu0
        %v1960 = vadd.f32 0.0, %v1959
        %v1961 = vpop.f32.mrb[0].mxu0
        %v1962 = vpop.f32.mrb[0].mxu0
        %v1963 = vadd.f32 0.0, %v1962
        %v1964 = vpop.f32.mrb[0].mxu0
        %1965 = vmatprep.mubr.bf16.mxu0 0
        %1966 = vmatmul.mubr.bf16.gmra.mrb[0].mxu0 %v1883
        %v1967 = vpop.f32.mrb[0].mxu0
        %v1968 = vadd.f32 0.0, %v1967
        %v1969 = vpop.f32.mrb[0].mxu0
        %v1970 = vpop.f32.mrb[0].mxu0
        %v1971 = vadd.f32 0.0, %v1970
        %v1972 = vpop.f32.mrb[0].mxu0
        %1973 = vmatprep.mubr.bf16.mxu0 0
        %1974 = vmatmul.mubr.bf16.gmra.mrb[0].mxu0 %v1884
        %v1975 = vpop.f32.mrb[0].mxu0
        %v1976 = vadd.f32 0.0, %v1975
        %v1977 = vpop.f32.mrb[0].mxu0
        %v1978 = vpop.f32.mrb[0].mxu0
        %v1979 = vadd.f32 0.0, %v1978
        %v1980 = vpop.f32.mrb[0].mxu0
        %1981 = vdwg.mxu0
        %1982 = vmatprep.subr.bf16.mxu0 0
        %1983 = vmatpush1.bf16.xpose.msra.mxu0 %v1565
        %1984 = vmatprep.subr.bf16.mxu0 0
        %1985 = vmatpush1.bf16.xpose.msra.mxu0 %v1567
        %1986 = vmatprep.subr.bf16.mxu0 0
        %1987 = vmatpush1.bf16.xpose.msra.mxu0 %v1569
        %1988 = vmatprep.subr.bf16.mxu0 0
        %1989 = vmatpush1.bf16.xpose.msra.mxu0 %v1571
        %1990 = vmatprep.subr.bf16.mxu0 0
        %1991 = vmatpush1.bf16.xpose.msra.mxu0 %v1573
        %1992 = vmatprep.subr.bf16.mxu0 0
        %1993 = vmatpush1.bf16.xpose.msra.mxu0 %v1575
        %1994 = vmatprep.subr.bf16.mxu0 0
        %1995 = vmatpush1.bf16.xpose.msra.mxu0 %v1577
        %1996 = vmatprep.subr.bf16.mxu0 0
        %1997 = vmatpush1.bf16.xpose.msra.mxu0 %v1579
        %1998 = vmatprep.subr.bf16.mxu0 0
        %1999 = vmatpush1.bf16.xpose.msra.mxu0 0
        %2000 = vmatprep.subr.bf16.mxu0 0
        %2001 = vmatpush1.bf16.xpose.msra.mxu0 0
        %2002 = vmatprep.subr.bf16.mxu0 0
        %2003 = vmatpush1.bf16.xpose.msra.mxu0 0
        %2004 = vmatprep.subr.bf16.mxu0 0
        %2005 = vmatpush1.bf16.xpose.msra.mxu0 0
        %2006 = vmatprep.subr.bf16.mxu0 0
        %2007 = vmatpush1.bf16.xpose.msra.mxu0 0
        %2008 = vmatprep.subr.bf16.mxu0 0
        %2009 = vmatpush1.bf16.xpose.msra.mxu0 0
        %2010 = vmatprep.subr.bf16.mxu0 0
        %2011 = vmatpush1.bf16.xpose.msra.mxu0 0
        %2012 = vmatprep.subr.bf16.mxu0 0
        %2013 = vmatpush1.bf16.xpose.msra.mxu0 0
        %2014 = vmatprep.mubr.bf16.mxu0 0
        %2015 = vmatmul.mubr.bf16.gmra.mrb[0].mxu0 %v1509
        %v2016 = vpop.f32.mrb[0].mxu0
        %v2017 = vadd.f32 0.0, %v2016
        %v2018 = vpop.f32.mrb[0].mxu0
        %v2019 = vpop.f32.mrb[0].mxu0
        %v2020 = vadd.f32 0.0, %v2019
        %v2021 = vpop.f32.mrb[0].mxu0
        %2022 = vmatprep.mubr.bf16.mxu0 0
        %2023 = vmatmul.mubr.bf16.gmra.mrb[0].mxu0 %v1511
        %v2024 = vpop.f32.mrb[0].mxu0
        %v2025 = vadd.f32 0.0, %v2024
        %v2026 = vpop.f32.mrb[0].mxu0
        %v2027 = vpop.f32.mrb[0].mxu0
        %v2028 = vadd.f32 0.0, %v2027
        %v2029 = vpop.f32.mrb[0].mxu0
        %2030 = vmatprep.mubr.bf16.mxu0 0
        %2031 = vmatmul.mubr.bf16.gmra.mrb[0].mxu0 %v1513
        %v2032 = vpop.f32.mrb[0].mxu0
        %v2033 = vadd.f32 0.0, %v2032
        %v2034 = vpop.f32.mrb[0].mxu0
        %v2035 = vpop.f32.mrb[0].mxu0
        %v2036 = vadd.f32 0.0, %v2035
        %v2037 = vpop.f32.mrb[0].mxu0
        %2038 = vmatprep.mubr.bf16.mxu0 0
        %2039 = vmatmul.mubr.bf16.gmra.mrb[0].mxu0 %v1515
        %v2040 = vpop.f32.mrb[0].mxu0
        %v2041 = vadd.f32 0.0, %v2040
        %v2042 = vpop.f32.mrb[0].mxu0
        %v2043 = vpop.f32.mrb[0].mxu0
        %v2044 = vadd.f32 0.0, %v2043
        %v2045 = vpop.f32.mrb[0].mxu0
        %2046 = vmatprep.mubr.bf16.mxu0 0
        %2047 = vmatmul.mubr.bf16.gmra.mrb[0].mxu0 %v1517
        %v2048 = vpop.f32.mrb[0].mxu0
        %v2049 = vadd.f32 0.0, %v2048
        %v2050 = vpop.f32.mrb[0].mxu0
        %v2051 = vpop.f32.mrb[0].mxu0
        %v2052 = vadd.f32 0.0, %v2051
        %v2053 = vpop.f32.mrb[0].mxu0
        %2054 = vmatprep.mubr.bf16.mxu0 0
        %2055 = vmatmul.mubr.bf16.gmra.mrb[0].mxu0 %v1519
        %v2056 = vpop.f32.mrb[0].mxu0
        %v2057 = vadd.f32 0.0, %v2056
        %v2058 = vpop.f32.mrb[0].mxu0
        %v2059 = vpop.f32.mrb[0].mxu0
        %v2060 = vadd.f32 0.0, %v2059
        %v2061 = vpop.f32.mrb[0].mxu0
        %2062 = vmatprep.mubr.bf16.mxu0 0
        %2063 = vmatmul.mubr.bf16.gmra.mrb[0].mxu0 %v1521
        %v2064 = vpop.f32.mrb[0].mxu0
        %v2065 = vadd.f32 0.0, %v2064
        %v2066 = vpop.f32.mrb[0].mxu0
        %v2067 = vpop.f32.mrb[0].mxu0
        %v2068 = vadd.f32 0.0, %v2067
        %v2069 = vpop.f32.mrb[0].mxu0
        %2070 = vmatprep.mubr.bf16.mxu0 0
        %2071 = vmatmul.mubr.bf16.gmra.mrb[0].mxu0 %v1523
        %v2072 = vpop.f32.mrb[0].mxu0
        %v2073 = vadd.f32 0.0, %v2072
        %v2074 = vpop.f32.mrb[0].mxu0
        %v2075 = vpop.f32.mrb[0].mxu0
        %v2076 = vadd.f32 0.0, %v2075
        %v2077 = vpop.f32.mrb[0].mxu0
        %2078 = vdwg.mxu0
        %2079 = vmax.xlane.f32.xlu0 %v2017
        %v2080 = vpop.xlane.xlu0 %2079
        %2081 = vmax.xlane.f32.xlu0 %v2020
        %v2082 = vpop.xlane.xlu0 %2081
        %2083 = vmax.xlane.f32.xlu0 %v2025
        %v2084 = vpop.xlane.xlu0 %2083
        %2085 = vmax.xlane.f32.xlu0 %v2028
        %v2086 = vpop.xlane.xlu0 %2085
        %2087 = vmax.xlane.f32.xlu0 %v2033
        %v2088 = vpop.xlane.xlu0 %2087
        %2089 = vmax.xlane.f32.xlu0 %v2036
        %v2090 = vpop.xlane.xlu0 %2089
        %2091 = vmax.xlane.f32.xlu0 %v2041
        %v2092 = vpop.xlane.xlu0 %2091
        %2093 = vmax.xlane.f32.xlu0 %v2044
        %v2094 = vpop.xlane.xlu0 %2093
        %2095 = vmax.xlane.f32.xlu0 %v2049
        %v2096 = vpop.xlane.xlu0 %2095
        %2097 = vmax.xlane.f32.xlu0 %v2052
        %v2098 = vpop.xlane.xlu0 %2097
        %2099 = vmax.xlane.f32.xlu0 %v2057
        %v2100 = vpop.xlane.xlu0 %2099
        %2101 = vmax.xlane.f32.xlu0 %v2060
        %v2102 = vpop.xlane.xlu0 %2101
        %2103 = vmax.xlane.f32.xlu0 %v2065
        %v2104 = vpop.xlane.xlu0 %2103
        %2105 = vmax.xlane.f32.xlu0 %v2068
        %v2106 = vpop.xlane.xlu0 %2105
        %2107 = vmax.xlane.f32.xlu0 %v2073
        %v2108 = vpop.xlane.xlu0 %2107
        %2109 = vmax.xlane.f32.xlu0 %v2076
        %v2110 = vpop.xlane.xlu0 %2109
        %v2111 = vsub.f32 %v2017, %v2080
        %v2112 = vsub.f32 %v2020, %v2082
        %v2113 = vsub.f32 %v2025, %v2084
        %v2114 = vsub.f32 %v2028, %v2086
        %v2115 = vsub.f32 %v2033, %v2088
        %v2116 = vsub.f32 %v2036, %v2090
        %v2117 = vsub.f32 %v2041, %v2092
        %v2118 = vsub.f32 %v2044, %v2094
        %v2119 = vsub.f32 %v2049, %v2096
        %v2120 = vsub.f32 %v2052, %v2098
        %v2121 = vsub.f32 %v2057, %v2100
        %v2122 = vsub.f32 %v2060, %v2102
        %v2123 = vsub.f32 %v2065, %v2104
        %v2124 = vsub.f32 %v2068, %v2106
        %v2125 = vsub.f32 %v2073, %v2108
        %v2126 = vsub.f32 %v2076, %v2110
        %v2127 = vmul.f32 %v2111, 1.442695
        %v2128 = vpow.pop %v2127
        %v2129 = vmul.f32 %v2112, 1.442695
        %v2130 = vpow.pop %v2129
        %v2131 = vmul.f32 %v2113, 1.442695
        %v2132 = vpow.pop %v2131
        %v2133 = vmul.f32 %v2114, 1.442695
        %v2134 = vpow.pop %v2133
        %v2135 = vmul.f32 %v2115, 1.442695
        %v2136 = vpow.pop %v2135
        %v2137 = vmul.f32 %v2116, 1.442695
        %v2138 = vpow.pop %v2137
        %v2139 = vmul.f32 %v2117, 1.442695
        %v2140 = vpow.pop %v2139
        %v2141 = vmul.f32 %v2118, 1.442695
        %v2142 = vpow.pop %v2141
        %v2143 = vmul.f32 %v2119, 1.442695
        %v2144 = vpow.pop %v2143
        %v2145 = vmul.f32 %v2120, 1.442695
        %v2146 = vpow.pop %v2145
        %v2147 = vmul.f32 %v2121, 1.442695
        %v2148 = vpow.pop %v2147
        %v2149 = vmul.f32 %v2122, 1.442695
        %v2150 = vpow.pop %v2149
        %v2151 = vmul.f32 %v2123, 1.442695
        %v2152 = vpow.pop %v2151
        %v2153 = vmul.f32 %v2124, 1.442695
        %v2154 = vpow.pop %v2153
        %v2155 = vmul.f32 %v2125, 1.442695
        %v2156 = vpow.pop %v2155
        %v2157 = vmul.f32 %v2126, 1.442695
        %v2158 = vpow.pop %v2157
        %2159 = vadd.xlane.f32.xlu0 %v2128
        %v2160 = vpop.xlane.xlu0 %2159
        %2161 = vadd.xlane.f32.xlu0 %v2130
        %v2162 = vpop.xlane.xlu0 %2161
        %2163 = vadd.xlane.f32.xlu0 %v2132
        %v2164 = vpop.xlane.xlu0 %2163
        %2165 = vadd.xlane.f32.xlu0 %v2134
        %v2166 = vpop.xlane.xlu0 %2165
        %2167 = vadd.xlane.f32.xlu0 %v2136
        %v2168 = vpop.xlane.xlu0 %2167
        %2169 = vadd.xlane.f32.xlu0 %v2138
        %v2170 = vpop.xlane.xlu0 %2169
        %2171 = vadd.xlane.f32.xlu0 %v2140
        %v2172 = vpop.xlane.xlu0 %2171
        %2173 = vadd.xlane.f32.xlu0 %v2142
        %v2174 = vpop.xlane.xlu0 %2173
        %2175 = vadd.xlane.f32.xlu0 %v2144
        %v2176 = vpop.xlane.xlu0 %2175
        %2177 = vadd.xlane.f32.xlu0 %v2146
        %v2178 = vpop.xlane.xlu0 %2177
        %2179 = vadd.xlane.f32.xlu0 %v2148
        %v2180 = vpop.xlane.xlu0 %2179
        %2181 = vadd.xlane.f32.xlu0 %v2150
        %v2182 = vpop.xlane.xlu0 %2181
        %2183 = vadd.xlane.f32.xlu0 %v2152
        %v2184 = vpop.xlane.xlu0 %2183
        %2185 = vadd.xlane.f32.xlu0 %v2154
        %v2186 = vpop.xlane.xlu0 %2185
        %2187 = vadd.xlane.f32.xlu0 %v2156
        %v2188 = vpop.xlane.xlu0 %2187
        %2189 = vadd.xlane.f32.xlu0 %v2158
        %v2190 = vpop.xlane.xlu0 %2189
        %v2191 = vrcp.pop %v2160
        %v2192 = vrcp.pop %v2162
        %v2193 = vrcp.pop %v2164
        %v2194 = vrcp.pop %v2166
        %v2195 = vrcp.pop %v2168
        %v2196 = vrcp.pop %v2170
        %v2197 = vrcp.pop %v2172
        %v2198 = vrcp.pop %v2174
        %v2199 = vrcp.pop %v2176
        %v2200 = vrcp.pop %v2178
        %v2201 = vrcp.pop %v2180
        %v2202 = vrcp.pop %v2182
        %v2203 = vrcp.pop %v2184
        %v2204 = vrcp.pop %v2186
        %v2205 = vrcp.pop %v2188
        %v2206 = vrcp.pop %v2190
        %v2207 = vmul.f32 %v2128, %v2191
        %v2208 = vmul.f32 %v2130, %v2192
        %v2209 = vmul.f32 %v2132, %v2193
        %v2210 = vmul.f32 %v2134, %v2194
        %v2211 = vmul.f32 %v2136, %v2195
        %v2212 = vmul.f32 %v2138, %v2196
        %v2213 = vmul.f32 %v2140, %v2197
        %v2214 = vmul.f32 %v2142, %v2198
        %v2215 = vmul.f32 %v2144, %v2199
        %v2216 = vmul.f32 %v2146, %v2200
        %v2217 = vmul.f32 %v2148, %v2201
        %v2218 = vmul.f32 %v2150, %v2202
        %v2219 = vmul.f32 %v2152, %v2203
        %v2220 = vmul.f32 %v2154, %v2204
        %v2221 = vmul.f32 %v2156, %v2205
        %v2222 = vmul.f32 %v2158, %v2206
        %v2223 = vpack.c.bf16 %v2208, %v2207
        %v2224 = vpack.c.bf16 %v2210, %v2209
        %v2225 = vpack.c.bf16 %v2212, %v2211
        %v2226 = vpack.c.bf16 %v2214, %v2213
        %v2227 = vpack.c.bf16 %v2216, %v2215
        %v2228 = vpack.c.bf16 %v2218, %v2217
        %v2229 = vpack.c.bf16 %v2220, %v2219
        %v2230 = vpack.c.bf16 %v2222, %v2221
        %2231 = vmatprep.subr.bf16.mxu0 0
        %2232 = vmatpush1.bf16.msra.mxu0 %v1621
        %2233 = vmatprep.subr.bf16.mxu0 0
        %2234 = vmatpush1.bf16.msra.mxu0 %v1623
        %2235 = vmatprep.subr.bf16.mxu0 0
        %2236 = vmatpush1.bf16.msra.mxu0 %v1625
        %2237 = vmatprep.subr.bf16.mxu0 0
        %2238 = vmatpush1.bf16.msra.mxu0 %v1627
        %2239 = vmatprep.subr.bf16.mxu0 0
        %2240 = vmatpush1.bf16.msra.mxu0 %v1629
        %2241 = vmatprep.subr.bf16.mxu0 0
        %2242 = vmatpush1.bf16.msra.mxu0 %v1631
        %2243 = vmatprep.subr.bf16.mxu0 0
        %2244 = vmatpush1.bf16.msra.mxu0 %v1633
        %2245 = vmatprep.subr.bf16.mxu0 0
        %2246 = vmatpush1.bf16.msra.mxu0 %v1635
        %2247 = vmatprep.subr.bf16.mxu0 0
        %2248 = vmatpush1.bf16.msra.mxu0 0
        %2249 = vmatprep.subr.bf16.mxu0 0
        %2250 = vmatpush1.bf16.msra.mxu0 0
        %2251 = vmatprep.subr.bf16.mxu0 0
        %2252 = vmatpush1.bf16.msra.mxu0 0
        %2253 = vmatprep.subr.bf16.mxu0 0
        %2254 = vmatpush1.bf16.msra.mxu0 0
        %2255 = vmatprep.subr.bf16.mxu0 0
        %2256 = vmatpush1.bf16.msra.mxu0 0
        %2257 = vmatprep.subr.bf16.mxu0 0
        %2258 = vmatpush1.bf16.msra.mxu0 0
        %2259 = vmatprep.subr.bf16.mxu0 0
        %2260 = vmatpush1.bf16.msra.mxu0 0
        %2261 = vmatprep.subr.bf16.mxu0 0
        %2262 = vmatpush1.bf16.msra.mxu0 0
        %2263 = vmatprep.mubr.bf16.mxu0 0
        %2264 = vmatmul.mubr.bf16.gmra.mrb[0].mxu0 %v2223
        %v2265 = vpop.f32.mrb[0].mxu0
        %v2266 = vadd.f32 0.0, %v2265
        %v2267 = vpop.f32.mrb[0].mxu0
        %v2268 = vpop.f32.mrb[0].mxu0
        %v2269 = vadd.f32 0.0, %v2268
        %v2270 = vpop.f32.mrb[0].mxu0
        %2271 = vmatprep.mubr.bf16.mxu0 0
        %2272 = vmatmul.mubr.bf16.gmra.mrb[0].mxu0 %v2224
        %v2273 = vpop.f32.mrb[0].mxu0
        %v2274 = vadd.f32 0.0, %v2273
        %v2275 = vpop.f32.mrb[0].mxu0
        %v2276 = vpop.f32.mrb[0].mxu0
        %v2277 = vadd.f32 0.0, %v2276
        %v2278 = vpop.f32.mrb[0].mxu0
        %2279 = vmatprep.mubr.bf16.mxu0 0
        %2280 = vmatmul.mubr.bf16.gmra.mrb[0].mxu0 %v2225
        %v2281 = vpop.f32.mrb[0].mxu0
        %v2282 = vadd.f32 0.0, %v2281
        %v2283 = vpop.f32.mrb[0].mxu0
        %v2284 = vpop.f32.mrb[0].mxu0
        %v2285 = vadd.f32 0.0, %v2284
        %v2286 = vpop.f32.mrb[0].mxu0
        %2287 = vmatprep.mubr.bf16.mxu0 0
        %2288 = vmatmul.mubr.bf16.gmra.mrb[0].mxu0 %v2226
        %v2289 = vpop.f32.mrb[0].mxu0
        %v2290 = vadd.f32 0.0, %v2289
        %v2291 = vpop.f32.mrb[0].mxu0
        %v2292 = vpop.f32.mrb[0].mxu0
        %v2293 = vadd.f32 0.0, %v2292
        %v2294 = vpop.f32.mrb[0].mxu0
        %2295 = vmatprep.mubr.bf16.mxu0 0
        %2296 = vmatmul.mubr.bf16.gmra.mrb[0].mxu0 %v2227
        %v2297 = vpop.f32.mrb[0].mxu0
        %v2298 = vadd.f32 0.0, %v2297
        %v2299 = vpop.f32.mrb[0].mxu0
        %v2300 = vpop.f32.mrb[0].mxu0
        %v2301 = vadd.f32 0.0, %v2300
        %v2302 = vpop.f32.mrb[0].mxu0
        %2303 = vmatprep.mubr.bf16.mxu0 0
        %2304 = vmatmul.mubr.bf16.gmra.mrb[0].mxu0 %v2228
        %v2305 = vpop.f32.mrb[0].mxu0
        %v2306 = vadd.f32 0.0, %v2305
        %v2307 = vpop.f32.mrb[0].mxu0
        %v2308 = vpop.f32.mrb[0].mxu0
        %v2309 = vadd.f32 0.0, %v2308
        %v2310 = vpop.f32.mrb[0].mxu0
        %2311 = vmatprep.mubr.bf16.mxu0 0
        %2312 = vmatmul.mubr.bf16.gmra.mrb[0].mxu0 %v2229
        %v2313 = vpop.f32.mrb[0].mxu0
        %v2314 = vadd.f32 0.0, %v2313
        %v2315 = vpop.f32.mrb[0].mxu0
        %v2316 = vpop.f32.mrb[0].mxu0
        %v2317 = vadd.f32 0.0, %v2316
        %v2318 = vpop.f32.mrb[0].mxu0
        %2319 = vmatprep.mubr.bf16.mxu0 0
        %2320 = vmatmul.mubr.bf16.gmra.mrb[0].mxu0 %v2230
        %v2321 = vpop.f32.mrb[0].mxu0
        %v2322 = vadd.f32 0.0, %v2321
        %v2323 = vpop.f32.mrb[0].mxu0
        %v2324 = vpop.f32.mrb[0].mxu0
        %v2325 = vadd.f32 0.0, %v2324
        %v2326 = vpop.f32.mrb[0].mxu0
        %2327 = vdwg.mxu0
        %v2328 = vpack.c.bf16 %v1923, %v1920
        %v2329 = vpack.c.bf16 %v2269, %v2266
        %v2330 = vpack.c.bf16 %v1931, %v1928
        %v2331 = vpack.c.bf16 %v2277, %v2274
        %v2332 = vpack.c.bf16 %v1939, %v1936
        %v2333 = vpack.c.bf16 %v2285, %v2282
        %v2334 = vpack.c.bf16 %v1947, %v1944
        %v2335 = vpack.c.bf16 %v2293, %v2290
        %v2336 = vpack.c.bf16 %v1955, %v1952
        %v2337 = vpack.c.bf16 %v2301, %v2298
        %v2338 = vpack.c.bf16 %v1963, %v1960
        %v2339 = vpack.c.bf16 %v2309, %v2306
        %v2340 = vpack.c.bf16 %v1971, %v1968
        %v2341 = vpack.c.bf16 %v2317, %v2314
        %v2342 = vpack.c.bf16 %v1979, %v1976
        %v2343 = vpack.c.bf16 %v2325, %v2322
        %v2344 = vld [vmem:[%s385] sm:$0xff]
        %v2345 = vld [vmem:[%s385 + $0x8] sm:$0xff]
        %v2346 = vld [vmem:[%s385 + $0x10] sm:$0xff]
        %v2347 = vld [vmem:[%s385 + $0x18] sm:$0xff]
        %v2348 = vld [vmem:[%s385 + $0x20] sm:$0xff]
        %v2349 = vld [vmem:[%s385 + $0x28] sm:$0xff]
        %v2350 = vld [vmem:[%s385 + $0x30] sm:$0xff]
        %v2351 = vld [vmem:[%s385 + $0x38] sm:$0xff]
        %v2352 = vld [vmem:[%s385 + $0x40] sm:$0xff]
        %v2353 = vld [vmem:[%s385 + $0x48] sm:$0xff]
        %v2354 = vld [vmem:[%s385 + $0x50] sm:$0xff]
        %v2355 = vld [vmem:[%s385 + $0x58] sm:$0xff]
        %v2356 = vld [vmem:[%s385 + $0x60] sm:$0xff]
        %v2357 = vld [vmem:[%s385 + $0x68] sm:$0xff]
        %v2358 = vld [vmem:[%s385 + $0x70] sm:$0xff]
        %v2359 = vld [vmem:[%s385 + $0x78] sm:$0xff]
        %v2360 = vld [vmem:[%s385 + $0x80] sm:$0xff]
        %v2361 = vld [vmem:[%s385 + $0x88] sm:$0xff]
        %v2362 = vld [vmem:[%s385 + $0x90] sm:$0xff]
        %v2363 = vld [vmem:[%s385 + $0x98] sm:$0xff]
        %v2364 = vld [vmem:[%s385 + $0xa0] sm:$0xff]
        %v2365 = vld [vmem:[%s385 + $0xa8] sm:$0xff]
        %v2366 = vld [vmem:[%s385 + $0xb0] sm:$0xff]
        %v2367 = vld [vmem:[%s385 + $0xb8] sm:$0xff]
        %v2368 = vld [vmem:[%s385 + $0xc0] sm:$0xff]
        %v2369 = vld [vmem:[%s385 + $0xc8] sm:$0xff]
        %v2370 = vld [vmem:[%s385 + $0xd0] sm:$0xff]
        %v2371 = vld [vmem:[%s385 + $0xd8] sm:$0xff]
        %v2372 = vld [vmem:[%s385 + $0xe0] sm:$0xff]
        %v2373 = vld [vmem:[%s385 + $0xe8] sm:$0xff]
        %v2374 = vld [vmem:[%s385 + $0xf0] sm:$0xff]
        %v2375 = vld [vmem:[%s385 + $0xf8] sm:$0xff]
        %v2376 = vlaneseq
        %v2377 = vshrl.u32 %v2376, 7
        %v2378 = vsub.s32 3, %v2377
        %v2379 = vrot.slane %v533, %v2378
        %v2380 = vlaneseq
        %v2381 = vshrl.u32 %v2380, 7
        %v2382 = vsub.s32 3, %v2381
        %v2383 = vrot.slane %v534, %v2382
        %v2416 = vunpack.c.l.b16 %v2344
        %v2417 = vunpack.c.h.b16 %v2344
        %v2418 = vunpack.c.l.b16 %v2345
        %v2419 = vunpack.c.h.b16 %v2345
        %v2420 = vunpack.c.l.b16 %v2346
        %v2421 = vunpack.c.h.b16 %v2346
        %v2422 = vunpack.c.l.b16 %v2347
        %v2423 = vunpack.c.h.b16 %v2347
        %v2424 = vunpack.c.l.b16 %v2348
        %v2425 = vunpack.c.h.b16 %v2348
        %v2426 = vunpack.c.l.b16 %v2349
        %v2427 = vunpack.c.h.b16 %v2349
        %v2428 = vunpack.c.l.b16 %v2350
        %v2429 = vunpack.c.h.b16 %v2350
        %v2430 = vunpack.c.l.b16 %v2351
        %v2431 = vunpack.c.h.b16 %v2351
        %v2432 = vunpack.c.l.b16 %v2352
        %v2433 = vunpack.c.h.b16 %v2352
        %v2434 = vunpack.c.l.b16 %v2353
        %v2435 = vunpack.c.h.b16 %v2353
        %v2436 = vunpack.c.l.b16 %v2354
        %v2437 = vunpack.c.h.b16 %v2354
        %v2438 = vunpack.c.l.b16 %v2355
        %v2439 = vunpack.c.h.b16 %v2355
        %v2440 = vunpack.c.l.b16 %v2356
        %v2441 = vunpack.c.h.b16 %v2356
        %v2442 = vunpack.c.l.b16 %v2357
        %v2443 = vunpack.c.h.b16 %v2357
        %v2444 = vunpack.c.l.b16 %v2358
        %v2445 = vunpack.c.h.b16 %v2358
        %v2446 = vunpack.c.l.b16 %v2359
        %v2447 = vunpack.c.h.b16 %v2359
        %v2448 = vunpack.c.l.b16 %v2360
        %v2449 = vunpack.c.h.b16 %v2360
        %v2450 = vunpack.c.l.b16 %v2361
        %v2451 = vunpack.c.h.b16 %v2361
        %v2452 = vunpack.c.l.b16 %v2362
        %v2453 = vunpack.c.h.b16 %v2362
        %v2454 = vunpack.c.l.b16 %v2363
        %v2455 = vunpack.c.h.b16 %v2363
        %v2456 = vunpack.c.l.b16 %v2364
        %v2457 = vunpack.c.h.b16 %v2364
        %v2458 = vunpack.c.l.b16 %v2365
        %v2459 = vunpack.c.h.b16 %v2365
        %v2460 = vunpack.c.l.b16 %v2366
        %v2461 = vunpack.c.h.b16 %v2366
        %v2462 = vunpack.c.l.b16 %v2367
        %v2463 = vunpack.c.h.b16 %v2367
        %v2464 = vunpack.c.l.b16 %v2368
        %v2465 = vunpack.c.h.b16 %v2368
        %v2466 = vunpack.c.l.b16 %v2369
        %v2467 = vunpack.c.h.b16 %v2369
        %v2468 = vunpack.c.l.b16 %v2370
        %v2469 = vunpack.c.h.b16 %v2370
        %v2470 = vunpack.c.l.b16 %v2371
        %v2471 = vunpack.c.h.b16 %v2371
        %v2472 = vunpack.c.l.b16 %v2372
        %v2473 = vunpack.c.h.b16 %v2372
        %v2474 = vunpack.c.l.b16 %v2373
        %v2475 = vunpack.c.h.b16 %v2373
        %v2476 = vunpack.c.l.b16 %v2374
        %v2477 = vunpack.c.h.b16 %v2374
        %v2478 = vunpack.c.l.b16 %v2375
        %v2479 = vunpack.c.h.b16 %v2375
        %v2480 = vpack.c.b16 %v2418, %v2416
        %v2481 = vpack.c.b16 %v2419, %v2417
        %v2482 = vpack.c.b16 %v2422, %v2420
        %v2483 = vpack.c.b16 %v2423, %v2421
        %v2484 = vpack.c.b16 %v2426, %v2424
        %v2485 = vpack.c.b16 %v2427, %v2425
        %v2486 = vpack.c.b16 %v2430, %v2428
        %v2487 = vpack.c.b16 %v2431, %v2429
        %v2488 = vpack.c.b16 %v2434, %v2432
        %v2489 = vpack.c.b16 %v2435, %v2433
        %v2490 = vpack.c.b16 %v2438, %v2436
        %v2491 = vpack.c.b16 %v2439, %v2437
        %v2492 = vpack.c.b16 %v2442, %v2440
        %v2493 = vpack.c.b16 %v2443, %v2441
        %v2494 = vpack.c.b16 %v2446, %v2444
        %v2495 = vpack.c.b16 %v2447, %v2445
        %v2496 = vpack.c.b16 %v2450, %v2448
        %v2497 = vpack.c.b16 %v2451, %v2449
        %v2498 = vpack.c.b16 %v2454, %v2452
        %v2499 = vpack.c.b16 %v2455, %v2453
        %v2500 = vpack.c.b16 %v2458, %v2456
        %v2501 = vpack.c.b16 %v2459, %v2457
        %v2502 = vpack.c.b16 %v2462, %v2460
        %v2503 = vpack.c.b16 %v2463, %v2461
        %v2504 = vpack.c.b16 %v2466, %v2464
        %v2505 = vpack.c.b16 %v2467, %v2465
        %v2506 = vpack.c.b16 %v2470, %v2468
        %v2507 = vpack.c.b16 %v2471, %v2469
        %v2508 = vpack.c.b16 %v2474, %v2472
        %v2509 = vpack.c.b16 %v2475, %v2473
        %v2510 = vpack.c.b16 %v2478, %v2476
        %v2511 = vpack.c.b16 %v2479, %v2477
        %2544 = vmatprep.subr.bf16.mxu0 %v2481
        %2545 = vmatpush1.bf16.msra.mxu0 %v2480
        %2546 = vmatprep.subr.bf16.mxu0 %v2483
        %2547 = vmatpush1.bf16.msra.mxu0 %v2482
        %2548 = vmatprep.subr.bf16.mxu0 %v2485
        %2549 = vmatpush1.bf16.msra.mxu0 %v2484
        %2550 = vmatprep.subr.bf16.mxu0 %v2487
        %2551 = vmatpush1.bf16.msra.mxu0 %v2486
        %2552 = vmatprep.subr.bf16.mxu0 %v2489
        %2553 = vmatpush1.bf16.msra.mxu0 %v2488
        %2554 = vmatprep.subr.bf16.mxu0 %v2491
        %2555 = vmatpush1.bf16.msra.mxu0 %v2490
        %2556 = vmatprep.subr.bf16.mxu0 %v2493
        %2557 = vmatpush1.bf16.msra.mxu0 %v2492
        %2558 = vmatprep.subr.bf16.mxu0 %v2495
        %2559 = vmatpush1.bf16.msra.mxu0 %v2494
        %2560 = vmatprep.subr.bf16.mxu0 %v2497
        %2561 = vmatpush1.bf16.msra.mxu0 %v2496
        %2562 = vmatprep.subr.bf16.mxu0 %v2499
        %2563 = vmatpush1.bf16.msra.mxu0 %v2498
        %2564 = vmatprep.subr.bf16.mxu0 %v2501
        %2565 = vmatpush1.bf16.msra.mxu0 %v2500
        %2566 = vmatprep.subr.bf16.mxu0 %v2503
        %2567 = vmatpush1.bf16.msra.mxu0 %v2502
        %2568 = vmatprep.subr.bf16.mxu0 %v2505
        %2569 = vmatpush1.bf16.msra.mxu0 %v2504
        %2570 = vmatprep.subr.bf16.mxu0 %v2507
        %2571 = vmatpush1.bf16.msra.mxu0 %v2506
        %2572 = vmatprep.subr.bf16.mxu0 %v2509
        %2573 = vmatpush1.bf16.msra.mxu0 %v2508
        %2574 = vmatprep.subr.bf16.mxu0 %v2511
        %2575 = vmatpush1.bf16.msra.mxu0 %v2510
        %2576 = vmatprep.mubr.bf16.mxu0 %v2329
        %2577 = vmatmul.mubr.bf16.gmra.mrb[0].mxu0 %v2328
        %v2578 = vpop.f32.mrb[0].mxu0
        %v2579 = vadd.f32 %v2379, %v2578
        %v2580 = vpop.f32.mrb[0].mxu0
        %v2581 = vadd.f32 %v2383, %v2580
        %v2582 = vpop.f32.mrb[0].mxu0
        %v2583 = vadd.f32 %v2379, %v2582
        %v2584 = vpop.f32.mrb[0].mxu0
        %v2585 = vadd.f32 %v2383, %v2584
        %2586 = vmatprep.mubr.bf16.mxu0 %v2331
        %2587 = vmatmul.mubr.bf16.gmra.mrb[0].mxu0 %v2330
        %v2588 = vpop.f32.mrb[0].mxu0
        %v2589 = vadd.f32 %v2379, %v2588
        %v2590 = vpop.f32.mrb[0].mxu0
        %v2591 = vadd.f32 %v2383, %v2590
        %v2592 = vpop.f32.mrb[0].mxu0
        %v2593 = vadd.f32 %v2379, %v2592
        %v2594 = vpop.f32.mrb[0].mxu0
        %v2595 = vadd.f32 %v2383, %v2594
        %2596 = vmatprep.mubr.bf16.mxu0 %v2333
        %2597 = vmatmul.mubr.bf16.gmra.mrb[0].mxu0 %v2332
        %v2598 = vpop.f32.mrb[0].mxu0
        %v2599 = vadd.f32 %v2379, %v2598
        %v2600 = vpop.f32.mrb[0].mxu0
        %v2601 = vadd.f32 %v2383, %v2600
        %v2602 = vpop.f32.mrb[0].mxu0
        %v2603 = vadd.f32 %v2379, %v2602
        %v2604 = vpop.f32.mrb[0].mxu0
        %v2605 = vadd.f32 %v2383, %v2604
        %2606 = vmatprep.mubr.bf16.mxu0 %v2335
        %2607 = vmatmul.mubr.bf16.gmra.mrb[0].mxu0 %v2334
        %v2608 = vpop.f32.mrb[0].mxu0
        %v2609 = vadd.f32 %v2379, %v2608
        %v2610 = vpop.f32.mrb[0].mxu0
        %v2611 = vadd.f32 %v2383, %v2610
        %v2612 = vpop.f32.mrb[0].mxu0
        %v2613 = vadd.f32 %v2379, %v2612
        %v2614 = vpop.f32.mrb[0].mxu0
        %v2615 = vadd.f32 %v2383, %v2614
        %2616 = vmatprep.mubr.bf16.mxu0 %v2337
        %2617 = vmatmul.mubr.bf16.gmra.mrb[0].mxu0 %v2336
        %v2618 = vpop.f32.mrb[0].mxu0
        %v2619 = vadd.f32 %v2379, %v2618
        %v2620 = vpop.f32.mrb[0].mxu0
        %v2621 = vadd.f32 %v2383, %v2620
        %v2622 = vpop.f32.mrb[0].mxu0
        %v2623 = vadd.f32 %v2379, %v2622
        %v2624 = vpop.f32.mrb[0].mxu0
        %v2625 = vadd.f32 %v2383, %v2624
        %2626 = vmatprep.mubr.bf16.mxu0 %v2339
        %2627 = vmatmul.mubr.bf16.gmra.mrb[0].mxu0 %v2338
        %v2628 = vpop.f32.mrb[0].mxu0
        %v2629 = vadd.f32 %v2379, %v2628
        %v2630 = vpop.f32.mrb[0].mxu0
        %v2631 = vadd.f32 %v2383, %v2630
        %v2632 = vpop.f32.mrb[0].mxu0
        %v2633 = vadd.f32 %v2379, %v2632
        %v2634 = vpop.f32.mrb[0].mxu0
        %v2635 = vadd.f32 %v2383, %v2634
        %2636 = vmatprep.mubr.bf16.mxu0 %v2341
        %2637 = vmatmul.mubr.bf16.gmra.mrb[0].mxu0 %v2340
        %v2638 = vpop.f32.mrb[0].mxu0
        %v2639 = vadd.f32 %v2379, %v2638
        %v2640 = vpop.f32.mrb[0].mxu0
        %v2641 = vadd.f32 %v2383, %v2640
        %v2642 = vpop.f32.mrb[0].mxu0
        %v2643 = vadd.f32 %v2379, %v2642
        %v2644 = vpop.f32.mrb[0].mxu0
        %v2645 = vadd.f32 %v2383, %v2644
        %2646 = vmatprep.mubr.bf16.mxu0 %v2343
        %2647 = vmatmul.mubr.bf16.gmra.mrb[0].mxu0 %v2342
        %v2648 = vpop.f32.mrb[0].mxu0
        %v2649 = vadd.f32 %v2379, %v2648
        %v2650 = vpop.f32.mrb[0].mxu0
        %v2651 = vadd.f32 %v2383, %v2650
        %v2652 = vpop.f32.mrb[0].mxu0
        %v2653 = vadd.f32 %v2379, %v2652
        %v2654 = vpop.f32.mrb[0].mxu0
        %v2655 = vadd.f32 %v2383, %v2654
        %2656 = vdwg.mxu0
        %v2657 = vadd.f32 %v501, %v2579
        %v2658 = vadd.f32 %v502, %v2581
        %v2659 = vadd.f32 %v503, %v2583
        %v2660 = vadd.f32 %v504, %v2585
        %v2661 = vadd.f32 %v505, %v2589
        %v2662 = vadd.f32 %v506, %v2591
        %v2663 = vadd.f32 %v507, %v2593
        %v2664 = vadd.f32 %v508, %v2595
        %v2665 = vadd.f32 %v509, %v2599
        %v2666 = vadd.f32 %v510, %v2601
        %v2667 = vadd.f32 %v511, %v2603
        %v2668 = vadd.f32 %v512, %v2605
        %v2669 = vadd.f32 %v513, %v2609
        %v2670 = vadd.f32 %v514, %v2611
        %v2671 = vadd.f32 %v515, %v2613
        %v2672 = vadd.f32 %v516, %v2615
        %v2673 = vadd.f32 %v517, %v2619
        %v2674 = vadd.f32 %v518, %v2621
        %v2675 = vadd.f32 %v519, %v2623
        %v2676 = vadd.f32 %v520, %v2625
        %v2677 = vadd.f32 %v521, %v2629
        %v2678 = vadd.f32 %v522, %v2631
        %v2679 = vadd.f32 %v523, %v2633
        %v2680 = vadd.f32 %v524, %v2635
        %v2681 = vadd.f32 %v525, %v2639
        %v2682 = vadd.f32 %v526, %v2641
        %v2683 = vadd.f32 %v527, %v2643
        %v2684 = vadd.f32 %v528, %v2645
        %v2685 = vadd.f32 %v529, %v2649
        %v2686 = vadd.f32 %v530, %v2651
        %v2687 = vadd.f32 %v531, %v2653
        %v2688 = vadd.f32 %v532, %v2655
        %v2689 = vadd.f32 %v2657, %v2658
        %2690 = vadd.xlane.f32.xlu0 %v2689
        %v2691 = vpop.xlane.xlu0 %2690
        %v2692 = vadd.f32 %v2659, %v2660
        %2693 = vadd.xlane.f32.xlu0 %v2692
        %v2694 = vpop.xlane.xlu0 %2693
        %v2695 = vadd.f32 %v2661, %v2662
        %2696 = vadd.xlane.f32.xlu0 %v2695
        %v2697 = vpop.xlane.xlu0 %2696
        %v2698 = vadd.f32 %v2663, %v2664
        %2699 = vadd.xlane.f32.xlu0 %v2698
        %v2700 = vpop.xlane.xlu0 %2699
        %v2701 = vadd.f32 %v2665, %v2666
        %2702 = vadd.xlane.f32.xlu0 %v2701
        %v2703 = vpop.xlane.xlu0 %2702
        %v2704 = vadd.f32 %v2667, %v2668
        %2705 = vadd.xlane.f32.xlu0 %v2704
        %v2706 = vpop.xlane.xlu0 %2705
        %v2707 = vadd.f32 %v2669, %v2670
        %2708 = vadd.xlane.f32.xlu0 %v2707
        %v2709 = vpop.xlane.xlu0 %2708
        %v2710 = vadd.f32 %v2671, %v2672
        %2711 = vadd.xlane.f32.xlu0 %v2710
        %v2712 = vpop.xlane.xlu0 %2711
        %v2713 = vadd.f32 %v2673, %v2674
        %2714 = vadd.xlane.f32.xlu0 %v2713
        %v2715 = vpop.xlane.xlu0 %2714
        %v2716 = vadd.f32 %v2675, %v2676
        %2717 = vadd.xlane.f32.xlu0 %v2716
        %v2718 = vpop.xlane.xlu0 %2717
        %v2719 = vadd.f32 %v2677, %v2678
        %2720 = vadd.xlane.f32.xlu0 %v2719
        %v2721 = vpop.xlane.xlu0 %2720
        %v2722 = vadd.f32 %v2679, %v2680
        %2723 = vadd.xlane.f32.xlu0 %v2722
        %v2724 = vpop.xlane.xlu0 %2723
        %v2725 = vadd.f32 %v2681, %v2682
        %2726 = vadd.xlane.f32.xlu0 %v2725
        %v2727 = vpop.xlane.xlu0 %2726
        %v2728 = vadd.f32 %v2683, %v2684
        %2729 = vadd.xlane.f32.xlu0 %v2728
        %v2730 = vpop.xlane.xlu0 %2729
        %v2731 = vadd.f32 %v2685, %v2686
        %2732 = vadd.xlane.f32.xlu0 %v2731
        %v2733 = vpop.xlane.xlu0 %2732
        %v2734 = vadd.f32 %v2687, %v2688
        %2735 = vadd.xlane.f32.xlu0 %v2734
        %v2736 = vpop.xlane.xlu0 %2735
        %v2737 = vrcp.pop 256.0
        %v2738 = vmul.f32 %v2691, %v2737
        %v2739 = vmul.f32 %v2694, %v2737
        %v2740 = vmul.f32 %v2697, %v2737
        %v2741 = vmul.f32 %v2700, %v2737
        %v2742 = vmul.f32 %v2703, %v2737
        %v2743 = vmul.f32 %v2706, %v2737
        %v2744 = vmul.f32 %v2709, %v2737
        %v2745 = vmul.f32 %v2712, %v2737
        %v2746 = vmul.f32 %v2715, %v2737
        %v2747 = vmul.f32 %v2718, %v2737
        %v2748 = vmul.f32 %v2721, %v2737
        %v2749 = vmul.f32 %v2724, %v2737
        %v2750 = vmul.f32 %v2727, %v2737
        %v2751 = vmul.f32 %v2730, %v2737
        %v2752 = vmul.f32 %v2733, %v2737
        %v2753 = vmul.f32 %v2736, %v2737
        %v2754 = vsub.f32 %v2657, %v2738
        %v2755 = vsub.f32 %v2658, %v2738
        %v2756 = vsub.f32 %v2659, %v2739
        %v2757 = vsub.f32 %v2660, %v2739
        %v2758 = vsub.f32 %v2661, %v2740
        %v2759 = vsub.f32 %v2662, %v2740
        %v2760 = vsub.f32 %v2663, %v2741
        %v2761 = vsub.f32 %v2664, %v2741
        %v2762 = vsub.f32 %v2665, %v2742
        %v2763 = vsub.f32 %v2666, %v2742
        %v2764 = vsub.f32 %v2667, %v2743
        %v2765 = vsub.f32 %v2668, %v2743
        %v2766 = vsub.f32 %v2669, %v2744
        %v2767 = vsub.f32 %v2670, %v2744
        %v2768 = vsub.f32 %v2671, %v2745
        %v2769 = vsub.f32 %v2672, %v2745
        %v2770 = vsub.f32 %v2673, %v2746
        %v2771 = vsub.f32 %v2674, %v2746
        %v2772 = vsub.f32 %v2675, %v2747
        %v2773 = vsub.f32 %v2676, %v2747
        %v2774 = vsub.f32 %v2677, %v2748
        %v2775 = vsub.f32 %v2678, %v2748
        %v2776 = vsub.f32 %v2679, %v2749
        %v2777 = vsub.f32 %v2680, %v2749
        %v2778 = vsub.f32 %v2681, %v2750
        %v2779 = vsub.f32 %v2682, %v2750
        %v2780 = vsub.f32 %v2683, %v2751
        %v2781 = vsub.f32 %v2684, %v2751
        %v2782 = vsub.f32 %v2685, %v2752
        %v2783 = vsub.f32 %v2686, %v2752
        %v2784 = vsub.f32 %v2687, %v2753
        %v2785 = vsub.f32 %v2688, %v2753
        %v2786 = vmul.f32 %v2754, %v2754
        %v2787 = vmul.f32 %v2755, %v2755
        %v2788 = vmul.f32 %v2756, %v2756
        %v2789 = vmul.f32 %v2757, %v2757
        %v2790 = vmul.f32 %v2758, %v2758
        %v2791 = vmul.f32 %v2759, %v2759
        %v2792 = vmul.f32 %v2760, %v2760
        %v2793 = vmul.f32 %v2761, %v2761
        %v2794 = vmul.f32 %v2762, %v2762
        %v2795 = vmul.f32 %v2763, %v2763
        %v2796 = vmul.f32 %v2764, %v2764
        %v2797 = vmul.f32 %v2765, %v2765
        %v2798 = vmul.f32 %v2766, %v2766
        %v2799 = vmul.f32 %v2767, %v2767
        %v2800 = vmul.f32 %v2768, %v2768
        %v2801 = vmul.f32 %v2769, %v2769
        %v2802 = vmul.f32 %v2770, %v2770
        %v2803 = vmul.f32 %v2771, %v2771
        %v2804 = vmul.f32 %v2772, %v2772
        %v2805 = vmul.f32 %v2773, %v2773
        %v2806 = vmul.f32 %v2774, %v2774
        %v2807 = vmul.f32 %v2775, %v2775
        %v2808 = vmul.f32 %v2776, %v2776
        %v2809 = vmul.f32 %v2777, %v2777
        %v2810 = vmul.f32 %v2778, %v2778
        %v2811 = vmul.f32 %v2779, %v2779
        %v2812 = vmul.f32 %v2780, %v2780
        %v2813 = vmul.f32 %v2781, %v2781
        %v2814 = vmul.f32 %v2782, %v2782
        %v2815 = vmul.f32 %v2783, %v2783
        %v2816 = vmul.f32 %v2784, %v2784
        %v2817 = vmul.f32 %v2785, %v2785
        %v2818 = vadd.f32 %v2786, %v2787
        %2819 = vadd.xlane.f32.xlu0 %v2818
        %v2820 = vpop.xlane.xlu0 %2819
        %v2821 = vadd.f32 %v2788, %v2789
        %2822 = vadd.xlane.f32.xlu0 %v2821
        %v2823 = vpop.xlane.xlu0 %2822
        %v2824 = vadd.f32 %v2790, %v2791
        %2825 = vadd.xlane.f32.xlu0 %v2824
        %v2826 = vpop.xlane.xlu0 %2825
        %v2827 = vadd.f32 %v2792, %v2793
        %2828 = vadd.xlane.f32.xlu0 %v2827
        %v2829 = vpop.xlane.xlu0 %2828
        %v2830 = vadd.f32 %v2794, %v2795
        %2831 = vadd.xlane.f32.xlu0 %v2830
        %v2832 = vpop.xlane.xlu0 %2831
        %v2833 = vadd.f32 %v2796, %v2797
        %2834 = vadd.xlane.f32.xlu0 %v2833
        %v2835 = vpop.xlane.xlu0 %2834
        %v2836 = vadd.f32 %v2798, %v2799
        %2837 = vadd.xlane.f32.xlu0 %v2836
        %v2838 = vpop.xlane.xlu0 %2837
        %v2839 = vadd.f32 %v2800, %v2801
        %2840 = vadd.xlane.f32.xlu0 %v2839
        %v2841 = vpop.xlane.xlu0 %2840
        %v2842 = vadd.f32 %v2802, %v2803
        %2843 = vadd.xlane.f32.xlu0 %v2842
        %v2844 = vpop.xlane.xlu0 %2843
        %v2845 = vadd.f32 %v2804, %v2805
        %2846 = vadd.xlane.f32.xlu0 %v2845
        %v2847 = vpop.xlane.xlu0 %2846
        %v2848 = vadd.f32 %v2806, %v2807
        %2849 = vadd.xlane.f32.xlu0 %v2848
        %v2850 = vpop.xlane.xlu0 %2849
        %v2851 = vadd.f32 %v2808, %v2809
        %2852 = vadd.xlane.f32.xlu0 %v2851
        %v2853 = vpop.xlane.xlu0 %2852
        %v2854 = vadd.f32 %v2810, %v2811
        %2855 = vadd.xlane.f32.xlu0 %v2854
        %v2856 = vpop.xlane.xlu0 %2855
        %v2857 = vadd.f32 %v2812, %v2813
        %2858 = vadd.xlane.f32.xlu0 %v2857
        %v2859 = vpop.xlane.xlu0 %2858
        %v2860 = vadd.f32 %v2814, %v2815
        %2861 = vadd.xlane.f32.xlu0 %v2860
        %v2862 = vpop.xlane.xlu0 %2861
        %v2863 = vadd.f32 %v2816, %v2817
        %2864 = vadd.xlane.f32.xlu0 %v2863
        %v2865 = vpop.xlane.xlu0 %2864
        %v2866 = vmul.f32 %v2820, %v2737
        %v2867 = vmul.f32 %v2823, %v2737
        %v2868 = vmul.f32 %v2826, %v2737
        %v2869 = vmul.f32 %v2829, %v2737
        %v2870 = vmul.f32 %v2832, %v2737
        %v2871 = vmul.f32 %v2835, %v2737
        %v2872 = vmul.f32 %v2838, %v2737
        %v2873 = vmul.f32 %v2841, %v2737
        %v2874 = vmul.f32 %v2844, %v2737
        %v2875 = vmul.f32 %v2847, %v2737
        %v2876 = vmul.f32 %v2850, %v2737
        %v2877 = vmul.f32 %v2853, %v2737
        %v2878 = vmul.f32 %v2856, %v2737
        %v2879 = vmul.f32 %v2859, %v2737
        %v2880 = vmul.f32 %v2862, %v2737
        %v2881 = vmul.f32 %v2865, %v2737
        %v2882 = vadd.f32 %v2866, 1e-12
        %v2883 = vadd.f32 %v2867, 1e-12
        %v2884 = vadd.f32 %v2868, 1e-12
        %v2885 = vadd.f32 %v2869, 1e-12
        %v2886 = vadd.f32 %v2870, 1e-12
        %v2887 = vadd.f32 %v2871, 1e-12
        %v2888 = vadd.f32 %v2872, 1e-12
        %v2889 = vadd.f32 %v2873, 1e-12
        %v2890 = vadd.f32 %v2874, 1e-12
        %v2891 = vadd.f32 %v2875, 1e-12
        %v2892 = vadd.f32 %v2876, 1e-12
        %v2893 = vadd.f32 %v2877, 1e-12
        %v2894 = vadd.f32 %v2878, 1e-12
        %v2895 = vadd.f32 %v2879, 1e-12
        %v2896 = vadd.f32 %v2880, 1e-12
        %v2897 = vadd.f32 %v2881, 1e-12
        %v2898 = vrsqrt.pop %v2882
        %v2899 = vrsqrt.pop %v2883
        %v2900 = vrsqrt.pop %v2884
        %v2901 = vrsqrt.pop %v2885
        %v2902 = vrsqrt.pop %v2886
        %v2903 = vrsqrt.pop %v2887
        %v2904 = vrsqrt.pop %v2888
        %v2905 = vrsqrt.pop %v2889
        %v2906 = vrsqrt.pop %v2890
        %v2907 = vrsqrt.pop %v2891
        %v2908 = vrsqrt.pop %v2892
        %v2909 = vrsqrt.pop %v2893
        %v2910 = vrsqrt.pop %v2894
        %v2911 = vrsqrt.pop %v2895
        %v2912 = vrsqrt.pop %v2896
        %v2913 = vrsqrt.pop %v2897
        %v2914 = vmul.f32 %v2754, %v2898
        %v2915 = vmul.f32 %v2755, %v2898
        %v2916 = vmul.f32 %v2756, %v2899
        %v2917 = vmul.f32 %v2757, %v2899
        %v2918 = vmul.f32 %v2758, %v2900
        %v2919 = vmul.f32 %v2759, %v2900
        %v2920 = vmul.f32 %v2760, %v2901
        %v2921 = vmul.f32 %v2761, %v2901
        %v2922 = vmul.f32 %v2762, %v2902
        %v2923 = vmul.f32 %v2763, %v2902
        %v2924 = vmul.f32 %v2764, %v2903
        %v2925 = vmul.f32 %v2765, %v2903
        %v2926 = vmul.f32 %v2766, %v2904
        %v2927 = vmul.f32 %v2767, %v2904
        %v2928 = vmul.f32 %v2768, %v2905
        %v2929 = vmul.f32 %v2769, %v2905
        %v2930 = vmul.f32 %v2770, %v2906
        %v2931 = vmul.f32 %v2771, %v2906
        %v2932 = vmul.f32 %v2772, %v2907
        %v2933 = vmul.f32 %v2773, %v2907
        %v2934 = vmul.f32 %v2774, %v2908
        %v2935 = vmul.f32 %v2775, %v2908
        %v2936 = vmul.f32 %v2776, %v2909
        %v2937 = vmul.f32 %v2777, %v2909
        %v2938 = vmul.f32 %v2778, %v2910
        %v2939 = vmul.f32 %v2779, %v2910
        %v2940 = vmul.f32 %v2780, %v2911
        %v2941 = vmul.f32 %v2781, %v2911
        %v2942 = vmul.f32 %v2782, %v2912
        %v2943 = vmul.f32 %v2783, %v2912
        %v2944 = vmul.f32 %v2784, %v2913
        %v2945 = vmul.f32 %v2785, %v2913
        %v2946 = vlaneseq
        %v2947 = vshrl.u32 %v2946, 7
        %v2948 = vsub.s32 4, %v2947
        %v2949 = vrot.slane %v533, %v2948
        %v2950 = vlaneseq
        %v2951 = vshrl.u32 %v2950, 7
        %v2952 = vsub.s32 4, %v2951
        %v2953 = vrot.slane %v534, %v2952
        %v2954 = vmul.f32 %v2914, %v2949
        %v2955 = vmul.f32 %v2915, %v2953
        %v2956 = vmul.f32 %v2916, %v2949
        %v2957 = vmul.f32 %v2917, %v2953
        %v2958 = vmul.f32 %v2918, %v2949
        %v2959 = vmul.f32 %v2919, %v2953
        %v2960 = vmul.f32 %v2920, %v2949
        %v2961 = vmul.f32 %v2921, %v2953
        %v2962 = vmul.f32 %v2922, %v2949
        %v2963 = vmul.f32 %v2923, %v2953
        %v2964 = vmul.f32 %v2924, %v2949
        %v2965 = vmul.f32 %v2925, %v2953
        %v2966 = vmul.f32 %v2926, %v2949
        %v2967 = vmul.f32 %v2927, %v2953
        %v2968 = vmul.f32 %v2928, %v2949
        %v2969 = vmul.f32 %v2929, %v2953
        %v2970 = vmul.f32 %v2930, %v2949
        %v2971 = vmul.f32 %v2931, %v2953
        %v2972 = vmul.f32 %v2932, %v2949
        %v2973 = vmul.f32 %v2933, %v2953
        %v2974 = vmul.f32 %v2934, %v2949
        %v2975 = vmul.f32 %v2935, %v2953
        %v2976 = vmul.f32 %v2936, %v2949
        %v2977 = vmul.f32 %v2937, %v2953
        %v2978 = vmul.f32 %v2938, %v2949
        %v2979 = vmul.f32 %v2939, %v2953
        %v2980 = vmul.f32 %v2940, %v2949
        %v2981 = vmul.f32 %v2941, %v2953
        %v2982 = vmul.f32 %v2942, %v2949
        %v2983 = vmul.f32 %v2943, %v2953
        %v2984 = vmul.f32 %v2944, %v2949
        %v2985 = vmul.f32 %v2945, %v2953
        %v2986 = vlaneseq
        %v2987 = vshrl.u32 %v2986, 7
        %v2988 = vsub.s32 5, %v2987
        %v2989 = vrot.slane %v533, %v2988
        %v2990 = vlaneseq
        %v2991 = vshrl.u32 %v2990, 7
        %v2992 = vsub.s32 5, %v2991
        %v2993 = vrot.slane %v534, %v2992
        %v2994 = vadd.f32 %v2954, %v2989
        %v2995 = vadd.f32 %v2955, %v2993
        %v2996 = vadd.f32 %v2956, %v2989
        %v2997 = vadd.f32 %v2957, %v2993
        %v2998 = vadd.f32 %v2958, %v2989
        %v2999 = vadd.f32 %v2959, %v2993
        %v3000 = vadd.f32 %v2960, %v2989
        %v3001 = vadd.f32 %v2961, %v2993
        %v3002 = vadd.f32 %v2962, %v2989
        %v3003 = vadd.f32 %v2963, %v2993
        %v3004 = vadd.f32 %v2964, %v2989
        %v3005 = vadd.f32 %v2965, %v2993
        %v3006 = vadd.f32 %v2966, %v2989
        %v3007 = vadd.f32 %v2967, %v2993
        %v3008 = vadd.f32 %v2968, %v2989
        %v3009 = vadd.f32 %v2969, %v2993
        %v3010 = vadd.f32 %v2970, %v2989
        %v3011 = vadd.f32 %v2971, %v2993
        %v3012 = vadd.f32 %v2972, %v2989
        %v3013 = vadd.f32 %v2973, %v2993
        %v3014 = vadd.f32 %v2974, %v2989
        %v3015 = vadd.f32 %v2975, %v2993
        %v3016 = vadd.f32 %v2976, %v2989
        %v3017 = vadd.f32 %v2977, %v2993
        %v3018 = vadd.f32 %v2978, %v2989
        %v3019 = vadd.f32 %v2979, %v2993
        %v3020 = vadd.f32 %v2980, %v2989
        %v3021 = vadd.f32 %v2981, %v2993
        %v3022 = vadd.f32 %v2982, %v2989
        %v3023 = vadd.f32 %v2983, %v2993
        %v3024 = vadd.f32 %v2984, %v2989
        %v3025 = vadd.f32 %v2985, %v2993
        %v3026 = vpack.c.bf16 %v2996, %v2994
        %v3027 = vpack.c.bf16 %v2997, %v2995
        %v3028 = vpack.c.bf16 %v3000, %v2998
        %v3029 = vpack.c.bf16 %v3001, %v2999
        %v3030 = vpack.c.bf16 %v3004, %v3002
        %v3031 = vpack.c.bf16 %v3005, %v3003
        %v3032 = vpack.c.bf16 %v3008, %v3006
        %v3033 = vpack.c.bf16 %v3009, %v3007
        %v3034 = vpack.c.bf16 %v3012, %v3010
        %v3035 = vpack.c.bf16 %v3013, %v3011
        %v3036 = vpack.c.bf16 %v3016, %v3014
        %v3037 = vpack.c.bf16 %v3017, %v3015
        %v3038 = vpack.c.bf16 %v3020, %v3018
        %v3039 = vpack.c.bf16 %v3021, %v3019
        %v3040 = vpack.c.bf16 %v3024, %v3022
        %v3041 = vpack.c.bf16 %v3025, %v3023
        %v3042 = vld [vmem:[%s394] sm:$0xff]
        %v3043 = vld [vmem:[%s394 + $0x8] sm:$0xff]
        %v3044 = vld [vmem:[%s394 + $0x10] sm:$0xff]
        %v3045 = vld [vmem:[%s394 + $0x18] sm:$0xff]
        %v3046 = vld [vmem:[%s394 + $0x20] sm:$0xff]
        %v3047 = vld [vmem:[%s394 + $0x28] sm:$0xff]
        %v3048 = vld [vmem:[%s394 + $0x30] sm:$0xff]
        %v3049 = vld [vmem:[%s394 + $0x38] sm:$0xff]
        %v3050 = vld [vmem:[%s394 + $0x40] sm:$0xff]
        %v3051 = vld [vmem:[%s394 + $0x48] sm:$0xff]
        %v3052 = vld [vmem:[%s394 + $0x50] sm:$0xff]
        %v3053 = vld [vmem:[%s394 + $0x58] sm:$0xff]
        %v3054 = vld [vmem:[%s394 + $0x60] sm:$0xff]
        %v3055 = vld [vmem:[%s394 + $0x68] sm:$0xff]
        %v3056 = vld [vmem:[%s394 + $0x70] sm:$0xff]
        %v3057 = vld [vmem:[%s394 + $0x78] sm:$0xff]
        %v3058 = vld [vmem:[%s394 + $0x80] sm:$0xff]
        %v3059 = vld [vmem:[%s394 + $0x88] sm:$0xff]
        %v3060 = vld [vmem:[%s394 + $0x90] sm:$0xff]
        %v3061 = vld [vmem:[%s394 + $0x98] sm:$0xff]
        %v3062 = vld [vmem:[%s394 + $0xa0] sm:$0xff]
        %v3063 = vld [vmem:[%s394 + $0xa8] sm:$0xff]
        %v3064 = vld [vmem:[%s394 + $0xb0] sm:$0xff]
        %v3065 = vld [vmem:[%s394 + $0xb8] sm:$0xff]
        %v3066 = vld [vmem:[%s394 + $0xc0] sm:$0xff]
        %v3067 = vld [vmem:[%s394 + $0xc8] sm:$0xff]
        %v3068 = vld [vmem:[%s394 + $0xd0] sm:$0xff]
        %v3069 = vld [vmem:[%s394 + $0xd8] sm:$0xff]
        %v3070 = vld [vmem:[%s394 + $0xe0] sm:$0xff]
        %v3071 = vld [vmem:[%s394 + $0xe8] sm:$0xff]
        %v3072 = vld [vmem:[%s394 + $0xf0] sm:$0xff]
        %v3073 = vld [vmem:[%s394 + $0xf8] sm:$0xff]
        %v3074 = vld [vmem:[%s394 + $0x100] sm:$0xff]
        %v3075 = vld [vmem:[%s394 + $0x108] sm:$0xff]
        %v3076 = vld [vmem:[%s394 + $0x110] sm:$0xff]
        %v3077 = vld [vmem:[%s394 + $0x118] sm:$0xff]
        %v3078 = vld [vmem:[%s394 + $0x120] sm:$0xff]
        %v3079 = vld [vmem:[%s394 + $0x128] sm:$0xff]
        %v3080 = vld [vmem:[%s394 + $0x130] sm:$0xff]
        %v3081 = vld [vmem:[%s394 + $0x138] sm:$0xff]
        %v3082 = vld [vmem:[%s394 + $0x140] sm:$0xff]
        %v3083 = vld [vmem:[%s394 + $0x148] sm:$0xff]
        %v3084 = vld [vmem:[%s394 + $0x150] sm:$0xff]
        %v3085 = vld [vmem:[%s394 + $0x158] sm:$0xff]
        %v3086 = vld [vmem:[%s394 + $0x160] sm:$0xff]
        %v3087 = vld [vmem:[%s394 + $0x168] sm:$0xff]
        %v3088 = vld [vmem:[%s394 + $0x170] sm:$0xff]
        %v3089 = vld [vmem:[%s394 + $0x178] sm:$0xff]
        %v3090 = vld [vmem:[%s394 + $0x180] sm:$0xff]
        %v3091 = vld [vmem:[%s394 + $0x188] sm:$0xff]
        %v3092 = vld [vmem:[%s394 + $0x190] sm:$0xff]
        %v3093 = vld [vmem:[%s394 + $0x198] sm:$0xff]
        %v3094 = vld [vmem:[%s394 + $0x1a0] sm:$0xff]
        %v3095 = vld [vmem:[%s394 + $0x1a8] sm:$0xff]
        %v3096 = vld [vmem:[%s394 + $0x1b0] sm:$0xff]
        %v3097 = vld [vmem:[%s394 + $0x1b8] sm:$0xff]
        %v3098 = vld [vmem:[%s394 + $0x1c0] sm:$0xff]
        %v3099 = vld [vmem:[%s394 + $0x1c8] sm:$0xff]
        %v3100 = vld [vmem:[%s394 + $0x1d0] sm:$0xff]
        %v3101 = vld [vmem:[%s394 + $0x1d8] sm:$0xff]
        %v3102 = vld [vmem:[%s394 + $0x1e0] sm:$0xff]
        %v3103 = vld [vmem:[%s394 + $0x1e8] sm:$0xff]
        %v3104 = vld [vmem:[%s394 + $0x1f0] sm:$0xff]
        %v3105 = vld [vmem:[%s394 + $0x1f8] sm:$0xff]
        %v3106 = vld [vmem:[%s394 + $0x200] sm:$0xff]
        %v3107 = vld [vmem:[%s394 + $0x208] sm:$0xff]
        %v3108 = vld [vmem:[%s394 + $0x210] sm:$0xff]
        %v3109 = vld [vmem:[%s394 + $0x218] sm:$0xff]
        %v3110 = vld [vmem:[%s394 + $0x220] sm:$0xff]
        %v3111 = vld [vmem:[%s394 + $0x228] sm:$0xff]
        %v3112 = vld [vmem:[%s394 + $0x230] sm:$0xff]
        %v3113 = vld [vmem:[%s394 + $0x238] sm:$0xff]
        %v3114 = vld [vmem:[%s394 + $0x240] sm:$0xff]
        %v3115 = vld [vmem:[%s394 + $0x248] sm:$0xff]
        %v3116 = vld [vmem:[%s394 + $0x250] sm:$0xff]
        %v3117 = vld [vmem:[%s394 + $0x258] sm:$0xff]
        %v3118 = vld [vmem:[%s394 + $0x260] sm:$0xff]
        %v3119 = vld [vmem:[%s394 + $0x268] sm:$0xff]
        %v3120 = vld [vmem:[%s394 + $0x270] sm:$0xff]
        %v3121 = vld [vmem:[%s394 + $0x278] sm:$0xff]
        %v3122 = vld [vmem:[%s394 + $0x280] sm:$0xff]
        %v3123 = vld [vmem:[%s394 + $0x288] sm:$0xff]
        %v3124 = vld [vmem:[%s394 + $0x290] sm:$0xff]
        %v3125 = vld [vmem:[%s394 + $0x298] sm:$0xff]
        %v3126 = vld [vmem:[%s394 + $0x2a0] sm:$0xff]
        %v3127 = vld [vmem:[%s394 + $0x2a8] sm:$0xff]
        %v3128 = vld [vmem:[%s394 + $0x2b0] sm:$0xff]
        %v3129 = vld [vmem:[%s394 + $0x2b8] sm:$0xff]
        %v3130 = vld [vmem:[%s394 + $0x2c0] sm:$0xff]
        %v3131 = vld [vmem:[%s394 + $0x2c8] sm:$0xff]
        %v3132 = vld [vmem:[%s394 + $0x2d0] sm:$0xff]
        %v3133 = vld [vmem:[%s394 + $0x2d8] sm:$0xff]
        %v3134 = vld [vmem:[%s394 + $0x2e0] sm:$0xff]
        %v3135 = vld [vmem:[%s394 + $0x2e8] sm:$0xff]
        %v3136 = vld [vmem:[%s394 + $0x2f0] sm:$0xff]
        %v3137 = vld [vmem:[%s394 + $0x2f8] sm:$0xff]
        %v3138 = vld [vmem:[%s394 + $0x300] sm:$0xff]
        %v3139 = vld [vmem:[%s394 + $0x308] sm:$0xff]
        %v3140 = vld [vmem:[%s394 + $0x310] sm:$0xff]
        %v3141 = vld [vmem:[%s394 + $0x318] sm:$0xff]
        %v3142 = vld [vmem:[%s394 + $0x320] sm:$0xff]
        %v3143 = vld [vmem:[%s394 + $0x328] sm:$0xff]
        %v3144 = vld [vmem:[%s394 + $0x330] sm:$0xff]
        %v3145 = vld [vmem:[%s394 + $0x338] sm:$0xff]
        %v3146 = vld [vmem:[%s394 + $0x340] sm:$0xff]
        %v3147 = vld [vmem:[%s394 + $0x348] sm:$0xff]
        %v3148 = vld [vmem:[%s394 + $0x350] sm:$0xff]
        %v3149 = vld [vmem:[%s394 + $0x358] sm:$0xff]
        %v3150 = vld [vmem:[%s394 + $0x360] sm:$0xff]
        %v3151 = vld [vmem:[%s394 + $0x368] sm:$0xff]
        %v3152 = vld [vmem:[%s394 + $0x370] sm:$0xff]
        %v3153 = vld [vmem:[%s394 + $0x378] sm:$0xff]
        %v3154 = vld [vmem:[%s394 + $0x380] sm:$0xff]
        %v3155 = vld [vmem:[%s394 + $0x388] sm:$0xff]
        %v3156 = vld [vmem:[%s394 + $0x390] sm:$0xff]
        %v3157 = vld [vmem:[%s394 + $0x398] sm:$0xff]
        %v3158 = vld [vmem:[%s394 + $0x3a0] sm:$0xff]
        %v3159 = vld [vmem:[%s394 + $0x3a8] sm:$0xff]
        %v3160 = vld [vmem:[%s394 + $0x3b0] sm:$0xff]
        %v3161 = vld [vmem:[%s394 + $0x3b8] sm:$0xff]
        %v3162 = vld [vmem:[%s394 + $0x3c0] sm:$0xff]
        %v3163 = vld [vmem:[%s394 + $0x3c8] sm:$0xff]
        %v3164 = vld [vmem:[%s394 + $0x3d0] sm:$0xff]
        %v3165 = vld [vmem:[%s394 + $0x3d8] sm:$0xff]
        %v3166 = vld [vmem:[%s394 + $0x3e0] sm:$0xff]
        %v3167 = vld [vmem:[%s394 + $0x3e8] sm:$0xff]
        %v3168 = vld [vmem:[%s394 + $0x3f0] sm:$0xff]
        %v3169 = vld [vmem:[%s394 + $0x3f8] sm:$0xff]
        %v3170 = vld [vmem:[%s421] sm:$0xff]
        %v3172 = vlaneseq
        %v3173 = vshrl.u32 %v3172, 7
        %v3174 = vsub.s32 0, %v3173
        %v3175 = vrot.slane %v3170, %v3174
        %v3176 = vlaneseq
        %v3177 = vshrl.u32 %v3176, 7
        %v3178 = vsub.s32 1, %v3177
        %v3179 = vrot.slane %v3170, %v3178
        %v3180 = vlaneseq
        %v3181 = vshrl.u32 %v3180, 7
        %v3182 = vsub.s32 2, %v3181
        %v3183 = vrot.slane %v3170, %v3182
        %v3184 = vlaneseq
        %v3185 = vshrl.u32 %v3184, 7
        %v3186 = vsub.s32 3, %v3185
        %v3187 = vrot.slane %v3170, %v3186
        %v3188 = vlaneseq
        %v3189 = vshrl.u32 %v3188, 7
        %v3190 = vsub.s32 4, %v3189
        %v3191 = vrot.slane %v3170, %v3190
        %v3192 = vlaneseq
        %v3193 = vshrl.u32 %v3192, 7
        %v3194 = vsub.s32 5, %v3193
        %v3195 = vrot.slane %v3170, %v3194
        %v3196 = vlaneseq
        %v3197 = vshrl.u32 %v3196, 7
        %v3198 = vsub.s32 6, %v3197
        %v3199 = vrot.slane %v3170, %v3198
        %v3200 = vlaneseq
        %v3201 = vshrl.u32 %v3200, 7
        %v3202 = vsub.s32 7, %v3201
        %v3203 = vrot.slane %v3170, %v3202
        %v3340 = vunpack.c.l.b16 %v3042
        %v3341 = vunpack.c.h.b16 %v3042
        %v3342 = vunpack.c.l.b16 %v3043
        %v3343 = vunpack.c.h.b16 %v3043
        %v3344 = vunpack.c.l.b16 %v3044
        %v3345 = vunpack.c.h.b16 %v3044
        %v3346 = vunpack.c.l.b16 %v3045
        %v3347 = vunpack.c.h.b16 %v3045
        %v3348 = vunpack.c.l.b16 %v3046
        %v3349 = vunpack.c.h.b16 %v3046
        %v3350 = vunpack.c.l.b16 %v3047
        %v3351 = vunpack.c.h.b16 %v3047
        %v3352 = vunpack.c.l.b16 %v3048
        %v3353 = vunpack.c.h.b16 %v3048
        %v3354 = vunpack.c.l.b16 %v3049
        %v3355 = vunpack.c.h.b16 %v3049
        %v3356 = vunpack.c.l.b16 %v3050
        %v3357 = vunpack.c.h.b16 %v3050
        %v3358 = vunpack.c.l.b16 %v3051
        %v3359 = vunpack.c.h.b16 %v3051
        %v3360 = vunpack.c.l.b16 %v3052
        %v3361 = vunpack.c.h.b16 %v3052
        %v3362 = vunpack.c.l.b16 %v3053
        %v3363 = vunpack.c.h.b16 %v3053
        %v3364 = vunpack.c.l.b16 %v3054
        %v3365 = vunpack.c.h.b16 %v3054
        %v3366 = vunpack.c.l.b16 %v3055
        %v3367 = vunpack.c.h.b16 %v3055
        %v3368 = vunpack.c.l.b16 %v3056
        %v3369 = vunpack.c.h.b16 %v3056
        %v3370 = vunpack.c.l.b16 %v3057
        %v3371 = vunpack.c.h.b16 %v3057
        %v3372 = vunpack.c.l.b16 %v3058
        %v3373 = vunpack.c.h.b16 %v3058
        %v3374 = vunpack.c.l.b16 %v3059
        %v3375 = vunpack.c.h.b16 %v3059
        %v3376 = vunpack.c.l.b16 %v3060
        %v3377 = vunpack.c.h.b16 %v3060
        %v3378 = vunpack.c.l.b16 %v3061
        %v3379 = vunpack.c.h.b16 %v3061
        %v3380 = vunpack.c.l.b16 %v3062
        %v3381 = vunpack.c.h.b16 %v3062
        %v3382 = vunpack.c.l.b16 %v3063
        %v3383 = vunpack.c.h.b16 %v3063
        %v3384 = vunpack.c.l.b16 %v3064
        %v3385 = vunpack.c.h.b16 %v3064
        %v3386 = vunpack.c.l.b16 %v3065
        %v3387 = vunpack.c.h.b16 %v3065
        %v3388 = vunpack.c.l.b16 %v3066
        %v3389 = vunpack.c.h.b16 %v3066
        %v3390 = vunpack.c.l.b16 %v3067
        %v3391 = vunpack.c.h.b16 %v3067
        %v3392 = vunpack.c.l.b16 %v3068
        %v3393 = vunpack.c.h.b16 %v3068
        %v3394 = vunpack.c.l.b16 %v3069
        %v3395 = vunpack.c.h.b16 %v3069
        %v3396 = vunpack.c.l.b16 %v3070
        %v3397 = vunpack.c.h.b16 %v3070
        %v3398 = vunpack.c.l.b16 %v3071
        %v3399 = vunpack.c.h.b16 %v3071
        %v3400 = vunpack.c.l.b16 %v3072
        %v3401 = vunpack.c.h.b16 %v3072
        %v3402 = vunpack.c.l.b16 %v3073
        %v3403 = vunpack.c.h.b16 %v3073
        %v3404 = vunpack.c.l.b16 %v3074
        %v3405 = vunpack.c.h.b16 %v3074
        %v3406 = vunpack.c.l.b16 %v3075
        %v3407 = vunpack.c.h.b16 %v3075
        %v3408 = vunpack.c.l.b16 %v3076
        %v3409 = vunpack.c.h.b16 %v3076
        %v3410 = vunpack.c.l.b16 %v3077
        %v3411 = vunpack.c.h.b16 %v3077
        %v3412 = vunpack.c.l.b16 %v3078
        %v3413 = vunpack.c.h.b16 %v3078
        %v3414 = vunpack.c.l.b16 %v3079
        %v3415 = vunpack.c.h.b16 %v3079
        %v3416 = vunpack.c.l.b16 %v3080
        %v3417 = vunpack.c.h.b16 %v3080
        %v3418 = vunpack.c.l.b16 %v3081
        %v3419 = vunpack.c.h.b16 %v3081
        %v3420 = vunpack.c.l.b16 %v3082
        %v3421 = vunpack.c.h.b16 %v3082
        %v3422 = vunpack.c.l.b16 %v3083
        %v3423 = vunpack.c.h.b16 %v3083
        %v3424 = vunpack.c.l.b16 %v3084
        %v3425 = vunpack.c.h.b16 %v3084
        %v3426 = vunpack.c.l.b16 %v3085
        %v3427 = vunpack.c.h.b16 %v3085
        %v3428 = vunpack.c.l.b16 %v3086
        %v3429 = vunpack.c.h.b16 %v3086
        %v3430 = vunpack.c.l.b16 %v3087
        %v3431 = vunpack.c.h.b16 %v3087
        %v3432 = vunpack.c.l.b16 %v3088
        %v3433 = vunpack.c.h.b16 %v3088
        %v3434 = vunpack.c.l.b16 %v3089
        %v3435 = vunpack.c.h.b16 %v3089
        %v3436 = vunpack.c.l.b16 %v3090
        %v3437 = vunpack.c.h.b16 %v3090
        %v3438 = vunpack.c.l.b16 %v3091
        %v3439 = vunpack.c.h.b16 %v3091
        %v3440 = vunpack.c.l.b16 %v3092
        %v3441 = vunpack.c.h.b16 %v3092
        %v3442 = vunpack.c.l.b16 %v3093
        %v3443 = vunpack.c.h.b16 %v3093
        %v3444 = vunpack.c.l.b16 %v3094
        %v3445 = vunpack.c.h.b16 %v3094
        %v3446 = vunpack.c.l.b16 %v3095
        %v3447 = vunpack.c.h.b16 %v3095
        %v3448 = vunpack.c.l.b16 %v3096
        %v3449 = vunpack.c.h.b16 %v3096
        %v3450 = vunpack.c.l.b16 %v3097
        %v3451 = vunpack.c.h.b16 %v3097
        %v3452 = vunpack.c.l.b16 %v3098
        %v3453 = vunpack.c.h.b16 %v3098
        %v3454 = vunpack.c.l.b16 %v3099
        %v3455 = vunpack.c.h.b16 %v3099
        %v3456 = vunpack.c.l.b16 %v3100
        %v3457 = vunpack.c.h.b16 %v3100
        %v3458 = vunpack.c.l.b16 %v3101
        %v3459 = vunpack.c.h.b16 %v3101
        %v3460 = vunpack.c.l.b16 %v3102
        %v3461 = vunpack.c.h.b16 %v3102
        %v3462 = vunpack.c.l.b16 %v3103
        %v3463 = vunpack.c.h.b16 %v3103
        %v3464 = vunpack.c.l.b16 %v3104
        %v3465 = vunpack.c.h.b16 %v3104
        %v3466 = vunpack.c.l.b16 %v3105
        %v3467 = vunpack.c.h.b16 %v3105
        %v3468 = vunpack.c.l.b16 %v3106
        %v3469 = vunpack.c.h.b16 %v3106
        %v3470 = vunpack.c.l.b16 %v3107
        %v3471 = vunpack.c.h.b16 %v3107
        %v3472 = vunpack.c.l.b16 %v3108
        %v3473 = vunpack.c.h.b16 %v3108
        %v3474 = vunpack.c.l.b16 %v3109
        %v3475 = vunpack.c.h.b16 %v3109
        %v3476 = vunpack.c.l.b16 %v3110
        %v3477 = vunpack.c.h.b16 %v3110
        %v3478 = vunpack.c.l.b16 %v3111
        %v3479 = vunpack.c.h.b16 %v3111
        %v3480 = vunpack.c.l.b16 %v3112
        %v3481 = vunpack.c.h.b16 %v3112
        %v3482 = vunpack.c.l.b16 %v3113
        %v3483 = vunpack.c.h.b16 %v3113
        %v3484 = vunpack.c.l.b16 %v3114
        %v3485 = vunpack.c.h.b16 %v3114
        %v3486 = vunpack.c.l.b16 %v3115
        %v3487 = vunpack.c.h.b16 %v3115
        %v3488 = vunpack.c.l.b16 %v3116
        %v3489 = vunpack.c.h.b16 %v3116
        %v3490 = vunpack.c.l.b16 %v3117
        %v3491 = vunpack.c.h.b16 %v3117
        %v3492 = vunpack.c.l.b16 %v3118
        %v3493 = vunpack.c.h.b16 %v3118
        %v3494 = vunpack.c.l.b16 %v3119
        %v3495 = vunpack.c.h.b16 %v3119
        %v3496 = vunpack.c.l.b16 %v3120
        %v3497 = vunpack.c.h.b16 %v3120
        %v3498 = vunpack.c.l.b16 %v3121
        %v3499 = vunpack.c.h.b16 %v3121
        %v3500 = vunpack.c.l.b16 %v3122
        %v3501 = vunpack.c.h.b16 %v3122
        %v3502 = vunpack.c.l.b16 %v3123
        %v3503 = vunpack.c.h.b16 %v3123
        %v3504 = vunpack.c.l.b16 %v3124
        %v3505 = vunpack.c.h.b16 %v3124
        %v3506 = vunpack.c.l.b16 %v3125
        %v3507 = vunpack.c.h.b16 %v3125
        %v3508 = vunpack.c.l.b16 %v3126
        %v3509 = vunpack.c.h.b16 %v3126
        %v3510 = vunpack.c.l.b16 %v3127
        %v3511 = vunpack.c.h.b16 %v3127
        %v3512 = vunpack.c.l.b16 %v3128
        %v3513 = vunpack.c.h.b16 %v3128
        %v3514 = vunpack.c.l.b16 %v3129
        %v3515 = vunpack.c.h.b16 %v3129
        %v3516 = vunpack.c.l.b16 %v3130
        %v3517 = vunpack.c.h.b16 %v3130
        %v3518 = vunpack.c.l.b16 %v3131
        %v3519 = vunpack.c.h.b16 %v3131
        %v3520 = vunpack.c.l.b16 %v3132
        %v3521 = vunpack.c.h.b16 %v3132
        %v3522 = vunpack.c.l.b16 %v3133
        %v3523 = vunpack.c.h.b16 %v3133
        %v3524 = vunpack.c.l.b16 %v3134
        %v3525 = vunpack.c.h.b16 %v3134
        %v3526 = vunpack.c.l.b16 %v3135
        %v3527 = vunpack.c.h.b16 %v3135
        %v3528 = vunpack.c.l.b16 %v3136
        %v3529 = vunpack.c.h.b16 %v3136
        %v3530 = vunpack.c.l.b16 %v3137
        %v3531 = vunpack.c.h.b16 %v3137
        %v3532 = vunpack.c.l.b16 %v3138
        %v3533 = vunpack.c.h.b16 %v3138
        %v3534 = vunpack.c.l.b16 %v3139
        %v3535 = vunpack.c.h.b16 %v3139
        %v3536 = vunpack.c.l.b16 %v3140
        %v3537 = vunpack.c.h.b16 %v3140
        %v3538 = vunpack.c.l.b16 %v3141
        %v3539 = vunpack.c.h.b16 %v3141
        %v3540 = vunpack.c.l.b16 %v3142
        %v3541 = vunpack.c.h.b16 %v3142
        %v3542 = vunpack.c.l.b16 %v3143
        %v3543 = vunpack.c.h.b16 %v3143
        %v3544 = vunpack.c.l.b16 %v3144
        %v3545 = vunpack.c.h.b16 %v3144
        %v3546 = vunpack.c.l.b16 %v3145
        %v3547 = vunpack.c.h.b16 %v3145
        %v3548 = vunpack.c.l.b16 %v3146
        %v3549 = vunpack.c.h.b16 %v3146
        %v3550 = vunpack.c.l.b16 %v3147
        %v3551 = vunpack.c.h.b16 %v3147
        %v3552 = vunpack.c.l.b16 %v3148
        %v3553 = vunpack.c.h.b16 %v3148
        %v3554 = vunpack.c.l.b16 %v3149
        %v3555 = vunpack.c.h.b16 %v3149
        %v3556 = vunpack.c.l.b16 %v3150
        %v3557 = vunpack.c.h.b16 %v3150
        %v3558 = vunpack.c.l.b16 %v3151
        %v3559 = vunpack.c.h.b16 %v3151
        %v3560 = vunpack.c.l.b16 %v3152
        %v3561 = vunpack.c.h.b16 %v3152
        %v3562 = vunpack.c.l.b16 %v3153
        %v3563 = vunpack.c.h.b16 %v3153
        %v3564 = vunpack.c.l.b16 %v3154
        %v3565 = vunpack.c.h.b16 %v3154
        %v3566 = vunpack.c.l.b16 %v3155
        %v3567 = vunpack.c.h.b16 %v3155
        %v3568 = vunpack.c.l.b16 %v3156
        %v3569 = vunpack.c.h.b16 %v3156
        %v3570 = vunpack.c.l.b16 %v3157
        %v3571 = vunpack.c.h.b16 %v3157
        %v3572 = vunpack.c.l.b16 %v3158
        %v3573 = vunpack.c.h.b16 %v3158
        %v3574 = vunpack.c.l.b16 %v3159
        %v3575 = vunpack.c.h.b16 %v3159
        %v3576 = vunpack.c.l.b16 %v3160
        %v3577 = vunpack.c.h.b16 %v3160
        %v3578 = vunpack.c.l.b16 %v3161
        %v3579 = vunpack.c.h.b16 %v3161
        %v3580 = vunpack.c.l.b16 %v3162
        %v3581 = vunpack.c.h.b16 %v3162
        %v3582 = vunpack.c.l.b16 %v3163
        %v3583 = vunpack.c.h.b16 %v3163
        %v3584 = vunpack.c.l.b16 %v3164
        %v3585 = vunpack.c.h.b16 %v3164
        %v3586 = vunpack.c.l.b16 %v3165
        %v3587 = vunpack.c.h.b16 %v3165
        %v3588 = vunpack.c.l.b16 %v3166
        %v3589 = vunpack.c.h.b16 %v3166
        %v3590 = vunpack.c.l.b16 %v3167
        %v3591 = vunpack.c.h.b16 %v3167
        %v3592 = vunpack.c.l.b16 %v3168
        %v3593 = vunpack.c.h.b16 %v3168
        %v3594 = vunpack.c.l.b16 %v3169
        %v3595 = vunpack.c.h.b16 %v3169
        %v3596 = vpack.c.b16 %v3348, %v3340
        %v3597 = vpack.c.b16 %v3349, %v3341
        %v3598 = vpack.c.b16 %v3350, %v3342
        %v3599 = vpack.c.b16 %v3351, %v3343
        %v3600 = vpack.c.b16 %v3352, %v3344
        %v3601 = vpack.c.b16 %v3353, %v3345
        %v3602 = vpack.c.b16 %v3354, %v3346
        %v3603 = vpack.c.b16 %v3355, %v3347
        %v3604 = vpack.c.b16 %v3364, %v3356
        %v3605 = vpack.c.b16 %v3365, %v3357
        %v3606 = vpack.c.b16 %v3366, %v3358
        %v3607 = vpack.c.b16 %v3367, %v3359
        %v3608 = vpack.c.b16 %v3368, %v3360
        %v3609 = vpack.c.b16 %v3369, %v3361
        %v3610 = vpack.c.b16 %v3370, %v3362
        %v3611 = vpack.c.b16 %v3371, %v3363
        %v3612 = vpack.c.b16 %v3380, %v3372
        %v3613 = vpack.c.b16 %v3381, %v3373
        %v3614 = vpack.c.b16 %v3382, %v3374
        %v3615 = vpack.c.b16 %v3383, %v3375
        %v3616 = vpack.c.b16 %v3384, %v3376
        %v3617 = vpack.c.b16 %v3385, %v3377
        %v3618 = vpack.c.b16 %v3386, %v3378
        %v3619 = vpack.c.b16 %v3387, %v3379
        %v3620 = vpack.c.b16 %v3396, %v3388
        %v3621 = vpack.c.b16 %v3397, %v3389
        %v3622 = vpack.c.b16 %v3398, %v3390
        %v3623 = vpack.c.b16 %v3399, %v3391
        %v3624 = vpack.c.b16 %v3400, %v3392
        %v3625 = vpack.c.b16 %v3401, %v3393
        %v3626 = vpack.c.b16 %v3402, %v3394
        %v3627 = vpack.c.b16 %v3403, %v3395
        %v3628 = vpack.c.b16 %v3412, %v3404
        %v3629 = vpack.c.b16 %v3413, %v3405
        %v3630 = vpack.c.b16 %v3414, %v3406
        %v3631 = vpack.c.b16 %v3415, %v3407
        %v3632 = vpack.c.b16 %v3416, %v3408
        %v3633 = vpack.c.b16 %v3417, %v3409
        %v3634 = vpack.c.b16 %v3418, %v3410
        %v3635 = vpack.c.b16 %v3419, %v3411
        %v3636 = vpack.c.b16 %v3428, %v3420
        %v3637 = vpack.c.b16 %v3429, %v3421
        %v3638 = vpack.c.b16 %v3430, %v3422
        %v3639 = vpack.c.b16 %v3431, %v3423
        %v3640 = vpack.c.b16 %v3432, %v3424
        %v3641 = vpack.c.b16 %v3433, %v3425
        %v3642 = vpack.c.b16 %v3434, %v3426
        %v3643 = vpack.c.b16 %v3435, %v3427
        %v3644 = vpack.c.b16 %v3444, %v3436
        %v3645 = vpack.c.b16 %v3445, %v3437
        %v3646 = vpack.c.b16 %v3446, %v3438
        %v3647 = vpack.c.b16 %v3447, %v3439
        %v3648 = vpack.c.b16 %v3448, %v3440
        %v3649 = vpack.c.b16 %v3449, %v3441
        %v3650 = vpack.c.b16 %v3450, %v3442
        %v3651 = vpack.c.b16 %v3451, %v3443
        %v3652 = vpack.c.b16 %v3460, %v3452
        %v3653 = vpack.c.b16 %v3461, %v3453
        %v3654 = vpack.c.b16 %v3462, %v3454
        %v3655 = vpack.c.b16 %v3463, %v3455
        %v3656 = vpack.c.b16 %v3464, %v3456
        %v3657 = vpack.c.b16 %v3465, %v3457
        %v3658 = vpack.c.b16 %v3466, %v3458
        %v3659 = vpack.c.b16 %v3467, %v3459
        %v3660 = vpack.c.b16 %v3476, %v3468
        %v3661 = vpack.c.b16 %v3477, %v3469
        %v3662 = vpack.c.b16 %v3478, %v3470
        %v3663 = vpack.c.b16 %v3479, %v3471
        %v3664 = vpack.c.b16 %v3480, %v3472
        %v3665 = vpack.c.b16 %v3481, %v3473
        %v3666 = vpack.c.b16 %v3482, %v3474
        %v3667 = vpack.c.b16 %v3483, %v3475
        %v3668 = vpack.c.b16 %v3492, %v3484
        %v3669 = vpack.c.b16 %v3493, %v3485
        %v3670 = vpack.c.b16 %v3494, %v3486
        %v3671 = vpack.c.b16 %v3495, %v3487
        %v3672 = vpack.c.b16 %v3496, %v3488
        %v3673 = vpack.c.b16 %v3497, %v3489
        %v3674 = vpack.c.b16 %v3498, %v3490
        %v3675 = vpack.c.b16 %v3499, %v3491
        %v3676 = vpack.c.b16 %v3508, %v3500
        %v3677 = vpack.c.b16 %v3509, %v3501
        %v3678 = vpack.c.b16 %v3510, %v3502
        %v3679 = vpack.c.b16 %v3511, %v3503
        %v3680 = vpack.c.b16 %v3512, %v3504
        %v3681 = vpack.c.b16 %v3513, %v3505
        %v3682 = vpack.c.b16 %v3514, %v3506
        %v3683 = vpack.c.b16 %v3515, %v3507
        %v3684 = vpack.c.b16 %v3524, %v3516
        %v3685 = vpack.c.b16 %v3525, %v3517
        %v3686 = vpack.c.b16 %v3526, %v3518
        %v3687 = vpack.c.b16 %v3527, %v3519
        %v3688 = vpack.c.b16 %v3528, %v3520
        %v3689 = vpack.c.b16 %v3529, %v3521
        %v3690 = vpack.c.b16 %v3530, %v3522
        %v3691 = vpack.c.b16 %v3531, %v3523
        %v3692 = vpack.c.b16 %v3540, %v3532
        %v3693 = vpack.c.b16 %v3541, %v3533
        %v3694 = vpack.c.b16 %v3542, %v3534
        %v3695 = vpack.c.b16 %v3543, %v3535
        %v3696 = vpack.c.b16 %v3544, %v3536
        %v3697 = vpack.c.b16 %v3545, %v3537
        %v3698 = vpack.c.b16 %v3546, %v3538
        %v3699 = vpack.c.b16 %v3547, %v3539
        %v3700 = vpack.c.b16 %v3556, %v3548
        %v3701 = vpack.c.b16 %v3557, %v3549
        %v3702 = vpack.c.b16 %v3558, %v3550
        %v3703 = vpack.c.b16 %v3559, %v3551
        %v3704 = vpack.c.b16 %v3560, %v3552
        %v3705 = vpack.c.b16 %v3561, %v3553
        %v3706 = vpack.c.b16 %v3562, %v3554
        %v3707 = vpack.c.b16 %v3563, %v3555
        %v3708 = vpack.c.b16 %v3572, %v3564
        %v3709 = vpack.c.b16 %v3573, %v3565
        %v3710 = vpack.c.b16 %v3574, %v3566
        %v3711 = vpack.c.b16 %v3575, %v3567
        %v3712 = vpack.c.b16 %v3576, %v3568
        %v3713 = vpack.c.b16 %v3577, %v3569
        %v3714 = vpack.c.b16 %v3578, %v3570
        %v3715 = vpack.c.b16 %v3579, %v3571
        %v3716 = vpack.c.b16 %v3588, %v3580
        %v3717 = vpack.c.b16 %v3589, %v3581
        %v3718 = vpack.c.b16 %v3590, %v3582
        %v3719 = vpack.c.b16 %v3591, %v3583
        %v3720 = vpack.c.b16 %v3592, %v3584
        %v3721 = vpack.c.b16 %v3593, %v3585
        %v3722 = vpack.c.b16 %v3594, %v3586
        %v3723 = vpack.c.b16 %v3595, %v3587
        %3852 = vmatprep.subr.bf16.mxu0 %v3597
        %3853 = vmatpush1.bf16.msra.mxu0 %v3596
        %3854 = vmatprep.subr.bf16.mxu0 %v3605
        %3855 = vmatpush1.bf16.msra.mxu0 %v3604
        %3856 = vmatprep.subr.bf16.mxu0 %v3613
        %3857 = vmatpush1.bf16.msra.mxu0 %v3612
        %3858 = vmatprep.subr.bf16.mxu0 %v3621
        %3859 = vmatpush1.bf16.msra.mxu0 %v3620
        %3860 = vmatprep.subr.bf16.mxu0 %v3629
        %3861 = vmatpush1.bf16.msra.mxu0 %v3628
        %3862 = vmatprep.subr.bf16.mxu0 %v3637
        %3863 = vmatpush1.bf16.msra.mxu0 %v3636
        %3864 = vmatprep.subr.bf16.mxu0 %v3645
        %3865 = vmatpush1.bf16.msra.mxu0 %v3644
        %3866 = vmatprep.subr.bf16.mxu0 %v3653
        %3867 = vmatpush1.bf16.msra.mxu0 %v3652
        %3868 = vmatprep.subr.bf16.mxu0 %v3661
        %3869 = vmatpush1.bf16.msra.mxu0 %v3660
        %3870 = vmatprep.subr.bf16.mxu0 %v3669
        %3871 = vmatpush1.bf16.msra.mxu0 %v3668
        %3872 = vmatprep.subr.bf16.mxu0 %v3677
        %3873 = vmatpush1.bf16.msra.mxu0 %v3676
        %3874 = vmatprep.subr.bf16.mxu0 %v3685
        %3875 = vmatpush1.bf16.msra.mxu0 %v3684
        %3876 = vmatprep.subr.bf16.mxu0 %v3693
        %3877 = vmatpush1.bf16.msra.mxu0 %v3692
        %3878 = vmatprep.subr.bf16.mxu0 %v3701
        %3879 = vmatpush1.bf16.msra.mxu0 %v3700
        %3880 = vmatprep.subr.bf16.mxu0 %v3709
        %3881 = vmatpush1.bf16.msra.mxu0 %v3708
        %3882 = vmatprep.subr.bf16.mxu0 %v3717
        %3883 = vmatpush1.bf16.msra.mxu0 %v3716
        %3884 = vmatprep.mubr.bf16.mxu0 %v3027
        %3885 = vmatmul.mubr.bf16.gmra.mrb[0].mxu0 %v3026
        %v3886 = vpop.f32.mrb[0].mxu0
        %v3887 = vadd.f32 %v3175, %v3886
        %v3888 = vpop.f32.mrb[0].mxu0
        %v3889 = vadd.f32 %v3179, %v3888
        %v3890 = vpop.f32.mrb[0].mxu0
        %v3891 = vadd.f32 %v3175, %v3890
        %v3892 = vpop.f32.mrb[0].mxu0
        %v3893 = vadd.f32 %v3179, %v3892
        %3894 = vmatprep.mubr.bf16.mxu0 %v3029
        %3895 = vmatmul.mubr.bf16.gmra.mrb[0].mxu0 %v3028
        %v3896 = vpop.f32.mrb[0].mxu0
        %v3897 = vadd.f32 %v3175, %v3896
        %v3898 = vpop.f32.mrb[0].mxu0
        %v3899 = vadd.f32 %v3179, %v3898
        %v3900 = vpop.f32.mrb[0].mxu0
        %v3901 = vadd.f32 %v3175, %v3900
        %v3902 = vpop.f32.mrb[0].mxu0
        %v3903 = vadd.f32 %v3179, %v3902
        %3904 = vmatprep.mubr.bf16.mxu0 %v3031
        %3905 = vmatmul.mubr.bf16.gmra.mrb[0].mxu0 %v3030
        %v3906 = vpop.f32.mrb[0].mxu0
        %v3907 = vadd.f32 %v3175, %v3906
        %v3908 = vpop.f32.mrb[0].mxu0
        %v3909 = vadd.f32 %v3179, %v3908
        %v3910 = vpop.f32.mrb[0].mxu0
        %v3911 = vadd.f32 %v3175, %v3910
        %v3912 = vpop.f32.mrb[0].mxu0
        %v3913 = vadd.f32 %v3179, %v3912
        %3914 = vmatprep.mubr.bf16.mxu0 %v3033
        %3915 = vmatmul.mubr.bf16.gmra.mrb[0].mxu0 %v3032
        %v3916 = vpop.f32.mrb[0].mxu0
        %v3917 = vadd.f32 %v3175, %v3916
        %v3918 = vpop.f32.mrb[0].mxu0
        %v3919 = vadd.f32 %v3179, %v3918
        %v3920 = vpop.f32.mrb[0].mxu0
        %v3921 = vadd.f32 %v3175, %v3920
        %v3922 = vpop.f32.mrb[0].mxu0
        %v3923 = vadd.f32 %v3179, %v3922
        %3924 = vmatprep.mubr.bf16.mxu0 %v3035
        %3925 = vmatmul.mubr.bf16.gmra.mrb[0].mxu0 %v3034
        %v3926 = vpop.f32.mrb[0].mxu0
        %v3927 = vadd.f32 %v3175, %v3926
        %v3928 = vpop.f32.mrb[0].mxu0
        %v3929 = vadd.f32 %v3179, %v3928
        %v3930 = vpop.f32.mrb[0].mxu0
        %v3931 = vadd.f32 %v3175, %v3930
        %v3932 = vpop.f32.mrb[0].mxu0
        %v3933 = vadd.f32 %v3179, %v3932
        %3934 = vmatprep.mubr.bf16.mxu0 %v3037
        %3935 = vmatmul.mubr.bf16.gmra.mrb[0].mxu0 %v3036
        %v3936 = vpop.f32.mrb[0].mxu0
        %v3937 = vadd.f32 %v3175, %v3936
        %v3938 = vpop.f32.mrb[0].mxu0
        %v3939 = vadd.f32 %v3179, %v3938
        %v3940 = vpop.f32.mrb[0].mxu0
        %v3941 = vadd.f32 %v3175, %v3940
        %v3942 = vpop.f32.mrb[0].mxu0
        %v3943 = vadd.f32 %v3179, %v3942
        %3944 = vmatprep.mubr.bf16.mxu0 %v3039
        %3945 = vmatmul.mubr.bf16.gmra.mrb[0].mxu0 %v3038
        %v3946 = vpop.f32.mrb[0].mxu0
        %v3947 = vadd.f32 %v3175, %v3946
        %v3948 = vpop.f32.mrb[0].mxu0
        %v3949 = vadd.f32 %v3179, %v3948
        %v3950 = vpop.f32.mrb[0].mxu0
        %v3951 = vadd.f32 %v3175, %v3950
        %v3952 = vpop.f32.mrb[0].mxu0
        %v3953 = vadd.f32 %v3179, %v3952
        %3954 = vmatprep.mubr.bf16.mxu0 %v3041
        %3955 = vmatmul.mubr.bf16.gmra.mrb[0].mxu0 %v3040
        %v3956 = vpop.f32.mrb[0].mxu0
        %v3957 = vadd.f32 %v3175, %v3956
        %v3958 = vpop.f32.mrb[0].mxu0
        %v3959 = vadd.f32 %v3179, %v3958
        %v3960 = vpop.f32.mrb[0].mxu0
        %v3961 = vadd.f32 %v3175, %v3960
        %v3962 = vpop.f32.mrb[0].mxu0
        %v3963 = vadd.f32 %v3179, %v3962
        %3964 = vdwg.mxu0
        %3965 = vmatprep.subr.bf16.mxu0 %v3599
        %3966 = vmatpush1.bf16.msra.mxu0 %v3598
        %3967 = vmatprep.subr.bf16.mxu0 %v3607
        %3968 = vmatpush1.bf16.msra.mxu0 %v3606
        %3969 = vmatprep.subr.bf16.mxu0 %v3615
        %3970 = vmatpush1.bf16.msra.mxu0 %v3614
        %3971 = vmatprep.subr.bf16.mxu0 %v3623
        %3972 = vmatpush1.bf16.msra.mxu0 %v3622
        %3973 = vmatprep.subr.bf16.mxu0 %v3631
        %3974 = vmatpush1.bf16.msra.mxu0 %v3630
        %3975 = vmatprep.subr.bf16.mxu0 %v3639
        %3976 = vmatpush1.bf16.msra.mxu0 %v3638
        %3977 = vmatprep.subr.bf16.mxu0 %v3647
        %3978 = vmatpush1.bf16.msra.mxu0 %v3646
        %3979 = vmatprep.subr.bf16.mxu0 %v3655
        %3980 = vmatpush1.bf16.msra.mxu0 %v3654
        %3981 = vmatprep.subr.bf16.mxu0 %v3663
        %3982 = vmatpush1.bf16.msra.mxu0 %v3662
        %3983 = vmatprep.subr.bf16.mxu0 %v3671
        %3984 = vmatpush1.bf16.msra.mxu0 %v3670
        %3985 = vmatprep.subr.bf16.mxu0 %v3679
        %3986 = vmatpush1.bf16.msra.mxu0 %v3678
        %3987 = vmatprep.subr.bf16.mxu0 %v3687
        %3988 = vmatpush1.bf16.msra.mxu0 %v3686
        %3989 = vmatprep.subr.bf16.mxu0 %v3695
        %3990 = vmatpush1.bf16.msra.mxu0 %v3694
        %3991 = vmatprep.subr.bf16.mxu0 %v3703
        %3992 = vmatpush1.bf16.msra.mxu0 %v3702
        %3993 = vmatprep.subr.bf16.mxu0 %v3711
        %3994 = vmatpush1.bf16.msra.mxu0 %v3710
        %3995 = vmatprep.subr.bf16.mxu0 %v3719
        %3996 = vmatpush1.bf16.msra.mxu0 %v3718
        %3997 = vmatprep.mubr.bf16.mxu0 %v3027
        %3998 = vmatmul.mubr.bf16.gmra.mrb[0].mxu0 %v3026
        %v3999 = vpop.f32.mrb[0].mxu0
        %v4000 = vadd.f32 %v3183, %v3999
        %v4001 = vpop.f32.mrb[0].mxu0
        %v4002 = vadd.f32 %v3187, %v4001
        %v4003 = vpop.f32.mrb[0].mxu0
        %v4004 = vadd.f32 %v3183, %v4003
        %v4005 = vpop.f32.mrb[0].mxu0
        %v4006 = vadd.f32 %v3187, %v4005
        %4007 = vmatprep.mubr.bf16.mxu0 %v3029
        %4008 = vmatmul.mubr.bf16.gmra.mrb[0].mxu0 %v3028
        %v4009 = vpop.f32.mrb[0].mxu0
        %v4010 = vadd.f32 %v3183, %v4009
        %v4011 = vpop.f32.mrb[0].mxu0
        %v4012 = vadd.f32 %v3187, %v4011
        %v4013 = vpop.f32.mrb[0].mxu0
        %v4014 = vadd.f32 %v3183, %v4013
        %v4015 = vpop.f32.mrb[0].mxu0
        %v4016 = vadd.f32 %v3187, %v4015
        %4017 = vmatprep.mubr.bf16.mxu0 %v3031
        %4018 = vmatmul.mubr.bf16.gmra.mrb[0].mxu0 %v3030
        %v4019 = vpop.f32.mrb[0].mxu0
        %v4020 = vadd.f32 %v3183, %v4019
        %v4021 = vpop.f32.mrb[0].mxu0
        %v4022 = vadd.f32 %v3187, %v4021
        %v4023 = vpop.f32.mrb[0].mxu0
        %v4024 = vadd.f32 %v3183, %v4023
        %v4025 = vpop.f32.mrb[0].mxu0
        %v4026 = vadd.f32 %v3187, %v4025
        %4027 = vmatprep.mubr.bf16.mxu0 %v3033
        %4028 = vmatmul.mubr.bf16.gmra.mrb[0].mxu0 %v3032
        %v4029 = vpop.f32.mrb[0].mxu0
        %v4030 = vadd.f32 %v3183, %v4029
        %v4031 = vpop.f32.mrb[0].mxu0
        %v4032 = vadd.f32 %v3187, %v4031
        %v4033 = vpop.f32.mrb[0].mxu0
        %v4034 = vadd.f32 %v3183, %v4033
        %v4035 = vpop.f32.mrb[0].mxu0
        %v4036 = vadd.f32 %v3187, %v4035
        %4037 = vmatprep.mubr.bf16.mxu0 %v3035
        %4038 = vmatmul.mubr.bf16.gmra.mrb[0].mxu0 %v3034
        %v4039 = vpop.f32.mrb[0].mxu0
        %v4040 = vadd.f32 %v3183, %v4039
        %v4041 = vpop.f32.mrb[0].mxu0
        %v4042 = vadd.f32 %v3187, %v4041
        %v4043 = vpop.f32.mrb[0].mxu0
        %v4044 = vadd.f32 %v3183, %v4043
        %v4045 = vpop.f32.mrb[0].mxu0
        %v4046 = vadd.f32 %v3187, %v4045
        %4047 = vmatprep.mubr.bf16.mxu0 %v3037
        %4048 = vmatmul.mubr.bf16.gmra.mrb[0].mxu0 %v3036
        %v4049 = vpop.f32.mrb[0].mxu0
        %v4050 = vadd.f32 %v3183, %v4049
        %v4051 = vpop.f32.mrb[0].mxu0
        %v4052 = vadd.f32 %v3187, %v4051
        %v4053 = vpop.f32.mrb[0].mxu0
        %v4054 = vadd.f32 %v3183, %v4053
        %v4055 = vpop.f32.mrb[0].mxu0
        %v4056 = vadd.f32 %v3187, %v4055
        %4057 = vmatprep.mubr.bf16.mxu0 %v3039
        %4058 = vmatmul.mubr.bf16.gmra.mrb[0].mxu0 %v3038
        %v4059 = vpop.f32.mrb[0].mxu0
        %v4060 = vadd.f32 %v3183, %v4059
        %v4061 = vpop.f32.mrb[0].mxu0
        %v4062 = vadd.f32 %v3187, %v4061
        %v4063 = vpop.f32.mrb[0].mxu0
        %v4064 = vadd.f32 %v3183, %v4063
        %v4065 = vpop.f32.mrb[0].mxu0
        %v4066 = vadd.f32 %v3187, %v4065
        %4067 = vmatprep.mubr.bf16.mxu0 %v3041
        %4068 = vmatmul.mubr.bf16.gmra.mrb[0].mxu0 %v3040
        %v4069 = vpop.f32.mrb[0].mxu0
        %v4070 = vadd.f32 %v3183, %v4069
        %v4071 = vpop.f32.mrb[0].mxu0
        %v4072 = vadd.f32 %v3187, %v4071
        %v4073 = vpop.f32.mrb[0].mxu0
        %v4074 = vadd.f32 %v3183, %v4073
        %v4075 = vpop.f32.mrb[0].mxu0
        %v4076 = vadd.f32 %v3187, %v4075
        %4077 = vdwg.mxu0
        %4078 = vmatprep.subr.bf16.mxu0 %v3601
        %4079 = vmatpush1.bf16.msra.mxu0 %v3600
        %4080 = vmatprep.subr.bf16.mxu0 %v3609
        %4081 = vmatpush1.bf16.msra.mxu0 %v3608
        %4082 = vmatprep.subr.bf16.mxu0 %v3617
        %4083 = vmatpush1.bf16.msra.mxu0 %v3616
        %4084 = vmatprep.subr.bf16.mxu0 %v3625
        %4085 = vmatpush1.bf16.msra.mxu0 %v3624
        %4086 = vmatprep.subr.bf16.mxu0 %v3633
        %4087 = vmatpush1.bf16.msra.mxu0 %v3632
        %4088 = vmatprep.subr.bf16.mxu0 %v3641
        %4089 = vmatpush1.bf16.msra.mxu0 %v3640
        %4090 = vmatprep.subr.bf16.mxu0 %v3649
        %4091 = vmatpush1.bf16.msra.mxu0 %v3648
        %4092 = vmatprep.subr.bf16.mxu0 %v3657
        %4093 = vmatpush1.bf16.msra.mxu0 %v3656
        %4094 = vmatprep.subr.bf16.mxu0 %v3665
        %4095 = vmatpush1.bf16.msra.mxu0 %v3664
        %4096 = vmatprep.subr.bf16.mxu0 %v3673
        %4097 = vmatpush1.bf16.msra.mxu0 %v3672
        %4098 = vmatprep.subr.bf16.mxu0 %v3681
        %4099 = vmatpush1.bf16.msra.mxu0 %v3680
        %4100 = vmatprep.subr.bf16.mxu0 %v3689
        %4101 = vmatpush1.bf16.msra.mxu0 %v3688
        %4102 = vmatprep.subr.bf16.mxu0 %v3697
        %4103 = vmatpush1.bf16.msra.mxu0 %v3696
        %4104 = vmatprep.subr.bf16.mxu0 %v3705
        %4105 = vmatpush1.bf16.msra.mxu0 %v3704
        %4106 = vmatprep.subr.bf16.mxu0 %v3713
        %4107 = vmatpush1.bf16.msra.mxu0 %v3712
        %4108 = vmatprep.subr.bf16.mxu0 %v3721
        %4109 = vmatpush1.bf16.msra.mxu0 %v3720
        %4110 = vmatprep.mubr.bf16.mxu0 %v3027
        %4111 = vmatmul.mubr.bf16.gmra.mrb[0].mxu0 %v3026
        %v4112 = vpop.f32.mrb[0].mxu0
        %v4113 = vadd.f32 %v3191, %v4112
        %v4114 = vpop.f32.mrb[0].mxu0
        %v4115 = vadd.f32 %v3195, %v4114
        %v4116 = vpop.f32.mrb[0].mxu0
        %v4117 = vadd.f32 %v3191, %v4116
        %v4118 = vpop.f32.mrb[0].mxu0
        %v4119 = vadd.f32 %v3195, %v4118
        %4120 = vmatprep.mubr.bf16.mxu0 %v3029
        %4121 = vmatmul.mubr.bf16.gmra.mrb[0].mxu0 %v3028
        %v4122 = vpop.f32.mrb[0].mxu0
        %v4123 = vadd.f32 %v3191, %v4122
        %v4124 = vpop.f32.mrb[0].mxu0
        %v4125 = vadd.f32 %v3195, %v4124
        %v4126 = vpop.f32.mrb[0].mxu0
        %v4127 = vadd.f32 %v3191, %v4126
        %v4128 = vpop.f32.mrb[0].mxu0
        %v4129 = vadd.f32 %v3195, %v4128
        %4130 = vmatprep.mubr.bf16.mxu0 %v3031
        %4131 = vmatmul.mubr.bf16.gmra.mrb[0].mxu0 %v3030
        %v4132 = vpop.f32.mrb[0].mxu0
        %v4133 = vadd.f32 %v3191, %v4132
        %v4134 = vpop.f32.mrb[0].mxu0
        %v4135 = vadd.f32 %v3195, %v4134
        %v4136 = vpop.f32.mrb[0].mxu0
        %v4137 = vadd.f32 %v3191, %v4136
        %v4138 = vpop.f32.mrb[0].mxu0
        %v4139 = vadd.f32 %v3195, %v4138
        %4140 = vmatprep.mubr.bf16.mxu0 %v3033
        %4141 = vmatmul.mubr.bf16.gmra.mrb[0].mxu0 %v3032
        %v4142 = vpop.f32.mrb[0].mxu0
        %v4143 = vadd.f32 %v3191, %v4142
        %v4144 = vpop.f32.mrb[0].mxu0
        %v4145 = vadd.f32 %v3195, %v4144
        %v4146 = vpop.f32.mrb[0].mxu0
        %v4147 = vadd.f32 %v3191, %v4146
        %v4148 = vpop.f32.mrb[0].mxu0
        %v4149 = vadd.f32 %v3195, %v4148
        %4150 = vmatprep.mubr.bf16.mxu0 %v3035
        %4151 = vmatmul.mubr.bf16.gmra.mrb[0].mxu0 %v3034
        %v4152 = vpop.f32.mrb[0].mxu0
        %v4153 = vadd.f32 %v3191, %v4152
        %v4154 = vpop.f32.mrb[0].mxu0
        %v4155 = vadd.f32 %v3195, %v4154
        %v4156 = vpop.f32.mrb[0].mxu0
        %v4157 = vadd.f32 %v3191, %v4156
        %v4158 = vpop.f32.mrb[0].mxu0
        %v4159 = vadd.f32 %v3195, %v4158
        %4160 = vmatprep.mubr.bf16.mxu0 %v3037
        %4161 = vmatmul.mubr.bf16.gmra.mrb[0].mxu0 %v3036
        %v4162 = vpop.f32.mrb[0].mxu0
        %v4163 = vadd.f32 %v3191, %v4162
        %v4164 = vpop.f32.mrb[0].mxu0
        %v4165 = vadd.f32 %v3195, %v4164
        %v4166 = vpop.f32.mrb[0].mxu0
        %v4167 = vadd.f32 %v3191, %v4166
        %v4168 = vpop.f32.mrb[0].mxu0
        %v4169 = vadd.f32 %v3195, %v4168
        %4170 = vmatprep.mubr.bf16.mxu0 %v3039
        %4171 = vmatmul.mubr.bf16.gmra.mrb[0].mxu0 %v3038
        %v4172 = vpop.f32.mrb[0].mxu0
        %v4173 = vadd.f32 %v3191, %v4172
        %v4174 = vpop.f32.mrb[0].mxu0
        %v4175 = vadd.f32 %v3195, %v4174
        %v4176 = vpop.f32.mrb[0].mxu0
        %v4177 = vadd.f32 %v3191, %v4176
        %v4178 = vpop.f32.mrb[0].mxu0
        %v4179 = vadd.f32 %v3195, %v4178
        %4180 = vmatprep.mubr.bf16.mxu0 %v3041
        %4181 = vmatmul.mubr.bf16.gmra.mrb[0].mxu0 %v3040
        %v4182 = vpop.f32.mrb[0].mxu0
        %v4183 = vadd.f32 %v3191, %v4182
        %v4184 = vpop.f32.mrb[0].mxu0
        %v4185 = vadd.f32 %v3195, %v4184
        %v4186 = vpop.f32.mrb[0].mxu0
        %v4187 = vadd.f32 %v3191, %v4186
        %v4188 = vpop.f32.mrb[0].mxu0
        %v4189 = vadd.f32 %v3195, %v4188
        %4190 = vdwg.mxu0
        %4191 = vmatprep.subr.bf16.mxu0 %v3603
        %4192 = vmatpush1.bf16.msra.mxu0 %v3602
        %4193 = vmatprep.subr.bf16.mxu0 %v3611
        %4194 = vmatpush1.bf16.msra.mxu0 %v3610
        %4195 = vmatprep.subr.bf16.mxu0 %v3619
        %4196 = vmatpush1.bf16.msra.mxu0 %v3618
        %4197 = vmatprep.subr.bf16.mxu0 %v3627
        %4198 = vmatpush1.bf16.msra.mxu0 %v3626
        %4199 = vmatprep.subr.bf16.mxu0 %v3635
        %4200 = vmatpush1.bf16.msra.mxu0 %v3634
        %4201 = vmatprep.subr.bf16.mxu0 %v3643
        %4202 = vmatpush1.bf16.msra.mxu0 %v3642
        %4203 = vmatprep.subr.bf16.mxu0 %v3651
        %4204 = vmatpush1.bf16.msra.mxu0 %v3650
        %4205 = vmatprep.subr.bf16.mxu0 %v3659
        %4206 = vmatpush1.bf16.msra.mxu0 %v3658
        %4207 = vmatprep.subr.bf16.mxu0 %v3667
        %4208 = vmatpush1.bf16.msra.mxu0 %v3666
        %4209 = vmatprep.subr.bf16.mxu0 %v3675
        %4210 = vmatpush1.bf16.msra.mxu0 %v3674
        %4211 = vmatprep.subr.bf16.mxu0 %v3683
        %4212 = vmatpush1.bf16.msra.mxu0 %v3682
        %4213 = vmatprep.subr.bf16.mxu0 %v3691
        %4214 = vmatpush1.bf16.msra.mxu0 %v3690
        %4215 = vmatprep.subr.bf16.mxu0 %v3699
        %4216 = vmatpush1.bf16.msra.mxu0 %v3698
        %4217 = vmatprep.subr.bf16.mxu0 %v3707
        %4218 = vmatpush1.bf16.msra.mxu0 %v3706
        %4219 = vmatprep.subr.bf16.mxu0 %v3715
        %4220 = vmatpush1.bf16.msra.mxu0 %v3714
        %4221 = vmatprep.subr.bf16.mxu0 %v3723
        %4222 = vmatpush1.bf16.msra.mxu0 %v3722
        %4223 = vmatprep.mubr.bf16.mxu0 %v3027
        %4224 = vmatmul.mubr.bf16.gmra.mrb[0].mxu0 %v3026
        %v4225 = vpop.f32.mrb[0].mxu0
        %v4226 = vadd.f32 %v3199, %v4225
        %v4227 = vpop.f32.mrb[0].mxu0
        %v4228 = vadd.f32 %v3203, %v4227
        %v4229 = vpop.f32.mrb[0].mxu0
        %v4230 = vadd.f32 %v3199, %v4229
        %v4231 = vpop.f32.mrb[0].mxu0
        %v4232 = vadd.f32 %v3203, %v4231
        %4233 = vmatprep.mubr.bf16.mxu0 %v3029
        %4234 = vmatmul.mubr.bf16.gmra.mrb[0].mxu0 %v3028
        %v4235 = vpop.f32.mrb[0].mxu0
        %v4236 = vadd.f32 %v3199, %v4235
        %v4237 = vpop.f32.mrb[0].mxu0
        %v4238 = vadd.f32 %v3203, %v4237
        %v4239 = vpop.f32.mrb[0].mxu0
        %v4240 = vadd.f32 %v3199, %v4239
        %v4241 = vpop.f32.mrb[0].mxu0
        %v4242 = vadd.f32 %v3203, %v4241
        %4243 = vmatprep.mubr.bf16.mxu0 %v3031
        %4244 = vmatmul.mubr.bf16.gmra.mrb[0].mxu0 %v3030
        %v4245 = vpop.f32.mrb[0].mxu0
        %v4246 = vadd.f32 %v3199, %v4245
        %v4247 = vpop.f32.mrb[0].mxu0
        %v4248 = vadd.f32 %v3203, %v4247
        %v4249 = vpop.f32.mrb[0].mxu0
        %v4250 = vadd.f32 %v3199, %v4249
        %v4251 = vpop.f32.mrb[0].mxu0
        %v4252 = vadd.f32 %v3203, %v4251
        %4253 = vmatprep.mubr.bf16.mxu0 %v3033
        %4254 = vmatmul.mubr.bf16.gmra.mrb[0].mxu0 %v3032
        %v4255 = vpop.f32.mrb[0].mxu0
        %v4256 = vadd.f32 %v3199, %v4255
        %v4257 = vpop.f32.mrb[0].mxu0
        %v4258 = vadd.f32 %v3203, %v4257
        %v4259 = vpop.f32.mrb[0].mxu0
        %v4260 = vadd.f32 %v3199, %v4259
        %v4261 = vpop.f32.mrb[0].mxu0
        %v4262 = vadd.f32 %v3203, %v4261
        %4263 = vmatprep.mubr.bf16.mxu0 %v3035
        %4264 = vmatmul.mubr.bf16.gmra.mrb[0].mxu0 %v3034
        %v4265 = vpop.f32.mrb[0].mxu0
        %v4266 = vadd.f32 %v3199, %v4265
        %v4267 = vpop.f32.mrb[0].mxu0
        %v4268 = vadd.f32 %v3203, %v4267
        %v4269 = vpop.f32.mrb[0].mxu0
        %v4270 = vadd.f32 %v3199, %v4269
        %v4271 = vpop.f32.mrb[0].mxu0
        %v4272 = vadd.f32 %v3203, %v4271
        %4273 = vmatprep.mubr.bf16.mxu0 %v3037
        %4274 = vmatmul.mubr.bf16.gmra.mrb[0].mxu0 %v3036
        %v4275 = vpop.f32.mrb[0].mxu0
        %v4276 = vadd.f32 %v3199, %v4275
        %v4277 = vpop.f32.mrb[0].mxu0
        %v4278 = vadd.f32 %v3203, %v4277
        %v4279 = vpop.f32.mrb[0].mxu0
        %v4280 = vadd.f32 %v3199, %v4279
        %v4281 = vpop.f32.mrb[0].mxu0
        %v4282 = vadd.f32 %v3203, %v4281
        %4283 = vmatprep.mubr.bf16.mxu0 %v3039
        %4284 = vmatmul.mubr.bf16.gmra.mrb[0].mxu0 %v3038
        %v4285 = vpop.f32.mrb[0].mxu0
        %v4286 = vadd.f32 %v3199, %v4285
        %v4287 = vpop.f32.mrb[0].mxu0
        %v4288 = vadd.f32 %v3203, %v4287
        %v4289 = vpop.f32.mrb[0].mxu0
        %v4290 = vadd.f32 %v3199, %v4289
        %v4291 = vpop.f32.mrb[0].mxu0
        %v4292 = vadd.f32 %v3203, %v4291
        %4293 = vmatprep.mubr.bf16.mxu0 %v3041
        %4294 = vmatmul.mubr.bf16.gmra.mrb[0].mxu0 %v3040
        %v4295 = vpop.f32.mrb[0].mxu0
        %v4296 = vadd.f32 %v3199, %v4295
        %v4297 = vpop.f32.mrb[0].mxu0
        %v4298 = vadd.f32 %v3203, %v4297
        %v4299 = vpop.f32.mrb[0].mxu0
        %v4300 = vadd.f32 %v3199, %v4299
        %v4301 = vpop.f32.mrb[0].mxu0
        %v4302 = vadd.f32 %v3203, %v4301
        %4303 = vdwg.mxu0
        %v4304 = vmul.f32 %v3887, 0.5
        %v4305 = vmul.f32 %v3889, 0.5
        %v4306 = vmul.f32 %v4000, 0.5
        %v4307 = vmul.f32 %v4002, 0.5
        %v4308 = vmul.f32 %v4113, 0.5
        %v4309 = vmul.f32 %v4115, 0.5
        %v4310 = vmul.f32 %v4226, 0.5
        %v4311 = vmul.f32 %v4228, 0.5
        %v4312 = vmul.f32 %v3891, 0.5
        %v4313 = vmul.f32 %v3893, 0.5
        %v4314 = vmul.f32 %v4004, 0.5
        %v4315 = vmul.f32 %v4006, 0.5
        %v4316 = vmul.f32 %v4117, 0.5
        %v4317 = vmul.f32 %v4119, 0.5
        %v4318 = vmul.f32 %v4230, 0.5
        %v4319 = vmul.f32 %v4232, 0.5
        %v4320 = vmul.f32 %v3897, 0.5
        %v4321 = vmul.f32 %v3899, 0.5
        %v4322 = vmul.f32 %v4010, 0.5
        %v4323 = vmul.f32 %v4012, 0.5
        %v4324 = vmul.f32 %v4123, 0.5
        %v4325 = vmul.f32 %v4125, 0.5
        %v4326 = vmul.f32 %v4236, 0.5
        %v4327 = vmul.f32 %v4238, 0.5
        %v4328 = vmul.f32 %v3901, 0.5
        %v4329 = vmul.f32 %v3903, 0.5
        %v4330 = vmul.f32 %v4014, 0.5
        %v4331 = vmul.f32 %v4016, 0.5
        %v4332 = vmul.f32 %v4127, 0.5
        %v4333 = vmul.f32 %v4129, 0.5
        %v4334 = vmul.f32 %v4240, 0.5
        %v4335 = vmul.f32 %v4242, 0.5
        %v4336 = vmul.f32 %v3907, 0.5
        %v4337 = vmul.f32 %v3909, 0.5
        %v4338 = vmul.f32 %v4020, 0.5
        %v4339 = vmul.f32 %v4022, 0.5
        %v4340 = vmul.f32 %v4133, 0.5
        %v4341 = vmul.f32 %v4135, 0.5
        %v4342 = vmul.f32 %v4246, 0.5
        %v4343 = vmul.f32 %v4248, 0.5
        %v4344 = vmul.f32 %v3911, 0.5
        %v4345 = vmul.f32 %v3913, 0.5
        %v4346 = vmul.f32 %v4024, 0.5
        %v4347 = vmul.f32 %v4026, 0.5
        %v4348 = vmul.f32 %v4137, 0.5
        %v4349 = vmul.f32 %v4139, 0.5
        %v4350 = vmul.f32 %v4250, 0.5
        %v4351 = vmul.f32 %v4252, 0.5
        %v4352 = vmul.f32 %v3917, 0.5
        %v4353 = vmul.f32 %v3919, 0.5
        %v4354 = vmul.f32 %v4030, 0.5
        %v4355 = vmul.f32 %v4032, 0.5
        %v4356 = vmul.f32 %v4143, 0.5
        %v4357 = vmul.f32 %v4145, 0.5
        %v4358 = vmul.f32 %v4256, 0.5
        %v4359 = vmul.f32 %v4258, 0.5
        %v4360 = vmul.f32 %v3921, 0.5
        %v4361 = vmul.f32 %v3923, 0.5
        %v4362 = vmul.f32 %v4034, 0.5
        %v4363 = vmul.f32 %v4036, 0.5
        %v4364 = vmul.f32 %v4147, 0.5
        %v4365 = vmul.f32 %v4149, 0.5
        %v4366 = vmul.f32 %v4260, 0.5
        %v4367 = vmul.f32 %v4262, 0.5
        %v4368 = vmul.f32 %v3927, 0.5
        %v4369 = vmul.f32 %v3929, 0.5
        %v4370 = vmul.f32 %v4040, 0.5
        %v4371 = vmul.f32 %v4042, 0.5
        %v4372 = vmul.f32 %v4153, 0.5
        %v4373 = vmul.f32 %v4155, 0.5
        %v4374 = vmul.f32 %v4266, 0.5
        %v4375 = vmul.f32 %v4268, 0.5
        %v4376 = vmul.f32 %v3931, 0.5
        %v4377 = vmul.f32 %v3933, 0.5
        %v4378 = vmul.f32 %v4044, 0.5
        %v4379 = vmul.f32 %v4046, 0.5
        %v4380 = vmul.f32 %v4157, 0.5
        %v4381 = vmul.f32 %v4159, 0.5
        %v4382 = vmul.f32 %v4270, 0.5
        %v4383 = vmul.f32 %v4272, 0.5
        %v4384 = vmul.f32 %v3937, 0.5
        %v4385 = vmul.f32 %v3939, 0.5
        %v4386 = vmul.f32 %v4050, 0.5
        %v4387 = vmul.f32 %v4052, 0.5
        %v4388 = vmul.f32 %v4163, 0.5
        %v4389 = vmul.f32 %v4165, 0.5
        %v4390 = vmul.f32 %v4276, 0.5
        %v4391 = vmul.f32 %v4278, 0.5
        %v4392 = vmul.f32 %v3941, 0.5
        %v4393 = vmul.f32 %v3943, 0.5
        %v4394 = vmul.f32 %v4054, 0.5
        %v4395 = vmul.f32 %v4056, 0.5
        %v4396 = vmul.f32 %v4167, 0.5
        %v4397 = vmul.f32 %v4169, 0.5
        %v4398 = vmul.f32 %v4280, 0.5
        %v4399 = vmul.f32 %v4282, 0.5
        %v4400 = vmul.f32 %v3947, 0.5
        %v4401 = vmul.f32 %v3949, 0.5
        %v4402 = vmul.f32 %v4060, 0.5
        %v4403 = vmul.f32 %v4062, 0.5
        %v4404 = vmul.f32 %v4173, 0.5
        %v4405 = vmul.f32 %v4175, 0.5
        %v4406 = vmul.f32 %v4286, 0.5
        %v4407 = vmul.f32 %v4288, 0.5
        %v4408 = vmul.f32 %v3951, 0.5
        %v4409 = vmul.f32 %v3953, 0.5
        %v4410 = vmul.f32 %v4064, 0.5
        %v4411 = vmul.f32 %v4066, 0.5
        %v4412 = vmul.f32 %v4177, 0.5
        %v4413 = vmul.f32 %v4179, 0.5
        %v4414 = vmul.f32 %v4290, 0.5
        %v4415 = vmul.f32 %v4292, 0.5
        %v4416 = vmul.f32 %v3957, 0.5
        %v4417 = vmul.f32 %v3959, 0.5
        %v4418 = vmul.f32 %v4070, 0.5
        %v4419 = vmul.f32 %v4072, 0.5
        %v4420 = vmul.f32 %v4183, 0.5
        %v4421 = vmul.f32 %v4185, 0.5
        %v4422 = vmul.f32 %v4296, 0.5
        %v4423 = vmul.f32 %v4298, 0.5
        %v4424 = vmul.f32 %v3961, 0.5
        %v4425 = vmul.f32 %v3963, 0.5
        %v4426 = vmul.f32 %v4074, 0.5
        %v4427 = vmul.f32 %v4076, 0.5
        %v4428 = vmul.f32 %v4187, 0.5
        %v4429 = vmul.f32 %v4189, 0.5
        %v4430 = vmul.f32 %v4300, 0.5
        %v4431 = vmul.f32 %v4302, 0.5
        %v4432 = vmul.f32 %v3887, 0.044715
        %v4433 = vmul.f32 %v3889, 0.044715
        %v4434 = vmul.f32 %v4000, 0.044715
        %v4435 = vmul.f32 %v4002, 0.044715
        %v4436 = vmul.f32 %v4113, 0.044715
        %v4437 = vmul.f32 %v4115, 0.044715
        %v4438 = vmul.f32 %v4226, 0.044715
        %v4439 = vmul.f32 %v4228, 0.044715
        %v4440 = vmul.f32 %v3891, 0.044715
        %v4441 = vmul.f32 %v3893, 0.044715
        %v4442 = vmul.f32 %v4004, 0.044715
        %v4443 = vmul.f32 %v4006, 0.044715
        %v4444 = vmul.f32 %v4117, 0.044715
        %v4445 = vmul.f32 %v4119, 0.044715
        %v4446 = vmul.f32 %v4230, 0.044715
        %v4447 = vmul.f32 %v4232, 0.044715
        %v4448 = vmul.f32 %v3897, 0.044715
        %v4449 = vmul.f32 %v3899, 0.044715
        %v4450 = vmul.f32 %v4010, 0.044715
        %v4451 = vmul.f32 %v4012, 0.044715
        %v4452 = vmul.f32 %v4123, 0.044715
        %v4453 = vmul.f32 %v4125, 0.044715
        %v4454 = vmul.f32 %v4236, 0.044715
        %v4455 = vmul.f32 %v4238, 0.044715
        %v4456 = vmul.f32 %v3901, 0.044715
        %v4457 = vmul.f32 %v3903, 0.044715
        %v4458 = vmul.f32 %v4014, 0.044715
        %v4459 = vmul.f32 %v4016, 0.044715
        %v4460 = vmul.f32 %v4127, 0.044715
        %v4461 = vmul.f32 %v4129, 0.044715
        %v4462 = vmul.f32 %v4240, 0.044715
        %v4463 = vmul.f32 %v4242, 0.044715
        %v4464 = vmul.f32 %v3907, 0.044715
        %v4465 = vmul.f32 %v3909, 0.044715
        %v4466 = vmul.f32 %v4020, 0.044715
        %v4467 = vmul.f32 %v4022, 0.044715
        %v4468 = vmul.f32 %v4133, 0.044715
        %v4469 = vmul.f32 %v4135, 0.044715
        %v4470 = vmul.f32 %v4246, 0.044715
        %v4471 = vmul.f32 %v4248, 0.044715
        %v4472 = vmul.f32 %v3911, 0.044715
        %v4473 = vmul.f32 %v3913, 0.044715
        %v4474 = vmul.f32 %v4024, 0.044715
        %v4475 = vmul.f32 %v4026, 0.044715
        %v4476 = vmul.f32 %v4137, 0.044715
        %v4477 = vmul.f32 %v4139, 0.044715
        %v4478 = vmul.f32 %v4250, 0.044715
        %v4479 = vmul.f32 %v4252, 0.044715
        %v4480 = vmul.f32 %v3917, 0.044715
        %v4481 = vmul.f32 %v3919, 0.044715
        %v4482 = vmul.f32 %v4030, 0.044715
        %v4483 = vmul.f32 %v4032, 0.044715
        %v4484 = vmul.f32 %v4143, 0.044715
        %v4485 = vmul.f32 %v4145, 0.044715
        %v4486 = vmul.f32 %v4256, 0.044715
        %v4487 = vmul.f32 %v4258, 0.044715
        %v4488 = vmul.f32 %v3921, 0.044715
        %v4489 = vmul.f32 %v3923, 0.044715
        %v4490 = vmul.f32 %v4034, 0.044715
        %v4491 = vmul.f32 %v4036, 0.044715
        %v4492 = vmul.f32 %v4147, 0.044715
        %v4493 = vmul.f32 %v4149, 0.044715
        %v4494 = vmul.f32 %v4260, 0.044715
        %v4495 = vmul.f32 %v4262, 0.044715
        %v4496 = vmul.f32 %v3927, 0.044715
        %v4497 = vmul.f32 %v3929, 0.044715
        %v4498 = vmul.f32 %v4040, 0.044715
        %v4499 = vmul.f32 %v4042, 0.044715
        %v4500 = vmul.f32 %v4153, 0.044715
        %v4501 = vmul.f32 %v4155, 0.044715
        %v4502 = vmul.f32 %v4266, 0.044715
        %v4503 = vmul.f32 %v4268, 0.044715
        %v4504 = vmul.f32 %v3931, 0.044715
        %v4505 = vmul.f32 %v3933, 0.044715
        %v4506 = vmul.f32 %v4044, 0.044715
        %v4507 = vmul.f32 %v4046, 0.044715
        %v4508 = vmul.f32 %v4157, 0.044715
        %v4509 = vmul.f32 %v4159, 0.044715
        %v4510 = vmul.f32 %v4270, 0.044715
        %v4511 = vmul.f32 %v4272, 0.044715
        %v4512 = vmul.f32 %v3937, 0.044715
        %v4513 = vmul.f32 %v3939, 0.044715
        %v4514 = vmul.f32 %v4050, 0.044715
        %v4515 = vmul.f32 %v4052, 0.044715
        %v4516 = vmul.f32 %v4163, 0.044715
        %v4517 = vmul.f32 %v4165, 0.044715
        %v4518 = vmul.f32 %v4276, 0.044715
        %v4519 = vmul.f32 %v4278, 0.044715
        %v4520 = vmul.f32 %v3941, 0.044715
        %v4521 = vmul.f32 %v3943, 0.044715
        %v4522 = vmul.f32 %v4054, 0.044715
        %v4523 = vmul.f32 %v4056, 0.044715
        %v4524 = vmul.f32 %v4167, 0.044715
        %v4525 = vmul.f32 %v4169, 0.044715
        %v4526 = vmul.f32 %v4280, 0.044715
        %v4527 = vmul.f32 %v4282, 0.044715
        %v4528 = vmul.f32 %v3947, 0.044715
        %v4529 = vmul.f32 %v3949, 0.044715
        %v4530 = vmul.f32 %v4060, 0.044715
        %v4531 = vmul.f32 %v4062, 0.044715
        %v4532 = vmul.f32 %v4173, 0.044715
        %v4533 = vmul.f32 %v4175, 0.044715
        %v4534 = vmul.f32 %v4286, 0.044715
        %v4535 = vmul.f32 %v4288, 0.044715
        %v4536 = vmul.f32 %v3951, 0.044715
        %v4537 = vmul.f32 %v3953, 0.044715
        %v4538 = vmul.f32 %v4064, 0.044715
        %v4539 = vmul.f32 %v4066, 0.044715
        %v4540 = vmul.f32 %v4177, 0.044715
        %v4541 = vmul.f32 %v4179, 0.044715
        %v4542 = vmul.f32 %v4290, 0.044715
        %v4543 = vmul.f32 %v4292, 0.044715
        %v4544 = vmul.f32 %v3957, 0.044715
        %v4545 = vmul.f32 %v3959, 0.044715
        %v4546 = vmul.f32 %v4070, 0.044715
        %v4547 = vmul.f32 %v4072, 0.044715
        %v4548 = vmul.f32 %v4183, 0.044715
        %v4549 = vmul.f32 %v4185, 0.044715
        %v4550 = vmul.f32 %v4296, 0.044715
        %v4551 = vmul.f32 %v4298, 0.044715
        %v4552 = vmul.f32 %v3961, 0.044715
        %v4553 = vmul.f32 %v3963, 0.044715
        %v4554 = vmul.f32 %v4074, 0.044715
        %v4555 = vmul.f32 %v4076, 0.044715
        %v4556 = vmul.f32 %v4187, 0.044715
        %v4557 = vmul.f32 %v4189, 0.044715
        %v4558 = vmul.f32 %v4300, 0.044715
        %v4559 = vmul.f32 %v4302, 0.044715
        %v4560 = vmul.f32 %v4432, %v3887
        %v4561 = vmul.f32 %v4433, %v3889
        %v4562 = vmul.f32 %v4434, %v4000
        %v4563 = vmul.f32 %v4435, %v4002
        %v4564 = vmul.f32 %v4436, %v4113
        %v4565 = vmul.f32 %v4437, %v4115
        %v4566 = vmul.f32 %v4438, %v4226
        %v4567 = vmul.f32 %v4439, %v4228
        %v4568 = vmul.f32 %v4440, %v3891
        %v4569 = vmul.f32 %v4441, %v3893
        %v4570 = vmul.f32 %v4442, %v4004
        %v4571 = vmul.f32 %v4443, %v4006
        %v4572 = vmul.f32 %v4444, %v4117
        %v4573 = vmul.f32 %v4445, %v4119
        %v4574 = vmul.f32 %v4446, %v4230
        %v4575 = vmul.f32 %v4447, %v4232
        %v4576 = vmul.f32 %v4448, %v3897
        %v4577 = vmul.f32 %v4449, %v3899
        %v4578 = vmul.f32 %v4450, %v4010
        %v4579 = vmul.f32 %v4451, %v4012
        %v4580 = vmul.f32 %v4452, %v4123
        %v4581 = vmul.f32 %v4453, %v4125
        %v4582 = vmul.f32 %v4454, %v4236
        %v4583 = vmul.f32 %v4455, %v4238
        %v4584 = vmul.f32 %v4456, %v3901
        %v4585 = vmul.f32 %v4457, %v3903
        %v4586 = vmul.f32 %v4458, %v4014
        %v4587 = vmul.f32 %v4459, %v4016
        %v4588 = vmul.f32 %v4460, %v4127
        %v4589 = vmul.f32 %v4461, %v4129
        %v4590 = vmul.f32 %v4462, %v4240
        %v4591 = vmul.f32 %v4463, %v4242
        %v4592 = vmul.f32 %v4464, %v3907
        %v4593 = vmul.f32 %v4465, %v3909
        %v4594 = vmul.f32 %v4466, %v4020
        %v4595 = vmul.f32 %v4467, %v4022
        %v4596 = vmul.f32 %v4468, %v4133
        %v4597 = vmul.f32 %v4469, %v4135
        %v4598 = vmul.f32 %v4470, %v4246
        %v4599 = vmul.f32 %v4471, %v4248
        %v4600 = vmul.f32 %v4472, %v3911
        %v4601 = vmul.f32 %v4473, %v3913
        %v4602 = vmul.f32 %v4474, %v4024
        %v4603 = vmul.f32 %v4475, %v4026
        %v4604 = vmul.f32 %v4476, %v4137
        %v4605 = vmul.f32 %v4477, %v4139
        %v4606 = vmul.f32 %v4478, %v4250
        %v4607 = vmul.f32 %v4479, %v4252
        %v4608 = vmul.f32 %v4480, %v3917
        %v4609 = vmul.f32 %v4481, %v3919
        %v4610 = vmul.f32 %v4482, %v4030
        %v4611 = vmul.f32 %v4483, %v4032
        %v4612 = vmul.f32 %v4484, %v4143
        %v4613 = vmul.f32 %v4485, %v4145
        %v4614 = vmul.f32 %v4486, %v4256
        %v4615 = vmul.f32 %v4487, %v4258
        %v4616 = vmul.f32 %v4488, %v3921
        %v4617 = vmul.f32 %v4489, %v3923
        %v4618 = vmul.f32 %v4490, %v4034
        %v4619 = vmul.f32 %v4491, %v4036
        %v4620 = vmul.f32 %v4492, %v4147
        %v4621 = vmul.f32 %v4493, %v4149
        %v4622 = vmul.f32 %v4494, %v4260
        %v4623 = vmul.f32 %v4495, %v4262
        %v4624 = vmul.f32 %v4496, %v3927
        %v4625 = vmul.f32 %v4497, %v3929
        %v4626 = vmul.f32 %v4498, %v4040
        %v4627 = vmul.f32 %v4499, %v4042
        %v4628 = vmul.f32 %v4500, %v4153
        %v4629 = vmul.f32 %v4501, %v4155
        %v4630 = vmul.f32 %v4502, %v4266
        %v4631 = vmul.f32 %v4503, %v4268
        %v4632 = vmul.f32 %v4504, %v3931
        %v4633 = vmul.f32 %v4505, %v3933
        %v4634 = vmul.f32 %v4506, %v4044
        %v4635 = vmul.f32 %v4507, %v4046
        %v4636 = vmul.f32 %v4508, %v4157
        %v4637 = vmul.f32 %v4509, %v4159
        %v4638 = vmul.f32 %v4510, %v4270
        %v4639 = vmul.f32 %v4511, %v4272
        %v4640 = vmul.f32 %v4512, %v3937
        %v4641 = vmul.f32 %v4513, %v3939
        %v4642 = vmul.f32 %v4514, %v4050
        %v4643 = vmul.f32 %v4515, %v4052
        %v4644 = vmul.f32 %v4516, %v4163
        %v4645 = vmul.f32 %v4517, %v4165
        %v4646 = vmul.f32 %v4518, %v4276
        %v4647 = vmul.f32 %v4519, %v4278
        %v4648 = vmul.f32 %v4520, %v3941
        %v4649 = vmul.f32 %v4521, %v3943
        %v4650 = vmul.f32 %v4522, %v4054
        %v4651 = vmul.f32 %v4523, %v4056
        %v4652 = vmul.f32 %v4524, %v4167
        %v4653 = vmul.f32 %v4525, %v4169
        %v4654 = vmul.f32 %v4526, %v4280
        %v4655 = vmul.f32 %v4527, %v4282
        %v4656 = vmul.f32 %v4528, %v3947
        %v4657 = vmul.f32 %v4529, %v3949
        %v4658 = vmul.f32 %v4530, %v4060
        %v4659 = vmul.f32 %v4531, %v4062
        %v4660 = vmul.f32 %v4532, %v4173
        %v4661 = vmul.f32 %v4533, %v4175
        %v4662 = vmul.f32 %v4534, %v4286
        %v4663 = vmul.f32 %v4535, %v4288
        %v4664 = vmul.f32 %v4536, %v3951
        %v4665 = vmul.f32 %v4537, %v3953
        %v4666 = vmul.f32 %v4538, %v4064
        %v4667 = vmul.f32 %v4539, %v4066
        %v4668 = vmul.f32 %v4540, %v4177
        %v4669 = vmul.f32 %v4541, %v4179
        %v4670 = vmul.f32 %v4542, %v4290
        %v4671 = vmul.f32 %v4543, %v4292
        %v4672 = vmul.f32 %v4544, %v3957
        %v4673 = vmul.f32 %v4545, %v3959
        %v4674 = vmul.f32 %v4546, %v4070
        %v4675 = vmul.f32 %v4547, %v4072
        %v4676 = vmul.f32 %v4548, %v4183
        %v4677 = vmul.f32 %v4549, %v4185
        %v4678 = vmul.f32 %v4550, %v4296
        %v4679 = vmul.f32 %v4551, %v4298
        %v4680 = vmul.f32 %v4552, %v3961
        %v4681 = vmul.f32 %v4553, %v3963
        %v4682 = vmul.f32 %v4554, %v4074
        %v4683 = vmul.f32 %v4555, %v4076
        %v4684 = vmul.f32 %v4556, %v4187
        %v4685 = vmul.f32 %v4557, %v4189
        %v4686 = vmul.f32 %v4558, %v4300
        %v4687 = vmul.f32 %v4559, %v4302
        %v4688 = vmul.f32 %v4560, %v3887
        %v4689 = vmul.f32 %v4561, %v3889
        %v4690 = vmul.f32 %v4562, %v4000
        %v4691 = vmul.f32 %v4563, %v4002
        %v4692 = vmul.f32 %v4564, %v4113
        %v4693 = vmul.f32 %v4565, %v4115
        %v4694 = vmul.f32 %v4566, %v4226
        %v4695 = vmul.f32 %v4567, %v4228
        %v4696 = vmul.f32 %v4568, %v3891
        %v4697 = vmul.f32 %v4569, %v3893
        %v4698 = vmul.f32 %v4570, %v4004
        %v4699 = vmul.f32 %v4571, %v4006
        %v4700 = vmul.f32 %v4572, %v4117
        %v4701 = vmul.f32 %v4573, %v4119
        %v4702 = vmul.f32 %v4574, %v4230
        %v4703 = vmul.f32 %v4575, %v4232
        %v4704 = vmul.f32 %v4576, %v3897
        %v4705 = vmul.f32 %v4577, %v3899
        %v4706 = vmul.f32 %v4578, %v4010
        %v4707 = vmul.f32 %v4579, %v4012
        %v4708 = vmul.f32 %v4580, %v4123
        %v4709 = vmul.f32 %v4581, %v4125
        %v4710 = vmul.f32 %v4582, %v4236
        %v4711 = vmul.f32 %v4583, %v4238
        %v4712 = vmul.f32 %v4584, %v3901
        %v4713 = vmul.f32 %v4585, %v3903
        %v4714 = vmul.f32 %v4586, %v4014
        %v4715 = vmul.f32 %v4587, %v4016
        %v4716 = vmul.f32 %v4588, %v4127
        %v4717 = vmul.f32 %v4589, %v4129
        %v4718 = vmul.f32 %v4590, %v4240
        %v4719 = vmul.f32 %v4591, %v4242
        %v4720 = vmul.f32 %v4592, %v3907
        %v4721 = vmul.f32 %v4593, %v3909
        %v4722 = vmul.f32 %v4594, %v4020
        %v4723 = vmul.f32 %v4595, %v4022
        %v4724 = vmul.f32 %v4596, %v4133
        %v4725 = vmul.f32 %v4597, %v4135
        %v4726 = vmul.f32 %v4598, %v4246
        %v4727 = vmul.f32 %v4599, %v4248
        %v4728 = vmul.f32 %v4600, %v3911
        %v4729 = vmul.f32 %v4601, %v3913
        %v4730 = vmul.f32 %v4602, %v4024
        %v4731 = vmul.f32 %v4603, %v4026
        %v4732 = vmul.f32 %v4604, %v4137
        %v4733 = vmul.f32 %v4605, %v4139
        %v4734 = vmul.f32 %v4606, %v4250
        %v4735 = vmul.f32 %v4607, %v4252
        %v4736 = vmul.f32 %v4608, %v3917
        %v4737 = vmul.f32 %v4609, %v3919
        %v4738 = vmul.f32 %v4610, %v4030
        %v4739 = vmul.f32 %v4611, %v4032
        %v4740 = vmul.f32 %v4612, %v4143
        %v4741 = vmul.f32 %v4613, %v4145
        %v4742 = vmul.f32 %v4614, %v4256
        %v4743 = vmul.f32 %v4615, %v4258
        %v4744 = vmul.f32 %v4616, %v3921
        %v4745 = vmul.f32 %v4617, %v3923
        %v4746 = vmul.f32 %v4618, %v4034
        %v4747 = vmul.f32 %v4619, %v4036
        %v4748 = vmul.f32 %v4620, %v4147
        %v4749 = vmul.f32 %v4621, %v4149
        %v4750 = vmul.f32 %v4622, %v4260
        %v4751 = vmul.f32 %v4623, %v4262
        %v4752 = vmul.f32 %v4624, %v3927
        %v4753 = vmul.f32 %v4625, %v3929
        %v4754 = vmul.f32 %v4626, %v4040
        %v4755 = vmul.f32 %v4627, %v4042
        %v4756 = vmul.f32 %v4628, %v4153
        %v4757 = vmul.f32 %v4629, %v4155
        %v4758 = vmul.f32 %v4630, %v4266
        %v4759 = vmul.f32 %v4631, %v4268
        %v4760 = vmul.f32 %v4632, %v3931
        %v4761 = vmul.f32 %v4633, %v3933
        %v4762 = vmul.f32 %v4634, %v4044
        %v4763 = vmul.f32 %v4635, %v4046
        %v4764 = vmul.f32 %v4636, %v4157
        %v4765 = vmul.f32 %v4637, %v4159
        %v4766 = vmul.f32 %v4638, %v4270
        %v4767 = vmul.f32 %v4639, %v4272
        %v4768 = vmul.f32 %v4640, %v3937
        %v4769 = vmul.f32 %v4641, %v3939
        %v4770 = vmul.f32 %v4642, %v4050
        %v4771 = vmul.f32 %v4643, %v4052
        %v4772 = vmul.f32 %v4644, %v4163
        %v4773 = vmul.f32 %v4645, %v4165
        %v4774 = vmul.f32 %v4646, %v4276
        %v4775 = vmul.f32 %v4647, %v4278
        %v4776 = vmul.f32 %v4648, %v3941
        %v4777 = vmul.f32 %v4649, %v3943
        %v4778 = vmul.f32 %v4650, %v4054
        %v4779 = vmul.f32 %v4651, %v4056
        %v4780 = vmul.f32 %v4652, %v4167
        %v4781 = vmul.f32 %v4653, %v4169
        %v4782 = vmul.f32 %v4654, %v4280
        %v4783 = vmul.f32 %v4655, %v4282
        %v4784 = vmul.f32 %v4656, %v3947
        %v4785 = vmul.f32 %v4657, %v3949
        %v4786 = vmul.f32 %v4658, %v4060
        %v4787 = vmul.f32 %v4659, %v4062
        %v4788 = vmul.f32 %v4660, %v4173
        %v4789 = vmul.f32 %v4661, %v4175
        %v4790 = vmul.f32 %v4662, %v4286
        %v4791 = vmul.f32 %v4663, %v4288
        %v4792 = vmul.f32 %v4664, %v3951
        %v4793 = vmul.f32 %v4665, %v3953
        %v4794 = vmul.f32 %v4666, %v4064
        %v4795 = vmul.f32 %v4667, %v4066
        %v4796 = vmul.f32 %v4668, %v4177
        %v4797 = vmul.f32 %v4669, %v4179
        %v4798 = vmul.f32 %v4670, %v4290
        %v4799 = vmul.f32 %v4671, %v4292
        %v4800 = vmul.f32 %v4672, %v3957
        %v4801 = vmul.f32 %v4673, %v3959
        %v4802 = vmul.f32 %v4674, %v4070
        %v4803 = vmul.f32 %v4675, %v4072
        %v4804 = vmul.f32 %v4676, %v4183
        %v4805 = vmul.f32 %v4677, %v4185
        %v4806 = vmul.f32 %v4678, %v4296
        %v4807 = vmul.f32 %v4679, %v4298
        %v4808 = vmul.f32 %v4680, %v3961
        %v4809 = vmul.f32 %v4681, %v3963
        %v4810 = vmul.f32 %v4682, %v4074
        %v4811 = vmul.f32 %v4683, %v4076
        %v4812 = vmul.f32 %v4684, %v4187
        %v4813 = vmul.f32 %v4685, %v4189
        %v4814 = vmul.f32 %v4686, %v4300
        %v4815 = vmul.f32 %v4687, %v4302
        %v4816 = vadd.f32 %v3887, %v4688
        %v4817 = vadd.f32 %v3889, %v4689
        %v4818 = vadd.f32 %v4000, %v4690
        %v4819 = vadd.f32 %v4002, %v4691
        %v4820 = vadd.f32 %v4113, %v4692
        %v4821 = vadd.f32 %v4115, %v4693
        %v4822 = vadd.f32 %v4226, %v4694
        %v4823 = vadd.f32 %v4228, %v4695
        %v4824 = vadd.f32 %v3891, %v4696
        %v4825 = vadd.f32 %v3893, %v4697
        %v4826 = vadd.f32 %v4004, %v4698
        %v4827 = vadd.f32 %v4006, %v4699
        %v4828 = vadd.f32 %v4117, %v4700
        %v4829 = vadd.f32 %v4119, %v4701
        %v4830 = vadd.f32 %v4230, %v4702
        %v4831 = vadd.f32 %v4232, %v4703
        %v4832 = vadd.f32 %v3897, %v4704
        %v4833 = vadd.f32 %v3899, %v4705
        %v4834 = vadd.f32 %v4010, %v4706
        %v4835 = vadd.f32 %v4012, %v4707
        %v4836 = vadd.f32 %v4123, %v4708
        %v4837 = vadd.f32 %v4125, %v4709
        %v4838 = vadd.f32 %v4236, %v4710
        %v4839 = vadd.f32 %v4238, %v4711
        %v4840 = vadd.f32 %v3901, %v4712
        %v4841 = vadd.f32 %v3903, %v4713
        %v4842 = vadd.f32 %v4014, %v4714
        %v4843 = vadd.f32 %v4016, %v4715
        %v4844 = vadd.f32 %v4127, %v4716
        %v4845 = vadd.f32 %v4129, %v4717
        %v4846 = vadd.f32 %v4240, %v4718
        %v4847 = vadd.f32 %v4242, %v4719
        %v4848 = vadd.f32 %v3907, %v4720
        %v4849 = vadd.f32 %v3909, %v4721
        %v4850 = vadd.f32 %v4020, %v4722
        %v4851 = vadd.f32 %v4022, %v4723
        %v4852 = vadd.f32 %v4133, %v4724
        %v4853 = vadd.f32 %v4135, %v4725
        %v4854 = vadd.f32 %v4246, %v4726
        %v4855 = vadd.f32 %v4248, %v4727
        %v4856 = vadd.f32 %v3911, %v4728
        %v4857 = vadd.f32 %v3913, %v4729
        %v4858 = vadd.f32 %v4024, %v4730
        %v4859 = vadd.f32 %v4026, %v4731
        %v4860 = vadd.f32 %v4137, %v4732
        %v4861 = vadd.f32 %v4139, %v4733
        %v4862 = vadd.f32 %v4250, %v4734
        %v4863 = vadd.f32 %v4252, %v4735
        %v4864 = vadd.f32 %v3917, %v4736
        %v4865 = vadd.f32 %v3919, %v4737
        %v4866 = vadd.f32 %v4030, %v4738
        %v4867 = vadd.f32 %v4032, %v4739
        %v4868 = vadd.f32 %v4143, %v4740
        %v4869 = vadd.f32 %v4145, %v4741
        %v4870 = vadd.f32 %v4256, %v4742
        %v4871 = vadd.f32 %v4258, %v4743
        %v4872 = vadd.f32 %v3921, %v4744
        %v4873 = vadd.f32 %v3923, %v4745
        %v4874 = vadd.f32 %v4034, %v4746
        %v4875 = vadd.f32 %v4036, %v4747
        %v4876 = vadd.f32 %v4147, %v4748
        %v4877 = vadd.f32 %v4149, %v4749
        %v4878 = vadd.f32 %v4260, %v4750
        %v4879 = vadd.f32 %v4262, %v4751
        %v4880 = vadd.f32 %v3927, %v4752
        %v4881 = vadd.f32 %v3929, %v4753
        %v4882 = vadd.f32 %v4040, %v4754
        %v4883 = vadd.f32 %v4042, %v4755
        %v4884 = vadd.f32 %v4153, %v4756
        %v4885 = vadd.f32 %v4155, %v4757
        %v4886 = vadd.f32 %v4266, %v4758
        %v4887 = vadd.f32 %v4268, %v4759
        %v4888 = vadd.f32 %v3931, %v4760
        %v4889 = vadd.f32 %v3933, %v4761
        %v4890 = vadd.f32 %v4044, %v4762
        %v4891 = vadd.f32 %v4046, %v4763
        %v4892 = vadd.f32 %v4157, %v4764
        %v4893 = vadd.f32 %v4159, %v4765
        %v4894 = vadd.f32 %v4270, %v4766
        %v4895 = vadd.f32 %v4272, %v4767
        %v4896 = vadd.f32 %v3937, %v4768
        %v4897 = vadd.f32 %v3939, %v4769
        %v4898 = vadd.f32 %v4050, %v4770
        %v4899 = vadd.f32 %v4052, %v4771
        %v4900 = vadd.f32 %v4163, %v4772
        %v4901 = vadd.f32 %v4165, %v4773
        %v4902 = vadd.f32 %v4276, %v4774
        %v4903 = vadd.f32 %v4278, %v4775
        %v4904 = vadd.f32 %v3941, %v4776
        %v4905 = vadd.f32 %v3943, %v4777
        %v4906 = vadd.f32 %v4054, %v4778
        %v4907 = vadd.f32 %v4056, %v4779
        %v4908 = vadd.f32 %v4167, %v4780
        %v4909 = vadd.f32 %v4169, %v4781
        %v4910 = vadd.f32 %v4280, %v4782
        %v4911 = vadd.f32 %v4282, %v4783
        %v4912 = vadd.f32 %v3947, %v4784
        %v4913 = vadd.f32 %v3949, %v4785
        %v4914 = vadd.f32 %v4060, %v4786
        %v4915 = vadd.f32 %v4062, %v4787
        %v4916 = vadd.f32 %v4173, %v4788
        %v4917 = vadd.f32 %v4175, %v4789
        %v4918 = vadd.f32 %v4286, %v4790
        %v4919 = vadd.f32 %v4288, %v4791
        %v4920 = vadd.f32 %v3951, %v4792
        %v4921 = vadd.f32 %v3953, %v4793
        %v4922 = vadd.f32 %v4064, %v4794
        %v4923 = vadd.f32 %v4066, %v4795
        %v4924 = vadd.f32 %v4177, %v4796
        %v4925 = vadd.f32 %v4179, %v4797
        %v4926 = vadd.f32 %v4290, %v4798
        %v4927 = vadd.f32 %v4292, %v4799
        %v4928 = vadd.f32 %v3957, %v4800
        %v4929 = vadd.f32 %v3959, %v4801
        %v4930 = vadd.f32 %v4070, %v4802
        %v4931 = vadd.f32 %v4072, %v4803
        %v4932 = vadd.f32 %v4183, %v4804
        %v4933 = vadd.f32 %v4185, %v4805
        %v4934 = vadd.f32 %v4296, %v4806
        %v4935 = vadd.f32 %v4298, %v4807
        %v4936 = vadd.f32 %v3961, %v4808
        %v4937 = vadd.f32 %v3963, %v4809
        %v4938 = vadd.f32 %v4074, %v4810
        %v4939 = vadd.f32 %v4076, %v4811
        %v4940 = vadd.f32 %v4187, %v4812
        %v4941 = vadd.f32 %v4189, %v4813
        %v4942 = vadd.f32 %v4300, %v4814
        %v4943 = vadd.f32 %v4302, %v4815
        %v4944 = vmul.f32 %v4816, 0.7978846
        %v4945 = vmul.f32 %v4817, 0.7978846
        %v4946 = vmul.f32 %v4818, 0.7978846
        %v4947 = vmul.f32 %v4819, 0.7978846
        %v4948 = vmul.f32 %v4820, 0.7978846
        %v4949 = vmul.f32 %v4821, 0.7978846
        %v4950 = vmul.f32 %v4822, 0.7978846
        %v4951 = vmul.f32 %v4823, 0.7978846
        %v4952 = vmul.f32 %v4824, 0.7978846
        %v4953 = vmul.f32 %v4825, 0.7978846
        %v4954 = vmul.f32 %v4826, 0.7978846
        %v4955 = vmul.f32 %v4827, 0.7978846
        %v4956 = vmul.f32 %v4828, 0.7978846
        %v4957 = vmul.f32 %v4829, 0.7978846
        %v4958 = vmul.f32 %v4830, 0.7978846
        %v4959 = vmul.f32 %v4831, 0.7978846
        %v4960 = vmul.f32 %v4832, 0.7978846
        %v4961 = vmul.f32 %v4833, 0.7978846
        %v4962 = vmul.f32 %v4834, 0.7978846
        %v4963 = vmul.f32 %v4835, 0.7978846
        %v4964 = vmul.f32 %v4836, 0.7978846
        %v4965 = vmul.f32 %v4837, 0.7978846
        %v4966 = vmul.f32 %v4838, 0.7978846
        %v4967 = vmul.f32 %v4839, 0.7978846
        %v4968 = vmul.f32 %v4840, 0.7978846
        %v4969 = vmul.f32 %v4841, 0.7978846
        %v4970 = vmul.f32 %v4842, 0.7978846
        %v4971 = vmul.f32 %v4843, 0.7978846
        %v4972 = vmul.f32 %v4844, 0.7978846
        %v4973 = vmul.f32 %v4845, 0.7978846
        %v4974 = vmul.f32 %v4846, 0.7978846
        %v4975 = vmul.f32 %v4847, 0.7978846
        %v4976 = vmul.f32 %v4848, 0.7978846
        %v4977 = vmul.f32 %v4849, 0.7978846
        %v4978 = vmul.f32 %v4850, 0.7978846
        %v4979 = vmul.f32 %v4851, 0.7978846
        %v4980 = vmul.f32 %v4852, 0.7978846
        %v4981 = vmul.f32 %v4853, 0.7978846
        %v4982 = vmul.f32 %v4854, 0.7978846
        %v4983 = vmul.f32 %v4855, 0.7978846
        %v4984 = vmul.f32 %v4856, 0.7978846
        %v4985 = vmul.f32 %v4857, 0.7978846
        %v4986 = vmul.f32 %v4858, 0.7978846
        %v4987 = vmul.f32 %v4859, 0.7978846
        %v4988 = vmul.f32 %v4860, 0.7978846
        %v4989 = vmul.f32 %v4861, 0.7978846
        %v4990 = vmul.f32 %v4862, 0.7978846
        %v4991 = vmul.f32 %v4863, 0.7978846
        %v4992 = vmul.f32 %v4864, 0.7978846
        %v4993 = vmul.f32 %v4865, 0.7978846
        %v4994 = vmul.f32 %v4866, 0.7978846
        %v4995 = vmul.f32 %v4867, 0.7978846
        %v4996 = vmul.f32 %v4868, 0.7978846
        %v4997 = vmul.f32 %v4869, 0.7978846
        %v4998 = vmul.f32 %v4870, 0.7978846
        %v4999 = vmul.f32 %v4871, 0.7978846
        %v5000 = vmul.f32 %v4872, 0.7978846
        %v5001 = vmul.f32 %v4873, 0.7978846
        %v5002 = vmul.f32 %v4874, 0.7978846
        %v5003 = vmul.f32 %v4875, 0.7978846
        %v5004 = vmul.f32 %v4876, 0.7978846
        %v5005 = vmul.f32 %v4877, 0.7978846
        %v5006 = vmul.f32 %v4878, 0.7978846
        %v5007 = vmul.f32 %v4879, 0.7978846
        %v5008 = vmul.f32 %v4880, 0.7978846
        %v5009 = vmul.f32 %v4881, 0.7978846
        %v5010 = vmul.f32 %v4882, 0.7978846
        %v5011 = vmul.f32 %v4883, 0.7978846
        %v5012 = vmul.f32 %v4884, 0.7978846
        %v5013 = vmul.f32 %v4885, 0.7978846
        %v5014 = vmul.f32 %v4886, 0.7978846
        %v5015 = vmul.f32 %v4887, 0.7978846
        %v5016 = vmul.f32 %v4888, 0.7978846
        %v5017 = vmul.f32 %v4889, 0.7978846
        %v5018 = vmul.f32 %v4890, 0.7978846
        %v5019 = vmul.f32 %v4891, 0.7978846
        %v5020 = vmul.f32 %v4892, 0.7978846
        %v5021 = vmul.f32 %v4893, 0.7978846
        %v5022 = vmul.f32 %v4894, 0.7978846
        %v5023 = vmul.f32 %v4895, 0.7978846
        %v5024 = vmul.f32 %v4896, 0.7978846
        %v5025 = vmul.f32 %v4897, 0.7978846
        %v5026 = vmul.f32 %v4898, 0.7978846
        %v5027 = vmul.f32 %v4899, 0.7978846
        %v5028 = vmul.f32 %v4900, 0.7978846
        %v5029 = vmul.f32 %v4901, 0.7978846
        %v5030 = vmul.f32 %v4902, 0.7978846
        %v5031 = vmul.f32 %v4903, 0.7978846
        %v5032 = vmul.f32 %v4904, 0.7978846
        %v5033 = vmul.f32 %v4905, 0.7978846
        %v5034 = vmul.f32 %v4906, 0.7978846
        %v5035 = vmul.f32 %v4907, 0.7978846
        %v5036 = vmul.f32 %v4908, 0.7978846
        %v5037 = vmul.f32 %v4909, 0.7978846
        %v5038 = vmul.f32 %v4910, 0.7978846
        %v5039 = vmul.f32 %v4911, 0.7978846
        %v5040 = vmul.f32 %v4912, 0.7978846
        %v5041 = vmul.f32 %v4913, 0.7978846
        %v5042 = vmul.f32 %v4914, 0.7978846
        %v5043 = vmul.f32 %v4915, 0.7978846
        %v5044 = vmul.f32 %v4916, 0.7978846
        %v5045 = vmul.f32 %v4917, 0.7978846
        %v5046 = vmul.f32 %v4918, 0.7978846
        %v5047 = vmul.f32 %v4919, 0.7978846
        %v5048 = vmul.f32 %v4920, 0.7978846
        %v5049 = vmul.f32 %v4921, 0.7978846
        %v5050 = vmul.f32 %v4922, 0.7978846
        %v5051 = vmul.f32 %v4923, 0.7978846
        %v5052 = vmul.f32 %v4924, 0.7978846
        %v5053 = vmul.f32 %v4925, 0.7978846
        %v5054 = vmul.f32 %v4926, 0.7978846
        %v5055 = vmul.f32 %v4927, 0.7978846
        %v5056 = vmul.f32 %v4928, 0.7978846
        %v5057 = vmul.f32 %v4929, 0.7978846
        %v5058 = vmul.f32 %v4930, 0.7978846
        %v5059 = vmul.f32 %v4931, 0.7978846
        %v5060 = vmul.f32 %v4932, 0.7978846
        %v5061 = vmul.f32 %v4933, 0.7978846
        %v5062 = vmul.f32 %v4934, 0.7978846
        %v5063 = vmul.f32 %v4935, 0.7978846
        %v5064 = vmul.f32 %v4936, 0.7978846
        %v5065 = vmul.f32 %v4937, 0.7978846
        %v5066 = vmul.f32 %v4938, 0.7978846
        %v5067 = vmul.f32 %v4939, 0.7978846
        %v5068 = vmul.f32 %v4940, 0.7978846
        %v5069 = vmul.f32 %v4941, 0.7978846
        %v5070 = vmul.f32 %v4942, 0.7978846
        %v5071 = vmul.f32 %v4943, 0.7978846
        %v5072 = vtanh.pop %v4944
        %v5073 = vtanh.pop %v4945
        %v5074 = vtanh.pop %v4946
        %v5075 = vtanh.pop %v4947
        %v5076 = vtanh.pop %v4948
        %v5077 = vtanh.pop %v4949
        %v5078 = vtanh.pop %v4950
        %v5079 = vtanh.pop %v4951
        %v5080 = vtanh.pop %v4952
        %v5081 = vtanh.pop %v4953
        %v5082 = vtanh.pop %v4954
        %v5083 = vtanh.pop %v4955
        %v5084 = vtanh.pop %v4956
        %v5085 = vtanh.pop %v4957
        %v5086 = vtanh.pop %v4958
        %v5087 = vtanh.pop %v4959
        %v5088 = vtanh.pop %v4960
        %v5089 = vtanh.pop %v4961
        %v5090 = vtanh.pop %v4962
        %v5091 = vtanh.pop %v4963
        %v5092 = vtanh.pop %v4964
        %v5093 = vtanh.pop %v4965
        %v5094 = vtanh.pop %v4966
        %v5095 = vtanh.pop %v4967
        %v5096 = vtanh.pop %v4968
        %v5097 = vtanh.pop %v4969
        %v5098 = vtanh.pop %v4970
        %v5099 = vtanh.pop %v4971
        %v5100 = vtanh.pop %v4972
        %v5101 = vtanh.pop %v4973
        %v5102 = vtanh.pop %v4974
        %v5103 = vtanh.pop %v4975
        %v5104 = vtanh.pop %v4976
        %v5105 = vtanh.pop %v4977
        %v5106 = vtanh.pop %v4978
        %v5107 = vtanh.pop %v4979
        %v5108 = vtanh.pop %v4980
        %v5109 = vtanh.pop %v4981
        %v5110 = vtanh.pop %v4982
        %v5111 = vtanh.pop %v4983
        %v5112 = vtanh.pop %v4984
        %v5113 = vtanh.pop %v4985
        %v5114 = vtanh.pop %v4986
        %v5115 = vtanh.pop %v4987
        %v5116 = vtanh.pop %v4988
        %v5117 = vtanh.pop %v4989
        %v5118 = vtanh.pop %v4990
        %v5119 = vtanh.pop %v4991
        %v5120 = vtanh.pop %v4992
        %v5121 = vtanh.pop %v4993
        %v5122 = vtanh.pop %v4994
        %v5123 = vtanh.pop %v4995
        %v5124 = vtanh.pop %v4996
        %v5125 = vtanh.pop %v4997
        %v5126 = vtanh.pop %v4998
        %v5127 = vtanh.pop %v4999
        %v5128 = vtanh.pop %v5000
        %v5129 = vtanh.pop %v5001
        %v5130 = vtanh.pop %v5002
        %v5131 = vtanh.pop %v5003
        %v5132 = vtanh.pop %v5004
        %v5133 = vtanh.pop %v5005
        %v5134 = vtanh.pop %v5006
        %v5135 = vtanh.pop %v5007
        %v5136 = vtanh.pop %v5008
        %v5137 = vtanh.pop %v5009
        %v5138 = vtanh.pop %v5010
        %v5139 = vtanh.pop %v5011
        %v5140 = vtanh.pop %v5012
        %v5141 = vtanh.pop %v5013
        %v5142 = vtanh.pop %v5014
        %v5143 = vtanh.pop %v5015
        %v5144 = vtanh.pop %v5016
        %v5145 = vtanh.pop %v5017
        %v5146 = vtanh.pop %v5018
        %v5147 = vtanh.pop %v5019
        %v5148 = vtanh.pop %v5020
        %v5149 = vtanh.pop %v5021
        %v5150 = vtanh.pop %v5022
        %v5151 = vtanh.pop %v5023
        %v5152 = vtanh.pop %v5024
        %v5153 = vtanh.pop %v5025
        %v5154 = vtanh.pop %v5026
        %v5155 = vtanh.pop %v5027
        %v5156 = vtanh.pop %v5028
        %v5157 = vtanh.pop %v5029
        %v5158 = vtanh.pop %v5030
        %v5159 = vtanh.pop %v5031
        %v5160 = vtanh.pop %v5032
        %v5161 = vtanh.pop %v5033
        %v5162 = vtanh.pop %v5034
        %v5163 = vtanh.pop %v5035
        %v5164 = vtanh.pop %v5036
        %v5165 = vtanh.pop %v5037
        %v5166 = vtanh.pop %v5038
        %v5167 = vtanh.pop %v5039
        %v5168 = vtanh.pop %v5040
        %v5169 = vtanh.pop %v5041
        %v5170 = vtanh.pop %v5042
        %v5171 = vtanh.pop %v5043
        %v5172 = vtanh.pop %v5044
        %v5173 = vtanh.pop %v5045
        %v5174 = vtanh.pop %v5046
        %v5175 = vtanh.pop %v5047
        %v5176 = vtanh.pop %v5048
        %v5177 = vtanh.pop %v5049
        %v5178 = vtanh.pop %v5050
        %v5179 = vtanh.pop %v5051
        %v5180 = vtanh.pop %v5052
        %v5181 = vtanh.pop %v5053
        %v5182 = vtanh.pop %v5054
        %v5183 = vtanh.pop %v5055
        %v5184 = vtanh.pop %v5056
        %v5185 = vtanh.pop %v5057
        %v5186 = vtanh.pop %v5058
        %v5187 = vtanh.pop %v5059
        %v5188 = vtanh.pop %v5060
        %v5189 = vtanh.pop %v5061
        %v5190 = vtanh.pop %v5062
        %v5191 = vtanh.pop %v5063
        %v5192 = vtanh.pop %v5064
        %v5193 = vtanh.pop %v5065
        %v5194 = vtanh.pop %v5066
        %v5195 = vtanh.pop %v5067
        %v5196 = vtanh.pop %v5068
        %v5197 = vtanh.pop %v5069
        %v5198 = vtanh.pop %v5070
        %v5199 = vtanh.pop %v5071
        %v5200 = vadd.f32 %v5072, 1.0
        %v5201 = vadd.f32 %v5073, 1.0
        %v5202 = vadd.f32 %v5074, 1.0
        %v5203 = vadd.f32 %v5075, 1.0
        %v5204 = vadd.f32 %v5076, 1.0
        %v5205 = vadd.f32 %v5077, 1.0
        %v5206 = vadd.f32 %v5078, 1.0
        %v5207 = vadd.f32 %v5079, 1.0
        %v5208 = vadd.f32 %v5080, 1.0
        %v5209 = vadd.f32 %v5081, 1.0
        %v5210 = vadd.f32 %v5082, 1.0
        %v5211 = vadd.f32 %v5083, 1.0
        %v5212 = vadd.f32 %v5084, 1.0
        %v5213 = vadd.f32 %v5085, 1.0
        %v5214 = vadd.f32 %v5086, 1.0
        %v5215 = vadd.f32 %v5087, 1.0
        %v5216 = vadd.f32 %v5088, 1.0
        %v5217 = vadd.f32 %v5089, 1.0
        %v5218 = vadd.f32 %v5090, 1.0
        %v5219 = vadd.f32 %v5091, 1.0
        %v5220 = vadd.f32 %v5092, 1.0
        %v5221 = vadd.f32 %v5093, 1.0
        %v5222 = vadd.f32 %v5094, 1.0
        %v5223 = vadd.f32 %v5095, 1.0
        %v5224 = vadd.f32 %v5096, 1.0
        %v5225 = vadd.f32 %v5097, 1.0
        %v5226 = vadd.f32 %v5098, 1.0
        %v5227 = vadd.f32 %v5099, 1.0
        %v5228 = vadd.f32 %v5100, 1.0
        %v5229 = vadd.f32 %v5101, 1.0
        %v5230 = vadd.f32 %v5102, 1.0
        %v5231 = vadd.f32 %v5103, 1.0
        %v5232 = vadd.f32 %v5104, 1.0
        %v5233 = vadd.f32 %v5105, 1.0
        %v5234 = vadd.f32 %v5106, 1.0
        %v5235 = vadd.f32 %v5107, 1.0
        %v5236 = vadd.f32 %v5108, 1.0
        %v5237 = vadd.f32 %v5109, 1.0
        %v5238 = vadd.f32 %v5110, 1.0
        %v5239 = vadd.f32 %v5111, 1.0
        %v5240 = vadd.f32 %v5112, 1.0
        %v5241 = vadd.f32 %v5113, 1.0
        %v5242 = vadd.f32 %v5114, 1.0
        %v5243 = vadd.f32 %v5115, 1.0
        %v5244 = vadd.f32 %v5116, 1.0
        %v5245 = vadd.f32 %v5117, 1.0
        %v5246 = vadd.f32 %v5118, 1.0
        %v5247 = vadd.f32 %v5119, 1.0
        %v5248 = vadd.f32 %v5120, 1.0
        %v5249 = vadd.f32 %v5121, 1.0
        %v5250 = vadd.f32 %v5122, 1.0
        %v5251 = vadd.f32 %v5123, 1.0
        %v5252 = vadd.f32 %v5124, 1.0
        %v5253 = vadd.f32 %v5125, 1.0
        %v5254 = vadd.f32 %v5126, 1.0
        %v5255 = vadd.f32 %v5127, 1.0
        %v5256 = vadd.f32 %v5128, 1.0
        %v5257 = vadd.f32 %v5129, 1.0
        %v5258 = vadd.f32 %v5130, 1.0
        %v5259 = vadd.f32 %v5131, 1.0
        %v5260 = vadd.f32 %v5132, 1.0
        %v5261 = vadd.f32 %v5133, 1.0
        %v5262 = vadd.f32 %v5134, 1.0
        %v5263 = vadd.f32 %v5135, 1.0
        %v5264 = vadd.f32 %v5136, 1.0
        %v5265 = vadd.f32 %v5137, 1.0
        %v5266 = vadd.f32 %v5138, 1.0
        %v5267 = vadd.f32 %v5139, 1.0
        %v5268 = vadd.f32 %v5140, 1.0
        %v5269 = vadd.f32 %v5141, 1.0
        %v5270 = vadd.f32 %v5142, 1.0
        %v5271 = vadd.f32 %v5143, 1.0
        %v5272 = vadd.f32 %v5144, 1.0
        %v5273 = vadd.f32 %v5145, 1.0
        %v5274 = vadd.f32 %v5146, 1.0
        %v5275 = vadd.f32 %v5147, 1.0
        %v5276 = vadd.f32 %v5148, 1.0
        %v5277 = vadd.f32 %v5149, 1.0
        %v5278 = vadd.f32 %v5150, 1.0
        %v5279 = vadd.f32 %v5151, 1.0
        %v5280 = vadd.f32 %v5152, 1.0
        %v5281 = vadd.f32 %v5153, 1.0
        %v5282 = vadd.f32 %v5154, 1.0
        %v5283 = vadd.f32 %v5155, 1.0
        %v5284 = vadd.f32 %v5156, 1.0
        %v5285 = vadd.f32 %v5157, 1.0
        %v5286 = vadd.f32 %v5158, 1.0
        %v5287 = vadd.f32 %v5159, 1.0
        %v5288 = vadd.f32 %v5160, 1.0
        %v5289 = vadd.f32 %v5161, 1.0
        %v5290 = vadd.f32 %v5162, 1.0
        %v5291 = vadd.f32 %v5163, 1.0
        %v5292 = vadd.f32 %v5164, 1.0
        %v5293 = vadd.f32 %v5165, 1.0
        %v5294 = vadd.f32 %v5166, 1.0
        %v5295 = vadd.f32 %v5167, 1.0
        %v5296 = vadd.f32 %v5168, 1.0
        %v5297 = vadd.f32 %v5169, 1.0
        %v5298 = vadd.f32 %v5170, 1.0
        %v5299 = vadd.f32 %v5171, 1.0
        %v5300 = vadd.f32 %v5172, 1.0
        %v5301 = vadd.f32 %v5173, 1.0
        %v5302 = vadd.f32 %v5174, 1.0
        %v5303 = vadd.f32 %v5175, 1.0
        %v5304 = vadd.f32 %v5176, 1.0
        %v5305 = vadd.f32 %v5177, 1.0
        %v5306 = vadd.f32 %v5178, 1.0
        %v5307 = vadd.f32 %v5179, 1.0
        %v5308 = vadd.f32 %v5180, 1.0
        %v5309 = vadd.f32 %v5181, 1.0
        %v5310 = vadd.f32 %v5182, 1.0
        %v5311 = vadd.f32 %v5183, 1.0
        %v5312 = vadd.f32 %v5184, 1.0
        %v5313 = vadd.f32 %v5185, 1.0
        %v5314 = vadd.f32 %v5186, 1.0
        %v5315 = vadd.f32 %v5187, 1.0
        %v5316 = vadd.f32 %v5188, 1.0
        %v5317 = vadd.f32 %v5189, 1.0
        %v5318 = vadd.f32 %v5190, 1.0
        %v5319 = vadd.f32 %v5191, 1.0
        %v5320 = vadd.f32 %v5192, 1.0
        %v5321 = vadd.f32 %v5193, 1.0
        %v5322 = vadd.f32 %v5194, 1.0
        %v5323 = vadd.f32 %v5195, 1.0
        %v5324 = vadd.f32 %v5196, 1.0
        %v5325 = vadd.f32 %v5197, 1.0
        %v5326 = vadd.f32 %v5198, 1.0
        %v5327 = vadd.f32 %v5199, 1.0
        %v5328 = vmul.f32 %v4304, %v5200
        %v5329 = vmul.f32 %v4305, %v5201
        %v5330 = vmul.f32 %v4306, %v5202
        %v5331 = vmul.f32 %v4307, %v5203
        %v5332 = vmul.f32 %v4308, %v5204
        %v5333 = vmul.f32 %v4309, %v5205
        %v5334 = vmul.f32 %v4310, %v5206
        %v5335 = vmul.f32 %v4311, %v5207
        %v5336 = vmul.f32 %v4312, %v5208
        %v5337 = vmul.f32 %v4313, %v5209
        %v5338 = vmul.f32 %v4314, %v5210
        %v5339 = vmul.f32 %v4315, %v5211
        %v5340 = vmul.f32 %v4316, %v5212
        %v5341 = vmul.f32 %v4317, %v5213
        %v5342 = vmul.f32 %v4318, %v5214
        %v5343 = vmul.f32 %v4319, %v5215
        %v5344 = vmul.f32 %v4320, %v5216
        %v5345 = vmul.f32 %v4321, %v5217
        %v5346 = vmul.f32 %v4322, %v5218
        %v5347 = vmul.f32 %v4323, %v5219
        %v5348 = vmul.f32 %v4324, %v5220
        %v5349 = vmul.f32 %v4325, %v5221
        %v5350 = vmul.f32 %v4326, %v5222
        %v5351 = vmul.f32 %v4327, %v5223
        %v5352 = vmul.f32 %v4328, %v5224
        %v5353 = vmul.f32 %v4329, %v5225
        %v5354 = vmul.f32 %v4330, %v5226
        %v5355 = vmul.f32 %v4331, %v5227
        %v5356 = vmul.f32 %v4332, %v5228
        %v5357 = vmul.f32 %v4333, %v5229
        %v5358 = vmul.f32 %v4334, %v5230
        %v5359 = vmul.f32 %v4335, %v5231
        %v5360 = vmul.f32 %v4336, %v5232
        %v5361 = vmul.f32 %v4337, %v5233
        %v5362 = vmul.f32 %v4338, %v5234
        %v5363 = vmul.f32 %v4339, %v5235
        %v5364 = vmul.f32 %v4340, %v5236
        %v5365 = vmul.f32 %v4341, %v5237
        %v5366 = vmul.f32 %v4342, %v5238
        %v5367 = vmul.f32 %v4343, %v5239
        %v5368 = vmul.f32 %v4344, %v5240
        %v5369 = vmul.f32 %v4345, %v5241
        %v5370 = vmul.f32 %v4346, %v5242
        %v5371 = vmul.f32 %v4347, %v5243
        %v5372 = vmul.f32 %v4348, %v5244
        %v5373 = vmul.f32 %v4349, %v5245
        %v5374 = vmul.f32 %v4350, %v5246
        %v5375 = vmul.f32 %v4351, %v5247
        %v5376 = vmul.f32 %v4352, %v5248
        %v5377 = vmul.f32 %v4353, %v5249
        %v5378 = vmul.f32 %v4354, %v5250
        %v5379 = vmul.f32 %v4355, %v5251
        %v5380 = vmul.f32 %v4356, %v5252
        %v5381 = vmul.f32 %v4357, %v5253
        %v5382 = vmul.f32 %v4358, %v5254
        %v5383 = vmul.f32 %v4359, %v5255
        %v5384 = vmul.f32 %v4360, %v5256
        %v5385 = vmul.f32 %v4361, %v5257
        %v5386 = vmul.f32 %v4362, %v5258
        %v5387 = vmul.f32 %v4363, %v5259
        %v5388 = vmul.f32 %v4364, %v5260
        %v5389 = vmul.f32 %v4365, %v5261
        %v5390 = vmul.f32 %v4366, %v5262
        %v5391 = vmul.f32 %v4367, %v5263
        %v5392 = vmul.f32 %v4368, %v5264
        %v5393 = vmul.f32 %v4369, %v5265
        %v5394 = vmul.f32 %v4370, %v5266
        %v5395 = vmul.f32 %v4371, %v5267
        %v5396 = vmul.f32 %v4372, %v5268
        %v5397 = vmul.f32 %v4373, %v5269
        %v5398 = vmul.f32 %v4374, %v5270
        %v5399 = vmul.f32 %v4375, %v5271
        %v5400 = vmul.f32 %v4376, %v5272
        %v5401 = vmul.f32 %v4377, %v5273
        %v5402 = vmul.f32 %v4378, %v5274
        %v5403 = vmul.f32 %v4379, %v5275
        %v5404 = vmul.f32 %v4380, %v5276
        %v5405 = vmul.f32 %v4381, %v5277
        %v5406 = vmul.f32 %v4382, %v5278
        %v5407 = vmul.f32 %v4383, %v5279
        %v5408 = vmul.f32 %v4384, %v5280
        %v5409 = vmul.f32 %v4385, %v5281
        %v5410 = vmul.f32 %v4386, %v5282
        %v5411 = vmul.f32 %v4387, %v5283
        %v5412 = vmul.f32 %v4388, %v5284
        %v5413 = vmul.f32 %v4389, %v5285
        %v5414 = vmul.f32 %v4390, %v5286
        %v5415 = vmul.f32 %v4391, %v5287
        %v5416 = vmul.f32 %v4392, %v5288
        %v5417 = vmul.f32 %v4393, %v5289
        %v5418 = vmul.f32 %v4394, %v5290
        %v5419 = vmul.f32 %v4395, %v5291
        %v5420 = vmul.f32 %v4396, %v5292
        %v5421 = vmul.f32 %v4397, %v5293
        %v5422 = vmul.f32 %v4398, %v5294
        %v5423 = vmul.f32 %v4399, %v5295
        %v5424 = vmul.f32 %v4400, %v5296
        %v5425 = vmul.f32 %v4401, %v5297
        %v5426 = vmul.f32 %v4402, %v5298
        %v5427 = vmul.f32 %v4403, %v5299
        %v5428 = vmul.f32 %v4404, %v5300
        %v5429 = vmul.f32 %v4405, %v5301
        %v5430 = vmul.f32 %v4406, %v5302
        %v5431 = vmul.f32 %v4407, %v5303
        %v5432 = vmul.f32 %v4408, %v5304
        %v5433 = vmul.f32 %v4409, %v5305
        %v5434 = vmul.f32 %v4410, %v5306
        %v5435 = vmul.f32 %v4411, %v5307
        %v5436 = vmul.f32 %v4412, %v5308
        %v5437 = vmul.f32 %v4413, %v5309
        %v5438 = vmul.f32 %v4414, %v5310
        %v5439 = vmul.f32 %v4415, %v5311
        %v5440 = vmul.f32 %v4416, %v5312
        %v5441 = vmul.f32 %v4417, %v5313
        %v5442 = vmul.f32 %v4418, %v5314
        %v5443 = vmul.f32 %v4419, %v5315
        %v5444 = vmul.f32 %v4420, %v5316
        %v5445 = vmul.f32 %v4421, %v5317
        %v5446 = vmul.f32 %v4422, %v5318
        %v5447 = vmul.f32 %v4423, %v5319
        %v5448 = vmul.f32 %v4424, %v5320
        %v5449 = vmul.f32 %v4425, %v5321
        %v5450 = vmul.f32 %v4426, %v5322
        %v5451 = vmul.f32 %v4427, %v5323
        %v5452 = vmul.f32 %v4428, %v5324
        %v5453 = vmul.f32 %v4429, %v5325
        %v5454 = vmul.f32 %v4430, %v5326
        %v5455 = vmul.f32 %v4431, %v5327
        %v5456 = vpack.c.bf16 %v5336, %v5328
        %v5457 = vpack.c.bf16 %v5337, %v5329
        %v5458 = vpack.c.bf16 %v5338, %v5330
        %v5459 = vpack.c.bf16 %v5339, %v5331
        %v5460 = vpack.c.bf16 %v5340, %v5332
        %v5461 = vpack.c.bf16 %v5341, %v5333
        %v5462 = vpack.c.bf16 %v5342, %v5334
        %v5463 = vpack.c.bf16 %v5343, %v5335
        %v5464 = vpack.c.bf16 %v5352, %v5344
        %v5465 = vpack.c.bf16 %v5353, %v5345
        %v5466 = vpack.c.bf16 %v5354, %v5346
        %v5467 = vpack.c.bf16 %v5355, %v5347
        %v5468 = vpack.c.bf16 %v5356, %v5348
        %v5469 = vpack.c.bf16 %v5357, %v5349
        %v5470 = vpack.c.bf16 %v5358, %v5350
        %v5471 = vpack.c.bf16 %v5359, %v5351
        %v5472 = vpack.c.bf16 %v5368, %v5360
        %v5473 = vpack.c.bf16 %v5369, %v5361
        %v5474 = vpack.c.bf16 %v5370, %v5362
        %v5475 = vpack.c.bf16 %v5371, %v5363
        %v5476 = vpack.c.bf16 %v5372, %v5364
        %v5477 = vpack.c.bf16 %v5373, %v5365
        %v5478 = vpack.c.bf16 %v5374, %v5366
        %v5479 = vpack.c.bf16 %v5375, %v5367
        %v5480 = vpack.c.bf16 %v5384, %v5376
        %v5481 = vpack.c.bf16 %v5385, %v5377
        %v5482 = vpack.c.bf16 %v5386, %v5378
        %v5483 = vpack.c.bf16 %v5387, %v5379
        %v5484 = vpack.c.bf16 %v5388, %v5380
        %v5485 = vpack.c.bf16 %v5389, %v5381
        %v5486 = vpack.c.bf16 %v5390, %v5382
        %v5487 = vpack.c.bf16 %v5391, %v5383
        %v5488 = vpack.c.bf16 %v5400, %v5392
        %v5489 = vpack.c.bf16 %v5401, %v5393
        %v5490 = vpack.c.bf16 %v5402, %v5394
        %v5491 = vpack.c.bf16 %v5403, %v5395
        %v5492 = vpack.c.bf16 %v5404, %v5396
        %v5493 = vpack.c.bf16 %v5405, %v5397
        %v5494 = vpack.c.bf16 %v5406, %v5398
        %v5495 = vpack.c.bf16 %v5407, %v5399
        %v5496 = vpack.c.bf16 %v5416, %v5408
        %v5497 = vpack.c.bf16 %v5417, %v5409
        %v5498 = vpack.c.bf16 %v5418, %v5410
        %v5499 = vpack.c.bf16 %v5419, %v5411
        %v5500 = vpack.c.bf16 %v5420, %v5412
        %v5501 = vpack.c.bf16 %v5421, %v5413
        %v5502 = vpack.c.bf16 %v5422, %v5414
        %v5503 = vpack.c.bf16 %v5423, %v5415
        %v5504 = vpack.c.bf16 %v5432, %v5424
        %v5505 = vpack.c.bf16 %v5433, %v5425
        %v5506 = vpack.c.bf16 %v5434, %v5426
        %v5507 = vpack.c.bf16 %v5435, %v5427
        %v5508 = vpack.c.bf16 %v5436, %v5428
        %v5509 = vpack.c.bf16 %v5437, %v5429
        %v5510 = vpack.c.bf16 %v5438, %v5430
        %v5511 = vpack.c.bf16 %v5439, %v5431
        %v5512 = vpack.c.bf16 %v5448, %v5440
        %v5513 = vpack.c.bf16 %v5449, %v5441
        %v5514 = vpack.c.bf16 %v5450, %v5442
        %v5515 = vpack.c.bf16 %v5451, %v5443
        %v5516 = vpack.c.bf16 %v5452, %v5444
        %v5517 = vpack.c.bf16 %v5453, %v5445
        %v5518 = vpack.c.bf16 %v5454, %v5446
        %v5519 = vpack.c.bf16 %v5455, %v5447
        %v5520 = vld [vmem:[%s403] sm:$0xff]
        %v5521 = vld [vmem:[%s403 + $0x8] sm:$0xff]
        %v5522 = vld [vmem:[%s403 + $0x10] sm:$0xff]
        %v5523 = vld [vmem:[%s403 + $0x18] sm:$0xff]
        %v5524 = vld [vmem:[%s403 + $0x20] sm:$0xff]
        %v5525 = vld [vmem:[%s403 + $0x28] sm:$0xff]
        %v5526 = vld [vmem:[%s403 + $0x30] sm:$0xff]
        %v5527 = vld [vmem:[%s403 + $0x38] sm:$0xff]
        %v5528 = vld [vmem:[%s403 + $0x40] sm:$0xff]
        %v5529 = vld [vmem:[%s403 + $0x48] sm:$0xff]
        %v5530 = vld [vmem:[%s403 + $0x50] sm:$0xff]
        %v5531 = vld [vmem:[%s403 + $0x58] sm:$0xff]
        %v5532 = vld [vmem:[%s403 + $0x60] sm:$0xff]
        %v5533 = vld [vmem:[%s403 + $0x68] sm:$0xff]
        %v5534 = vld [vmem:[%s403 + $0x70] sm:$0xff]
        %v5535 = vld [vmem:[%s403 + $0x78] sm:$0xff]
        %v5536 = vld [vmem:[%s403 + $0x80] sm:$0xff]
        %v5537 = vld [vmem:[%s403 + $0x88] sm:$0xff]
        %v5538 = vld [vmem:[%s403 + $0x90] sm:$0xff]
        %v5539 = vld [vmem:[%s403 + $0x98] sm:$0xff]
        %v5540 = vld [vmem:[%s403 + $0xa0] sm:$0xff]
        %v5541 = vld [vmem:[%s403 + $0xa8] sm:$0xff]
        %v5542 = vld [vmem:[%s403 + $0xb0] sm:$0xff]
        %v5543 = vld [vmem:[%s403 + $0xb8] sm:$0xff]
        %v5544 = vld [vmem:[%s403 + $0xc0] sm:$0xff]
        %v5545 = vld [vmem:[%s403 + $0xc8] sm:$0xff]
        %v5546 = vld [vmem:[%s403 + $0xd0] sm:$0xff]
        %v5547 = vld [vmem:[%s403 + $0xd8] sm:$0xff]
        %v5548 = vld [vmem:[%s403 + $0xe0] sm:$0xff]
        %v5549 = vld [vmem:[%s403 + $0xe8] sm:$0xff]
        %v5550 = vld [vmem:[%s403 + $0xf0] sm:$0xff]
        %v5551 = vld [vmem:[%s403 + $0xf8] sm:$0xff]
        %v5552 = vld [vmem:[%s403 + $0x100] sm:$0xff]
        %v5553 = vld [vmem:[%s403 + $0x108] sm:$0xff]
        %v5554 = vld [vmem:[%s403 + $0x110] sm:$0xff]
        %v5555 = vld [vmem:[%s403 + $0x118] sm:$0xff]
        %v5556 = vld [vmem:[%s403 + $0x120] sm:$0xff]
        %v5557 = vld [vmem:[%s403 + $0x128] sm:$0xff]
        %v5558 = vld [vmem:[%s403 + $0x130] sm:$0xff]
        %v5559 = vld [vmem:[%s403 + $0x138] sm:$0xff]
        %v5560 = vld [vmem:[%s403 + $0x140] sm:$0xff]
        %v5561 = vld [vmem:[%s403 + $0x148] sm:$0xff]
        %v5562 = vld [vmem:[%s403 + $0x150] sm:$0xff]
        %v5563 = vld [vmem:[%s403 + $0x158] sm:$0xff]
        %v5564 = vld [vmem:[%s403 + $0x160] sm:$0xff]
        %v5565 = vld [vmem:[%s403 + $0x168] sm:$0xff]
        %v5566 = vld [vmem:[%s403 + $0x170] sm:$0xff]
        %v5567 = vld [vmem:[%s403 + $0x178] sm:$0xff]
        %v5568 = vld [vmem:[%s403 + $0x180] sm:$0xff]
        %v5569 = vld [vmem:[%s403 + $0x188] sm:$0xff]
        %v5570 = vld [vmem:[%s403 + $0x190] sm:$0xff]
        %v5571 = vld [vmem:[%s403 + $0x198] sm:$0xff]
        %v5572 = vld [vmem:[%s403 + $0x1a0] sm:$0xff]
        %v5573 = vld [vmem:[%s403 + $0x1a8] sm:$0xff]
        %v5574 = vld [vmem:[%s403 + $0x1b0] sm:$0xff]
        %v5575 = vld [vmem:[%s403 + $0x1b8] sm:$0xff]
        %v5576 = vld [vmem:[%s403 + $0x1c0] sm:$0xff]
        %v5577 = vld [vmem:[%s403 + $0x1c8] sm:$0xff]
        %v5578 = vld [vmem:[%s403 + $0x1d0] sm:$0xff]
        %v5579 = vld [vmem:[%s403 + $0x1d8] sm:$0xff]
        %v5580 = vld [vmem:[%s403 + $0x1e0] sm:$0xff]
        %v5581 = vld [vmem:[%s403 + $0x1e8] sm:$0xff]
        %v5582 = vld [vmem:[%s403 + $0x1f0] sm:$0xff]
        %v5583 = vld [vmem:[%s403 + $0x1f8] sm:$0xff]
        %v5584 = vld [vmem:[%s403 + $0x200] sm:$0xff]
        %v5585 = vld [vmem:[%s403 + $0x208] sm:$0xff]
        %v5586 = vld [vmem:[%s403 + $0x210] sm:$0xff]
        %v5587 = vld [vmem:[%s403 + $0x218] sm:$0xff]
        %v5588 = vld [vmem:[%s403 + $0x220] sm:$0xff]
        %v5589 = vld [vmem:[%s403 + $0x228] sm:$0xff]
        %v5590 = vld [vmem:[%s403 + $0x230] sm:$0xff]
        %v5591 = vld [vmem:[%s403 + $0x238] sm:$0xff]
        %v5592 = vld [vmem:[%s403 + $0x240] sm:$0xff]
        %v5593 = vld [vmem:[%s403 + $0x248] sm:$0xff]
        %v5594 = vld [vmem:[%s403 + $0x250] sm:$0xff]
        %v5595 = vld [vmem:[%s403 + $0x258] sm:$0xff]
        %v5596 = vld [vmem:[%s403 + $0x260] sm:$0xff]
        %v5597 = vld [vmem:[%s403 + $0x268] sm:$0xff]
        %v5598 = vld [vmem:[%s403 + $0x270] sm:$0xff]
        %v5599 = vld [vmem:[%s403 + $0x278] sm:$0xff]
        %v5600 = vld [vmem:[%s403 + $0x280] sm:$0xff]
        %v5601 = vld [vmem:[%s403 + $0x288] sm:$0xff]
        %v5602 = vld [vmem:[%s403 + $0x290] sm:$0xff]
        %v5603 = vld [vmem:[%s403 + $0x298] sm:$0xff]
        %v5604 = vld [vmem:[%s403 + $0x2a0] sm:$0xff]
        %v5605 = vld [vmem:[%s403 + $0x2a8] sm:$0xff]
        %v5606 = vld [vmem:[%s403 + $0x2b0] sm:$0xff]
        %v5607 = vld [vmem:[%s403 + $0x2b8] sm:$0xff]
        %v5608 = vld [vmem:[%s403 + $0x2c0] sm:$0xff]
        %v5609 = vld [vmem:[%s403 + $0x2c8] sm:$0xff]
        %v5610 = vld [vmem:[%s403 + $0x2d0] sm:$0xff]
        %v5611 = vld [vmem:[%s403 + $0x2d8] sm:$0xff]
        %v5612 = vld [vmem:[%s403 + $0x2e0] sm:$0xff]
        %v5613 = vld [vmem:[%s403 + $0x2e8] sm:$0xff]
        %v5614 = vld [vmem:[%s403 + $0x2f0] sm:$0xff]
        %v5615 = vld [vmem:[%s403 + $0x2f8] sm:$0xff]
        %v5616 = vld [vmem:[%s403 + $0x300] sm:$0xff]
        %v5617 = vld [vmem:[%s403 + $0x308] sm:$0xff]
        %v5618 = vld [vmem:[%s403 + $0x310] sm:$0xff]
        %v5619 = vld [vmem:[%s403 + $0x318] sm:$0xff]
        %v5620 = vld [vmem:[%s403 + $0x320] sm:$0xff]
        %v5621 = vld [vmem:[%s403 + $0x328] sm:$0xff]
        %v5622 = vld [vmem:[%s403 + $0x330] sm:$0xff]
        %v5623 = vld [vmem:[%s403 + $0x338] sm:$0xff]
        %v5624 = vld [vmem:[%s403 + $0x340] sm:$0xff]
        %v5625 = vld [vmem:[%s403 + $0x348] sm:$0xff]
        %v5626 = vld [vmem:[%s403 + $0x350] sm:$0xff]
        %v5627 = vld [vmem:[%s403 + $0x358] sm:$0xff]
        %v5628 = vld [vmem:[%s403 + $0x360] sm:$0xff]
        %v5629 = vld [vmem:[%s403 + $0x368] sm:$0xff]
        %v5630 = vld [vmem:[%s403 + $0x370] sm:$0xff]
        %v5631 = vld [vmem:[%s403 + $0x378] sm:$0xff]
        %v5632 = vld [vmem:[%s403 + $0x380] sm:$0xff]
        %v5633 = vld [vmem:[%s403 + $0x388] sm:$0xff]
        %v5634 = vld [vmem:[%s403 + $0x390] sm:$0xff]
        %v5635 = vld [vmem:[%s403 + $0x398] sm:$0xff]
        %v5636 = vld [vmem:[%s403 + $0x3a0] sm:$0xff]
        %v5637 = vld [vmem:[%s403 + $0x3a8] sm:$0xff]
        %v5638 = vld [vmem:[%s403 + $0x3b0] sm:$0xff]
        %v5639 = vld [vmem:[%s403 + $0x3b8] sm:$0xff]
        %v5640 = vld [vmem:[%s403 + $0x3c0] sm:$0xff]
        %v5641 = vld [vmem:[%s403 + $0x3c8] sm:$0xff]
        %v5642 = vld [vmem:[%s403 + $0x3d0] sm:$0xff]
        %v5643 = vld [vmem:[%s403 + $0x3d8] sm:$0xff]
        %v5644 = vld [vmem:[%s403 + $0x3e0] sm:$0xff]
        %v5645 = vld [vmem:[%s403 + $0x3e8] sm:$0xff]
        %v5646 = vld [vmem:[%s403 + $0x3f0] sm:$0xff]
        %v5647 = vld [vmem:[%s403 + $0x3f8] sm:$0xff]
        %v5648 = vlaneseq
        %v5649 = vshrl.u32 %v5648, 7
        %v5650 = vsub.s32 6, %v5649
        %v5651 = vrot.slane %v533, %v5650
        %v5652 = vlaneseq
        %v5653 = vshrl.u32 %v5652, 7
        %v5654 = vsub.s32 6, %v5653
        %v5655 = vrot.slane %v534, %v5654
        %v5784 = vunpack.c.l.b16 %v5520
        %v5785 = vunpack.c.h.b16 %v5520
        %v5786 = vunpack.c.l.b16 %v5521
        %v5787 = vunpack.c.h.b16 %v5521
        %v5788 = vunpack.c.l.b16 %v5522
        %v5789 = vunpack.c.h.b16 %v5522
        %v5790 = vunpack.c.l.b16 %v5523
        %v5791 = vunpack.c.h.b16 %v5523
        %v5792 = vunpack.c.l.b16 %v5524
        %v5793 = vunpack.c.h.b16 %v5524
        %v5794 = vunpack.c.l.b16 %v5525
        %v5795 = vunpack.c.h.b16 %v5525
        %v5796 = vunpack.c.l.b16 %v5526
        %v5797 = vunpack.c.h.b16 %v5526
        %v5798 = vunpack.c.l.b16 %v5527
        %v5799 = vunpack.c.h.b16 %v5527
        %v5800 = vunpack.c.l.b16 %v5528
        %v5801 = vunpack.c.h.b16 %v5528
        %v5802 = vunpack.c.l.b16 %v5529
        %v5803 = vunpack.c.h.b16 %v5529
        %v5804 = vunpack.c.l.b16 %v5530
        %v5805 = vunpack.c.h.b16 %v5530
        %v5806 = vunpack.c.l.b16 %v5531
        %v5807 = vunpack.c.h.b16 %v5531
        %v5808 = vunpack.c.l.b16 %v5532
        %v5809 = vunpack.c.h.b16 %v5532
        %v5810 = vunpack.c.l.b16 %v5533
        %v5811 = vunpack.c.h.b16 %v5533
        %v5812 = vunpack.c.l.b16 %v5534
        %v5813 = vunpack.c.h.b16 %v5534
        %v5814 = vunpack.c.l.b16 %v5535
        %v5815 = vunpack.c.h.b16 %v5535
        %v5816 = vunpack.c.l.b16 %v5536
        %v5817 = vunpack.c.h.b16 %v5536
        %v5818 = vunpack.c.l.b16 %v5537
        %v5819 = vunpack.c.h.b16 %v5537
        %v5820 = vunpack.c.l.b16 %v5538
        %v5821 = vunpack.c.h.b16 %v5538
        %v5822 = vunpack.c.l.b16 %v5539
        %v5823 = vunpack.c.h.b16 %v5539
        %v5824 = vunpack.c.l.b16 %v5540
        %v5825 = vunpack.c.h.b16 %v5540
        %v5826 = vunpack.c.l.b16 %v5541
        %v5827 = vunpack.c.h.b16 %v5541
        %v5828 = vunpack.c.l.b16 %v5542
        %v5829 = vunpack.c.h.b16 %v5542
        %v5830 = vunpack.c.l.b16 %v5543
        %v5831 = vunpack.c.h.b16 %v5543
        %v5832 = vunpack.c.l.b16 %v5544
        %v5833 = vunpack.c.h.b16 %v5544
        %v5834 = vunpack.c.l.b16 %v5545
        %v5835 = vunpack.c.h.b16 %v5545
        %v5836 = vunpack.c.l.b16 %v5546
        %v5837 = vunpack.c.h.b16 %v5546
        %v5838 = vunpack.c.l.b16 %v5547
        %v5839 = vunpack.c.h.b16 %v5547
        %v5840 = vunpack.c.l.b16 %v5548
        %v5841 = vunpack.c.h.b16 %v5548
        %v5842 = vunpack.c.l.b16 %v5549
        %v5843 = vunpack.c.h.b16 %v5549
        %v5844 = vunpack.c.l.b16 %v5550
        %v5845 = vunpack.c.h.b16 %v5550
        %v5846 = vunpack.c.l.b16 %v5551
        %v5847 = vunpack.c.h.b16 %v5551
        %v5848 = vunpack.c.l.b16 %v5552
        %v5849 = vunpack.c.h.b16 %v5552
        %v5850 = vunpack.c.l.b16 %v5553
        %v5851 = vunpack.c.h.b16 %v5553
        %v5852 = vunpack.c.l.b16 %v5554
        %v5853 = vunpack.c.h.b16 %v5554
        %v5854 = vunpack.c.l.b16 %v5555
        %v5855 = vunpack.c.h.b16 %v5555
        %v5856 = vunpack.c.l.b16 %v5556
        %v5857 = vunpack.c.h.b16 %v5556
        %v5858 = vunpack.c.l.b16 %v5557
        %v5859 = vunpack.c.h.b16 %v5557
        %v5860 = vunpack.c.l.b16 %v5558
        %v5861 = vunpack.c.h.b16 %v5558
        %v5862 = vunpack.c.l.b16 %v5559
        %v5863 = vunpack.c.h.b16 %v5559
        %v5864 = vunpack.c.l.b16 %v5560
        %v5865 = vunpack.c.h.b16 %v5560
        %v5866 = vunpack.c.l.b16 %v5561
        %v5867 = vunpack.c.h.b16 %v5561
        %v5868 = vunpack.c.l.b16 %v5562
        %v5869 = vunpack.c.h.b16 %v5562
        %v5870 = vunpack.c.l.b16 %v5563
        %v5871 = vunpack.c.h.b16 %v5563
        %v5872 = vunpack.c.l.b16 %v5564
        %v5873 = vunpack.c.h.b16 %v5564
        %v5874 = vunpack.c.l.b16 %v5565
        %v5875 = vunpack.c.h.b16 %v5565
        %v5876 = vunpack.c.l.b16 %v5566
        %v5877 = vunpack.c.h.b16 %v5566
        %v5878 = vunpack.c.l.b16 %v5567
        %v5879 = vunpack.c.h.b16 %v5567
        %v5880 = vunpack.c.l.b16 %v5568
        %v5881 = vunpack.c.h.b16 %v5568
        %v5882 = vunpack.c.l.b16 %v5569
        %v5883 = vunpack.c.h.b16 %v5569
        %v5884 = vunpack.c.l.b16 %v5570
        %v5885 = vunpack.c.h.b16 %v5570
        %v5886 = vunpack.c.l.b16 %v5571
        %v5887 = vunpack.c.h.b16 %v5571
        %v5888 = vunpack.c.l.b16 %v5572
        %v5889 = vunpack.c.h.b16 %v5572
        %v5890 = vunpack.c.l.b16 %v5573
        %v5891 = vunpack.c.h.b16 %v5573
        %v5892 = vunpack.c.l.b16 %v5574
        %v5893 = vunpack.c.h.b16 %v5574
        %v5894 = vunpack.c.l.b16 %v5575
        %v5895 = vunpack.c.h.b16 %v5575
        %v5896 = vunpack.c.l.b16 %v5576
        %v5897 = vunpack.c.h.b16 %v5576
        %v5898 = vunpack.c.l.b16 %v5577
        %v5899 = vunpack.c.h.b16 %v5577
        %v5900 = vunpack.c.l.b16 %v5578
        %v5901 = vunpack.c.h.b16 %v5578
        %v5902 = vunpack.c.l.b16 %v5579
        %v5903 = vunpack.c.h.b16 %v5579
        %v5904 = vunpack.c.l.b16 %v5580
        %v5905 = vunpack.c.h.b16 %v5580
        %v5906 = vunpack.c.l.b16 %v5581
        %v5907 = vunpack.c.h.b16 %v5581
        %v5908 = vunpack.c.l.b16 %v5582
        %v5909 = vunpack.c.h.b16 %v5582
        %v5910 = vunpack.c.l.b16 %v5583
        %v5911 = vunpack.c.h.b16 %v5583
        %v5912 = vunpack.c.l.b16 %v5584
        %v5913 = vunpack.c.h.b16 %v5584
        %v5914 = vunpack.c.l.b16 %v5585
        %v5915 = vunpack.c.h.b16 %v5585
        %v5916 = vunpack.c.l.b16 %v5586
        %v5917 = vunpack.c.h.b16 %v5586
        %v5918 = vunpack.c.l.b16 %v5587
        %v5919 = vunpack.c.h.b16 %v5587
        %v5920 = vunpack.c.l.b16 %v5588
        %v5921 = vunpack.c.h.b16 %v5588
        %v5922 = vunpack.c.l.b16 %v5589
        %v5923 = vunpack.c.h.b16 %v5589
        %v5924 = vunpack.c.l.b16 %v5590
        %v5925 = vunpack.c.h.b16 %v5590
        %v5926 = vunpack.c.l.b16 %v5591
        %v5927 = vunpack.c.h.b16 %v5591
        %v5928 = vunpack.c.l.b16 %v5592
        %v5929 = vunpack.c.h.b16 %v5592
        %v5930 = vunpack.c.l.b16 %v5593
        %v5931 = vunpack.c.h.b16 %v5593
        %v5932 = vunpack.c.l.b16 %v5594
        %v5933 = vunpack.c.h.b16 %v5594
        %v5934 = vunpack.c.l.b16 %v5595
        %v5935 = vunpack.c.h.b16 %v5595
        %v5936 = vunpack.c.l.b16 %v5596
        %v5937 = vunpack.c.h.b16 %v5596
        %v5938 = vunpack.c.l.b16 %v5597
        %v5939 = vunpack.c.h.b16 %v5597
        %v5940 = vunpack.c.l.b16 %v5598
        %v5941 = vunpack.c.h.b16 %v5598
        %v5942 = vunpack.c.l.b16 %v5599
        %v5943 = vunpack.c.h.b16 %v5599
        %v5944 = vunpack.c.l.b16 %v5600
        %v5945 = vunpack.c.h.b16 %v5600
        %v5946 = vunpack.c.l.b16 %v5601
        %v5947 = vunpack.c.h.b16 %v5601
        %v5948 = vunpack.c.l.b16 %v5602
        %v5949 = vunpack.c.h.b16 %v5602
        %v5950 = vunpack.c.l.b16 %v5603
        %v5951 = vunpack.c.h.b16 %v5603
        %v5952 = vunpack.c.l.b16 %v5604
        %v5953 = vunpack.c.h.b16 %v5604
        %v5954 = vunpack.c.l.b16 %v5605
        %v5955 = vunpack.c.h.b16 %v5605
        %v5956 = vunpack.c.l.b16 %v5606
        %v5957 = vunpack.c.h.b16 %v5606
        %v5958 = vunpack.c.l.b16 %v5607
        %v5959 = vunpack.c.h.b16 %v5607
        %v5960 = vunpack.c.l.b16 %v5608
        %v5961 = vunpack.c.h.b16 %v5608
        %v5962 = vunpack.c.l.b16 %v5609
        %v5963 = vunpack.c.h.b16 %v5609
        %v5964 = vunpack.c.l.b16 %v5610
        %v5965 = vunpack.c.h.b16 %v5610
        %v5966 = vunpack.c.l.b16 %v5611
        %v5967 = vunpack.c.h.b16 %v5611
        %v5968 = vunpack.c.l.b16 %v5612
        %v5969 = vunpack.c.h.b16 %v5612
        %v5970 = vunpack.c.l.b16 %v5613
        %v5971 = vunpack.c.h.b16 %v5613
        %v5972 = vunpack.c.l.b16 %v5614
        %v5973 = vunpack.c.h.b16 %v5614
        %v5974 = vunpack.c.l.b16 %v5615
        %v5975 = vunpack.c.h.b16 %v5615
        %v5976 = vunpack.c.l.b16 %v5616
        %v5977 = vunpack.c.h.b16 %v5616
        %v5978 = vunpack.c.l.b16 %v5617
        %v5979 = vunpack.c.h.b16 %v5617
        %v5980 = vunpack.c.l.b16 %v5618
        %v5981 = vunpack.c.h.b16 %v5618
        %v5982 = vunpack.c.l.b16 %v5619
        %v5983 = vunpack.c.h.b16 %v5619
        %v5984 = vunpack.c.l.b16 %v5620
        %v5985 = vunpack.c.h.b16 %v5620
        %v5986 = vunpack.c.l.b16 %v5621
        %v5987 = vunpack.c.h.b16 %v5621
        %v5988 = vunpack.c.l.b16 %v5622
        %v5989 = vunpack.c.h.b16 %v5622
        %v5990 = vunpack.c.l.b16 %v5623
        %v5991 = vunpack.c.h.b16 %v5623
        %v5992 = vunpack.c.l.b16 %v5624
        %v5993 = vunpack.c.h.b16 %v5624
        %v5994 = vunpack.c.l.b16 %v5625
        %v5995 = vunpack.c.h.b16 %v5625
        %v5996 = vunpack.c.l.b16 %v5626
        %v5997 = vunpack.c.h.b16 %v5626
        %v5998 = vunpack.c.l.b16 %v5627
        %v5999 = vunpack.c.h.b16 %v5627
        %v6000 = vunpack.c.l.b16 %v5628
        %v6001 = vunpack.c.h.b16 %v5628
        %v6002 = vunpack.c.l.b16 %v5629
        %v6003 = vunpack.c.h.b16 %v5629
        %v6004 = vunpack.c.l.b16 %v5630
        %v6005 = vunpack.c.h.b16 %v5630
        %v6006 = vunpack.c.l.b16 %v5631
        %v6007 = vunpack.c.h.b16 %v5631
        %v6008 = vunpack.c.l.b16 %v5632
        %v6009 = vunpack.c.h.b16 %v5632
        %v6010 = vunpack.c.l.b16 %v5633
        %v6011 = vunpack.c.h.b16 %v5633
        %v6012 = vunpack.c.l.b16 %v5634
        %v6013 = vunpack.c.h.b16 %v5634
        %v6014 = vunpack.c.l.b16 %v5635
        %v6015 = vunpack.c.h.b16 %v5635
        %v6016 = vunpack.c.l.b16 %v5636
        %v6017 = vunpack.c.h.b16 %v5636
        %v6018 = vunpack.c.l.b16 %v5637
        %v6019 = vunpack.c.h.b16 %v5637
        %v6020 = vunpack.c.l.b16 %v5638
        %v6021 = vunpack.c.h.b16 %v5638
        %v6022 = vunpack.c.l.b16 %v5639
        %v6023 = vunpack.c.h.b16 %v5639
        %v6024 = vunpack.c.l.b16 %v5640
        %v6025 = vunpack.c.h.b16 %v5640
        %v6026 = vunpack.c.l.b16 %v5641
        %v6027 = vunpack.c.h.b16 %v5641
        %v6028 = vunpack.c.l.b16 %v5642
        %v6029 = vunpack.c.h.b16 %v5642
        %v6030 = vunpack.c.l.b16 %v5643
        %v6031 = vunpack.c.h.b16 %v5643
        %v6032 = vunpack.c.l.b16 %v5644
        %v6033 = vunpack.c.h.b16 %v5644
        %v6034 = vunpack.c.l.b16 %v5645
        %v6035 = vunpack.c.h.b16 %v5645
        %v6036 = vunpack.c.l.b16 %v5646
        %v6037 = vunpack.c.h.b16 %v5646
        %v6038 = vunpack.c.l.b16 %v5647
        %v6039 = vunpack.c.h.b16 %v5647
        %v6040 = vpack.c.b16 %v5786, %v5784
        %v6041 = vpack.c.b16 %v5787, %v5785
        %v6042 = vpack.c.b16 %v5790, %v5788
        %v6043 = vpack.c.b16 %v5791, %v5789
        %v6044 = vpack.c.b16 %v5794, %v5792
        %v6045 = vpack.c.b16 %v5795, %v5793
        %v6046 = vpack.c.b16 %v5798, %v5796
        %v6047 = vpack.c.b16 %v5799, %v5797
        %v6048 = vpack.c.b16 %v5802, %v5800
        %v6049 = vpack.c.b16 %v5803, %v5801
        %v6050 = vpack.c.b16 %v5806, %v5804
        %v6051 = vpack.c.b16 %v5807, %v5805
        %v6052 = vpack.c.b16 %v5810, %v5808
        %v6053 = vpack.c.b16 %v5811, %v5809
        %v6054 = vpack.c.b16 %v5814, %v5812
        %v6055 = vpack.c.b16 %v5815, %v5813
        %v6056 = vpack.c.b16 %v5818, %v5816
        %v6057 = vpack.c.b16 %v5819, %v5817
        %v6058 = vpack.c.b16 %v5822, %v5820
        %v6059 = vpack.c.b16 %v5823, %v5821
        %v6060 = vpack.c.b16 %v5826, %v5824
        %v6061 = vpack.c.b16 %v5827, %v5825
        %v6062 = vpack.c.b16 %v5830, %v5828
        %v6063 = vpack.c.b16 %v5831, %v5829
        %v6064 = vpack.c.b16 %v5834, %v5832
        %v6065 = vpack.c.b16 %v5835, %v5833
        %v6066 = vpack.c.b16 %v5838, %v5836
        %v6067 = vpack.c.b16 %v5839, %v5837
        %v6068 = vpack.c.b16 %v5842, %v5840
        %v6069 = vpack.c.b16 %v5843, %v5841
        %v6070 = vpack.c.b16 %v5846, %v5844
        %v6071 = vpack.c.b16 %v5847, %v5845
        %v6072 = vpack.c.b16 %v5850, %v5848
        %v6073 = vpack.c.b16 %v5851, %v5849
        %v6074 = vpack.c.b16 %v5854, %v5852
        %v6075 = vpack.c.b16 %v5855, %v5853
        %v6076 = vpack.c.b16 %v5858, %v5856
        %v6077 = vpack.c.b16 %v5859, %v5857
        %v6078 = vpack.c.b16 %v5862, %v5860
        %v6079 = vpack.c.b16 %v5863, %v5861
        %v6080 = vpack.c.b16 %v5866, %v5864
        %v6081 = vpack.c.b16 %v5867, %v5865
        %v6082 = vpack.c.b16 %v5870, %v5868
        %v6083 = vpack.c.b16 %v5871, %v5869
        %v6084 = vpack.c.b16 %v5874, %v5872
        %v6085 = vpack.c.b16 %v5875, %v5873
        %v6086 = vpack.c.b16 %v5878, %v5876
        %v6087 = vpack.c.b16 %v5879, %v5877
        %v6088 = vpack.c.b16 %v5882, %v5880
        %v6089 = vpack.c.b16 %v5883, %v5881
        %v6090 = vpack.c.b16 %v5886, %v5884
        %v6091 = vpack.c.b16 %v5887, %v5885
        %v6092 = vpack.c.b16 %v5890, %v5888
        %v6093 = vpack.c.b16 %v5891, %v5889
        %v6094 = vpack.c.b16 %v5894, %v5892
        %v6095 = vpack.c.b16 %v5895, %v5893
        %v6096 = vpack.c.b16 %v5898, %v5896
        %v6097 = vpack.c.b16 %v5899, %v5897
        %v6098 = vpack.c.b16 %v5902, %v5900
        %v6099 = vpack.c.b16 %v5903, %v5901
        %v6100 = vpack.c.b16 %v5906, %v5904
        %v6101 = vpack.c.b16 %v5907, %v5905
        %v6102 = vpack.c.b16 %v5910, %v5908
        %v6103 = vpack.c.b16 %v5911, %v5909
        %v6104 = vpack.c.b16 %v5914, %v5912
        %v6105 = vpack.c.b16 %v5915, %v5913
        %v6106 = vpack.c.b16 %v5918, %v5916
        %v6107 = vpack.c.b16 %v5919, %v5917
        %v6108 = vpack.c.b16 %v5922, %v5920
        %v6109 = vpack.c.b16 %v5923, %v5921
        %v6110 = vpack.c.b16 %v5926, %v5924
        %v6111 = vpack.c.b16 %v5927, %v5925
        %v6112 = vpack.c.b16 %v5930, %v5928
        %v6113 = vpack.c.b16 %v5931, %v5929
        %v6114 = vpack.c.b16 %v5934, %v5932
        %v6115 = vpack.c.b16 %v5935, %v5933
        %v6116 = vpack.c.b16 %v5938, %v5936
        %v6117 = vpack.c.b16 %v5939, %v5937
        %v6118 = vpack.c.b16 %v5942, %v5940
        %v6119 = vpack.c.b16 %v5943, %v5941
        %v6120 = vpack.c.b16 %v5946, %v5944
        %v6121 = vpack.c.b16 %v5947, %v5945
        %v6122 = vpack.c.b16 %v5950, %v5948
        %v6123 = vpack.c.b16 %v5951, %v5949
        %v6124 = vpack.c.b16 %v5954, %v5952
        %v6125 = vpack.c.b16 %v5955, %v5953
        %v6126 = vpack.c.b16 %v5958, %v5956
        %v6127 = vpack.c.b16 %v5959, %v5957
        %v6128 = vpack.c.b16 %v5962, %v5960
        %v6129 = vpack.c.b16 %v5963, %v5961
        %v6130 = vpack.c.b16 %v5966, %v5964
        %v6131 = vpack.c.b16 %v5967, %v5965
        %v6132 = vpack.c.b16 %v5970, %v5968
        %v6133 = vpack.c.b16 %v5971, %v5969
        %v6134 = vpack.c.b16 %v5974, %v5972
        %v6135 = vpack.c.b16 %v5975, %v5973
        %v6136 = vpack.c.b16 %v5978, %v5976
        %v6137 = vpack.c.b16 %v5979, %v5977
        %v6138 = vpack.c.b16 %v5982, %v5980
        %v6139 = vpack.c.b16 %v5983, %v5981
        %v6140 = vpack.c.b16 %v5986, %v5984
        %v6141 = vpack.c.b16 %v5987, %v5985
        %v6142 = vpack.c.b16 %v5990, %v5988
        %v6143 = vpack.c.b16 %v5991, %v5989
        %v6144 = vpack.c.b16 %v5994, %v5992
        %v6145 = vpack.c.b16 %v5995, %v5993
        %v6146 = vpack.c.b16 %v5998, %v5996
        %v6147 = vpack.c.b16 %v5999, %v5997
        %v6148 = vpack.c.b16 %v6002, %v6000
        %v6149 = vpack.c.b16 %v6003, %v6001
        %v6150 = vpack.c.b16 %v6006, %v6004
        %v6151 = vpack.c.b16 %v6007, %v6005
        %v6152 = vpack.c.b16 %v6010, %v6008
        %v6153 = vpack.c.b16 %v6011, %v6009
        %v6154 = vpack.c.b16 %v6014, %v6012
        %v6155 = vpack.c.b16 %v6015, %v6013
        %v6156 = vpack.c.b16 %v6018, %v6016
        %v6157 = vpack.c.b16 %v6019, %v6017
        %v6158 = vpack.c.b16 %v6022, %v6020
        %v6159 = vpack.c.b16 %v6023, %v6021
        %v6160 = vpack.c.b16 %v6026, %v6024
        %v6161 = vpack.c.b16 %v6027, %v6025
        %v6162 = vpack.c.b16 %v6030, %v6028
        %v6163 = vpack.c.b16 %v6031, %v6029
        %v6164 = vpack.c.b16 %v6034, %v6032
        %v6165 = vpack.c.b16 %v6035, %v6033
        %v6166 = vpack.c.b16 %v6038, %v6036
        %v6167 = vpack.c.b16 %v6039, %v6037
        %6296 = vmatprep.subr.bf16.mxu0 %v6041
        %6297 = vmatpush1.bf16.msra.mxu0 %v6040
        %6298 = vmatprep.subr.bf16.mxu0 %v6043
        %6299 = vmatpush1.bf16.msra.mxu0 %v6042
        %6300 = vmatprep.subr.bf16.mxu0 %v6045
        %6301 = vmatpush1.bf16.msra.mxu0 %v6044
        %6302 = vmatprep.subr.bf16.mxu0 %v6047
        %6303 = vmatpush1.bf16.msra.mxu0 %v6046
        %6304 = vmatprep.subr.bf16.mxu0 %v6049
        %6305 = vmatpush1.bf16.msra.mxu0 %v6048
        %6306 = vmatprep.subr.bf16.mxu0 %v6051
        %6307 = vmatpush1.bf16.msra.mxu0 %v6050
        %6308 = vmatprep.subr.bf16.mxu0 %v6053
        %6309 = vmatpush1.bf16.msra.mxu0 %v6052
        %6310 = vmatprep.subr.bf16.mxu0 %v6055
        %6311 = vmatpush1.bf16.msra.mxu0 %v6054
        %6312 = vmatprep.subr.bf16.mxu0 %v6057
        %6313 = vmatpush1.bf16.msra.mxu0 %v6056
        %6314 = vmatprep.subr.bf16.mxu0 %v6059
        %6315 = vmatpush1.bf16.msra.mxu0 %v6058
        %6316 = vmatprep.subr.bf16.mxu0 %v6061
        %6317 = vmatpush1.bf16.msra.mxu0 %v6060
        %6318 = vmatprep.subr.bf16.mxu0 %v6063
        %6319 = vmatpush1.bf16.msra.mxu0 %v6062
        %6320 = vmatprep.subr.bf16.mxu0 %v6065
        %6321 = vmatpush1.bf16.msra.mxu0 %v6064
        %6322 = vmatprep.subr.bf16.mxu0 %v6067
        %6323 = vmatpush1.bf16.msra.mxu0 %v6066
        %6324 = vmatprep.subr.bf16.mxu0 %v6069
        %6325 = vmatpush1.bf16.msra.mxu0 %v6068
        %6326 = vmatprep.subr.bf16.mxu0 %v6071
        %6327 = vmatpush1.bf16.msra.mxu0 %v6070
        %6328 = vmatprep.mubr.bf16.mxu0 %v5457
        %6329 = vmatmul.mubr.bf16.gmra.mrb[0].mxu0 %v5456
        %v6330 = vpop.f32.mrb[0].mxu0
        %v6331 = vadd.f32 %v5651, %v6330
        %v6332 = vpop.f32.mrb[0].mxu0
        %v6333 = vadd.f32 %v5655, %v6332
        %v6334 = vpop.f32.mrb[0].mxu0
        %v6335 = vadd.f32 %v5651, %v6334
        %v6336 = vpop.f32.mrb[0].mxu0
        %v6337 = vadd.f32 %v5655, %v6336
        %6338 = vmatprep.mubr.bf16.mxu0 %v5465
        %6339 = vmatmul.mubr.bf16.gmra.mrb[0].mxu0 %v5464
        %v6340 = vpop.f32.mrb[0].mxu0
        %v6341 = vadd.f32 %v5651, %v6340
        %v6342 = vpop.f32.mrb[0].mxu0
        %v6343 = vadd.f32 %v5655, %v6342
        %v6344 = vpop.f32.mrb[0].mxu0
        %v6345 = vadd.f32 %v5651, %v6344
        %v6346 = vpop.f32.mrb[0].mxu0
        %v6347 = vadd.f32 %v5655, %v6346
        %6348 = vmatprep.mubr.bf16.mxu0 %v5473
        %6349 = vmatmul.mubr.bf16.gmra.mrb[0].mxu0 %v5472
        %v6350 = vpop.f32.mrb[0].mxu0
        %v6351 = vadd.f32 %v5651, %v6350
        %v6352 = vpop.f32.mrb[0].mxu0
        %v6353 = vadd.f32 %v5655, %v6352
        %v6354 = vpop.f32.mrb[0].mxu0
        %v6355 = vadd.f32 %v5651, %v6354
        %v6356 = vpop.f32.mrb[0].mxu0
        %v6357 = vadd.f32 %v5655, %v6356
        %6358 = vmatprep.mubr.bf16.mxu0 %v5481
        %6359 = vmatmul.mubr.bf16.gmra.mrb[0].mxu0 %v5480
        %v6360 = vpop.f32.mrb[0].mxu0
        %v6361 = vadd.f32 %v5651, %v6360
        %v6362 = vpop.f32.mrb[0].mxu0
        %v6363 = vadd.f32 %v5655, %v6362
        %v6364 = vpop.f32.mrb[0].mxu0
        %v6365 = vadd.f32 %v5651, %v6364
        %v6366 = vpop.f32.mrb[0].mxu0
        %v6367 = vadd.f32 %v5655, %v6366
        %6368 = vmatprep.mubr.bf16.mxu0 %v5489
        %6369 = vmatmul.mubr.bf16.gmra.mrb[0].mxu0 %v5488
        %v6370 = vpop.f32.mrb[0].mxu0
        %v6371 = vadd.f32 %v5651, %v6370
        %v6372 = vpop.f32.mrb[0].mxu0
        %v6373 = vadd.f32 %v5655, %v6372
        %v6374 = vpop.f32.mrb[0].mxu0
        %v6375 = vadd.f32 %v5651, %v6374
        %v6376 = vpop.f32.mrb[0].mxu0
        %v6377 = vadd.f32 %v5655, %v6376
        %6378 = vmatprep.mubr.bf16.mxu0 %v5497
        %6379 = vmatmul.mubr.bf16.gmra.mrb[0].mxu0 %v5496
        %v6380 = vpop.f32.mrb[0].mxu0
        %v6381 = vadd.f32 %v5651, %v6380
        %v6382 = vpop.f32.mrb[0].mxu0
        %v6383 = vadd.f32 %v5655, %v6382
        %v6384 = vpop.f32.mrb[0].mxu0
        %v6385 = vadd.f32 %v5651, %v6384
        %v6386 = vpop.f32.mrb[0].mxu0
        %v6387 = vadd.f32 %v5655, %v6386
        %6388 = vmatprep.mubr.bf16.mxu0 %v5505
        %6389 = vmatmul.mubr.bf16.gmra.mrb[0].mxu0 %v5504
        %v6390 = vpop.f32.mrb[0].mxu0
        %v6391 = vadd.f32 %v5651, %v6390
        %v6392 = vpop.f32.mrb[0].mxu0
        %v6393 = vadd.f32 %v5655, %v6392
        %v6394 = vpop.f32.mrb[0].mxu0
        %v6395 = vadd.f32 %v5651, %v6394
        %v6396 = vpop.f32.mrb[0].mxu0
        %v6397 = vadd.f32 %v5655, %v6396
        %6398 = vmatprep.mubr.bf16.mxu0 %v5513
        %6399 = vmatmul.mubr.bf16.gmra.mrb[0].mxu0 %v5512
        %v6400 = vpop.f32.mrb[0].mxu0
        %v6401 = vadd.f32 %v5651, %v6400
        %v6402 = vpop.f32.mrb[0].mxu0
        %v6403 = vadd.f32 %v5655, %v6402
        %v6404 = vpop.f32.mrb[0].mxu0
        %v6405 = vadd.f32 %v5651, %v6404
        %v6406 = vpop.f32.mrb[0].mxu0
        %v6407 = vadd.f32 %v5655, %v6406
        %6408 = vdwg.mxu0
        %6409 = vmatprep.subr.bf16.mxu0 %v6073
        %6410 = vmatpush1.bf16.msra.mxu0 %v6072
        %6411 = vmatprep.subr.bf16.mxu0 %v6075
        %6412 = vmatpush1.bf16.msra.mxu0 %v6074
        %6413 = vmatprep.subr.bf16.mxu0 %v6077
        %6414 = vmatpush1.bf16.msra.mxu0 %v6076
        %6415 = vmatprep.subr.bf16.mxu0 %v6079
        %6416 = vmatpush1.bf16.msra.mxu0 %v6078
        %6417 = vmatprep.subr.bf16.mxu0 %v6081
        %6418 = vmatpush1.bf16.msra.mxu0 %v6080
        %6419 = vmatprep.subr.bf16.mxu0 %v6083
        %6420 = vmatpush1.bf16.msra.mxu0 %v6082
        %6421 = vmatprep.subr.bf16.mxu0 %v6085
        %6422 = vmatpush1.bf16.msra.mxu0 %v6084
        %6423 = vmatprep.subr.bf16.mxu0 %v6087
        %6424 = vmatpush1.bf16.msra.mxu0 %v6086
        %6425 = vmatprep.subr.bf16.mxu0 %v6089
        %6426 = vmatpush1.bf16.msra.mxu0 %v6088
        %6427 = vmatprep.subr.bf16.mxu0 %v6091
        %6428 = vmatpush1.bf16.msra.mxu0 %v6090
        %6429 = vmatprep.subr.bf16.mxu0 %v6093
        %6430 = vmatpush1.bf16.msra.mxu0 %v6092
        %6431 = vmatprep.subr.bf16.mxu0 %v6095
        %6432 = vmatpush1.bf16.msra.mxu0 %v6094
        %6433 = vmatprep.subr.bf16.mxu0 %v6097
        %6434 = vmatpush1.bf16.msra.mxu0 %v6096
        %6435 = vmatprep.subr.bf16.mxu0 %v6099
        %6436 = vmatpush1.bf16.msra.mxu0 %v6098
        %6437 = vmatprep.subr.bf16.mxu0 %v6101
        %6438 = vmatpush1.bf16.msra.mxu0 %v6100
        %6439 = vmatprep.subr.bf16.mxu0 %v6103
        %6440 = vmatpush1.bf16.msra.mxu0 %v6102
        %6441 = vmatprep.mubr.bf16.mxu0 %v5459
        %6442 = vmatmul.mubr.bf16.gmra.mrb[0].mxu0 %v5458
        %v6443 = vpop.f32.mrb[0].mxu0
        %v6444 = vadd.f32 %v6331, %v6443
        %v6445 = vpop.f32.mrb[0].mxu0
        %v6446 = vadd.f32 %v6333, %v6445
        %v6447 = vpop.f32.mrb[0].mxu0
        %v6448 = vadd.f32 %v6335, %v6447
        %v6449 = vpop.f32.mrb[0].mxu0
        %v6450 = vadd.f32 %v6337, %v6449
        %6451 = vmatprep.mubr.bf16.mxu0 %v5467
        %6452 = vmatmul.mubr.bf16.gmra.mrb[0].mxu0 %v5466
        %v6453 = vpop.f32.mrb[0].mxu0
        %v6454 = vadd.f32 %v6341, %v6453
        %v6455 = vpop.f32.mrb[0].mxu0
        %v6456 = vadd.f32 %v6343, %v6455
        %v6457 = vpop.f32.mrb[0].mxu0
        %v6458 = vadd.f32 %v6345, %v6457
        %v6459 = vpop.f32.mrb[0].mxu0
        %v6460 = vadd.f32 %v6347, %v6459
        %6461 = vmatprep.mubr.bf16.mxu0 %v5475
        %6462 = vmatmul.mubr.bf16.gmra.mrb[0].mxu0 %v5474
        %v6463 = vpop.f32.mrb[0].mxu0
        %v6464 = vadd.f32 %v6351, %v6463
        %v6465 = vpop.f32.mrb[0].mxu0
        %v6466 = vadd.f32 %v6353, %v6465
        %v6467 = vpop.f32.mrb[0].mxu0
        %v6468 = vadd.f32 %v6355, %v6467
        %v6469 = vpop.f32.mrb[0].mxu0
        %v6470 = vadd.f32 %v6357, %v6469
        %6471 = vmatprep.mubr.bf16.mxu0 %v5483
        %6472 = vmatmul.mubr.bf16.gmra.mrb[0].mxu0 %v5482
        %v6473 = vpop.f32.mrb[0].mxu0
        %v6474 = vadd.f32 %v6361, %v6473
        %v6475 = vpop.f32.mrb[0].mxu0
        %v6476 = vadd.f32 %v6363, %v6475
        %v6477 = vpop.f32.mrb[0].mxu0
        %v6478 = vadd.f32 %v6365, %v6477
        %v6479 = vpop.f32.mrb[0].mxu0
        %v6480 = vadd.f32 %v6367, %v6479
        %6481 = vmatprep.mubr.bf16.mxu0 %v5491
        %6482 = vmatmul.mubr.bf16.gmra.mrb[0].mxu0 %v5490
        %v6483 = vpop.f32.mrb[0].mxu0
        %v6484 = vadd.f32 %v6371, %v6483
        %v6485 = vpop.f32.mrb[0].mxu0
        %v6486 = vadd.f32 %v6373, %v6485
        %v6487 = vpop.f32.mrb[0].mxu0
        %v6488 = vadd.f32 %v6375, %v6487
        %v6489 = vpop.f32.mrb[0].mxu0
        %v6490 = vadd.f32 %v6377, %v6489
        %6491 = vmatprep.mubr.bf16.mxu0 %v5499
        %6492 = vmatmul.mubr.bf16.gmra.mrb[0].mxu0 %v5498
        %v6493 = vpop.f32.mrb[0].mxu0
        %v6494 = vadd.f32 %v6381, %v6493
        %v6495 = vpop.f32.mrb[0].mxu0
        %v6496 = vadd.f32 %v6383, %v6495
        %v6497 = vpop.f32.mrb[0].mxu0
        %v6498 = vadd.f32 %v6385, %v6497
        %v6499 = vpop.f32.mrb[0].mxu0
        %v6500 = vadd.f32 %v6387, %v6499
        %6501 = vmatprep.mubr.bf16.mxu0 %v5507
        %6502 = vmatmul.mubr.bf16.gmra.mrb[0].mxu0 %v5506
        %v6503 = vpop.f32.mrb[0].mxu0
        %v6504 = vadd.f32 %v6391, %v6503
        %v6505 = vpop.f32.mrb[0].mxu0
        %v6506 = vadd.f32 %v6393, %v6505
        %v6507 = vpop.f32.mrb[0].mxu0
        %v6508 = vadd.f32 %v6395, %v6507
        %v6509 = vpop.f32.mrb[0].mxu0
        %v6510 = vadd.f32 %v6397, %v6509
        %6511 = vmatprep.mubr.bf16.mxu0 %v5515
        %6512 = vmatmul.mubr.bf16.gmra.mrb[0].mxu0 %v5514
        %v6513 = vpop.f32.mrb[0].mxu0
        %v6514 = vadd.f32 %v6401, %v6513
        %v6515 = vpop.f32.mrb[0].mxu0
        %v6516 = vadd.f32 %v6403, %v6515
        %v6517 = vpop.f32.mrb[0].mxu0
        %v6518 = vadd.f32 %v6405, %v6517
        %v6519 = vpop.f32.mrb[0].mxu0
        %v6520 = vadd.f32 %v6407, %v6519
        %6521 = vdwg.mxu0
        %6522 = vmatprep.subr.bf16.mxu0 %v6105
        %6523 = vmatpush1.bf16.msra.mxu0 %v6104
        %6524 = vmatprep.subr.bf16.mxu0 %v6107
        %6525 = vmatpush1.bf16.msra.mxu0 %v6106
        %6526 = vmatprep.subr.bf16.mxu0 %v6109
        %6527 = vmatpush1.bf16.msra.mxu0 %v6108
        %6528 = vmatprep.subr.bf16.mxu0 %v6111
        %6529 = vmatpush1.bf16.msra.mxu0 %v6110
        %6530 = vmatprep.subr.bf16.mxu0 %v6113
        %6531 = vmatpush1.bf16.msra.mxu0 %v6112
        %6532 = vmatprep.subr.bf16.mxu0 %v6115
        %6533 = vmatpush1.bf16.msra.mxu0 %v6114
        %6534 = vmatprep.subr.bf16.mxu0 %v6117
        %6535 = vmatpush1.bf16.msra.mxu0 %v6116
        %6536 = vmatprep.subr.bf16.mxu0 %v6119
        %6537 = vmatpush1.bf16.msra.mxu0 %v6118
        %6538 = vmatprep.subr.bf16.mxu0 %v6121
        %6539 = vmatpush1.bf16.msra.mxu0 %v6120
        %6540 = vmatprep.subr.bf16.mxu0 %v6123
        %6541 = vmatpush1.bf16.msra.mxu0 %v6122
        %6542 = vmatprep.subr.bf16.mxu0 %v6125
        %6543 = vmatpush1.bf16.msra.mxu0 %v6124
        %6544 = vmatprep.subr.bf16.mxu0 %v6127
        %6545 = vmatpush1.bf16.msra.mxu0 %v6126
        %6546 = vmatprep.subr.bf16.mxu0 %v6129
        %6547 = vmatpush1.bf16.msra.mxu0 %v6128
        %6548 = vmatprep.subr.bf16.mxu0 %v6131
        %6549 = vmatpush1.bf16.msra.mxu0 %v6130
        %6550 = vmatprep.subr.bf16.mxu0 %v6133
        %6551 = vmatpush1.bf16.msra.mxu0 %v6132
        %6552 = vmatprep.subr.bf16.mxu0 %v6135
        %6553 = vmatpush1.bf16.msra.mxu0 %v6134
        %6554 = vmatprep.mubr.bf16.mxu0 %v5461
        %6555 = vmatmul.mubr.bf16.gmra.mrb[0].mxu0 %v5460
        %v6556 = vpop.f32.mrb[0].mxu0
        %v6557 = vadd.f32 %v6444, %v6556
        %v6558 = vpop.f32.mrb[0].mxu0
        %v6559 = vadd.f32 %v6446, %v6558
        %v6560 = vpop.f32.mrb[0].mxu0
        %v6561 = vadd.f32 %v6448, %v6560
        %v6562 = vpop.f32.mrb[0].mxu0
        %v6563 = vadd.f32 %v6450, %v6562
        %6564 = vmatprep.mubr.bf16.mxu0 %v5469
        %6565 = vmatmul.mubr.bf16.gmra.mrb[0].mxu0 %v5468
        %v6566 = vpop.f32.mrb[0].mxu0
        %v6567 = vadd.f32 %v6454, %v6566
        %v6568 = vpop.f32.mrb[0].mxu0
        %v6569 = vadd.f32 %v6456, %v6568
        %v6570 = vpop.f32.mrb[0].mxu0
        %v6571 = vadd.f32 %v6458, %v6570
        %v6572 = vpop.f32.mrb[0].mxu0
        %v6573 = vadd.f32 %v6460, %v6572
        %6574 = vmatprep.mubr.bf16.mxu0 %v5477
        %6575 = vmatmul.mubr.bf16.gmra.mrb[0].mxu0 %v5476
        %v6576 = vpop.f32.mrb[0].mxu0
        %v6577 = vadd.f32 %v6464, %v6576
        %v6578 = vpop.f32.mrb[0].mxu0
        %v6579 = vadd.f32 %v6466, %v6578
        %v6580 = vpop.f32.mrb[0].mxu0
        %v6581 = vadd.f32 %v6468, %v6580
        %v6582 = vpop.f32.mrb[0].mxu0
        %v6583 = vadd.f32 %v6470, %v6582
        %6584 = vmatprep.mubr.bf16.mxu0 %v5485
        %6585 = vmatmul.mubr.bf16.gmra.mrb[0].mxu0 %v5484
        %v6586 = vpop.f32.mrb[0].mxu0
        %v6587 = vadd.f32 %v6474, %v6586
        %v6588 = vpop.f32.mrb[0].mxu0
        %v6589 = vadd.f32 %v6476, %v6588
        %v6590 = vpop.f32.mrb[0].mxu0
        %v6591 = vadd.f32 %v6478, %v6590
        %v6592 = vpop.f32.mrb[0].mxu0
        %v6593 = vadd.f32 %v6480, %v6592
        %6594 = vmatprep.mubr.bf16.mxu0 %v5493
        %6595 = vmatmul.mubr.bf16.gmra.mrb[0].mxu0 %v5492
        %v6596 = vpop.f32.mrb[0].mxu0
        %v6597 = vadd.f32 %v6484, %v6596
        %v6598 = vpop.f32.mrb[0].mxu0
        %v6599 = vadd.f32 %v6486, %v6598
        %v6600 = vpop.f32.mrb[0].mxu0
        %v6601 = vadd.f32 %v6488, %v6600
        %v6602 = vpop.f32.mrb[0].mxu0
        %v6603 = vadd.f32 %v6490, %v6602
        %6604 = vmatprep.mubr.bf16.mxu0 %v5501
        %6605 = vmatmul.mubr.bf16.gmra.mrb[0].mxu0 %v5500
        %v6606 = vpop.f32.mrb[0].mxu0
        %v6607 = vadd.f32 %v6494, %v6606
        %v6608 = vpop.f32.mrb[0].mxu0
        %v6609 = vadd.f32 %v6496, %v6608
        %v6610 = vpop.f32.mrb[0].mxu0
        %v6611 = vadd.f32 %v6498, %v6610
        %v6612 = vpop.f32.mrb[0].mxu0
        %v6613 = vadd.f32 %v6500, %v6612
        %6614 = vmatprep.mubr.bf16.mxu0 %v5509
        %6615 = vmatmul.mubr.bf16.gmra.mrb[0].mxu0 %v5508
        %v6616 = vpop.f32.mrb[0].mxu0
        %v6617 = vadd.f32 %v6504, %v6616
        %v6618 = vpop.f32.mrb[0].mxu0
        %v6619 = vadd.f32 %v6506, %v6618
        %v6620 = vpop.f32.mrb[0].mxu0
        %v6621 = vadd.f32 %v6508, %v6620
        %v6622 = vpop.f32.mrb[0].mxu0
        %v6623 = vadd.f32 %v6510, %v6622
        %6624 = vmatprep.mubr.bf16.mxu0 %v5517
        %6625 = vmatmul.mubr.bf16.gmra.mrb[0].mxu0 %v5516
        %v6626 = vpop.f32.mrb[0].mxu0
        %v6627 = vadd.f32 %v6514, %v6626
        %v6628 = vpop.f32.mrb[0].mxu0
        %v6629 = vadd.f32 %v6516, %v6628
        %v6630 = vpop.f32.mrb[0].mxu0
        %v6631 = vadd.f32 %v6518, %v6630
        %v6632 = vpop.f32.mrb[0].mxu0
        %v6633 = vadd.f32 %v6520, %v6632
        %6634 = vdwg.mxu0
        %6635 = vmatprep.subr.bf16.mxu0 %v6137
        %6636 = vmatpush1.bf16.msra.mxu0 %v6136
        %6637 = vmatprep.subr.bf16.mxu0 %v6139
        %6638 = vmatpush1.bf16.msra.mxu0 %v6138
        %6639 = vmatprep.subr.bf16.mxu0 %v6141
        %6640 = vmatpush1.bf16.msra.mxu0 %v6140
        %6641 = vmatprep.subr.bf16.mxu0 %v6143
        %6642 = vmatpush1.bf16.msra.mxu0 %v6142
        %6643 = vmatprep.subr.bf16.mxu0 %v6145
        %6644 = vmatpush1.bf16.msra.mxu0 %v6144
        %6645 = vmatprep.subr.bf16.mxu0 %v6147
        %6646 = vmatpush1.bf16.msra.mxu0 %v6146
        %6647 = vmatprep.subr.bf16.mxu0 %v6149
        %6648 = vmatpush1.bf16.msra.mxu0 %v6148
        %6649 = vmatprep.subr.bf16.mxu0 %v6151
        %6650 = vmatpush1.bf16.msra.mxu0 %v6150
        %6651 = vmatprep.subr.bf16.mxu0 %v6153
        %6652 = vmatpush1.bf16.msra.mxu0 %v6152
        %6653 = vmatprep.subr.bf16.mxu0 %v6155
        %6654 = vmatpush1.bf16.msra.mxu0 %v6154
        %6655 = vmatprep.subr.bf16.mxu0 %v6157
        %6656 = vmatpush1.bf16.msra.mxu0 %v6156
        %6657 = vmatprep.subr.bf16.mxu0 %v6159
        %6658 = vmatpush1.bf16.msra.mxu0 %v6158
        %6659 = vmatprep.subr.bf16.mxu0 %v6161
        %6660 = vmatpush1.bf16.msra.mxu0 %v6160
        %6661 = vmatprep.subr.bf16.mxu0 %v6163
        %6662 = vmatpush1.bf16.msra.mxu0 %v6162
        %6663 = vmatprep.subr.bf16.mxu0 %v6165
        %6664 = vmatpush1.bf16.msra.mxu0 %v6164
        %6665 = vmatprep.subr.bf16.mxu0 %v6167
        %6666 = vmatpush1.bf16.msra.mxu0 %v6166
        %6667 = vmatprep.mubr.bf16.mxu0 %v5463
        %6668 = vmatmul.mubr.bf16.gmra.mrb[0].mxu0 %v5462
        %v6669 = vpop.f32.mrb[0].mxu0
        %v6670 = vadd.f32 %v6557, %v6669
        %v6671 = vpop.f32.mrb[0].mxu0
        %v6672 = vadd.f32 %v6559, %v6671
        %v6673 = vpop.f32.mrb[0].mxu0
        %v6674 = vadd.f32 %v6561, %v6673
        %v6675 = vpop.f32.mrb[0].mxu0
        %v6676 = vadd.f32 %v6563, %v6675
        %6677 = vmatprep.mubr.bf16.mxu0 %v5471
        %6678 = vmatmul.mubr.bf16.gmra.mrb[0].mxu0 %v5470
        %v6679 = vpop.f32.mrb[0].mxu0
        %v6680 = vadd.f32 %v6567, %v6679
        %v6681 = vpop.f32.mrb[0].mxu0
        %v6682 = vadd.f32 %v6569, %v6681
        %v6683 = vpop.f32.mrb[0].mxu0
        %v6684 = vadd.f32 %v6571, %v6683
        %v6685 = vpop.f32.mrb[0].mxu0
        %v6686 = vadd.f32 %v6573, %v6685
        %6687 = vmatprep.mubr.bf16.mxu0 %v5479
        %6688 = vmatmul.mubr.bf16.gmra.mrb[0].mxu0 %v5478
        %v6689 = vpop.f32.mrb[0].mxu0
        %v6690 = vadd.f32 %v6577, %v6689
        %v6691 = vpop.f32.mrb[0].mxu0
        %v6692 = vadd.f32 %v6579, %v6691
        %v6693 = vpop.f32.mrb[0].mxu0
        %v6694 = vadd.f32 %v6581, %v6693
        %v6695 = vpop.f32.mrb[0].mxu0
        %v6696 = vadd.f32 %v6583, %v6695
        %6697 = vmatprep.mubr.bf16.mxu0 %v5487
        %6698 = vmatmul.mubr.bf16.gmra.mrb[0].mxu0 %v5486
        %v6699 = vpop.f32.mrb[0].mxu0
        %v6700 = vadd.f32 %v6587, %v6699
        %v6701 = vpop.f32.mrb[0].mxu0
        %v6702 = vadd.f32 %v6589, %v6701
        %v6703 = vpop.f32.mrb[0].mxu0
        %v6704 = vadd.f32 %v6591, %v6703
        %v6705 = vpop.f32.mrb[0].mxu0
        %v6706 = vadd.f32 %v6593, %v6705
        %6707 = vmatprep.mubr.bf16.mxu0 %v5495
        %6708 = vmatmul.mubr.bf16.gmra.mrb[0].mxu0 %v5494
        %v6709 = vpop.f32.mrb[0].mxu0
        %v6710 = vadd.f32 %v6597, %v6709
        %v6711 = vpop.f32.mrb[0].mxu0
        %v6712 = vadd.f32 %v6599, %v6711
        %v6713 = vpop.f32.mrb[0].mxu0
        %v6714 = vadd.f32 %v6601, %v6713
        %v6715 = vpop.f32.mrb[0].mxu0
        %v6716 = vadd.f32 %v6603, %v6715
        %6717 = vmatprep.mubr.bf16.mxu0 %v5503
        %6718 = vmatmul.mubr.bf16.gmra.mrb[0].mxu0 %v5502
        %v6719 = vpop.f32.mrb[0].mxu0
        %v6720 = vadd.f32 %v6607, %v6719
        %v6721 = vpop.f32.mrb[0].mxu0
        %v6722 = vadd.f32 %v6609, %v6721
        %v6723 = vpop.f32.mrb[0].mxu0
        %v6724 = vadd.f32 %v6611, %v6723
        %v6725 = vpop.f32.mrb[0].mxu0
        %v6726 = vadd.f32 %v6613, %v6725
        %6727 = vmatprep.mubr.bf16.mxu0 %v5511
        %6728 = vmatmul.mubr.bf16.gmra.mrb[0].mxu0 %v5510
        %v6729 = vpop.f32.mrb[0].mxu0
        %v6730 = vadd.f32 %v6617, %v6729
        %v6731 = vpop.f32.mrb[0].mxu0
        %v6732 = vadd.f32 %v6619, %v6731
        %v6733 = vpop.f32.mrb[0].mxu0
        %v6734 = vadd.f32 %v6621, %v6733
        %v6735 = vpop.f32.mrb[0].mxu0
        %v6736 = vadd.f32 %v6623, %v6735
        %6737 = vmatprep.mubr.bf16.mxu0 %v5519
        %6738 = vmatmul.mubr.bf16.gmra.mrb[0].mxu0 %v5518
        %v6739 = vpop.f32.mrb[0].mxu0
        %v6740 = vadd.f32 %v6627, %v6739
        %v6741 = vpop.f32.mrb[0].mxu0
        %v6742 = vadd.f32 %v6629, %v6741
        %v6743 = vpop.f32.mrb[0].mxu0
        %v6744 = vadd.f32 %v6631, %v6743
        %v6745 = vpop.f32.mrb[0].mxu0
        %v6746 = vadd.f32 %v6633, %v6745
        %6747 = vdwg.mxu0
        %v6748 = vadd.f32 %v2994, %v6670
        %v6749 = vadd.f32 %v2995, %v6672
        %v6750 = vadd.f32 %v2996, %v6674
        %v6751 = vadd.f32 %v2997, %v6676
        %v6752 = vadd.f32 %v2998, %v6680
        %v6753 = vadd.f32 %v2999, %v6682
        %v6754 = vadd.f32 %v3000, %v6684
        %v6755 = vadd.f32 %v3001, %v6686
        %v6756 = vadd.f32 %v3002, %v6690
        %v6757 = vadd.f32 %v3003, %v6692
        %v6758 = vadd.f32 %v3004, %v6694
        %v6759 = vadd.f32 %v3005, %v6696
        %v6760 = vadd.f32 %v3006, %v6700
        %v6761 = vadd.f32 %v3007, %v6702
        %v6762 = vadd.f32 %v3008, %v6704
        %v6763 = vadd.f32 %v3009, %v6706
        %v6764 = vadd.f32 %v3010, %v6710
        %v6765 = vadd.f32 %v3011, %v6712
        %v6766 = vadd.f32 %v3012, %v6714
        %v6767 = vadd.f32 %v3013, %v6716
        %v6768 = vadd.f32 %v3014, %v6720
        %v6769 = vadd.f32 %v3015, %v6722
        %v6770 = vadd.f32 %v3016, %v6724
        %v6771 = vadd.f32 %v3017, %v6726
        %v6772 = vadd.f32 %v3018, %v6730
        %v6773 = vadd.f32 %v3019, %v6732
        %v6774 = vadd.f32 %v3020, %v6734
        %v6775 = vadd.f32 %v3021, %v6736
        %v6776 = vadd.f32 %v3022, %v6740
        %v6777 = vadd.f32 %v3023, %v6742
        %v6778 = vadd.f32 %v3024, %v6744
        %v6779 = vadd.f32 %v3025, %v6746
        %v6780 = vadd.f32 %v6748, %v6749
        %6781 = vadd.xlane.f32.xlu0 %v6780
        %v6782 = vpop.xlane.xlu0 %6781
        %v6783 = vadd.f32 %v6750, %v6751
        %6784 = vadd.xlane.f32.xlu0 %v6783
        %v6785 = vpop.xlane.xlu0 %6784
        %v6786 = vadd.f32 %v6752, %v6753
        %6787 = vadd.xlane.f32.xlu0 %v6786
        %v6788 = vpop.xlane.xlu0 %6787
        %v6789 = vadd.f32 %v6754, %v6755
        %6790 = vadd.xlane.f32.xlu0 %v6789
        %v6791 = vpop.xlane.xlu0 %6790
        %v6792 = vadd.f32 %v6756, %v6757
        %6793 = vadd.xlane.f32.xlu0 %v6792
        %v6794 = vpop.xlane.xlu0 %6793
        %v6795 = vadd.f32 %v6758, %v6759
        %6796 = vadd.xlane.f32.xlu0 %v6795
        %v6797 = vpop.xlane.xlu0 %6796
        %v6798 = vadd.f32 %v6760, %v6761
        %6799 = vadd.xlane.f32.xlu0 %v6798
        %v6800 = vpop.xlane.xlu0 %6799
        %v6801 = vadd.f32 %v6762, %v6763
        %6802 = vadd.xlane.f32.xlu0 %v6801
        %v6803 = vpop.xlane.xlu0 %6802
        %v6804 = vadd.f32 %v6764, %v6765
        %6805 = vadd.xlane.f32.xlu0 %v6804
        %v6806 = vpop.xlane.xlu0 %6805
        %v6807 = vadd.f32 %v6766, %v6767
        %6808 = vadd.xlane.f32.xlu0 %v6807
        %v6809 = vpop.xlane.xlu0 %6808
        %v6810 = vadd.f32 %v6768, %v6769
        %6811 = vadd.xlane.f32.xlu0 %v6810
        %v6812 = vpop.xlane.xlu0 %6811
        %v6813 = vadd.f32 %v6770, %v6771
        %6814 = vadd.xlane.f32.xlu0 %v6813
        %v6815 = vpop.xlane.xlu0 %6814
        %v6816 = vadd.f32 %v6772, %v6773
        %6817 = vadd.xlane.f32.xlu0 %v6816
        %v6818 = vpop.xlane.xlu0 %6817
        %v6819 = vadd.f32 %v6774, %v6775
        %6820 = vadd.xlane.f32.xlu0 %v6819
        %v6821 = vpop.xlane.xlu0 %6820
        %v6822 = vadd.f32 %v6776, %v6777
        %6823 = vadd.xlane.f32.xlu0 %v6822
        %v6824 = vpop.xlane.xlu0 %6823
        %v6825 = vadd.f32 %v6778, %v6779
        %6826 = vadd.xlane.f32.xlu0 %v6825
        %v6827 = vpop.xlane.xlu0 %6826
        %v6828 = vmul.f32 %v6782, %v2737
        %v6829 = vmul.f32 %v6785, %v2737
        %v6830 = vmul.f32 %v6788, %v2737
        %v6831 = vmul.f32 %v6791, %v2737
        %v6832 = vmul.f32 %v6794, %v2737
        %v6833 = vmul.f32 %v6797, %v2737
        %v6834 = vmul.f32 %v6800, %v2737
        %v6835 = vmul.f32 %v6803, %v2737
        %v6836 = vmul.f32 %v6806, %v2737
        %v6837 = vmul.f32 %v6809, %v2737
        %v6838 = vmul.f32 %v6812, %v2737
        %v6839 = vmul.f32 %v6815, %v2737
        %v6840 = vmul.f32 %v6818, %v2737
        %v6841 = vmul.f32 %v6821, %v2737
        %v6842 = vmul.f32 %v6824, %v2737
        %v6843 = vmul.f32 %v6827, %v2737
        %v6844 = vsub.f32 %v6748, %v6828
        %v6845 = vsub.f32 %v6749, %v6828
        %v6846 = vsub.f32 %v6750, %v6829
        %v6847 = vsub.f32 %v6751, %v6829
        %v6848 = vsub.f32 %v6752, %v6830
        %v6849 = vsub.f32 %v6753, %v6830
        %v6850 = vsub.f32 %v6754, %v6831
        %v6851 = vsub.f32 %v6755, %v6831
        %v6852 = vsub.f32 %v6756, %v6832
        %v6853 = vsub.f32 %v6757, %v6832
        %v6854 = vsub.f32 %v6758, %v6833
        %v6855 = vsub.f32 %v6759, %v6833
        %v6856 = vsub.f32 %v6760, %v6834
        %v6857 = vsub.f32 %v6761, %v6834
        %v6858 = vsub.f32 %v6762, %v6835
        %v6859 = vsub.f32 %v6763, %v6835
        %v6860 = vsub.f32 %v6764, %v6836
        %v6861 = vsub.f32 %v6765, %v6836
        %v6862 = vsub.f32 %v6766, %v6837
        %v6863 = vsub.f32 %v6767, %v6837
        %v6864 = vsub.f32 %v6768, %v6838
        %v6865 = vsub.f32 %v6769, %v6838
        %v6866 = vsub.f32 %v6770, %v6839
        %v6867 = vsub.f32 %v6771, %v6839
        %v6868 = vsub.f32 %v6772, %v6840
        %v6869 = vsub.f32 %v6773, %v6840
        %v6870 = vsub.f32 %v6774, %v6841
        %v6871 = vsub.f32 %v6775, %v6841
        %v6872 = vsub.f32 %v6776, %v6842
        %v6873 = vsub.f32 %v6777, %v6842
        %v6874 = vsub.f32 %v6778, %v6843
        %v6875 = vsub.f32 %v6779, %v6843
        %v6876 = vmul.f32 %v6844, %v6844
        %v6877 = vmul.f32 %v6845, %v6845
        %v6878 = vmul.f32 %v6846, %v6846
        %v6879 = vmul.f32 %v6847, %v6847
        %v6880 = vmul.f32 %v6848, %v6848
        %v6881 = vmul.f32 %v6849, %v6849
        %v6882 = vmul.f32 %v6850, %v6850
        %v6883 = vmul.f32 %v6851, %v6851
        %v6884 = vmul.f32 %v6852, %v6852
        %v6885 = vmul.f32 %v6853, %v6853
        %v6886 = vmul.f32 %v6854, %v6854
        %v6887 = vmul.f32 %v6855, %v6855
        %v6888 = vmul.f32 %v6856, %v6856
        %v6889 = vmul.f32 %v6857, %v6857
        %v6890 = vmul.f32 %v6858, %v6858
        %v6891 = vmul.f32 %v6859, %v6859
        %v6892 = vmul.f32 %v6860, %v6860
        %v6893 = vmul.f32 %v6861, %v6861
        %v6894 = vmul.f32 %v6862, %v6862
        %v6895 = vmul.f32 %v6863, %v6863
        %v6896 = vmul.f32 %v6864, %v6864
        %v6897 = vmul.f32 %v6865, %v6865
        %v6898 = vmul.f32 %v6866, %v6866
        %v6899 = vmul.f32 %v6867, %v6867
        %v6900 = vmul.f32 %v6868, %v6868
        %v6901 = vmul.f32 %v6869, %v6869
        %v6902 = vmul.f32 %v6870, %v6870
        %v6903 = vmul.f32 %v6871, %v6871
        %v6904 = vmul.f32 %v6872, %v6872
        %v6905 = vmul.f32 %v6873, %v6873
        %v6906 = vmul.f32 %v6874, %v6874
        %v6907 = vmul.f32 %v6875, %v6875
        %v6908 = vadd.f32 %v6876, %v6877
        %6909 = vadd.xlane.f32.xlu0 %v6908
        %v6910 = vpop.xlane.xlu0 %6909
        %v6911 = vadd.f32 %v6878, %v6879
        %6912 = vadd.xlane.f32.xlu0 %v6911
        %v6913 = vpop.xlane.xlu0 %6912
        %v6914 = vadd.f32 %v6880, %v6881
        %6915 = vadd.xlane.f32.xlu0 %v6914
        %v6916 = vpop.xlane.xlu0 %6915
        %v6917 = vadd.f32 %v6882, %v6883
        %6918 = vadd.xlane.f32.xlu0 %v6917
        %v6919 = vpop.xlane.xlu0 %6918
        %v6920 = vadd.f32 %v6884, %v6885
        %6921 = vadd.xlane.f32.xlu0 %v6920
        %v6922 = vpop.xlane.xlu0 %6921
        %v6923 = vadd.f32 %v6886, %v6887
        %6924 = vadd.xlane.f32.xlu0 %v6923
        %v6925 = vpop.xlane.xlu0 %6924
        %v6926 = vadd.f32 %v6888, %v6889
        %6927 = vadd.xlane.f32.xlu0 %v6926
        %v6928 = vpop.xlane.xlu0 %6927
        %v6929 = vadd.f32 %v6890, %v6891
        %6930 = vadd.xlane.f32.xlu0 %v6929
        %v6931 = vpop.xlane.xlu0 %6930
        %v6932 = vadd.f32 %v6892, %v6893
        %6933 = vadd.xlane.f32.xlu0 %v6932
        %v6934 = vpop.xlane.xlu0 %6933
        %v6935 = vadd.f32 %v6894, %v6895
        %6936 = vadd.xlane.f32.xlu0 %v6935
        %v6937 = vpop.xlane.xlu0 %6936
        %v6938 = vadd.f32 %v6896, %v6897
        %6939 = vadd.xlane.f32.xlu0 %v6938
        %v6940 = vpop.xlane.xlu0 %6939
        %v6941 = vadd.f32 %v6898, %v6899
        %6942 = vadd.xlane.f32.xlu0 %v6941
        %v6943 = vpop.xlane.xlu0 %6942
        %v6944 = vadd.f32 %v6900, %v6901
        %6945 = vadd.xlane.f32.xlu0 %v6944
        %v6946 = vpop.xlane.xlu0 %6945
        %v6947 = vadd.f32 %v6902, %v6903
        %6948 = vadd.xlane.f32.xlu0 %v6947
        %v6949 = vpop.xlane.xlu0 %6948
        %v6950 = vadd.f32 %v6904, %v6905
        %6951 = vadd.xlane.f32.xlu0 %v6950
        %v6952 = vpop.xlane.xlu0 %6951
        %v6953 = vadd.f32 %v6906, %v6907
        %6954 = vadd.xlane.f32.xlu0 %v6953
        %v6955 = vpop.xlane.xlu0 %6954
        %v6956 = vmul.f32 %v6910, %v2737
        %v6957 = vmul.f32 %v6913, %v2737
        %v6958 = vmul.f32 %v6916, %v2737
        %v6959 = vmul.f32 %v6919, %v2737
        %v6960 = vmul.f32 %v6922, %v2737
        %v6961 = vmul.f32 %v6925, %v2737
        %v6962 = vmul.f32 %v6928, %v2737
        %v6963 = vmul.f32 %v6931, %v2737
        %v6964 = vmul.f32 %v6934, %v2737
        %v6965 = vmul.f32 %v6937, %v2737
        %v6966 = vmul.f32 %v6940, %v2737
        %v6967 = vmul.f32 %v6943, %v2737
        %v6968 = vmul.f32 %v6946, %v2737
        %v6969 = vmul.f32 %v6949, %v2737
        %v6970 = vmul.f32 %v6952, %v2737
        %v6971 = vmul.f32 %v6955, %v2737
        %v6972 = vadd.f32 %v6956, 1e-12
        %v6973 = vadd.f32 %v6957, 1e-12
        %v6974 = vadd.f32 %v6958, 1e-12
        %v6975 = vadd.f32 %v6959, 1e-12
        %v6976 = vadd.f32 %v6960, 1e-12
        %v6977 = vadd.f32 %v6961, 1e-12
        %v6978 = vadd.f32 %v6962, 1e-12
        %v6979 = vadd.f32 %v6963, 1e-12
        %v6980 = vadd.f32 %v6964, 1e-12
        %v6981 = vadd.f32 %v6965, 1e-12
        %v6982 = vadd.f32 %v6966, 1e-12
        %v6983 = vadd.f32 %v6967, 1e-12
        %v6984 = vadd.f32 %v6968, 1e-12
        %v6985 = vadd.f32 %v6969, 1e-12
        %v6986 = vadd.f32 %v6970, 1e-12
        %v6987 = vadd.f32 %v6971, 1e-12
        %v6988 = vrsqrt.pop %v6972
        %v6989 = vrsqrt.pop %v6973
        %v6990 = vrsqrt.pop %v6974
        %v6991 = vrsqrt.pop %v6975
        %v6992 = vrsqrt.pop %v6976
        %v6993 = vrsqrt.pop %v6977
        %v6994 = vrsqrt.pop %v6978
        %v6995 = vrsqrt.pop %v6979
        %v6996 = vrsqrt.pop %v6980
        %v6997 = vrsqrt.pop %v6981
        %v6998 = vrsqrt.pop %v6982
        %v6999 = vrsqrt.pop %v6983
        %v7000 = vrsqrt.pop %v6984
        %v7001 = vrsqrt.pop %v6985
        %v7002 = vrsqrt.pop %v6986
        %v7003 = vrsqrt.pop %v6987
        %v7004 = vmul.f32 %v6844, %v6988
        %v7005 = vmul.f32 %v6845, %v6988
        %v7006 = vmul.f32 %v6846, %v6989
        %v7007 = vmul.f32 %v6847, %v6989
        %v7008 = vmul.f32 %v6848, %v6990
        %v7009 = vmul.f32 %v6849, %v6990
        %v7010 = vmul.f32 %v6850, %v6991
        %v7011 = vmul.f32 %v6851, %v6991
        %v7012 = vmul.f32 %v6852, %v6992
        %v7013 = vmul.f32 %v6853, %v6992
        %v7014 = vmul.f32 %v6854, %v6993
        %v7015 = vmul.f32 %v6855, %v6993
        %v7016 = vmul.f32 %v6856, %v6994
        %v7017 = vmul.f32 %v6857, %v6994
        %v7018 = vmul.f32 %v6858, %v6995
        %v7019 = vmul.f32 %v6859, %v6995
        %v7020 = vmul.f32 %v6860, %v6996
        %v7021 = vmul.f32 %v6861, %v6996
        %v7022 = vmul.f32 %v6862, %v6997
        %v7023 = vmul.f32 %v6863, %v6997
        %v7024 = vmul.f32 %v6864, %v6998
        %v7025 = vmul.f32 %v6865, %v6998
        %v7026 = vmul.f32 %v6866, %v6999
        %v7027 = vmul.f32 %v6867, %v6999
        %v7028 = vmul.f32 %v6868, %v7000
        %v7029 = vmul.f32 %v6869, %v7000
        %v7030 = vmul.f32 %v6870, %v7001
        %v7031 = vmul.f32 %v6871, %v7001
        %v7032 = vmul.f32 %v6872, %v7002
        %v7033 = vmul.f32 %v6873, %v7002
        %v7034 = vmul.f32 %v6874, %v7003
        %v7035 = vmul.f32 %v6875, %v7003
        %v7036 = vlaneseq
        %v7037 = vshrl.u32 %v7036, 7
        %v7038 = vsub.s32 7, %v7037
        %v7039 = vrot.slane %v533, %v7038
        %v7040 = vlaneseq
        %v7041 = vshrl.u32 %v7040, 7
        %v7042 = vsub.s32 7, %v7041
        %v7043 = vrot.slane %v534, %v7042
        %v7044 = vmul.f32 %v7004, %v7039
        %v7045 = vmul.f32 %v7005, %v7043
        %v7046 = vmul.f32 %v7006, %v7039
        %v7047 = vmul.f32 %v7007, %v7043
        %v7048 = vmul.f32 %v7008, %v7039
        %v7049 = vmul.f32 %v7009, %v7043
        %v7050 = vmul.f32 %v7010, %v7039
        %v7051 = vmul.f32 %v7011, %v7043
        %v7052 = vmul.f32 %v7012, %v7039
        %v7053 = vmul.f32 %v7013, %v7043
        %v7054 = vmul.f32 %v7014, %v7039
        %v7055 = vmul.f32 %v7015, %v7043
        %v7056 = vmul.f32 %v7016, %v7039
        %v7057 = vmul.f32 %v7017, %v7043
        %v7058 = vmul.f32 %v7018, %v7039
        %v7059 = vmul.f32 %v7019, %v7043
        %v7060 = vmul.f32 %v7020, %v7039
        %v7061 = vmul.f32 %v7021, %v7043
        %v7062 = vmul.f32 %v7022, %v7039
        %v7063 = vmul.f32 %v7023, %v7043
        %v7064 = vmul.f32 %v7024, %v7039
        %v7065 = vmul.f32 %v7025, %v7043
        %v7066 = vmul.f32 %v7026, %v7039
        %v7067 = vmul.f32 %v7027, %v7043
        %v7068 = vmul.f32 %v7028, %v7039
        %v7069 = vmul.f32 %v7029, %v7043
        %v7070 = vmul.f32 %v7030, %v7039
        %v7071 = vmul.f32 %v7031, %v7043
        %v7072 = vmul.f32 %v7032, %v7039
        %v7073 = vmul.f32 %v7033, %v7043
        %v7074 = vmul.f32 %v7034, %v7039
        %v7075 = vmul.f32 %v7035, %v7043
        %v7076 = vlaneseq
        %v7077 = vshrl.u32 %v7076, 7
        %v7078 = vsub.s32 0, %v7077
        %v7079 = vrot.slane %v535, %v7078
        %v7080 = vlaneseq
        %v7081 = vshrl.u32 %v7080, 7
        %v7082 = vsub.s32 0, %v7081
        %v7083 = vrot.slane %v536, %v7082
        %v7084 = vadd.f32 %v7044, %v7079
        %v7085 = vadd.f32 %v7045, %v7083
        %v7086 = vadd.f32 %v7046, %v7079
        %v7087 = vadd.f32 %v7047, %v7083
        %v7088 = vadd.f32 %v7048, %v7079
        %v7089 = vadd.f32 %v7049, %v7083
        %v7090 = vadd.f32 %v7050, %v7079
        %v7091 = vadd.f32 %v7051, %v7083
        %v7092 = vadd.f32 %v7052, %v7079
        %v7093 = vadd.f32 %v7053, %v7083
        %v7094 = vadd.f32 %v7054, %v7079
        %v7095 = vadd.f32 %v7055, %v7083
        %v7096 = vadd.f32 %v7056, %v7079
        %v7097 = vadd.f32 %v7057, %v7083
        %v7098 = vadd.f32 %v7058, %v7079
        %v7099 = vadd.f32 %v7059, %v7083
        %v7100 = vadd.f32 %v7060, %v7079
        %v7101 = vadd.f32 %v7061, %v7083
        %v7102 = vadd.f32 %v7062, %v7079
        %v7103 = vadd.f32 %v7063, %v7083
        %v7104 = vadd.f32 %v7064, %v7079
        %v7105 = vadd.f32 %v7065, %v7083
        %v7106 = vadd.f32 %v7066, %v7079
        %v7107 = vadd.f32 %v7067, %v7083
        %v7108 = vadd.f32 %v7068, %v7079
        %v7109 = vadd.f32 %v7069, %v7083
        %v7110 = vadd.f32 %v7070, %v7079
        %v7111 = vadd.f32 %v7071, %v7083
        %v7112 = vadd.f32 %v7072, %v7079
        %v7113 = vadd.f32 %v7073, %v7083
        %v7114 = vadd.f32 %v7074, %v7079
        %v7115 = vadd.f32 %v7075, %v7083
        %7116 = vst [vmem:[#allocation2] sm:$0xff] %v7084
        %7117 = vst [vmem:[#allocation2 + $0x8] sm:$0xff] %v7085
        %7118 = vst [vmem:[#allocation2 + $0x10] sm:$0xff] %v7086
        %7119 = vst [vmem:[#allocation2 + $0x18] sm:$0xff] %v7087
        %7120 = vst [vmem:[#allocation2 + $0x20] sm:$0xff] %v7088
        %7121 = vst [vmem:[#allocation2 + $0x28] sm:$0xff] %v7089
        %7122 = vst [vmem:[#allocation2 + $0x30] sm:$0xff] %v7090
        %7123 = vst [vmem:[#allocation2 + $0x38] sm:$0xff] %v7091
        %7124 = vst [vmem:[#allocation2 + $0x40] sm:$0xff] %v7092
        %7125 = vst [vmem:[#allocation2 + $0x48] sm:$0xff] %v7093
        %7126 = vst [vmem:[#allocation2 + $0x50] sm:$0xff] %v7094
        %7127 = vst [vmem:[#allocation2 + $0x58] sm:$0xff] %v7095
        %7128 = vst [vmem:[#allocation2 + $0x60] sm:$0xff] %v7096
        %7129 = vst [vmem:[#allocation2 + $0x68] sm:$0xff] %v7097
        %7130 = vst [vmem:[#allocation2 + $0x70] sm:$0xff] %v7098
        %7131 = vst [vmem:[#allocation2 + $0x78] sm:$0xff] %v7099
        %7132 = vst [vmem:[#allocation2 + $0x80] sm:$0xff] %v7100
        %7133 = vst [vmem:[#allocation2 + $0x88] sm:$0xff] %v7101
        %7134 = vst [vmem:[#allocation2 + $0x90] sm:$0xff] %v7102
        %7135 = vst [vmem:[#allocation2 + $0x98] sm:$0xff] %v7103
        %7136 = vst [vmem:[#allocation2 + $0xa0] sm:$0xff] %v7104
        %7137 = vst [vmem:[#allocation2 + $0xa8] sm:$0xff] %v7105
        %7138 = vst [vmem:[#allocation2 + $0xb0] sm:$0xff] %v7106
        %7139 = vst [vmem:[#allocation2 + $0xb8] sm:$0xff] %v7107
        %7140 = vst [vmem:[#allocation2 + $0xc0] sm:$0xff] %v7108
        %7141 = vst [vmem:[#allocation2 + $0xc8] sm:$0xff] %v7109
        %7142 = vst [vmem:[#allocation2 + $0xd0] sm:$0xff] %v7110
        %7143 = vst [vmem:[#allocation2 + $0xd8] sm:$0xff] %v7111
        %7144 = vst [vmem:[#allocation2 + $0xe0] sm:$0xff] %v7112
        %7145 = vst [vmem:[#allocation2 + $0xe8] sm:$0xff] %v7113
        %7146 = vst [vmem:[#allocation2 + $0xf0] sm:$0xff] %v7114
        %7147 = vst [vmem:[#allocation2 + $0xf8] sm:$0xff] %v7115
        %p7148 = scmp.eq.s32.totalorder %s38, 1
        // Predicated region
        $region77: #{tpu_custom_call.1} parent=43 // pred_check
          %p7149 = pneg %p7148
        $region78: #{tpu_custom_call.1} parent=43 // pred_check_branch
          %7151 = sbr.rel (%p7149) target = $region80
        $region79: #{tpu_custom_call.1} parent=43 // pred_region
          %7152 = vmatprep.subr.mxu0 %v7085
          %7153 = vmatpush1.msra.mxu0 %v7084
          %7154 = vmatprep.subr.mxu0 %v7087
          %7155 = vmatpush1.msra.mxu0 %v7086
          %7156 = vmatprep.subr.mxu0 %v7089
          %7157 = vmatpush1.msra.mxu0 %v7088
          %7158 = vmatprep.subr.mxu0 %v7091
          %7159 = vmatpush1.msra.mxu0 %v7090
          %7160 = vmatprep.subr.mxu0 %v7093
          %7161 = vmatpush1.msra.mxu0 %v7092
          %7162 = vmatprep.subr.mxu0 %v7095
          %7163 = vmatpush1.msra.mxu0 %v7094
          %7164 = vmatprep.subr.mxu0 %v7097
          %7165 = vmatpush1.msra.mxu0 %v7096
          %7166 = vmatprep.subr.mxu0 %v7099
          %7167 = vmatpush1.msra.mxu0 %v7098
          %7168 = vmatprep.subr.mxu0 %v7101
          %7169 = vmatpush1.msra.mxu0 %v7100
          %7170 = vmatprep.subr.mxu0 %v7103
          %7171 = vmatpush1.msra.mxu0 %v7102
          %7172 = vmatprep.subr.mxu0 %v7105
          %7173 = vmatpush1.msra.mxu0 %v7104
          %7174 = vmatprep.subr.mxu0 %v7107
          %7175 = vmatpush1.msra.mxu0 %v7106
          %7176 = vmatprep.subr.mxu0 %v7109
          %7177 = vmatpush1.msra.mxu0 %v7108
          %7178 = vmatprep.subr.mxu0 %v7111
          %7179 = vmatpush1.msra.mxu0 %v7110
          %7180 = vmatprep.subr.mxu0 %v7113
          %7181 = vmatpush1.msra.mxu0 %v7112
          %7182 = vmatprep.subr.mxu0 %v7115
          %7183 = vmatpush1.msra.mxu0 %v7114
          %7184 = vmatprep.subr.mxu0 0.0
          %7185 = vmatpush1.msra.mxu0 0.0
          %7186 = vmatprep.subr.mxu0 0.0
          %7187 = vmatpush1.msra.mxu0 0.0
          %7188 = vmatprep.subr.mxu0 0.0
          %7189 = vmatpush1.msra.mxu0 0.0
          %7190 = vmatprep.subr.mxu0 0.0
          %7191 = vmatpush1.msra.mxu0 0.0
          %7192 = vmatprep.subr.mxu0 0.0
          %7193 = vmatpush1.msra.mxu0 0.0
          %7194 = vmatprep.subr.mxu0 0.0
          %7195 = vmatpush1.msra.mxu0 0.0
          %7196 = vmatprep.subr.mxu0 0.0
          %7197 = vmatpush1.msra.mxu0 0.0
          %7198 = vmatprep.subr.mxu0 0.0
          %7199 = vmatpush1.msra.mxu0 0.0
          %7200 = vmatprep.subr.mxu0 0.0
          %7201 = vmatpush1.msra.mxu0 0.0
          %7202 = vmatprep.subr.mxu0 0.0
          %7203 = vmatpush1.msra.mxu0 0.0
          %7204 = vmatprep.subr.mxu0 0.0
          %7205 = vmatpush1.msra.mxu0 0.0
          %7206 = vmatprep.subr.mxu0 0.0
          %7207 = vmatpush1.msra.mxu0 0.0
          %7208 = vmatprep.subr.mxu0 0.0
          %7209 = vmatpush1.msra.mxu0 0.0
          %7210 = vmatprep.subr.mxu0 0.0
          %7211 = vmatpush1.msra.mxu0 0.0
          %7212 = vmatprep.subr.mxu0 0.0
          %7213 = vmatpush1.msra.mxu0 0.0
          %7214 = vmatprep.subr.mxu0 0.0
          %7215 = vmatpush1.msra.mxu0 0.0
          %7216 = vmatprep.mubr.f32.mxu0 0.0
          %7217 = vmatmul.mubr.f32.gmra.mrb[0].mxu0 0.0078125
          %v7218 = vpop.f32.mrb[0].mxu0
          %v7219 = vadd.f32 0.0, %v7218
          %v7220 = vpop.f32.mrb[0].mxu0
          %v7221 = vadd.f32 0.0, %v7220
          %7222 = vdwg.mxu0
          %v7225 = vcombine.low %v7219, %v7221
          %v7227 = vunpack.c.l.s4 1966171168
          %v7228 = vunpack.c.0.s8 %v7227
          %v7229 = vlaneseq
          %v7230 = vshrl.u32 %v7229, 7
          %v7231 = vsub.s32 %v7228, %v7230
          %v7232 = vrot.slane %v7225, %v7231
          %v7234 = vunpack.c.l.s4 1966171168
          %v7235 = vunpack.c.0.s8 %v7234
          %v7236 = vlaneseq
          %v7237 = vshrl.u32 %v7236, 7
          %v7238 = vsub.s32 %v7235, %v7237
          %v7239 = vrot.slane %v7232, %v7238
          %v7241 = vlaneseq
          %vm7242 = vcmp.ge.s32.totalorder %v7241, 0
          %vm7243 = vcmp.lt.s32.totalorder %v7241, 256
          %vm7244 = vmand %vm7242, %vm7243
          %7245 = vst.msk [vmem:[%s474] sm:$0x3] %vm7244, %v7239
        $region80: #{tpu_custom_call.1} parent=43 // pred_fallthru
          _
        %s7246 = sand.u32 %s209, 1
        %s7247 = scalar_lea.sflag [#allocation6], %s7246
        %s7248 = sand.u32 %s209, 1
        %s7249 = smul.addr %s7248, 2
        %s7250 = scalar_lea.vmem [#allocation15], %s7249
        // Predicated region
        $region81: #{tpu_custom_call.1} parent=43 // pred_check
          %p7251 = pneg %p219
        $region82: #{tpu_custom_call.1} parent=43 // pred_check_branch
          %7253 = sbr.rel (%p7251) target = $region84
        $region83: #{tpu_custom_call.1} parent=43 // pred_region
          %s7255 = ssub.s32 32, 32
          %7256 = vsyncadd %s7247, %s7255
          %s7257 = smul.addr %s37, 2
          %s7258 = smul.addr %s7257, 16
          %s7259 = scalar_lea.hbm %s7, %s7258
          %s7261 = sshll.u32 %s7250, 4
          %s7262 = int_to_ptr.vmem [resolvable:$true] %s7261
          %7264 = dma.vmem_to_hbm [thread:$0]  %s7262, 32, %s7259, %s7247
        $region84: #{tpu_custom_call.1} parent=43 // pred_fallthru
          _
      $region44: #{tpu_custom_call.1} parent=5 // pred_fallthru
        _
      %p7265 = scmp.le.s32.totalorder 2, %s28
      // Predicated region
      $region85: #{tpu_custom_call.1} parent=5 // pred_check
        %p7266 = pneg %p7265
      $region86: #{tpu_custom_call.1} parent=5 // pred_check_branch
        %7268 = sbr.rel (%p7266) target = $region88
      $region87: #{tpu_custom_call.1} parent=5 // pred_region
        %s7269 = ssub.s32 %s28, 2
        // Predicated region
        $region89: #{tpu_custom_call.1} parent=87 // pred_check
          %p7270 = pneg %p225
        $region90: #{tpu_custom_call.1} parent=87 // pred_check_branch
          %7272 = sbr.rel (%p7270) target = $region92
        $region91: #{tpu_custom_call.1} parent=87 // pred_region
          %s7273 = sand.u32 %s210, 1
          %s7274 = scalar_lea.sflag [#allocation6], %s7273
          %s7275 = sand.u32 %s210, 1
          %s7276 = smul.addr %s7275, 2
          %s7277 = scalar_lea.vmem [#allocation15], %s7276
          %7278 = dma.done %s7274, 32
        $region92: #{tpu_custom_call.1} parent=87 // pred_fallthru
          _
      $region88: #{tpu_custom_call.1} parent=5 // pred_fallthru
        _
    $region6: #{tpu_custom_call.1} parent=1 // loop_footer
      %s32 = sadd.s32 1, %s28
    $region7: #{tpu_custom_call.1} parent=1 // loop_footer_branch
      %27 = sbr.rel target = $region3
    $region8: #{tpu_custom_call.1} parent=1 // loop_exit
      _
    %7279 = vsyncpa [#allocation5], 1
    %s7280 = scalar_lea.sflag [#allocation5], 1
    %7281 = vsyncpa %s7280, 1
    %7282 = vsyncpa [#allocation8], 1
    %s7283 = scalar_lea.sflag [#allocation8], 1
    %7284 = vsyncpa %s7283, 1
    %7285 = vsyncpa [#allocation11], 1
    %s7286 = scalar_lea.sflag [#allocation11], 1
    %7287 = vsyncpa %s7286, 1
    %7288 = vsyncpa [#allocation14], 1
    %s7289 = scalar_lea.sflag [#allocation14], 1
    %7290 = vsyncpa %s7289, 1
    %7291 = vsyncpa [#allocation6], 1
    %s7292 = scalar_lea.sflag [#allocation6], 1
    %7293 = vsyncpa %s7292, 1
  %7294 = vsyncmov [#allocation3]
  %s7295 = vpop.sfrf %7294
  %p7296 = scmp.eq.s32.totalorder %s7295, 0
  %p7297 = pneg %p7296
  %7299 = shalt.err (%p7297)

</llo_original>
